<compile_context>
chip_gen: v7x
topology: tpu7x:2x2x1
jax: 0.10.0
libtpu: 0.0.40
codegen_flags: <defaults>
</compile_context>

<pallas_src>
import numpy as np
import jax
import jax.numpy as jnp
from jax.experimental import pallas as pl
from jax.experimental.pallas import tpu as pltpu

# ---- model geometry (28x28x3 input is implied by the 48*4*4 flatten) ----
H_IN, W_IN, C_IN = 28, 28, 3
K = 5
C1, C2 = 32, 48
H1C, W1C = H_IN - K + 1, W_IN - K + 1        # 24, 24 (conv1 valid output)
H1P, W1P = H1C // 2, W1C // 2                # 12, 12 (after 2x2 maxpool)
H2C, W2C = H1P - K + 1, W1P - K + 1          # 8, 8
H2P, W2P = H2C // 2, W2C // 2                # 4, 4
FEAT = C2 * H2P * W2P                        # 768
HALF1 = W1P * C1                             # 384 (conv1 pooled-W width, lane-aligned)
HALF2 = W2P * C2                             # 192 (conv2 pooled-W width)

LANE1 = 128                                  # conv1 contraction lanes (84 padded to 128)
NH_PAD = 256                                 # fused head: class [0,128), domain [128,256)
NT_PAD = 128                                 # tail K/N padding (100 -> 128)
OUT_LANES = 128                              # merged logits: class [0,10), domain [10,12)

# ---- VMEM budgeting (per grid step) ----
VMEM_LIMIT_BYTES = 48 * 1024 * 1024   # <= v7x 64 MiB/TC, well under v5e/v6e 128 MiB
ACT_BYTES_PER_SAMPLE = 416 * 1024     # conservative: conv1 f32 acc/affine (~147 KB),
                                      # pool temps, bf16 slabs, conv2 chain, I/O buffers
VMEM_HEADROOM = 2 * 1024 * 1024       # sublane padding of small operands, mosaic scratch
BT_MAX = 128


# ----------------------------------------------------------------------------
# The single fused kernel
# ----------------------------------------------------------------------------
def dann_kernel(x_ref,
                w1_ref, s1_ref, t1_ref,
                w2_ref, s2_ref, t2_ref,
                wh1_ref, sh1_ref, th1_ref,
                cw2_ref, cs2_ref, ct2_ref,
                cw3_ref, dw2_ref, b3_ref,
                out_ref):
    BT = x_ref.shape[0]

    # ---- conv1: ONE banded-im2col MXU matmul (K = 5*128), folded bias+BN,
    #      2x2 maxpool (W via lane halves, H via paired rows), ReLU ----
    xb = x_ref[...]                                            # (BT, 28, 128) bf16
    slab1 = jnp.concatenate(
        [xb[:, kh:kh + H1C, :].reshape(BT * H1C, LANE1) for kh in range(K)],
        axis=1)                                                # (BT*24, 640); 128-aligned pieces
    y = jnp.dot(slab1, w1_ref[...],
                preferred_element_type=jnp.float32)            # (BT*24, 768)
    y = y * s1_ref[...] + t1_ref[...]                          # conv bias + eval-BN folded
    y = jnp.maximum(y[:, :HALF1], y[:, HALF1:])                # pool along W (lane-aligned)
    y = jnp.max(y.reshape(BT * H1P, 2, HALF1), axis=1)         # pool along H
    r1 = jnp.maximum(y, 0.0).astype(jnp.bfloat16)              # ReLU
    r1 = r1.reshape(BT, H1P, HALF1)                            # (BT, 12, 384)

    # ---- conv2: ONE banded matmul (K = 5*384), BN, Dropout2d=identity,
    #      maxpool, ReLU ----
    slab2 = jnp.concatenate(
        [r1[:, kh:kh + H2C, :].reshape(BT * H2C, HALF1) for kh in range(K)],
        axis=1)                                                # (BT*8, 1920)
    y2 = jnp.dot(slab2, w2_ref[...],
                 preferred_element_type=jnp.float32)           # (BT*8, 384)
    y2 = y2 * s2_ref[...] + t2_ref[...]
    y2 = jnp.maximum(y2[:, :HALF2], y2[:, HALF2:])             # pool along W
    y2 = jnp.max(y2.reshape(BT * H2P, 2, HALF2), axis=1)       # pool along H
    z = jnp.maximum(y2, 0.0).astype(jnp.bfloat16)              # (BT*4, 192) HWC features
    z = z.reshape(BT, H2P, HALF2)

    # ---- fused first Linear of both heads + BN + ReLU.  Per-pooled-row matmuls
    #      (K=192 each) so the HWC conv output is consumed without regrouping
    #      the lane dimension.  Class lanes [0,128), domain lanes [128,256). ----
    h = jnp.zeros((BT, NH_PAD), jnp.float32)
    for hh in range(H2P):
        h = h + jnp.dot(z[:, hh, :], wh1_ref[hh],
                        preferred_element_type=jnp.float32)
    h = jnp.maximum(h * sh1_ref[...] + th1_ref[...], 0.0)      # Linear+BN+ReLU (padded cols = 0)
    hc = h[:, :128].astype(jnp.bfloat16)   # class branch  (Dropout = identity in eval)
    hd = h[:, 128:].astype(jnp.bfloat16)   # domain branch (gradient reversal = identity fwd)

    # class tail: Linear(100,100)+BN+ReLU -> Linear(100,10)
    # domain tail: Linear(100,2).  Final logits merged into one 128-lane slab.
    h2 = jnp.dot(hc, cw2_ref[...], preferred_element_type=jnp.float32)
    h2 = jnp.maximum(h2 * cs2_ref[...] + ct2_ref[...], 0.0).astype(jnp.bfloat16)
    out = (jnp.dot(h2, cw3_ref[...], preferred_element_type=jnp.float32)
           + jnp.dot(hd, dw2_ref[...], preferred_element_type=jnp.float32)
           + b3_ref[...])                                      # class [0,10), domain [10,12)
    out_ref[...] = out


# ----------------------------------------------------------------------------
# pallas_call wrapper
# ----------------------------------------------------------------------------
def _weight_tuple(ops):
    return (ops['w1'], ops['s1'], ops['t1'],
            ops['w2'], ops['s2'], ops['t2'],
            ops['wh1'], ops['sh1'], ops['th1'],
            ops['cw2'], ops['cs2'], ops['ct2'],
            ops['cw3'], ops['dw2'], ops['b3'])


def _choose_batch_tile(B, weights):
    """Largest BT (<=128, multiple of 8) whose per-step activations plus the
    double-buffered resident weights fit the scoped-VMEM budget."""
    wbytes = sum(int(np.prod(w.shape)) * np.dtype(w.dtype).itemsize for w in weights)
    budget = VMEM_LIMIT_BYTES - 2 * wbytes - VMEM_HEADROOM     # weights double-buffered
    cap = int(max(8, min(BT_MAX, budget // ACT_BYTES_PER_SAMPLE)))
    cap = (cap // 8) * 8                                       # keep output block 8-aligned
    if B <= cap:
        return B, 1                                            # one step: batch folded into M
    g = -(-B // cap)                                           # ceil(B / cap)
    return cap, g


def dann_pallas(x, ops):
    """x: (B, 28, 128) bf16 NHWC with the (W*C)=84 lane dim zero-padded to 128."""
    B = x.shape[0]
    weights = _weight_tuple(ops)
    BT, G = _choose_batch_tile(B, weights)
    B_pad = BT * G
    if B_pad != B:
        x = jnp.pad(x, ((0, B_pad - B), (0, 0), (0, 0)))       # zero rows -> sliced away below

    def rep(a):  # whole-array block, constant index map (VMEM-resident weight)
        return pl.BlockSpec(a.shape, lambda g, _n=a.ndim: (0,) * _n)

    out = pl.pallas_call(
        dann_kernel,
        out_shape=jax.ShapeDtypeStruct((B_pad, OUT_LANES), jnp.float32),
        grid=(G,),
        in_specs=[pl.BlockSpec((BT, H_IN, LANE1), lambda g: (g, 0, 0))]
                + [rep(w) for w in weights],
        out_specs=pl.BlockSpec((BT, OUT_LANES), lambda g: (g, 0)),
        compiler_params=pltpu.CompilerParams(
            dimension_semantics=("parallel",),
            vmem_limit_bytes=VMEM_LIMIT_BYTES),
    )(x, *weights)
    return out[:B, 0:10], out[:B, 10:12]


@jax.jit
def dann_forward(x_nchw, alpha, ops):
    del alpha  # ReverseLayerF is identity in forward; alpha only scales grads
    B = x_nchw.shape[0]
    # NCHW -> NHWC, merge (W, C) into lanes, zero-pad 84 -> 128; bf16 MXU operand.
    x = jnp.transpose(x_nchw, (0, 2, 3, 1)).reshape(B, H_IN, W_IN * C_IN)
    x = jnp.pad(x, ((0, 0), (0, 0), (0, LANE1 - W_IN * C_IN)))
    return dann_pallas(x.astype(jnp.bfloat16), ops)


# ----------------------------------------------------------------------------
# Parameters (deterministic synthetic, torch-like layout) + host-side packing
# ----------------------------------------------------------------------------
def init_params(key):
    ks = iter(jax.random.split(key, 32))

    def nrm(shape, s=0.05):
        return jax.random.normal(next(ks), shape, jnp.float32) * s

    zeros = lambda n: jnp.zeros((n,), jnp.float32)
    ones = lambda n: jnp.ones((n,), jnp.float32)

    p = {}
    # feature extractor (conv weights in (K, K, Cin, Cout) layout)
    p['conv1_w'] = nrm((K, K, C_IN, C1)); p['conv1_b'] = nrm((C1,))
    p['bn1_g'] = 1.0 + nrm((C1,)); p['bn1_b'] = nrm((C1,))
    p['bn1_m'] = zeros(C1);        p['bn1_v'] = ones(C1)       # running stats (fresh module)
    p['conv2_w'] = nrm((K, K, C1, C2)); p['conv2_b'] = nrm((C2,))
    p['bn2_g'] = 1.0 + nrm((C2,)); p['bn2_b'] = nrm((C2,))
    p['bn2_m'] = zeros(C2);        p['bn2_v'] = ones(C2)
    # class classifier (Linear weights stored (in, out); layer-1 input rows in
    # torch's CHW flatten order, exactly like the nn.Module)
    p['cls_w1'] = nrm((FEAT, 100)); p['cls_b1'] = nrm((100,))
    p['cls_bn1_g'] = 1.0 + nrm((100,)); p['cls_bn1_b'] = nrm((100,))
    p['cls_bn1_m'] = zeros(100);        p['cls_bn1_v'] = ones(100)
    p['cls_w2'] = nrm((100, 100)); p['cls_b2'] = nrm((100,))
    p['cls_bn2_g'] = 1.0 + nrm((100,)); p['cls_bn2_b'] = nrm((100,))
    p['cls_bn2_m'] = zeros(100);        p['cls_bn2_v'] = ones(100)
    p['cls_w3'] = nrm((100, 10)); p['cls_b3'] = nrm((10,))
    # domain classifier
    p['dom_w1'] = nrm((FEAT, 100)); p['dom_b1'] = nrm((100,))
    p['dom_bn1_g'] = 1.0 + nrm((100,)); p['dom_bn1_b'] = nrm((100,))
    p['dom_bn1_m'] = zeros(100);        p['dom_bn1_v'] = ones(100)
    p['dom_w2'] = nrm((100, 2)); p['dom_b2'] = nrm((2,))
    return p


def _bn_fold(bias, gamma, beta, mean, var, eps=1e-5):
    """Fold eval-mode BatchNorm (running stats) + the preceding bias into a
    per-channel scale/shift applied after the bias-free matmul."""
    scale = gamma / np.sqrt(var + eps)
    shift = (bias - mean) * scale + beta
    return scale, shift


def _band_conv(w_kkio, w_in, w_out, lane_pad=None):
    """K-stacked banded im2col weight, shape (K*rows, w_out*cout).

    Output columns are ordered (w_parity, w_half, cout) so the 2x2 maxpool
    along W becomes a max of two contiguous lane slabs in the kernel; rows for
    the KH kernel positions are stacked along the contraction dim to match the
    lane-concatenated LHS built in the kernel.
    """
    kk, _, cin, cout = w_kkio.shape
    wp = w_out // 2
    rows = w_in * cin
    band = np.zeros((kk, rows, w_out * cout), np.float32)
    for kh in range(kk):
        for kw in range(kk):
            for wo in range(w_out):
                wi = wo + kw
                col = ((wo % 2) * wp + wo // 2) * cout
                band[kh, wi * cin:(wi + 1) * cin, col:col + cout] = w_kkio[kh, kw]
    if lane_pad is not None and lane_pad > rows:
        band = np.pad(band, ((0, 0), (0, lane_pad - rows), (0, 0)))
    return band.reshape(-1, w_out * cout)


def pack_params(p):
    f32, bf16 = jnp.float32, jnp.bfloat16
    pn = {k: np.asarray(v, np.float32) for k, v in p.items()}
    ops = {}

    # conv blocks: stacked banded bf16 matmul weights + f32 per-column scale/shift
    s1, t1 = _bn_fold(pn['conv1_b'], pn['bn1_g'], pn['bn1_b'], pn['bn1_m'], pn['bn1_v'])
    ops['w1'] = jnp.asarray(_band_conv(pn['conv1_w'], W_IN, W1C,
                                       lane_pad=LANE1)).astype(bf16)      # (640, 768)
    ops['s1'] = jnp.asarray(np.tile(s1, W1C)[None, :], f32)
    ops['t1'] = jnp.asarray(np.tile(t1, W1C)[None, :], f32)

    s2, t2 = _bn_fold(pn['conv2_b'], pn['bn2_g'], pn['bn2_b'], pn['bn2_m'], pn['bn2_v'])
    ops['w2'] = jnp.asarray(_band_conv(pn['conv2_w'], W1P, W2C)).astype(bf16)  # (1920, 384)
    ops['s2'] = jnp.asarray(np.tile(s2, W2C)[None, :], f32)
    ops['t2'] = jnp.asarray(np.tile(t2, W2C)[None, :], f32)

    # fused first Linear of both heads: rows permuted CHW->HWC so the NHWC conv
    # output is consumed directly; columns padded to 256 with the class block in
    # [0,100) and the domain block in [128,228) (vreg-aligned split at 128).
    def chw_to_hwc(w):   # rows c*16 + h*4 + w  ->  rows h*192 + w*48 + c
        return w.reshape(C2, H2P, W2P, -1).transpose(1, 2, 0, 3).reshape(FEAT, -1)

    wh1 = np.zeros((FEAT, NH_PAD), np.float32)
    wh1[:, :100] = chw_to_hwc(pn['cls_w1'])
    wh1[:, 128:228] = chw_to_hwc(pn['dom_w1'])
    cs1, ct1 = _bn_fold(pn['cls_b1'], pn['cls_bn1_g'], pn['cls_bn1_b'],
                        pn['cls_bn1_m'], pn['cls_bn1_v'])
    ds1, dt1 = _bn_fold(pn['dom_b1'], pn['dom_bn1_g'], pn['dom_bn1_b'],
                        pn['dom_bn1_m'], pn['dom_bn1_v'])
    sh1 = np.zeros((1, NH_PAD), np.float32); th1 = np.zeros((1, NH_PAD), np.float32)
    sh1[0, :100] = cs1; th1[0, :100] = ct1
    sh1[0, 128:228] = ds1; th1[0, 128:228] = dt1
    ops['wh1'] = jnp.asarray(wh1.reshape(H2P, HALF2, NH_PAD)).astype(bf16)   # (4, 192, 256)
    ops['sh1'] = jnp.asarray(sh1, f32)
    ops['th1'] = jnp.asarray(th1, f32)

    # class classifier tail, K/N padded 100 -> 128
    cs2, ct2 = _bn_fold(pn['cls_b2'], pn['cls_bn2_g'], pn['cls_bn2_b'],
                        pn['cls_bn2_m'], pn['cls_bn2_v'])
    cw2 = np.zeros((NT_PAD, NT_PAD), np.float32); cw2[:100, :100] = pn['cls_w2']
    csc = np.zeros((1, NT_PAD), np.float32); csc[0, :100] = cs2
    ctc = np.zeros((1, NT_PAD), np.float32); ctc[0, :100] = ct2
    ops['cw2'] = jnp.asarray(cw2).astype(bf16)
    ops['cs2'] = jnp.asarray(csc, f32)
    ops['ct2'] = jnp.asarray(ctc, f32)

    # merged final layer: class logits -> lanes [0,10), domain logits -> lanes [10,12)
    cw3 = np.zeros((NT_PAD, OUT_LANES), np.float32); cw3[:100, :10] = pn['cls_w3']
    dw2 = np.zeros((NT_PAD, OUT_LANES), np.float32); dw2[:100, 10:12] = pn['dom_w2']
    b3 = np.zeros((1, OUT_LANES), np.float32)
    b3[0, :10] = pn['cls_b3']; b3[0, 10:12] = pn['dom_b2']
    ops['cw3'] = jnp.asarray(cw3).astype(bf16)
    ops['dw2'] = jnp.asarray(dw2).astype(bf16)
    ops['b3'] = jnp.asarray(b3, f32)
    return ops


if __name__ == "__main__":
    key = jax.random.PRNGKey(0)
    kp, kx = jax.random.split(key)
    params = init_params(kp)
    ops = pack_params(params)
    # 28x28 input is implied by the architecture (48*4*4 flatten); batch=2.
    x = jax.random.normal(kx, (2, 3, 28, 28), jnp.float32)   # NCHW like PyTorch
    alpha = 0.1
    class_out, domain_out = dann_forward(x, alpha, ops)
    jax.block_until_ready((class_out, domain_out))
    assert class_out.shape == (2, 10) and domain_out.shape == (2, 2)
    assert bool(jnp.all(jnp.isfinite(class_out))) and bool(jnp.all(jnp.isfinite(domain_out)))
    print("KERNEL_OK")
</pallas_src>

<mosaic_0001>
module attributes {stable_mosaic.version = 11 : i64} {
  func.func @dann_kernel(%arg0: i32, %arg1: memref<2x28x128xbf16, #tpu.memory_space<vmem>>, %arg2: memref<640x768xbf16, #tpu.memory_space<vmem>>, %arg3: memref<1x768xf32, #tpu.memory_space<vmem>>, %arg4: memref<1x768xf32, #tpu.memory_space<vmem>>, %arg5: memref<1920x384xbf16, #tpu.memory_space<vmem>>, %arg6: memref<1x384xf32, #tpu.memory_space<vmem>>, %arg7: memref<1x384xf32, #tpu.memory_space<vmem>>, %arg8: memref<4x192x256xbf16, #tpu.memory_space<vmem>>, %arg9: memref<1x256xf32, #tpu.memory_space<vmem>>, %arg10: memref<1x256xf32, #tpu.memory_space<vmem>>, %arg11: memref<128x128xbf16, #tpu.memory_space<vmem>>, %arg12: memref<1x128xf32, #tpu.memory_space<vmem>>, %arg13: memref<1x128xf32, #tpu.memory_space<vmem>>, %arg14: memref<128x128xbf16, #tpu.memory_space<vmem>>, %arg15: memref<128x128xbf16, #tpu.memory_space<vmem>>, %arg16: memref<1x128xf32, #tpu.memory_space<vmem>>, %arg17: memref<2x128xf32, #tpu.memory_space<vmem>>) attributes {dimension_semantics = [#tpu.dimension_semantics<parallel>], iteration_bounds = array<i64: 1>, scalar_prefetch = 0 : i64, scratch_operands = 0 : i64, tpu.core_type = #tpu.core_type<tc>, window_params = [{transform_indices = @transform_0, window_bounds = array<i64: 2, 28, 128>}, {pipeline_mode = #tpu.pipeline_mode<synchronous>, transform_indices = @transform_1, window_bounds = array<i64: 640, 768>}, {pipeline_mode = #tpu.pipeline_mode<synchronous>, transform_indices = @transform_2, window_bounds = array<i64: 1, 768>}, {pipeline_mode = #tpu.pipeline_mode<synchronous>, transform_indices = @transform_3, window_bounds = array<i64: 1, 768>}, {pipeline_mode = #tpu.pipeline_mode<synchronous>, transform_indices = @transform_4, window_bounds = array<i64: 1920, 384>}, {pipeline_mode = #tpu.pipeline_mode<synchronous>, transform_indices = @transform_5, window_bounds = array<i64: 1, 384>}, {pipeline_mode = #tpu.pipeline_mode<synchronous>, transform_indices = @transform_6, window_bounds = array<i64: 1, 384>}, {pipeline_mode = #tpu.pipeline_mode<synchronous>, transform_indices = @transform_7, window_bounds = array<i64: 4, 192, 256>}, {pipeline_mode = #tpu.pipeline_mode<synchronous>, transform_indices = @transform_8, window_bounds = array<i64: 1, 256>}, {pipeline_mode = #tpu.pipeline_mode<synchronous>, transform_indices = @transform_9, window_bounds = array<i64: 1, 256>}, {pipeline_mode = #tpu.pipeline_mode<synchronous>, transform_indices = @transform_10, window_bounds = array<i64: 128, 128>}, {pipeline_mode = #tpu.pipeline_mode<synchronous>, transform_indices = @transform_11, window_bounds = array<i64: 1, 128>}, {pipeline_mode = #tpu.pipeline_mode<synchronous>, transform_indices = @transform_12, window_bounds = array<i64: 1, 128>}, {pipeline_mode = #tpu.pipeline_mode<synchronous>, transform_indices = @transform_13, window_bounds = array<i64: 128, 128>}, {pipeline_mode = #tpu.pipeline_mode<synchronous>, transform_indices = @transform_14, window_bounds = array<i64: 128, 128>}, {pipeline_mode = #tpu.pipeline_mode<synchronous>, transform_indices = @transform_15, window_bounds = array<i64: 1, 128>}, {transform_indices = @transform_16, window_bounds = array<i64: 2, 128>}]} {
    %c0 = arith.constant 0 : index
    %c0_0 = arith.constant 0 : index
    %c0_1 = arith.constant 0 : index
    %0 = vector.load %arg1[%c0, %c0_0, %c0_1] : memref<2x28x128xbf16, #tpu.memory_space<vmem>>, vector<2x28x128xbf16>
    %1 = vector.extract_strided_slice %0 {offsets = [0, 0, 0], sizes = [2, 24, 128], strides = [1, 1, 1]} : vector<2x28x128xbf16> to vector<2x24x128xbf16>
    %2 = vector.shape_cast %1 : vector<2x24x128xbf16> to vector<48x128xbf16>
    %3 = vector.extract_strided_slice %0 {offsets = [0, 1, 0], sizes = [2, 24, 128], strides = [1, 1, 1]} : vector<2x28x128xbf16> to vector<2x24x128xbf16>
    %4 = vector.shape_cast %3 : vector<2x24x128xbf16> to vector<48x128xbf16>
    %5 = vector.extract_strided_slice %0 {offsets = [0, 2, 0], sizes = [2, 24, 128], strides = [1, 1, 1]} : vector<2x28x128xbf16> to vector<2x24x128xbf16>
    %6 = vector.shape_cast %5 : vector<2x24x128xbf16> to vector<48x128xbf16>
    %7 = vector.extract_strided_slice %0 {offsets = [0, 3, 0], sizes = [2, 24, 128], strides = [1, 1, 1]} : vector<2x28x128xbf16> to vector<2x24x128xbf16>
    %8 = vector.shape_cast %7 : vector<2x24x128xbf16> to vector<48x128xbf16>
    %9 = vector.extract_strided_slice %0 {offsets = [0, 4, 0], sizes = [2, 24, 128], strides = [1, 1, 1]} : vector<2x28x128xbf16> to vector<2x24x128xbf16>
    %10 = vector.shape_cast %9 : vector<2x24x128xbf16> to vector<48x128xbf16>
    %11 = tpu.concatenate %2, %4, %6, %8, %10 in 1 : vector<48x128xbf16>, vector<48x128xbf16>, vector<48x128xbf16>, vector<48x128xbf16>, vector<48x128xbf16> -> vector<48x640xbf16>
    %c0_2 = arith.constant 0 : index
    %c0_3 = arith.constant 0 : index
    %12 = vector.load %arg2[%c0_2, %c0_3] : memref<640x768xbf16, #tpu.memory_space<vmem>>, vector<640x768xbf16>
    %cst = arith.constant dense<0.000000e+00> : vector<48x768xf32>
    %13 = tpu.matmul %11, %12, %cst {dimension_numbers = #tpu.dot_dimension_numbers<[1], [0], [0], [1], [0, 0, 1, 1], [], []>} : vector<48x640xbf16>, vector<640x768xbf16>, vector<48x768xf32> -> vector<48x768xf32>
    %c0_4 = arith.constant 0 : index
    %c0_5 = arith.constant 0 : index
    %14 = vector.load %arg3[%c0_4, %c0_5] : memref<1x768xf32, #tpu.memory_space<vmem>>, vector<1x768xf32>
    %15 = vector.broadcast %14 : vector<1x768xf32> to vector<48x768xf32>
    %16 = arith.mulf %13, %15 : vector<48x768xf32>
    %c0_6 = arith.constant 0 : index
    %c0_7 = arith.constant 0 : index
    %17 = vector.load %arg4[%c0_6, %c0_7] : memref<1x768xf32, #tpu.memory_space<vmem>>, vector<1x768xf32>
    %18 = vector.broadcast %17 : vector<1x768xf32> to vector<48x768xf32>
    %19 = arith.addf %16, %18 : vector<48x768xf32>
    %20 = vector.extract_strided_slice %19 {offsets = [0, 0], sizes = [48, 384], strides = [1, 1]} : vector<48x768xf32> to vector<48x384xf32>
    %21 = vector.extract_strided_slice %19 {offsets = [0, 384], sizes = [48, 384], strides = [1, 1]} : vector<48x768xf32> to vector<48x384xf32>
    %22 = arith.maximumf %20, %21 : vector<48x384xf32>
    %23 = vector.shape_cast %22 : vector<48x384xf32> to vector<24x2x384xf32>
    %cst_8 = arith.constant dense<0xFF800000> : vector<24x384xf32>
    %24 = vector.multi_reduction <maximumf>, %23, %cst_8 [1] : vector<24x2x384xf32> to vector<24x384xf32>
    %cst_9 = arith.constant 0.000000e+00 : f32
    %25 = vector.broadcast %cst_9 : f32 to vector<24x384xf32>
    %26 = arith.maximumf %24, %25 : vector<24x384xf32>
    %27 = arith.truncf %26 : vector<24x384xf32> to vector<24x384xbf16>
    %28 = vector.shape_cast %27 : vector<24x384xbf16> to vector<2x12x384xbf16>
    %29 = vector.extract_strided_slice %28 {offsets = [0, 0, 0], sizes = [2, 8, 384], strides = [1, 1, 1]} : vector<2x12x384xbf16> to vector<2x8x384xbf16>
    %30 = vector.shape_cast %29 : vector<2x8x384xbf16> to vector<16x384xbf16>
    %31 = vector.extract_strided_slice %28 {offsets = [0, 1, 0], sizes = [2, 8, 384], strides = [1, 1, 1]} : vector<2x12x384xbf16> to vector<2x8x384xbf16>
    %32 = vector.shape_cast %31 : vector<2x8x384xbf16> to vector<16x384xbf16>
    %33 = vector.extract_strided_slice %28 {offsets = [0, 2, 0], sizes = [2, 8, 384], strides = [1, 1, 1]} : vector<2x12x384xbf16> to vector<2x8x384xbf16>
    %34 = vector.shape_cast %33 : vector<2x8x384xbf16> to vector<16x384xbf16>
    %35 = vector.extract_strided_slice %28 {offsets = [0, 3, 0], sizes = [2, 8, 384], strides = [1, 1, 1]} : vector<2x12x384xbf16> to vector<2x8x384xbf16>
    %36 = vector.shape_cast %35 : vector<2x8x384xbf16> to vector<16x384xbf16>
    %37 = vector.extract_strided_slice %28 {offsets = [0, 4, 0], sizes = [2, 8, 384], strides = [1, 1, 1]} : vector<2x12x384xbf16> to vector<2x8x384xbf16>
    %38 = vector.shape_cast %37 : vector<2x8x384xbf16> to vector<16x384xbf16>
    %39 = tpu.concatenate %30, %32, %34, %36, %38 in 1 : vector<16x384xbf16>, vector<16x384xbf16>, vector<16x384xbf16>, vector<16x384xbf16>, vector<16x384xbf16> -> vector<16x1920xbf16>
    %c0_10 = arith.constant 0 : index
    %c0_11 = arith.constant 0 : index
    %40 = vector.load %arg5[%c0_10, %c0_11] : memref<1920x384xbf16, #tpu.memory_space<vmem>>, vector<1920x384xbf16>
    %cst_12 = arith.constant dense<0.000000e+00> : vector<16x384xf32>
    %41 = tpu.matmul %39, %40, %cst_12 {dimension_numbers = #tpu.dot_dimension_numbers<[1], [0], [0], [1], [0, 0, 1, 1], [], []>} : vector<16x1920xbf16>, vector<1920x384xbf16>, vector<16x384xf32> -> vector<16x384xf32>
    %c0_13 = arith.constant 0 : index
    %c0_14 = arith.constant 0 : index
    %42 = vector.load %arg6[%c0_13, %c0_14] : memref<1x384xf32, #tpu.memory_space<vmem>>, vector<1x384xf32>
    %43 = vector.broadcast %42 : vector<1x384xf32> to vector<16x384xf32>
    %44 = arith.mulf %41, %43 : vector<16x384xf32>
    %c0_15 = arith.constant 0 : index
    %c0_16 = arith.constant 0 : index
    %45 = vector.load %arg7[%c0_15, %c0_16] : memref<1x384xf32, #tpu.memory_space<vmem>>, vector<1x384xf32>
    %46 = vector.broadcast %45 : vector<1x384xf32> to vector<16x384xf32>
    %47 = arith.addf %44, %46 : vector<16x384xf32>
    %48 = vector.extract_strided_slice %47 {offsets = [0, 0], sizes = [16, 192], strides = [1, 1]} : vector<16x384xf32> to vector<16x192xf32>
    %49 = vector.extract_strided_slice %47 {offsets = [0, 192], sizes = [16, 192], strides = [1, 1]} : vector<16x384xf32> to vector<16x192xf32>
    %50 = arith.maximumf %48, %49 : vector<16x192xf32>
    %51 = vector.shape_cast %50 : vector<16x192xf32> to vector<8x2x192xf32>
    %cst_17 = arith.constant dense<0xFF800000> : vector<8x192xf32>
    %52 = vector.multi_reduction <maximumf>, %51, %cst_17 [1] : vector<8x2x192xf32> to vector<8x192xf32>
    %cst_18 = arith.constant 0.000000e+00 : f32
    %53 = vector.broadcast %cst_18 : f32 to vector<8x192xf32>
    %54 = arith.maximumf %52, %53 : vector<8x192xf32>
    %55 = arith.truncf %54 : vector<8x192xf32> to vector<8x192xbf16>
    %56 = vector.shape_cast %55 : vector<8x192xbf16> to vector<2x4x192xbf16>
    %cst_19 = arith.constant 0.000000e+00 : f32
    %57 = vector.broadcast %cst_19 : f32 to vector<2x256xf32>
    %58 = vector.extract_strided_slice %56 {offsets = [0, 0, 0], sizes = [2, 1, 192], strides = [1, 1, 1]} : vector<2x4x192xbf16> to vector<2x1x192xbf16>
    %59 = vector.shape_cast %58 : vector<2x1x192xbf16> to vector<2x192xbf16>
    %c0_20 = arith.constant 0 : index
    %c0_21 = arith.constant 0 : index
    %c0_22 = arith.constant 0 : index
    %60 = vector.load %arg8[%c0_20, %c0_21, %c0_22] : memref<4x192x256xbf16, #tpu.memory_space<vmem>>, vector<1x192x256xbf16>
    %61 = vector.shape_cast %60 : vector<1x192x256xbf16> to vector<192x256xbf16>
    %cst_23 = arith.constant dense<0.000000e+00> : vector<2x256xf32>
    %62 = tpu.matmul %59, %61, %cst_23 {dimension_numbers = #tpu.dot_dimension_numbers<[1], [0], [0], [1], [0, 0, 1, 1], [], []>} : vector<2x192xbf16>, vector<192x256xbf16>, vector<2x256xf32> -> vector<2x256xf32>
    %63 = arith.addf %57, %62 : vector<2x256xf32>
    %64 = vector.extract_strided_slice %56 {offsets = [0, 1, 0], sizes = [2, 1, 192], strides = [1, 1, 1]} : vector<2x4x192xbf16> to vector<2x1x192xbf16>
    %65 = vector.shape_cast %64 : vector<2x1x192xbf16> to vector<2x192xbf16>
    %c1 = arith.constant 1 : index
    %c0_24 = arith.constant 0 : index
    %c0_25 = arith.constant 0 : index
    %66 = vector.load %arg8[%c1, %c0_24, %c0_25] : memref<4x192x256xbf16, #tpu.memory_space<vmem>>, vector<1x192x256xbf16>
    %67 = vector.shape_cast %66 : vector<1x192x256xbf16> to vector<192x256xbf16>
    %cst_26 = arith.constant dense<0.000000e+00> : vector<2x256xf32>
    %68 = tpu.matmul %65, %67, %cst_26 {dimension_numbers = #tpu.dot_dimension_numbers<[1], [0], [0], [1], [0, 0, 1, 1], [], []>} : vector<2x192xbf16>, vector<192x256xbf16>, vector<2x256xf32> -> vector<2x256xf32>
    %69 = arith.addf %63, %68 : vector<2x256xf32>
    %70 = vector.extract_strided_slice %56 {offsets = [0, 2, 0], sizes = [2, 1, 192], strides = [1, 1, 1]} : vector<2x4x192xbf16> to vector<2x1x192xbf16>
    %71 = vector.shape_cast %70 : vector<2x1x192xbf16> to vector<2x192xbf16>
    %c2 = arith.constant 2 : index
    %c0_27 = arith.constant 0 : index
    %c0_28 = arith.constant 0 : index
    %72 = vector.load %arg8[%c2, %c0_27, %c0_28] : memref<4x192x256xbf16, #tpu.memory_space<vmem>>, vector<1x192x256xbf16>
    %73 = vector.shape_cast %72 : vector<1x192x256xbf16> to vector<192x256xbf16>
    %cst_29 = arith.constant dense<0.000000e+00> : vector<2x256xf32>
    %74 = tpu.matmul %71, %73, %cst_29 {dimension_numbers = #tpu.dot_dimension_numbers<[1], [0], [0], [1], [0, 0, 1, 1], [], []>} : vector<2x192xbf16>, vector<192x256xbf16>, vector<2x256xf32> -> vector<2x256xf32>
    %75 = arith.addf %69, %74 : vector<2x256xf32>
    %76 = vector.extract_strided_slice %56 {offsets = [0, 3, 0], sizes = [2, 1, 192], strides = [1, 1, 1]} : vector<2x4x192xbf16> to vector<2x1x192xbf16>
    %77 = vector.shape_cast %76 : vector<2x1x192xbf16> to vector<2x192xbf16>
    %c3 = arith.constant 3 : index
    %c0_30 = arith.constant 0 : index
    %c0_31 = arith.constant 0 : index
    %78 = vector.load %arg8[%c3, %c0_30, %c0_31] : memref<4x192x256xbf16, #tpu.memory_space<vmem>>, vector<1x192x256xbf16>
    %79 = vector.shape_cast %78 : vector<1x192x256xbf16> to vector<192x256xbf16>
    %cst_32 = arith.constant dense<0.000000e+00> : vector<2x256xf32>
    %80 = tpu.matmul %77, %79, %cst_32 {dimension_numbers = #tpu.dot_dimension_numbers<[1], [0], [0], [1], [0, 0, 1, 1], [], []>} : vector<2x192xbf16>, vector<192x256xbf16>, vector<2x256xf32> -> vector<2x256xf32>
    %81 = arith.addf %75, %80 : vector<2x256xf32>
    %c0_33 = arith.constant 0 : index
    %c0_34 = arith.constant 0 : index
    %82 = vector.load %arg9[%c0_33, %c0_34] : memref<1x256xf32, #tpu.memory_space<vmem>>, vector<1x256xf32>
    %83 = vector.broadcast %82 : vector<1x256xf32> to vector<2x256xf32>
    %84 = arith.mulf %81, %83 : vector<2x256xf32>
    %c0_35 = arith.constant 0 : index
    %c0_36 = arith.constant 0 : index
    %85 = vector.load %arg10[%c0_35, %c0_36] : memref<1x256xf32, #tpu.memory_space<vmem>>, vector<1x256xf32>
    %86 = vector.broadcast %85 : vector<1x256xf32> to vector<2x256xf32>
    %87 = arith.addf %84, %86 : vector<2x256xf32>
    %cst_37 = arith.constant 0.000000e+00 : f32
    %88 = vector.broadcast %cst_37 : f32 to vector<2x256xf32>
    %89 = arith.maximumf %87, %88 : vector<2x256xf32>
    %90 = vector.extract_strided_slice %89 {offsets = [0, 0], sizes = [2, 128], strides = [1, 1]} : vector<2x256xf32> to vector<2x128xf32>
    %91 = arith.truncf %90 : vector<2x128xf32> to vector<2x128xbf16>
    %92 = vector.extract_strided_slice %89 {offsets = [0, 128], sizes = [2, 128], strides = [1, 1]} : vector<2x256xf32> to vector<2x128xf32>
    %93 = arith.truncf %92 : vector<2x128xf32> to vector<2x128xbf16>
    %c0_38 = arith.constant 0 : index
    %c0_39 = arith.constant 0 : index
    %94 = vector.load %arg11[%c0_38, %c0_39] : memref<128x128xbf16, #tpu.memory_space<vmem>>, vector<128x128xbf16>
    %cst_40 = arith.constant dense<0.000000e+00> : vector<2x128xf32>
    %95 = tpu.matmul %91, %94, %cst_40 {dimension_numbers = #tpu.dot_dimension_numbers<[1], [0], [0], [1], [0, 0, 1, 1], [], []>} : vector<2x128xbf16>, vector<128x128xbf16>, vector<2x128xf32> -> vector<2x128xf32>
    %c0_41 = arith.constant 0 : index
    %c0_42 = arith.constant 0 : index
    %96 = vector.load %arg12[%c0_41, %c0_42] : memref<1x128xf32, #tpu.memory_space<vmem>>, vector<1x128xf32>
    %97 = vector.broadcast %96 : vector<1x128xf32> to vector<2x128xf32>
    %98 = arith.mulf %95, %97 : vector<2x128xf32>
    %c0_43 = arith.constant 0 : index
    %c0_44 = arith.constant 0 : index
    %99 = vector.load %arg13[%c0_43, %c0_44] : memref<1x128xf32, #tpu.memory_space<vmem>>, vector<1x128xf32>
    %100 = vector.broadcast %99 : vector<1x128xf32> to vector<2x128xf32>
    %101 = arith.addf %98, %100 : vector<2x128xf32>
    %cst_45 = arith.constant 0.000000e+00 : f32
    %102 = vector.broadcast %cst_45 : f32 to vector<2x128xf32>
    %103 = arith.maximumf %101, %102 : vector<2x128xf32>
    %104 = arith.truncf %103 : vector<2x128xf32> to vector<2x128xbf16>
    %c0_46 = arith.constant 0 : index
    %c0_47 = arith.constant 0 : index
    %105 = vector.load %arg14[%c0_46, %c0_47] : memref<128x128xbf16, #tpu.memory_space<vmem>>, vector<128x128xbf16>
    %cst_48 = arith.constant dense<0.000000e+00> : vector<2x128xf32>
    %106 = tpu.matmul %104, %105, %cst_48 {dimension_numbers = #tpu.dot_dimension_numbers<[1], [0], [0], [1], [0, 0, 1, 1], [], []>} : vector<2x128xbf16>, vector<128x128xbf16>, vector<2x128xf32> -> vector<2x128xf32>
    %c0_49 = arith.constant 0 : index
    %c0_50 = arith.constant 0 : index
    %107 = vector.load %arg15[%c0_49, %c0_50] : memref<128x128xbf16, #tpu.memory_space<vmem>>, vector<128x128xbf16>
    %cst_51 = arith.constant dense<0.000000e+00> : vector<2x128xf32>
    %108 = tpu.matmul %93, %107, %cst_51 {dimension_numbers = #tpu.dot_dimension_numbers<[1], [0], [0], [1], [0, 0, 1, 1], [], []>} : vector<2x128xbf16>, vector<128x128xbf16>, vector<2x128xf32> -> vector<2x128xf32>
    %109 = arith.addf %106, %108 : vector<2x128xf32>
    %c0_52 = arith.constant 0 : index
    %c0_53 = arith.constant 0 : index
    %110 = vector.load %arg16[%c0_52, %c0_53] : memref<1x128xf32, #tpu.memory_space<vmem>>, vector<1x128xf32>
    %111 = vector.broadcast %110 : vector<1x128xf32> to vector<2x128xf32>
    %112 = arith.addf %109, %111 : vector<2x128xf32>
    %c0_54 = arith.constant 0 : index
    %c0_55 = arith.constant 0 : index
    %113 = vector.load %arg17[%c0_54, %c0_55] : memref<2x128xf32, #tpu.memory_space<vmem>>, vector<2x128xf32>
    tpu.vector_store %arg17[%c0_54, %c0_55], %112 {strides = array<i32>} : memref<2x128xf32, #tpu.memory_space<vmem>>, vector<2x128xf32>,
    return
  }
  func.func @transform_0(%arg0: i32) -> (i32, i32, i32) {
    %c0_i32 = arith.constant 0 : i32
    %c0_i32_0 = arith.constant 0 : i32
    %c0_i32_1 = arith.constant 0 : i32
    return %arg0, %c0_i32, %c0_i32_0 : i32, i32, i32
  }
  func.func @transform_1(%arg0: i32) -> (i32, i32) {
    %c0_i32 = arith.constant 0 : i32
    %c0_i32_0 = arith.constant 0 : i32
    %c0_i32_1 = arith.constant 0 : i32
    return %c0_i32, %c0_i32_0 : i32, i32
  }
  func.func @transform_2(%arg0: i32) -> (i32, i32) {
    %c0_i32 = arith.constant 0 : i32
    %c0_i32_0 = arith.constant 0 : i32
    %c0_i32_1 = arith.constant 0 : i32
    return %c0_i32, %c0_i32_0 : i32, i32
  }
  func.func @transform_3(%arg0: i32) -> (i32, i32) {
    %c0_i32 = arith.constant 0 : i32
    %c0_i32_0 = arith.constant 0 : i32
    %c0_i32_1 = arith.constant 0 : i32
    return %c0_i32, %c0_i32_0 : i32, i32
  }
  func.func @transform_4(%arg0: i32) -> (i32, i32) {
    %c0_i32 = arith.constant 0 : i32
    %c0_i32_0 = arith.constant 0 : i32
    %c0_i32_1 = arith.constant 0 : i32
    return %c0_i32, %c0_i32_0 : i32, i32
  }
  func.func @transform_5(%arg0: i32) -> (i32, i32) {
    %c0_i32 = arith.constant 0 : i32
    %c0_i32_0 = arith.constant 0 : i32
    %c0_i32_1 = arith.constant 0 : i32
    return %c0_i32, %c0_i32_0 : i32, i32
  }
  func.func @transform_6(%arg0: i32) -> (i32, i32) {
    %c0_i32 = arith.constant 0 : i32
    %c0_i32_0 = arith.constant 0 : i32
    %c0_i32_1 = arith.constant 0 : i32
    return %c0_i32, %c0_i32_0 : i32, i32
  }
  func.func @transform_7(%arg0: i32) -> (i32, i32, i32) {
    %c0_i32 = arith.constant 0 : i32
    %c0_i32_0 = arith.constant 0 : i32
    %c0_i32_1 = arith.constant 0 : i32
    %c0_i32_2 = arith.constant 0 : i32
    return %c0_i32, %c0_i32_0, %c0_i32_1 : i32, i32, i32
  }
  func.func @transform_8(%arg0: i32) -> (i32, i32) {
    %c0_i32 = arith.constant 0 : i32
    %c0_i32_0 = arith.constant 0 : i32
    %c0_i32_1 = arith.constant 0 : i32
    return %c0_i32, %c0_i32_0 : i32, i32
  }
  func.func @transform_9(%arg0: i32) -> (i32, i32) {
    %c0_i32 = arith.constant 0 : i32
    %c0_i32_0 = arith.constant 0 : i32
    %c0_i32_1 = arith.constant 0 : i32
    return %c0_i32, %c0_i32_0 : i32, i32
  }
  func.func @transform_10(%arg0: i32) -> (i32, i32) {
    %c0_i32 = arith.constant 0 : i32
    %c0_i32_0 = arith.constant 0 : i32
    %c0_i32_1 = arith.constant 0 : i32
    return %c0_i32, %c0_i32_0 : i32, i32
  }
  func.func @transform_11(%arg0: i32) -> (i32, i32) {
    %c0_i32 = arith.constant 0 : i32
    %c0_i32_0 = arith.constant 0 : i32
    %c0_i32_1 = arith.constant 0 : i32
    return %c0_i32, %c0_i32_0 : i32, i32
  }
  func.func @transform_12(%arg0: i32) -> (i32, i32) {
    %c0_i32 = arith.constant 0 : i32
    %c0_i32_0 = arith.constant 0 : i32
    %c0_i32_1 = arith.constant 0 : i32
    return %c0_i32, %c0_i32_0 : i32, i32
  }
  func.func @transform_13(%arg0: i32) -> (i32, i32) {
    %c0_i32 = arith.constant 0 : i32
    %c0_i32_0 = arith.constant 0 : i32
    %c0_i32_1 = arith.constant 0 : i32
    return %c0_i32, %c0_i32_0 : i32, i32
  }
  func.func @transform_14(%arg0: i32) -> (i32, i32) {
    %c0_i32 = arith.constant 0 : i32
    %c0_i32_0 = arith.constant 0 : i32
    %c0_i32_1 = arith.constant 0 : i32
    return %c0_i32, %c0_i32_0 : i32, i32
  }
  func.func @transform_15(%arg0: i32) -> (i32, i32) {
    %c0_i32 = arith.constant 0 : i32
    %c0_i32_0 = arith.constant 0 : i32
    %c0_i32_1 = arith.constant 0 : i32
    return %c0_i32, %c0_i32_0 : i32, i32
  }
  func.func @transform_16(%arg0: i32) -> (i32, i32) {
    %c0_i32 = arith.constant 0 : i32
    %c0_i32_0 = arith.constant 0 : i32
    return %arg0, %c0_i32 : i32, i32
  }
}

</mosaic_0001>

<llo_original>
// kernel: dann_forward.1
$region0: #{dann_forward.1}
  #allocation0 [shape = 'u32[]', space=smem, size = 0x4, offset = 0x4, fixed_abs, tag = 'smem constant byte address 0x4 - core index']
  #allocation1 [shape = 'u32[144,128]{1,0:T(1,128)}', space=vmem, size = 0x12000, scoped, tag = 'internal scratch']
  %s0 = inlined_call_operand.vmem [shape: bf16[2,28,128], index: 0, kind: input, shape index: {}]
  %s1 = inlined_call_operand.hbm [shape: bf16[640,768], index: 1, kind: input, shape index: {}]
  %s2 = inlined_call_operand.hbm [shape: f32[1,768], index: 2, kind: input, shape index: {}]
  %s3 = inlined_call_operand.hbm [shape: f32[1,768], index: 3, kind: input, shape index: {}]
  %s4 = inlined_call_operand.hbm [shape: bf16[1920,384], index: 4, kind: input, shape index: {}]
  %s5 = inlined_call_operand.hbm [shape: f32[1,384], index: 5, kind: input, shape index: {}]
  %s6 = inlined_call_operand.hbm [shape: f32[1,384], index: 6, kind: input, shape index: {}]
  %s7 = inlined_call_operand.hbm [shape: bf16[4,192,256], index: 7, kind: input, shape index: {}]
  %s8 = inlined_call_operand.hbm [shape: f32[1,256], index: 8, kind: input, shape index: {}]
  %s9 = inlined_call_operand.hbm [shape: f32[1,256], index: 9, kind: input, shape index: {}]
  %s10 = inlined_call_operand.hbm [shape: bf16[128,128], index: 10, kind: input, shape index: {}]
  %s11 = inlined_call_operand.hbm [shape: f32[1,128], index: 11, kind: input, shape index: {}]
  %s12 = inlined_call_operand.hbm [shape: f32[1,128], index: 12, kind: input, shape index: {}]
  %s13 = inlined_call_operand.hbm [shape: bf16[128,128], index: 13, kind: input, shape index: {}]
  %s14 = inlined_call_operand.hbm [shape: bf16[128,128], index: 14, kind: input, shape index: {}]
  %s15 = inlined_call_operand.hbm [shape: f32[1,128], index: 15, kind: input, shape index: {}]
  %s16 = inlined_call_operand.vmem [shape: f32[2,128], index: 16, kind: output, shape index: {}]
  %s17 = sld [smem:[#allocation0]]
  $region134: #{dann_forward.1} parent=0
    _
  %s19 = ssub.s32 1, %s17
  %s20 = scalar_select 0, %s19, %s17
  $region1: #{dann_forward.1} parent=0
    #allocation2 [shape = 'u8[983040]{0}', space=vmem, size = 0xf0000, scoped, tag = 'input window, operand 1, single buffered']
    #allocation3 [shape = 's32[1]{0}', space=sflag, size = 0x4, scoped, tag = 'scoped memory for dann_forward.1']
    #allocation4 [shape = 'u8[3072]{0}', space=vmem, size = 0xc00, scoped, tag = 'input window, operand 2, single buffered']
    #allocation5 [shape = 's32[1]{0}', space=sflag, size = 0x4, scoped, tag = 'scoped memory for dann_forward.1']
    #allocation6 [shape = 'u8[3072]{0}', space=vmem, size = 0xc00, scoped, tag = 'input window, operand 3, single buffered']
    #allocation7 [shape = 'u8[1474560]{0}', space=vmem, size = 0x168000, scoped, tag = 'input window, operand 4, single buffered']
    #allocation8 [shape = 's32[1]{0}', space=sflag, size = 0x4, scoped, tag = 'scoped memory for dann_forward.1']
    #allocation9 [shape = 'u8[1536]{0}', space=vmem, size = 0x800, scoped, tag = 'input window, operand 5, single buffered']
    #allocation10 [shape = 'u8[1536]{0}', space=vmem, size = 0x800, scoped, tag = 'input window, operand 6, single buffered']
    #allocation11 [shape = 's32[1]{0}', space=sflag, size = 0x4, scoped, tag = 'scoped memory for dann_forward.1']
    #allocation12 [shape = 'u8[393216]{0}', space=vmem, size = 0x60000, scoped, tag = 'input window, operand 7, single buffered']
    #allocation13 [shape = 'u8[1024]{0}', space=vmem, size = 0x400, scoped, tag = 'input window, operand 8, single buffered']
    #allocation14 [shape = 's32[1]{0}', space=sflag, size = 0x4, scoped, tag = 'scoped memory for dann_forward.1']
    #allocation15 [shape = 'u8[1024]{0}', space=vmem, size = 0x400, scoped, tag = 'input window, operand 9, single buffered']
    #allocation16 [shape = 'u8[32768]{0}', space=vmem, size = 0x8000, scoped, tag = 'input window, operand 10, single buffered']
    #allocation17 [shape = 's32[1]{0}', space=sflag, size = 0x4, scoped, tag = 'scoped memory for dann_forward.1']
    #allocation18 [shape = 'u8[512]{0}', space=vmem, size = 0x400, scoped, tag = 'input window, operand 11, single buffered']
    #allocation19 [shape = 'u8[512]{0}', space=vmem, size = 0x400, scoped, tag = 'input window, operand 12, single buffered']
    #allocation20 [shape = 's32[1]{0}', space=sflag, size = 0x4, scoped, tag = 'scoped memory for dann_forward.1']
    #allocation21 [shape = 'u8[32768]{0}', space=vmem, size = 0x8000, scoped, tag = 'input window, operand 13, single buffered']
    #allocation22 [shape = 'u8[32768]{0}', space=vmem, size = 0x8000, scoped, tag = 'input window, operand 14, single buffered']
    #allocation23 [shape = 's32[1]{0}', space=sflag, size = 0x4, scoped, tag = 'scoped memory for dann_forward.1']
    #allocation24 [shape = 'u8[512]{0}', space=vmem, size = 0x400, scoped, tag = 'input window, operand 15, single buffered']
    %21 = vsyncpa [#allocation3], 0
    %22 = vsyncpa [#allocation5], 0
    %23 = vsyncpa [#allocation8], 0
    %24 = vsyncpa [#allocation11], 0
    %25 = vsyncpa [#allocation14], 0
    %26 = vsyncpa [#allocation17], 0
    %27 = vsyncpa [#allocation20], 0
    %28 = vsyncpa [#allocation23], 0
    // Predicated region
    $region2: #{dann_forward.1} parent=1 // pred_check
      _
    $region3: #{dann_forward.1} parent=1 // pred_check_branch
      %30 = sbr.rel (0) target = $region5
    $region4: #{dann_forward.1} parent=1 // pred_region
      _
    $region5: #{dann_forward.1} parent=1 // pred_fallthru
      _
    // Predicated region
    $region6: #{dann_forward.1} parent=1 // pred_check
      _
    $region7: #{dann_forward.1} parent=1 // pred_check_branch
      %32 = sbr.rel (0) target = $region9
    $region8: #{dann_forward.1} parent=1 // pred_region
      %s34 = ssub.s32 30720, 30720
      %35 = vsyncadd [#allocation3], %s34
      %s36 = sshll.u32 [#allocation2], 4
      %s37 = int_to_ptr.vmem [resolvable:$true] %s36
      %42 = dma.hbm_to_vmem [thread:$0]  %s1, 30720, %s37, [#allocation3], 384, 384, 24
    $region9: #{dann_forward.1} parent=1 // pred_fallthru
      _
    // Predicated region
    $region10: #{dann_forward.1} parent=1 // pred_check
      _
    $region11: #{dann_forward.1} parent=1 // pred_check_branch
      %44 = sbr.rel (0) target = $region13
    $region12: #{dann_forward.1} parent=1 // pred_region
      %s46 = ssub.s32 96, 96
      %47 = vsyncadd [#allocation5], %s46
      %s49 = sshll.u32 [#allocation4], 4
      %s50 = int_to_ptr.vmem [resolvable:$true] %s49
      %52 = dma.hbm_to_vmem [thread:$0]  %s2, 96, %s50, [#allocation5]
    $region13: #{dann_forward.1} parent=1 // pred_fallthru
      _
    // Predicated region
    $region14: #{dann_forward.1} parent=1 // pred_check
      _
    $region15: #{dann_forward.1} parent=1 // pred_check_branch
      %54 = sbr.rel (0) target = $region17
    $region16: #{dann_forward.1} parent=1 // pred_region
      %s56 = ssub.s32 96, 96
      %57 = vsyncadd [#allocation5], %s56
      %s59 = sshll.u32 [#allocation6], 4
      %s60 = int_to_ptr.vmem [resolvable:$true] %s59
      %62 = dma.hbm_to_vmem [thread:$0]  %s3, 96, %s60, [#allocation5]
    $region17: #{dann_forward.1} parent=1 // pred_fallthru
      _
    // Predicated region
    $region18: #{dann_forward.1} parent=1 // pred_check
      _
    $region19: #{dann_forward.1} parent=1 // pred_check_branch
      %64 = sbr.rel (0) target = $region21
    $region20: #{dann_forward.1} parent=1 // pred_region
      %s66 = ssub.s32 46080, 46080
      %67 = vsyncadd [#allocation8], %s66
      %s68 = sshll.u32 [#allocation7], 4
      %s69 = int_to_ptr.vmem [resolvable:$true] %s68
      %74 = dma.hbm_to_vmem [thread:$0]  %s4, 46080, %s69, [#allocation8], 192, 192, 12
    $region21: #{dann_forward.1} parent=1 // pred_fallthru
      _
    // Predicated region
    $region22: #{dann_forward.1} parent=1 // pred_check
      _
    $region23: #{dann_forward.1} parent=1 // pred_check_branch
      %76 = sbr.rel (0) target = $region25
    $region24: #{dann_forward.1} parent=1 // pred_region
      %s78 = ssub.s32 48, 48
      %79 = vsyncadd [#allocation8], %s78
      %s81 = sshll.u32 [#allocation9], 4
      %s82 = int_to_ptr.vmem [resolvable:$true] %s81
      %84 = dma.hbm_to_vmem [thread:$0]  %s5, 48, %s82, [#allocation8]
    $region25: #{dann_forward.1} parent=1 // pred_fallthru
      _
    // Predicated region
    $region26: #{dann_forward.1} parent=1 // pred_check
      _
    $region27: #{dann_forward.1} parent=1 // pred_check_branch
      %86 = sbr.rel (0) target = $region29
    $region28: #{dann_forward.1} parent=1 // pred_region
      %s88 = ssub.s32 48, 48
      %89 = vsyncadd [#allocation11], %s88
      %s91 = sshll.u32 [#allocation10], 4
      %s92 = int_to_ptr.vmem [resolvable:$true] %s91
      %94 = dma.hbm_to_vmem [thread:$0]  %s6, 48, %s92, [#allocation11]
    $region29: #{dann_forward.1} parent=1 // pred_fallthru
      _
    // Predicated region
    $region30: #{dann_forward.1} parent=1 // pred_check
      _
    $region31: #{dann_forward.1} parent=1 // pred_check_branch
      %96 = sbr.rel (0) target = $region33
    $region32: #{dann_forward.1} parent=1 // pred_region
      %s98 = ssub.s32 12288, 12288
      %99 = vsyncadd [#allocation11], %s98
      %s100 = sshll.u32 [#allocation12], 4
      %s101 = int_to_ptr.vmem [resolvable:$true] %s100
      %106 = dma.hbm_to_vmem [thread:$0]  %s7, 12288, %s101, [#allocation11], 128, 128, 8
    $region33: #{dann_forward.1} parent=1 // pred_fallthru
      _
    // Predicated region
    $region34: #{dann_forward.1} parent=1 // pred_check
      _
    $region35: #{dann_forward.1} parent=1 // pred_check_branch
      %108 = sbr.rel (0) target = $region37
    $region36: #{dann_forward.1} parent=1 // pred_region
      %s110 = ssub.s32 32, 32
      %111 = vsyncadd [#allocation14], %s110
      %s113 = sshll.u32 [#allocation13], 4
      %s114 = int_to_ptr.vmem [resolvable:$true] %s113
      %116 = dma.hbm_to_vmem [thread:$0]  %s8, 32, %s114, [#allocation14]
    $region37: #{dann_forward.1} parent=1 // pred_fallthru
      _
    // Predicated region
    $region38: #{dann_forward.1} parent=1 // pred_check
      _
    $region39: #{dann_forward.1} parent=1 // pred_check_branch
      %118 = sbr.rel (0) target = $region41
    $region40: #{dann_forward.1} parent=1 // pred_region
      %s120 = ssub.s32 32, 32
      %121 = vsyncadd [#allocation14], %s120
      %s123 = sshll.u32 [#allocation15], 4
      %s124 = int_to_ptr.vmem [resolvable:$true] %s123
      %126 = dma.hbm_to_vmem [thread:$0]  %s9, 32, %s124, [#allocation14]
    $region41: #{dann_forward.1} parent=1 // pred_fallthru
      _
    // Predicated region
    $region42: #{dann_forward.1} parent=1 // pred_check
      _
    $region43: #{dann_forward.1} parent=1 // pred_check_branch
      %128 = sbr.rel (0) target = $region45
    $region44: #{dann_forward.1} parent=1 // pred_region
      %s130 = ssub.s32 1024, 1024
      %131 = vsyncadd [#allocation17], %s130
      %s132 = sshll.u32 [#allocation16], 4
      %s133 = int_to_ptr.vmem [resolvable:$true] %s132
      %138 = dma.hbm_to_vmem [thread:$0]  %s10, 1024, %s133, [#allocation17], 64, 64, 4
    $region45: #{dann_forward.1} parent=1 // pred_fallthru
      _
    // Predicated region
    $region46: #{dann_forward.1} parent=1 // pred_check
      _
    $region47: #{dann_forward.1} parent=1 // pred_check_branch
      %140 = sbr.rel (0) target = $region49
    $region48: #{dann_forward.1} parent=1 // pred_region
      %s142 = ssub.s32 16, 16
      %143 = vsyncadd [#allocation17], %s142
      %s145 = sshll.u32 [#allocation18], 4
      %s146 = int_to_ptr.vmem [resolvable:$true] %s145
      %148 = dma.hbm_to_vmem [thread:$0]  %s11, 16, %s146, [#allocation17]
    $region49: #{dann_forward.1} parent=1 // pred_fallthru
      _
    // Predicated region
    $region50: #{dann_forward.1} parent=1 // pred_check
      _
    $region51: #{dann_forward.1} parent=1 // pred_check_branch
      %150 = sbr.rel (0) target = $region53
    $region52: #{dann_forward.1} parent=1 // pred_region
      %s152 = ssub.s32 16, 16
      %153 = vsyncadd [#allocation20], %s152
      %s155 = sshll.u32 [#allocation19], 4
      %s156 = int_to_ptr.vmem [resolvable:$true] %s155
      %158 = dma.hbm_to_vmem [thread:$0]  %s12, 16, %s156, [#allocation20]
    $region53: #{dann_forward.1} parent=1 // pred_fallthru
      _
    // Predicated region
    $region54: #{dann_forward.1} parent=1 // pred_check
      _
    $region55: #{dann_forward.1} parent=1 // pred_check_branch
      %160 = sbr.rel (0) target = $region57
    $region56: #{dann_forward.1} parent=1 // pred_region
      %s162 = ssub.s32 1024, 1024
      %163 = vsyncadd [#allocation20], %s162
      %s164 = sshll.u32 [#allocation21], 4
      %s165 = int_to_ptr.vmem [resolvable:$true] %s164
      %170 = dma.hbm_to_vmem [thread:$0]  %s13, 1024, %s165, [#allocation20], 64, 64, 4
    $region57: #{dann_forward.1} parent=1 // pred_fallthru
      _
    // Predicated region
    $region58: #{dann_forward.1} parent=1 // pred_check
      _
    $region59: #{dann_forward.1} parent=1 // pred_check_branch
      %172 = sbr.rel (0) target = $region61
    $region60: #{dann_forward.1} parent=1 // pred_region
      %s174 = ssub.s32 1024, 1024
      %175 = vsyncadd [#allocation23], %s174
      %s176 = sshll.u32 [#allocation22], 4
      %s177 = int_to_ptr.vmem [resolvable:$true] %s176
      %182 = dma.hbm_to_vmem [thread:$0]  %s14, 1024, %s177, [#allocation23], 64, 64, 4
    $region61: #{dann_forward.1} parent=1 // pred_fallthru
      _
    // Predicated region
    $region62: #{dann_forward.1} parent=1 // pred_check
      _
    $region63: #{dann_forward.1} parent=1 // pred_check_branch
      %184 = sbr.rel (0) target = $region65
    $region64: #{dann_forward.1} parent=1 // pred_region
      %s186 = ssub.s32 16, 16
      %187 = vsyncadd [#allocation23], %s186
      %s189 = sshll.u32 [#allocation24], 4
      %s190 = int_to_ptr.vmem [resolvable:$true] %s189
      %192 = dma.hbm_to_vmem [thread:$0]  %s15, 16, %s190, [#allocation23]
    $region65: #{dann_forward.1} parent=1 // pred_fallthru
      _
    // Predicated region
    $region66: #{dann_forward.1} parent=1 // pred_check
      _
    $region67: #{dann_forward.1} parent=1 // pred_check_branch
      %194 = sbr.rel (0) target = $region69
    $region68: #{dann_forward.1} parent=1 // pred_region
      %195 = dma.done [#allocation3], 30720
    $region69: #{dann_forward.1} parent=1 // pred_fallthru
      _
    // Predicated region
    $region70: #{dann_forward.1} parent=1 // pred_check
      _
    $region71: #{dann_forward.1} parent=1 // pred_check_branch
      %197 = sbr.rel (0) target = $region73
    $region72: #{dann_forward.1} parent=1 // pred_region
      %198 = dma.done [#allocation5], 96
    $region73: #{dann_forward.1} parent=1 // pred_fallthru
      _
    // Predicated region
    $region74: #{dann_forward.1} parent=1 // pred_check
      _
    $region75: #{dann_forward.1} parent=1 // pred_check_branch
      %200 = sbr.rel (0) target = $region77
    $region76: #{dann_forward.1} parent=1 // pred_region
      %201 = dma.done [#allocation5], 96
    $region77: #{dann_forward.1} parent=1 // pred_fallthru
      _
    // Predicated region
    $region78: #{dann_forward.1} parent=1 // pred_check
      _
    $region79: #{dann_forward.1} parent=1 // pred_check_branch
      %203 = sbr.rel (0) target = $region81
    $region80: #{dann_forward.1} parent=1 // pred_region
      %204 = dma.done [#allocation8], 46080
    $region81: #{dann_forward.1} parent=1 // pred_fallthru
      _
    // Predicated region
    $region82: #{dann_forward.1} parent=1 // pred_check
      _
    $region83: #{dann_forward.1} parent=1 // pred_check_branch
      %206 = sbr.rel (0) target = $region85
    $region84: #{dann_forward.1} parent=1 // pred_region
      %207 = dma.done [#allocation8], 48
    $region85: #{dann_forward.1} parent=1 // pred_fallthru
      _
    // Predicated region
    $region86: #{dann_forward.1} parent=1 // pred_check
      _
    $region87: #{dann_forward.1} parent=1 // pred_check_branch
      %209 = sbr.rel (0) target = $region89
    $region88: #{dann_forward.1} parent=1 // pred_region
      %210 = dma.done [#allocation11], 48
    $region89: #{dann_forward.1} parent=1 // pred_fallthru
      _
    // Predicated region
    $region90: #{dann_forward.1} parent=1 // pred_check
      _
    $region91: #{dann_forward.1} parent=1 // pred_check_branch
      %212 = sbr.rel (0) target = $region93
    $region92: #{dann_forward.1} parent=1 // pred_region
      %213 = dma.done [#allocation11], 12288
    $region93: #{dann_forward.1} parent=1 // pred_fallthru
      _
    // Predicated region
    $region94: #{dann_forward.1} parent=1 // pred_check
      _
    $region95: #{dann_forward.1} parent=1 // pred_check_branch
      %215 = sbr.rel (0) target = $region97
    $region96: #{dann_forward.1} parent=1 // pred_region
      %216 = dma.done [#allocation14], 32
    $region97: #{dann_forward.1} parent=1 // pred_fallthru
      _
    // Predicated region
    $region98: #{dann_forward.1} parent=1 // pred_check
      _
    $region99: #{dann_forward.1} parent=1 // pred_check_branch
      %218 = sbr.rel (0) target = $region101
    $region100: #{dann_forward.1} parent=1 // pred_region
      %219 = dma.done [#allocation14], 32
    $region101: #{dann_forward.1} parent=1 // pred_fallthru
      _
    // Predicated region
    $region102: #{dann_forward.1} parent=1 // pred_check
      _
    $region103: #{dann_forward.1} parent=1 // pred_check_branch
      %221 = sbr.rel (0) target = $region105
    $region104: #{dann_forward.1} parent=1 // pred_region
      %222 = dma.done [#allocation17], 1024
    $region105: #{dann_forward.1} parent=1 // pred_fallthru
      _
    // Predicated region
    $region106: #{dann_forward.1} parent=1 // pred_check
      _
    $region107: #{dann_forward.1} parent=1 // pred_check_branch
      %224 = sbr.rel (0) target = $region109
    $region108: #{dann_forward.1} parent=1 // pred_region
      %225 = dma.done [#allocation17], 16
    $region109: #{dann_forward.1} parent=1 // pred_fallthru
      _
    // Predicated region
    $region110: #{dann_forward.1} parent=1 // pred_check
      _
    $region111: #{dann_forward.1} parent=1 // pred_check_branch
      %227 = sbr.rel (0) target = $region113
    $region112: #{dann_forward.1} parent=1 // pred_region
      %228 = dma.done [#allocation20], 16
    $region113: #{dann_forward.1} parent=1 // pred_fallthru
      _
    // Predicated region
    $region114: #{dann_forward.1} parent=1 // pred_check
      _
    $region115: #{dann_forward.1} parent=1 // pred_check_branch
      %230 = sbr.rel (0) target = $region117
    $region116: #{dann_forward.1} parent=1 // pred_region
      %231 = dma.done [#allocation20], 1024
    $region117: #{dann_forward.1} parent=1 // pred_fallthru
      _
    // Predicated region
    $region118: #{dann_forward.1} parent=1 // pred_check
      _
    $region119: #{dann_forward.1} parent=1 // pred_check_branch
      %233 = sbr.rel (0) target = $region121
    $region120: #{dann_forward.1} parent=1 // pred_region
      %234 = dma.done [#allocation23], 1024
    $region121: #{dann_forward.1} parent=1 // pred_fallthru
      _
    // Predicated region
    $region122: #{dann_forward.1} parent=1 // pred_check
      _
    $region123: #{dann_forward.1} parent=1 // pred_check_branch
      %236 = sbr.rel (0) target = $region125
    $region124: #{dann_forward.1} parent=1 // pred_region
      %237 = dma.done [#allocation23], 16
    $region125: #{dann_forward.1} parent=1 // pred_fallthru
      _
    %v239 = vld [vmem:[%s0] sm:$0xf]
    %v240 = vld [vmem:[%s0 + $0x4] sm:$0xf]
    %v241 = vld [vmem:[%s0 + $0x8] sm:$0xf]
    %v242 = vld [vmem:[%s0 + $0xc] sm:$0x3]
    %v243 = vld [vmem:[%s0 + $0x10] sm:$0xf]
    %v244 = vld [vmem:[%s0 + $0x14] sm:$0xf]
    %v245 = vld [vmem:[%s0 + $0x18] sm:$0xf]
    %v246 = vld [vmem:[%s0 + $0x1c] sm:$0x3]
    %vm247 = vsmask.f32 3328
    %vm248 = vsmask.f32 7440
    %vm249 = vmor %vm247, %vm248
    %v251 = vshrl.u32 %v239, 16
    %v253 = vrot.slane %v251, 4
    %v254 = vshll.u32 %v239, 16
    %v256 = vrot.slane %v254, 5
    %v257 = vor.u32 %v253, %v256
    %v258 = vrot.slane %v257, 4
    %v260 = vshll.u32 %v240, 16
    %v262 = vrot.slane %v260, 5
    %v263 = vsel %vm249, %v258, %v262
    %v264 = vshrl.u32 %v240, 16
    %v266 = vrot.slane %v264, 4
    %v267 = vor.u32 %v266, %v262
    %v268 = vrot.slane %v267, 4
    %v270 = vshll.u32 %v241, 16
    %v272 = vrot.slane %v270, 5
    %v273 = vsel %vm249, %v268, %v272
    %v274 = vshrl.u32 %v241, 16
    %v276 = vrot.slane %v274, 4
    %v277 = vor.u32 %v276, %v272
    %v278 = vrot.slane %v277, 4
    %v280 = vshll.u32 %v242, 16
    %v282 = vrot.slane %v280, 5
    %v283 = vsel %vm249, %v278, %v282
    %v285 = vshrl.u32 %v243, 16
    %v287 = vrot.slane %v285, 4
    %v288 = vshll.u32 %v243, 16
    %v290 = vrot.slane %v288, 5
    %v291 = vor.u32 %v287, %v290
    %v292 = vrot.slane %v291, 4
    %v294 = vshll.u32 %v244, 16
    %v296 = vrot.slane %v294, 5
    %v297 = vsel %vm249, %v292, %v296
    %v298 = vshrl.u32 %v244, 16
    %v300 = vrot.slane %v298, 4
    %v301 = vor.u32 %v300, %v296
    %v302 = vrot.slane %v301, 4
    %v304 = vshll.u32 %v245, 16
    %v306 = vrot.slane %v304, 5
    %v307 = vsel %vm249, %v302, %v306
    %v308 = vshrl.u32 %v245, 16
    %v310 = vrot.slane %v308, 4
    %v311 = vor.u32 %v310, %v306
    %v312 = vrot.slane %v311, 4
    %v314 = vshll.u32 %v246, 16
    %v316 = vrot.slane %v314, 5
    %v317 = vsel %vm249, %v312, %v316
    %vm326 = vcmask 1042432
    %vm327 = vcmask 1046532
    %vm328 = vmor %vm326, %vm327
    %v329 = vrot.slane %v239, 5
    %v330 = vrot.slane %v329, 4
    %v331 = vrot.slane %v240, 5
    %v332 = vsel %vm328, %v330, %v331
    %v333 = vrot.slane %v331, 4
    %v334 = vrot.slane %v241, 5
    %v335 = vsel %vm328, %v333, %v334
    %v336 = vrot.slane %v334, 4
    %v337 = vrot.slane %v242, 5
    %v338 = vsel %vm328, %v336, %v337
    %v339 = vrot.slane %v243, 5
    %v340 = vrot.slane %v339, 4
    %v341 = vrot.slane %v244, 5
    %v342 = vsel %vm328, %v340, %v341
    %v343 = vrot.slane %v341, 4
    %v344 = vrot.slane %v245, 5
    %v345 = vsel %vm328, %v343, %v344
    %v346 = vrot.slane %v344, 4
    %v347 = vrot.slane %v246, 5
    %v348 = vsel %vm328, %v346, %v347
    %vm349 = vsmask.f32 2304
    %vm350 = vsmask.f32 6416
    %vm351 = vmor %vm349, %vm350
    %v352 = vrot.slane %v251, 5
    %v353 = vrot.slane %v254, 6
    %v354 = vor.u32 %v352, %v353
    %v355 = vrot.slane %v354, 4
    %v356 = vrot.slane %v264, 5
    %v357 = vrot.slane %v260, 6
    %v358 = vor.u32 %v356, %v357
    %v359 = vsel %vm351, %v355, %v358
    %v360 = vrot.slane %v358, 4
    %v361 = vrot.slane %v274, 5
    %v362 = vrot.slane %v270, 6
    %v363 = vor.u32 %v361, %v362
    %v364 = vsel %vm351, %v360, %v363
    %v365 = vrot.slane %v363, 4
    %v366 = vshrl.u32 %v242, 16
    %v368 = vrot.slane %v366, 5
    %v369 = vrot.slane %v280, 6
    %v370 = vor.u32 %v368, %v369
    %v371 = vsel %vm351, %v365, %v370
    %v372 = vrot.slane %v285, 5
    %v373 = vrot.slane %v288, 6
    %v374 = vor.u32 %v372, %v373
    %v375 = vrot.slane %v374, 4
    %v376 = vrot.slane %v298, 5
    %v377 = vrot.slane %v294, 6
    %v378 = vor.u32 %v376, %v377
    %v379 = vsel %vm351, %v375, %v378
    %v380 = vrot.slane %v378, 4
    %v381 = vrot.slane %v308, 5
    %v382 = vrot.slane %v304, 6
    %v383 = vor.u32 %v381, %v382
    %v384 = vsel %vm351, %v380, %v383
    %v385 = vrot.slane %v383, 4
    %v386 = vshrl.u32 %v246, 16
    %v388 = vrot.slane %v386, 5
    %v389 = vrot.slane %v314, 6
    %v390 = vor.u32 %v388, %v389
    %v391 = vsel %vm351, %v385, %v390
    %vm392 = vcmask 1041408
    %vm393 = vcmask 1045508
    %vm394 = vmor %vm392, %vm393
    %v395 = vrot.slane %v239, 6
    %v396 = vrot.slane %v395, 4
    %v397 = vrot.slane %v240, 6
    %v398 = vsel %vm394, %v396, %v397
    %v399 = vrot.slane %v397, 4
    %v400 = vrot.slane %v241, 6
    %v401 = vsel %vm394, %v399, %v400
    %v402 = vrot.slane %v400, 4
    %v403 = vrot.slane %v242, 6
    %v404 = vsel %vm394, %v402, %v403
    %v405 = vrot.slane %v243, 6
    %v406 = vrot.slane %v405, 4
    %v407 = vrot.slane %v244, 6
    %v408 = vsel %vm394, %v406, %v407
    %v409 = vrot.slane %v407, 4
    %v410 = vrot.slane %v245, 6
    %v411 = vsel %vm394, %v409, %v410
    %v412 = vrot.slane %v410, 4
    %v413 = vrot.slane %v246, 6
    %v414 = vsel %vm394, %v412, %v413
    %v415 = vunpack.c.l.b16 %v239
    %v416 = vunpack.c.l.b16 %v240
    %v417 = vunpack.c.l.b16 %v241
    %v418 = vunpack.c.l.b16 %v243
    %v419 = vunpack.c.l.b16 %v244
    %v420 = vunpack.c.l.b16 %v245
    %v421 = vpack.c.b16 %v416, %v415
    %v422 = vpack.c.b16 %v418, %v417
    %v423 = vpack.c.b16 %v420, %v419
    %v427 = vunpack.c.l.b16 %v263
    %v428 = vunpack.c.l.b16 %v273
    %v429 = vunpack.c.l.b16 %v283
    %v430 = vunpack.c.l.b16 %v297
    %v431 = vunpack.c.l.b16 %v307
    %v432 = vunpack.c.l.b16 %v317
    %v433 = vpack.c.b16 %v428, %v427
    %v434 = vpack.c.b16 %v430, %v429
    %v435 = vpack.c.b16 %v432, %v431
    %v439 = vunpack.c.l.b16 %v332
    %v440 = vunpack.c.l.b16 %v335
    %v441 = vunpack.c.l.b16 %v338
    %v442 = vunpack.c.l.b16 %v342
    %v443 = vunpack.c.l.b16 %v345
    %v444 = vunpack.c.l.b16 %v348
    %v445 = vpack.c.b16 %v440, %v439
    %v446 = vpack.c.b16 %v442, %v441
    %v447 = vpack.c.b16 %v444, %v443
    %v451 = vunpack.c.l.b16 %v359
    %v452 = vunpack.c.l.b16 %v364
    %v453 = vunpack.c.l.b16 %v371
    %v454 = vunpack.c.l.b16 %v379
    %v455 = vunpack.c.l.b16 %v384
    %v456 = vunpack.c.l.b16 %v391
    %v457 = vpack.c.b16 %v452, %v451
    %v458 = vpack.c.b16 %v454, %v453
    %v459 = vpack.c.b16 %v456, %v455
    %v463 = vunpack.c.l.b16 %v398
    %v464 = vunpack.c.l.b16 %v401
    %v465 = vunpack.c.l.b16 %v404
    %v466 = vunpack.c.l.b16 %v408
    %v467 = vunpack.c.l.b16 %v411
    %v468 = vunpack.c.l.b16 %v414
    %v469 = vpack.c.b16 %v464, %v463
    %v470 = vpack.c.b16 %v466, %v465
    %v471 = vpack.c.b16 %v468, %v467
    %v475 = vld [vmem:[#allocation2] sm:$0xff]
    %v476 = vld [vmem:[#allocation2 + $0x8] sm:$0xff]
    %v477 = vld [vmem:[#allocation2 + $0x10] sm:$0xff]
    %v478 = vld [vmem:[#allocation2 + $0x18] sm:$0xff]
    %v479 = vld [vmem:[#allocation2 + $0x20] sm:$0xff]
    %v480 = vld [vmem:[#allocation2 + $0x28] sm:$0xff]
    %v481 = vld [vmem:[#allocation2 + $0x30] sm:$0xff]
    %v482 = vld [vmem:[#allocation2 + $0x38] sm:$0xff]
    %v483 = vld [vmem:[#allocation2 + $0x40] sm:$0xff]
    %v484 = vld [vmem:[#allocation2 + $0x48] sm:$0xff]
    %v485 = vld [vmem:[#allocation2 + $0x50] sm:$0xff]
    %v486 = vld [vmem:[#allocation2 + $0x58] sm:$0xff]
    %v487 = vld [vmem:[#allocation2 + $0x60] sm:$0xff]
    %v488 = vld [vmem:[#allocation2 + $0x68] sm:$0xff]
    %v489 = vld [vmem:[#allocation2 + $0x70] sm:$0xff]
    %v490 = vld [vmem:[#allocation2 + $0x78] sm:$0xff]
    %v491 = vld [vmem:[#allocation2 + $0x80] sm:$0xff]
    %v492 = vld [vmem:[#allocation2 + $0x88] sm:$0xff]
    %v493 = vld [vmem:[#allocation2 + $0x90] sm:$0xff]
    %v494 = vld [vmem:[#allocation2 + $0x98] sm:$0xff]
    %v495 = vld [vmem:[#allocation2 + $0xa0] sm:$0xff]
    %v496 = vld [vmem:[#allocation2 + $0xa8] sm:$0xff]
    %v497 = vld [vmem:[#allocation2 + $0xb0] sm:$0xff]
    %v498 = vld [vmem:[#allocation2 + $0xb8] sm:$0xff]
    %v499 = vld [vmem:[#allocation2 + $0xc0] sm:$0xff]
    %v500 = vld [vmem:[#allocation2 + $0xc8] sm:$0xff]
    %v501 = vld [vmem:[#allocation2 + $0xd0] sm:$0xff]
    %v502 = vld [vmem:[#allocation2 + $0xd8] sm:$0xff]
    %v503 = vld [vmem:[#allocation2 + $0xe0] sm:$0xff]
    %v504 = vld [vmem:[#allocation2 + $0xe8] sm:$0xff]
    %v505 = vld [vmem:[#allocation2 + $0xf0] sm:$0xff]
    %v506 = vld [vmem:[#allocation2 + $0xf8] sm:$0xff]
    %v507 = vld [vmem:[#allocation2 + $0x100] sm:$0xff]
    %v508 = vld [vmem:[#allocation2 + $0x108] sm:$0xff]
    %v509 = vld [vmem:[#allocation2 + $0x110] sm:$0xff]
    %v510 = vld [vmem:[#allocation2 + $0x118] sm:$0xff]
    %v511 = vld [vmem:[#allocation2 + $0x120] sm:$0xff]
    %v512 = vld [vmem:[#allocation2 + $0x128] sm:$0xff]
    %v513 = vld [vmem:[#allocation2 + $0x130] sm:$0xff]
    %v514 = vld [vmem:[#allocation2 + $0x138] sm:$0xff]
    %v515 = vld [vmem:[#allocation2 + $0x140] sm:$0xff]
    %v516 = vld [vmem:[#allocation2 + $0x148] sm:$0xff]
    %v517 = vld [vmem:[#allocation2 + $0x150] sm:$0xff]
    %v518 = vld [vmem:[#allocation2 + $0x158] sm:$0xff]
    %v519 = vld [vmem:[#allocation2 + $0x160] sm:$0xff]
    %v520 = vld [vmem:[#allocation2 + $0x168] sm:$0xff]
    %v521 = vld [vmem:[#allocation2 + $0x170] sm:$0xff]
    %v522 = vld [vmem:[#allocation2 + $0x178] sm:$0xff]
    %v523 = vld [vmem:[#allocation2 + $0x180] sm:$0xff]
    %v524 = vld [vmem:[#allocation2 + $0x188] sm:$0xff]
    %v525 = vld [vmem:[#allocation2 + $0x190] sm:$0xff]
    %v526 = vld [vmem:[#allocation2 + $0x198] sm:$0xff]
    %v527 = vld [vmem:[#allocation2 + $0x1a0] sm:$0xff]
    %v528 = vld [vmem:[#allocation2 + $0x1a8] sm:$0xff]
    %v529 = vld [vmem:[#allocation2 + $0x1b0] sm:$0xff]
    %v530 = vld [vmem:[#allocation2 + $0x1b8] sm:$0xff]
    %v531 = vld [vmem:[#allocation2 + $0x1c0] sm:$0xff]
    %v532 = vld [vmem:[#allocation2 + $0x1c8] sm:$0xff]
    %v533 = vld [vmem:[#allocation2 + $0x1d0] sm:$0xff]
    %v534 = vld [vmem:[#allocation2 + $0x1d8] sm:$0xff]
    %v535 = vld [vmem:[#allocation2 + $0x1e0] sm:$0xff]
    %v536 = vld [vmem:[#allocation2 + $0x1e8] sm:$0xff]
    %v537 = vld [vmem:[#allocation2 + $0x1f0] sm:$0xff]
    %v538 = vld [vmem:[#allocation2 + $0x1f8] sm:$0xff]
    %v539 = vld [vmem:[#allocation2 + $0x200] sm:$0xff]
    %v540 = vld [vmem:[#allocation2 + $0x208] sm:$0xff]
    %v541 = vld [vmem:[#allocation2 + $0x210] sm:$0xff]
    %v542 = vld [vmem:[#allocation2 + $0x218] sm:$0xff]
    %v543 = vld [vmem:[#allocation2 + $0x220] sm:$0xff]
    %v544 = vld [vmem:[#allocation2 + $0x228] sm:$0xff]
    %v545 = vld [vmem:[#allocation2 + $0x230] sm:$0xff]
    %v546 = vld [vmem:[#allocation2 + $0x238] sm:$0xff]
    %v547 = vld [vmem:[#allocation2 + $0x240] sm:$0xff]
    %v548 = vld [vmem:[#allocation2 + $0x248] sm:$0xff]
    %v549 = vld [vmem:[#allocation2 + $0x250] sm:$0xff]
    %v550 = vld [vmem:[#allocation2 + $0x258] sm:$0xff]
    %v551 = vld [vmem:[#allocation2 + $0x260] sm:$0xff]
    %v552 = vld [vmem:[#allocation2 + $0x268] sm:$0xff]
    %v553 = vld [vmem:[#allocation2 + $0x270] sm:$0xff]
    %v554 = vld [vmem:[#allocation2 + $0x278] sm:$0xff]
    %v555 = vld [vmem:[#allocation2 + $0x280] sm:$0xff]
    %v556 = vld [vmem:[#allocation2 + $0x288] sm:$0xff]
    %v557 = vld [vmem:[#allocation2 + $0x290] sm:$0xff]
    %v558 = vld [vmem:[#allocation2 + $0x298] sm:$0xff]
    %v559 = vld [vmem:[#allocation2 + $0x2a0] sm:$0xff]
    %v560 = vld [vmem:[#allocation2 + $0x2a8] sm:$0xff]
    %v561 = vld [vmem:[#allocation2 + $0x2b0] sm:$0xff]
    %v562 = vld [vmem:[#allocation2 + $0x2b8] sm:$0xff]
    %v563 = vld [vmem:[#allocation2 + $0x2c0] sm:$0xff]
    %v564 = vld [vmem:[#allocation2 + $0x2c8] sm:$0xff]
    %v565 = vld [vmem:[#allocation2 + $0x2d0] sm:$0xff]
    %v566 = vld [vmem:[#allocation2 + $0x2d8] sm:$0xff]
    %v567 = vld [vmem:[#allocation2 + $0x2e0] sm:$0xff]
    %v568 = vld [vmem:[#allocation2 + $0x2e8] sm:$0xff]
    %v569 = vld [vmem:[#allocation2 + $0x2f0] sm:$0xff]
    %v570 = vld [vmem:[#allocation2 + $0x2f8] sm:$0xff]
    %v571 = vld [vmem:[#allocation2 + $0x300] sm:$0xff]
    %v572 = vld [vmem:[#allocation2 + $0x308] sm:$0xff]
    %v573 = vld [vmem:[#allocation2 + $0x310] sm:$0xff]
    %v574 = vld [vmem:[#allocation2 + $0x318] sm:$0xff]
    %v575 = vld [vmem:[#allocation2 + $0x320] sm:$0xff]
    %v576 = vld [vmem:[#allocation2 + $0x328] sm:$0xff]
    %v577 = vld [vmem:[#allocation2 + $0x330] sm:$0xff]
    %v578 = vld [vmem:[#allocation2 + $0x338] sm:$0xff]
    %v579 = vld [vmem:[#allocation2 + $0x340] sm:$0xff]
    %v580 = vld [vmem:[#allocation2 + $0x348] sm:$0xff]
    %v581 = vld [vmem:[#allocation2 + $0x350] sm:$0xff]
    %v582 = vld [vmem:[#allocation2 + $0x358] sm:$0xff]
    %v583 = vld [vmem:[#allocation2 + $0x360] sm:$0xff]
    %v584 = vld [vmem:[#allocation2 + $0x368] sm:$0xff]
    %v585 = vld [vmem:[#allocation2 + $0x370] sm:$0xff]
    %v586 = vld [vmem:[#allocation2 + $0x378] sm:$0xff]
    %v587 = vld [vmem:[#allocation2 + $0x380] sm:$0xff]
    %v588 = vld [vmem:[#allocation2 + $0x388] sm:$0xff]
    %v589 = vld [vmem:[#allocation2 + $0x390] sm:$0xff]
    %v590 = vld [vmem:[#allocation2 + $0x398] sm:$0xff]
    %v591 = vld [vmem:[#allocation2 + $0x3a0] sm:$0xff]
    %v592 = vld [vmem:[#allocation2 + $0x3a8] sm:$0xff]
    %v593 = vld [vmem:[#allocation2 + $0x3b0] sm:$0xff]
    %v594 = vld [vmem:[#allocation2 + $0x3b8] sm:$0xff]
    %v595 = vld [vmem:[#allocation2 + $0x3c0] sm:$0xff]
    %v596 = vld [vmem:[#allocation2 + $0x3c8] sm:$0xff]
    %v597 = vld [vmem:[#allocation2 + $0x3d0] sm:$0xff]
    %v598 = vld [vmem:[#allocation2 + $0x3d8] sm:$0xff]
    %v599 = vld [vmem:[#allocation2 + $0x3e0] sm:$0xff]
    %v600 = vld [vmem:[#allocation2 + $0x3e8] sm:$0xff]
    %v601 = vld [vmem:[#allocation2 + $0x3f0] sm:$0xff]
    %v602 = vld [vmem:[#allocation2 + $0x3f8] sm:$0xff]
    %v603 = vld [vmem:[#allocation2 + $0x400] sm:$0xff]
    %v604 = vld [vmem:[#allocation2 + $0x408] sm:$0xff]
    %v605 = vld [vmem:[#allocation2 + $0x410] sm:$0xff]
    %v606 = vld [vmem:[#allocation2 + $0x418] sm:$0xff]
    %v607 = vld [vmem:[#allocation2 + $0x420] sm:$0xff]
    %v608 = vld [vmem:[#allocation2 + $0x428] sm:$0xff]
    %v609 = vld [vmem:[#allocation2 + $0x430] sm:$0xff]
    %v610 = vld [vmem:[#allocation2 + $0x438] sm:$0xff]
    %v611 = vld [vmem:[#allocation2 + $0x440] sm:$0xff]
    %v612 = vld [vmem:[#allocation2 + $0x448] sm:$0xff]
    %v613 = vld [vmem:[#allocation2 + $0x450] sm:$0xff]
    %v614 = vld [vmem:[#allocation2 + $0x458] sm:$0xff]
    %v615 = vld [vmem:[#allocation2 + $0x460] sm:$0xff]
    %v616 = vld [vmem:[#allocation2 + $0x468] sm:$0xff]
    %v617 = vld [vmem:[#allocation2 + $0x470] sm:$0xff]
    %v618 = vld [vmem:[#allocation2 + $0x478] sm:$0xff]
    %v619 = vld [vmem:[#allocation2 + $0x480] sm:$0xff]
    %v620 = vld [vmem:[#allocation2 + $0x488] sm:$0xff]
    %v621 = vld [vmem:[#allocation2 + $0x490] sm:$0xff]
    %v622 = vld [vmem:[#allocation2 + $0x498] sm:$0xff]
    %v623 = vld [vmem:[#allocation2 + $0x4a0] sm:$0xff]
    %v624 = vld [vmem:[#allocation2 + $0x4a8] sm:$0xff]
    %v625 = vld [vmem:[#allocation2 + $0x4b0] sm:$0xff]
    %v626 = vld [vmem:[#allocation2 + $0x4b8] sm:$0xff]
    %v627 = vld [vmem:[#allocation2 + $0x4c0] sm:$0xff]
    %v628 = vld [vmem:[#allocation2 + $0x4c8] sm:$0xff]
    %v629 = vld [vmem:[#allocation2 + $0x4d0] sm:$0xff]
    %v630 = vld [vmem:[#allocation2 + $0x4d8] sm:$0xff]
    %v631 = vld [vmem:[#allocation2 + $0x4e0] sm:$0xff]
    %v632 = vld [vmem:[#allocation2 + $0x4e8] sm:$0xff]
    %v633 = vld [vmem:[#allocation2 + $0x4f0] sm:$0xff]
    %v634 = vld [vmem:[#allocation2 + $0x4f8] sm:$0xff]
    %v635 = vld [vmem:[#allocation2 + $0x500] sm:$0xff]
    %v636 = vld [vmem:[#allocation2 + $0x508] sm:$0xff]
    %v637 = vld [vmem:[#allocation2 + $0x510] sm:$0xff]
    %v638 = vld [vmem:[#allocation2 + $0x518] sm:$0xff]
    %v639 = vld [vmem:[#allocation2 + $0x520] sm:$0xff]
    %v640 = vld [vmem:[#allocation2 + $0x528] sm:$0xff]
    %v641 = vld [vmem:[#allocation2 + $0x530] sm:$0xff]
    %v642 = vld [vmem:[#allocation2 + $0x538] sm:$0xff]
    %v643 = vld [vmem:[#allocation2 + $0x540] sm:$0xff]
    %v644 = vld [vmem:[#allocation2 + $0x548] sm:$0xff]
    %v645 = vld [vmem:[#allocation2 + $0x550] sm:$0xff]
    %v646 = vld [vmem:[#allocation2 + $0x558] sm:$0xff]
    %v647 = vld [vmem:[#allocation2 + $0x560] sm:$0xff]
    %v648 = vld [vmem:[#allocation2 + $0x568] sm:$0xff]
    %v649 = vld [vmem:[#allocation2 + $0x570] sm:$0xff]
    %v650 = vld [vmem:[#allocation2 + $0x578] sm:$0xff]
    %v651 = vld [vmem:[#allocation2 + $0x580] sm:$0xff]
    %v652 = vld [vmem:[#allocation2 + $0x588] sm:$0xff]
    %v653 = vld [vmem:[#allocation2 + $0x590] sm:$0xff]
    %v654 = vld [vmem:[#allocation2 + $0x598] sm:$0xff]
    %v655 = vld [vmem:[#allocation2 + $0x5a0] sm:$0xff]
    %v656 = vld [vmem:[#allocation2 + $0x5a8] sm:$0xff]
    %v657 = vld [vmem:[#allocation2 + $0x5b0] sm:$0xff]
    %v658 = vld [vmem:[#allocation2 + $0x5b8] sm:$0xff]
    %v659 = vld [vmem:[#allocation2 + $0x5c0] sm:$0xff]
    %v660 = vld [vmem:[#allocation2 + $0x5c8] sm:$0xff]
    %v661 = vld [vmem:[#allocation2 + $0x5d0] sm:$0xff]
    %v662 = vld [vmem:[#allocation2 + $0x5d8] sm:$0xff]
    %v663 = vld [vmem:[#allocation2 + $0x5e0] sm:$0xff]
    %v664 = vld [vmem:[#allocation2 + $0x5e8] sm:$0xff]
    %v665 = vld [vmem:[#allocation2 + $0x5f0] sm:$0xff]
    %v666 = vld [vmem:[#allocation2 + $0x5f8] sm:$0xff]
    %v667 = vld [vmem:[#allocation2 + $0x600] sm:$0xff]
    %v668 = vld [vmem:[#allocation2 + $0x608] sm:$0xff]
    %v669 = vld [vmem:[#allocation2 + $0x610] sm:$0xff]
    %v670 = vld [vmem:[#allocation2 + $0x618] sm:$0xff]
    %v671 = vld [vmem:[#allocation2 + $0x620] sm:$0xff]
    %v672 = vld [vmem:[#allocation2 + $0x628] sm:$0xff]
    %v673 = vld [vmem:[#allocation2 + $0x630] sm:$0xff]
    %v674 = vld [vmem:[#allocation2 + $0x638] sm:$0xff]
    %v675 = vld [vmem:[#allocation2 + $0x640] sm:$0xff]
    %v676 = vld [vmem:[#allocation2 + $0x648] sm:$0xff]
    %v677 = vld [vmem:[#allocation2 + $0x650] sm:$0xff]
    %v678 = vld [vmem:[#allocation2 + $0x658] sm:$0xff]
    %v679 = vld [vmem:[#allocation2 + $0x660] sm:$0xff]
    %v680 = vld [vmem:[#allocation2 + $0x668] sm:$0xff]
    %v681 = vld [vmem:[#allocation2 + $0x670] sm:$0xff]
    %v682 = vld [vmem:[#allocation2 + $0x678] sm:$0xff]
    %v683 = vld [vmem:[#allocation2 + $0x680] sm:$0xff]
    %v684 = vld [vmem:[#allocation2 + $0x688] sm:$0xff]
    %v685 = vld [vmem:[#allocation2 + $0x690] sm:$0xff]
    %v686 = vld [vmem:[#allocation2 + $0x698] sm:$0xff]
    %v687 = vld [vmem:[#allocation2 + $0x6a0] sm:$0xff]
    %v688 = vld [vmem:[#allocation2 + $0x6a8] sm:$0xff]
    %v689 = vld [vmem:[#allocation2 + $0x6b0] sm:$0xff]
    %v690 = vld [vmem:[#allocation2 + $0x6b8] sm:$0xff]
    %v691 = vld [vmem:[#allocation2 + $0x6c0] sm:$0xff]
    %v692 = vld [vmem:[#allocation2 + $0x6c8] sm:$0xff]
    %v693 = vld [vmem:[#allocation2 + $0x6d0] sm:$0xff]
    %v694 = vld [vmem:[#allocation2 + $0x6d8] sm:$0xff]
    %v695 = vld [vmem:[#allocation2 + $0x6e0] sm:$0xff]
    %v696 = vld [vmem:[#allocation2 + $0x6e8] sm:$0xff]
    %v697 = vld [vmem:[#allocation2 + $0x6f0] sm:$0xff]
    %v698 = vld [vmem:[#allocation2 + $0x6f8] sm:$0xff]
    %v699 = vld [vmem:[#allocation2 + $0x700] sm:$0xff]
    %v700 = vld [vmem:[#allocation2 + $0x708] sm:$0xff]
    %v701 = vld [vmem:[#allocation2 + $0x710] sm:$0xff]
    %v702 = vld [vmem:[#allocation2 + $0x718] sm:$0xff]
    %v703 = vld [vmem:[#allocation2 + $0x720] sm:$0xff]
    %v704 = vld [vmem:[#allocation2 + $0x728] sm:$0xff]
    %v705 = vld [vmem:[#allocation2 + $0x730] sm:$0xff]
    %v706 = vld [vmem:[#allocation2 + $0x738] sm:$0xff]
    %v707 = vld [vmem:[#allocation2 + $0x740] sm:$0xff]
    %v708 = vld [vmem:[#allocation2 + $0x748] sm:$0xff]
    %v709 = vld [vmem:[#allocation2 + $0x750] sm:$0xff]
    %v710 = vld [vmem:[#allocation2 + $0x758] sm:$0xff]
    %v711 = vld [vmem:[#allocation2 + $0x760] sm:$0xff]
    %v712 = vld [vmem:[#allocation2 + $0x768] sm:$0xff]
    %v713 = vld [vmem:[#allocation2 + $0x770] sm:$0xff]
    %v714 = vld [vmem:[#allocation2 + $0x778] sm:$0xff]
    %v955 = vunpack.c.l.b16 %v475
    %v956 = vunpack.c.h.b16 %v475
    %v957 = vunpack.c.l.b16 %v476
    %v958 = vunpack.c.h.b16 %v476
    %v959 = vunpack.c.l.b16 %v477
    %v960 = vunpack.c.h.b16 %v477
    %v961 = vunpack.c.l.b16 %v478
    %v962 = vunpack.c.h.b16 %v478
    %v963 = vunpack.c.l.b16 %v479
    %v964 = vunpack.c.h.b16 %v479
    %v965 = vunpack.c.l.b16 %v480
    %v966 = vunpack.c.h.b16 %v480
    %v967 = vunpack.c.l.b16 %v481
    %v968 = vunpack.c.h.b16 %v481
    %v969 = vunpack.c.l.b16 %v482
    %v970 = vunpack.c.h.b16 %v482
    %v971 = vunpack.c.l.b16 %v483
    %v972 = vunpack.c.h.b16 %v483
    %v973 = vunpack.c.l.b16 %v484
    %v974 = vunpack.c.h.b16 %v484
    %v975 = vunpack.c.l.b16 %v485
    %v976 = vunpack.c.h.b16 %v485
    %v977 = vunpack.c.l.b16 %v486
    %v978 = vunpack.c.h.b16 %v486
    %v979 = vunpack.c.l.b16 %v487
    %v980 = vunpack.c.h.b16 %v487
    %v981 = vunpack.c.l.b16 %v488
    %v982 = vunpack.c.h.b16 %v488
    %v983 = vunpack.c.l.b16 %v489
    %v984 = vunpack.c.h.b16 %v489
    %v985 = vunpack.c.l.b16 %v490
    %v986 = vunpack.c.h.b16 %v490
    %v987 = vunpack.c.l.b16 %v491
    %v988 = vunpack.c.h.b16 %v491
    %v989 = vunpack.c.l.b16 %v492
    %v990 = vunpack.c.h.b16 %v492
    %v991 = vunpack.c.l.b16 %v493
    %v992 = vunpack.c.h.b16 %v493
    %v993 = vunpack.c.l.b16 %v494
    %v994 = vunpack.c.h.b16 %v494
    %v995 = vunpack.c.l.b16 %v495
    %v996 = vunpack.c.h.b16 %v495
    %v997 = vunpack.c.l.b16 %v496
    %v998 = vunpack.c.h.b16 %v496
    %v999 = vunpack.c.l.b16 %v497
    %v1000 = vunpack.c.h.b16 %v497
    %v1001 = vunpack.c.l.b16 %v498
    %v1002 = vunpack.c.h.b16 %v498
    %v1003 = vunpack.c.l.b16 %v499
    %v1004 = vunpack.c.h.b16 %v499
    %v1005 = vunpack.c.l.b16 %v500
    %v1006 = vunpack.c.h.b16 %v500
    %v1007 = vunpack.c.l.b16 %v501
    %v1008 = vunpack.c.h.b16 %v501
    %v1009 = vunpack.c.l.b16 %v502
    %v1010 = vunpack.c.h.b16 %v502
    %v1011 = vunpack.c.l.b16 %v503
    %v1012 = vunpack.c.h.b16 %v503
    %v1013 = vunpack.c.l.b16 %v504
    %v1014 = vunpack.c.h.b16 %v504
    %v1015 = vunpack.c.l.b16 %v505
    %v1016 = vunpack.c.h.b16 %v505
    %v1017 = vunpack.c.l.b16 %v506
    %v1018 = vunpack.c.h.b16 %v506
    %v1019 = vunpack.c.l.b16 %v507
    %v1020 = vunpack.c.h.b16 %v507
    %v1021 = vunpack.c.l.b16 %v508
    %v1022 = vunpack.c.h.b16 %v508
    %v1023 = vunpack.c.l.b16 %v509
    %v1024 = vunpack.c.h.b16 %v509
    %v1025 = vunpack.c.l.b16 %v510
    %v1026 = vunpack.c.h.b16 %v510
    %v1027 = vunpack.c.l.b16 %v511
    %v1028 = vunpack.c.h.b16 %v511
    %v1029 = vunpack.c.l.b16 %v512
    %v1030 = vunpack.c.h.b16 %v512
    %v1031 = vunpack.c.l.b16 %v513
    %v1032 = vunpack.c.h.b16 %v513
    %v1033 = vunpack.c.l.b16 %v514
    %v1034 = vunpack.c.h.b16 %v514
    %v1035 = vunpack.c.l.b16 %v515
    %v1036 = vunpack.c.h.b16 %v515
    %v1037 = vunpack.c.l.b16 %v516
    %v1038 = vunpack.c.h.b16 %v516
    %v1039 = vunpack.c.l.b16 %v517
    %v1040 = vunpack.c.h.b16 %v517
    %v1041 = vunpack.c.l.b16 %v518
    %v1042 = vunpack.c.h.b16 %v518
    %v1043 = vunpack.c.l.b16 %v519
    %v1044 = vunpack.c.h.b16 %v519
    %v1045 = vunpack.c.l.b16 %v520
    %v1046 = vunpack.c.h.b16 %v520
    %v1047 = vunpack.c.l.b16 %v521
    %v1048 = vunpack.c.h.b16 %v521
    %v1049 = vunpack.c.l.b16 %v522
    %v1050 = vunpack.c.h.b16 %v522
    %v1051 = vunpack.c.l.b16 %v523
    %v1052 = vunpack.c.h.b16 %v523
    %v1053 = vunpack.c.l.b16 %v524
    %v1054 = vunpack.c.h.b16 %v524
    %v1055 = vunpack.c.l.b16 %v525
    %v1056 = vunpack.c.h.b16 %v525
    %v1057 = vunpack.c.l.b16 %v526
    %v1058 = vunpack.c.h.b16 %v526
    %v1059 = vunpack.c.l.b16 %v527
    %v1060 = vunpack.c.h.b16 %v527
    %v1061 = vunpack.c.l.b16 %v528
    %v1062 = vunpack.c.h.b16 %v528
    %v1063 = vunpack.c.l.b16 %v529
    %v1064 = vunpack.c.h.b16 %v529
    %v1065 = vunpack.c.l.b16 %v530
    %v1066 = vunpack.c.h.b16 %v530
    %v1067 = vunpack.c.l.b16 %v531
    %v1068 = vunpack.c.h.b16 %v531
    %v1069 = vunpack.c.l.b16 %v532
    %v1070 = vunpack.c.h.b16 %v532
    %v1071 = vunpack.c.l.b16 %v533
    %v1072 = vunpack.c.h.b16 %v533
    %v1073 = vunpack.c.l.b16 %v534
    %v1074 = vunpack.c.h.b16 %v534
    %v1075 = vunpack.c.l.b16 %v535
    %v1076 = vunpack.c.h.b16 %v535
    %v1077 = vunpack.c.l.b16 %v536
    %v1078 = vunpack.c.h.b16 %v536
    %v1079 = vunpack.c.l.b16 %v537
    %v1080 = vunpack.c.h.b16 %v537
    %v1081 = vunpack.c.l.b16 %v538
    %v1082 = vunpack.c.h.b16 %v538
    %v1083 = vunpack.c.l.b16 %v539
    %v1084 = vunpack.c.h.b16 %v539
    %v1085 = vunpack.c.l.b16 %v540
    %v1086 = vunpack.c.h.b16 %v540
    %v1087 = vunpack.c.l.b16 %v541
    %v1088 = vunpack.c.h.b16 %v541
    %v1089 = vunpack.c.l.b16 %v542
    %v1090 = vunpack.c.h.b16 %v542
    %v1091 = vunpack.c.l.b16 %v543
    %v1092 = vunpack.c.h.b16 %v543
    %v1093 = vunpack.c.l.b16 %v544
    %v1094 = vunpack.c.h.b16 %v544
    %v1095 = vunpack.c.l.b16 %v545
    %v1096 = vunpack.c.h.b16 %v545
    %v1097 = vunpack.c.l.b16 %v546
    %v1098 = vunpack.c.h.b16 %v546
    %v1099 = vunpack.c.l.b16 %v547
    %v1100 = vunpack.c.h.b16 %v547
    %v1101 = vunpack.c.l.b16 %v548
    %v1102 = vunpack.c.h.b16 %v548
    %v1103 = vunpack.c.l.b16 %v549
    %v1104 = vunpack.c.h.b16 %v549
    %v1105 = vunpack.c.l.b16 %v550
    %v1106 = vunpack.c.h.b16 %v550
    %v1107 = vunpack.c.l.b16 %v551
    %v1108 = vunpack.c.h.b16 %v551
    %v1109 = vunpack.c.l.b16 %v552
    %v1110 = vunpack.c.h.b16 %v552
    %v1111 = vunpack.c.l.b16 %v553
    %v1112 = vunpack.c.h.b16 %v553
    %v1113 = vunpack.c.l.b16 %v554
    %v1114 = vunpack.c.h.b16 %v554
    %v1115 = vunpack.c.l.b16 %v555
    %v1116 = vunpack.c.h.b16 %v555
    %v1117 = vunpack.c.l.b16 %v556
    %v1118 = vunpack.c.h.b16 %v556
    %v1119 = vunpack.c.l.b16 %v557
    %v1120 = vunpack.c.h.b16 %v557
    %v1121 = vunpack.c.l.b16 %v558
    %v1122 = vunpack.c.h.b16 %v558
    %v1123 = vunpack.c.l.b16 %v559
    %v1124 = vunpack.c.h.b16 %v559
    %v1125 = vunpack.c.l.b16 %v560
    %v1126 = vunpack.c.h.b16 %v560
    %v1127 = vunpack.c.l.b16 %v561
    %v1128 = vunpack.c.h.b16 %v561
    %v1129 = vunpack.c.l.b16 %v562
    %v1130 = vunpack.c.h.b16 %v562
    %v1131 = vunpack.c.l.b16 %v563
    %v1132 = vunpack.c.h.b16 %v563
    %v1133 = vunpack.c.l.b16 %v564
    %v1134 = vunpack.c.h.b16 %v564
    %v1135 = vunpack.c.l.b16 %v565
    %v1136 = vunpack.c.h.b16 %v565
    %v1137 = vunpack.c.l.b16 %v566
    %v1138 = vunpack.c.h.b16 %v566
    %v1139 = vunpack.c.l.b16 %v567
    %v1140 = vunpack.c.h.b16 %v567
    %v1141 = vunpack.c.l.b16 %v568
    %v1142 = vunpack.c.h.b16 %v568
    %v1143 = vunpack.c.l.b16 %v569
    %v1144 = vunpack.c.h.b16 %v569
    %v1145 = vunpack.c.l.b16 %v570
    %v1146 = vunpack.c.h.b16 %v570
    %v1147 = vunpack.c.l.b16 %v571
    %v1148 = vunpack.c.h.b16 %v571
    %v1149 = vunpack.c.l.b16 %v572
    %v1150 = vunpack.c.h.b16 %v572
    %v1151 = vunpack.c.l.b16 %v573
    %v1152 = vunpack.c.h.b16 %v573
    %v1153 = vunpack.c.l.b16 %v574
    %v1154 = vunpack.c.h.b16 %v574
    %v1155 = vunpack.c.l.b16 %v575
    %v1156 = vunpack.c.h.b16 %v575
    %v1157 = vunpack.c.l.b16 %v576
    %v1158 = vunpack.c.h.b16 %v576
    %v1159 = vunpack.c.l.b16 %v577
    %v1160 = vunpack.c.h.b16 %v577
    %v1161 = vunpack.c.l.b16 %v578
    %v1162 = vunpack.c.h.b16 %v578
    %v1163 = vunpack.c.l.b16 %v579
    %v1164 = vunpack.c.h.b16 %v579
    %v1165 = vunpack.c.l.b16 %v580
    %v1166 = vunpack.c.h.b16 %v580
    %v1167 = vunpack.c.l.b16 %v581
    %v1168 = vunpack.c.h.b16 %v581
    %v1169 = vunpack.c.l.b16 %v582
    %v1170 = vunpack.c.h.b16 %v582
    %v1171 = vunpack.c.l.b16 %v583
    %v1172 = vunpack.c.h.b16 %v583
    %v1173 = vunpack.c.l.b16 %v584
    %v1174 = vunpack.c.h.b16 %v584
    %v1175 = vunpack.c.l.b16 %v585
    %v1176 = vunpack.c.h.b16 %v585
    %v1177 = vunpack.c.l.b16 %v586
    %v1178 = vunpack.c.h.b16 %v586
    %v1179 = vunpack.c.l.b16 %v587
    %v1180 = vunpack.c.h.b16 %v587
    %v1181 = vunpack.c.l.b16 %v588
    %v1182 = vunpack.c.h.b16 %v588
    %v1183 = vunpack.c.l.b16 %v589
    %v1184 = vunpack.c.h.b16 %v589
    %v1185 = vunpack.c.l.b16 %v590
    %v1186 = vunpack.c.h.b16 %v590
    %v1187 = vunpack.c.l.b16 %v591
    %v1188 = vunpack.c.h.b16 %v591
    %v1189 = vunpack.c.l.b16 %v592
    %v1190 = vunpack.c.h.b16 %v592
    %v1191 = vunpack.c.l.b16 %v593
    %v1192 = vunpack.c.h.b16 %v593
    %v1193 = vunpack.c.l.b16 %v594
    %v1194 = vunpack.c.h.b16 %v594
    %v1195 = vunpack.c.l.b16 %v595
    %v1196 = vunpack.c.h.b16 %v595
    %v1197 = vunpack.c.l.b16 %v596
    %v1198 = vunpack.c.h.b16 %v596
    %v1199 = vunpack.c.l.b16 %v597
    %v1200 = vunpack.c.h.b16 %v597
    %v1201 = vunpack.c.l.b16 %v598
    %v1202 = vunpack.c.h.b16 %v598
    %v1203 = vunpack.c.l.b16 %v599
    %v1204 = vunpack.c.h.b16 %v599
    %v1205 = vunpack.c.l.b16 %v600
    %v1206 = vunpack.c.h.b16 %v600
    %v1207 = vunpack.c.l.b16 %v601
    %v1208 = vunpack.c.h.b16 %v601
    %v1209 = vunpack.c.l.b16 %v602
    %v1210 = vunpack.c.h.b16 %v602
    %v1211 = vunpack.c.l.b16 %v603
    %v1212 = vunpack.c.h.b16 %v603
    %v1213 = vunpack.c.l.b16 %v604
    %v1214 = vunpack.c.h.b16 %v604
    %v1215 = vunpack.c.l.b16 %v605
    %v1216 = vunpack.c.h.b16 %v605
    %v1217 = vunpack.c.l.b16 %v606
    %v1218 = vunpack.c.h.b16 %v606
    %v1219 = vunpack.c.l.b16 %v607
    %v1220 = vunpack.c.h.b16 %v607
    %v1221 = vunpack.c.l.b16 %v608
    %v1222 = vunpack.c.h.b16 %v608
    %v1223 = vunpack.c.l.b16 %v609
    %v1224 = vunpack.c.h.b16 %v609
    %v1225 = vunpack.c.l.b16 %v610
    %v1226 = vunpack.c.h.b16 %v610
    %v1227 = vunpack.c.l.b16 %v611
    %v1228 = vunpack.c.h.b16 %v611
    %v1229 = vunpack.c.l.b16 %v612
    %v1230 = vunpack.c.h.b16 %v612
    %v1231 = vunpack.c.l.b16 %v613
    %v1232 = vunpack.c.h.b16 %v613
    %v1233 = vunpack.c.l.b16 %v614
    %v1234 = vunpack.c.h.b16 %v614
    %v1235 = vunpack.c.l.b16 %v615
    %v1236 = vunpack.c.h.b16 %v615
    %v1237 = vunpack.c.l.b16 %v616
    %v1238 = vunpack.c.h.b16 %v616
    %v1239 = vunpack.c.l.b16 %v617
    %v1240 = vunpack.c.h.b16 %v617
    %v1241 = vunpack.c.l.b16 %v618
    %v1242 = vunpack.c.h.b16 %v618
    %v1243 = vunpack.c.l.b16 %v619
    %v1244 = vunpack.c.h.b16 %v619
    %v1245 = vunpack.c.l.b16 %v620
    %v1246 = vunpack.c.h.b16 %v620
    %v1247 = vunpack.c.l.b16 %v621
    %v1248 = vunpack.c.h.b16 %v621
    %v1249 = vunpack.c.l.b16 %v622
    %v1250 = vunpack.c.h.b16 %v622
    %v1251 = vunpack.c.l.b16 %v623
    %v1252 = vunpack.c.h.b16 %v623
    %v1253 = vunpack.c.l.b16 %v624
    %v1254 = vunpack.c.h.b16 %v624
    %v1255 = vunpack.c.l.b16 %v625
    %v1256 = vunpack.c.h.b16 %v625
    %v1257 = vunpack.c.l.b16 %v626
    %v1258 = vunpack.c.h.b16 %v626
    %v1259 = vunpack.c.l.b16 %v627
    %v1260 = vunpack.c.h.b16 %v627
    %v1261 = vunpack.c.l.b16 %v628
    %v1262 = vunpack.c.h.b16 %v628
    %v1263 = vunpack.c.l.b16 %v629
    %v1264 = vunpack.c.h.b16 %v629
    %v1265 = vunpack.c.l.b16 %v630
    %v1266 = vunpack.c.h.b16 %v630
    %v1267 = vunpack.c.l.b16 %v631
    %v1268 = vunpack.c.h.b16 %v631
    %v1269 = vunpack.c.l.b16 %v632
    %v1270 = vunpack.c.h.b16 %v632
    %v1271 = vunpack.c.l.b16 %v633
    %v1272 = vunpack.c.h.b16 %v633
    %v1273 = vunpack.c.l.b16 %v634
    %v1274 = vunpack.c.h.b16 %v634
    %v1275 = vunpack.c.l.b16 %v635
    %v1276 = vunpack.c.h.b16 %v635
    %v1277 = vunpack.c.l.b16 %v636
    %v1278 = vunpack.c.h.b16 %v636
    %v1279 = vunpack.c.l.b16 %v637
    %v1280 = vunpack.c.h.b16 %v637
    %v1281 = vunpack.c.l.b16 %v638
    %v1282 = vunpack.c.h.b16 %v638
    %v1283 = vunpack.c.l.b16 %v639
    %v1284 = vunpack.c.h.b16 %v639
    %v1285 = vunpack.c.l.b16 %v640
    %v1286 = vunpack.c.h.b16 %v640
    %v1287 = vunpack.c.l.b16 %v641
    %v1288 = vunpack.c.h.b16 %v641
    %v1289 = vunpack.c.l.b16 %v642
    %v1290 = vunpack.c.h.b16 %v642
    %v1291 = vunpack.c.l.b16 %v643
    %v1292 = vunpack.c.h.b16 %v643
    %v1293 = vunpack.c.l.b16 %v644
    %v1294 = vunpack.c.h.b16 %v644
    %v1295 = vunpack.c.l.b16 %v645
    %v1296 = vunpack.c.h.b16 %v645
    %v1297 = vunpack.c.l.b16 %v646
    %v1298 = vunpack.c.h.b16 %v646
    %v1299 = vunpack.c.l.b16 %v647
    %v1300 = vunpack.c.h.b16 %v647
    %v1301 = vunpack.c.l.b16 %v648
    %v1302 = vunpack.c.h.b16 %v648
    %v1303 = vunpack.c.l.b16 %v649
    %v1304 = vunpack.c.h.b16 %v649
    %v1305 = vunpack.c.l.b16 %v650
    %v1306 = vunpack.c.h.b16 %v650
    %v1307 = vunpack.c.l.b16 %v651
    %v1308 = vunpack.c.h.b16 %v651
    %v1309 = vunpack.c.l.b16 %v652
    %v1310 = vunpack.c.h.b16 %v652
    %v1311 = vunpack.c.l.b16 %v653
    %v1312 = vunpack.c.h.b16 %v653
    %v1313 = vunpack.c.l.b16 %v654
    %v1314 = vunpack.c.h.b16 %v654
    %v1315 = vunpack.c.l.b16 %v655
    %v1316 = vunpack.c.h.b16 %v655
    %v1317 = vunpack.c.l.b16 %v656
    %v1318 = vunpack.c.h.b16 %v656
    %v1319 = vunpack.c.l.b16 %v657
    %v1320 = vunpack.c.h.b16 %v657
    %v1321 = vunpack.c.l.b16 %v658
    %v1322 = vunpack.c.h.b16 %v658
    %v1323 = vunpack.c.l.b16 %v659
    %v1324 = vunpack.c.h.b16 %v659
    %v1325 = vunpack.c.l.b16 %v660
    %v1326 = vunpack.c.h.b16 %v660
    %v1327 = vunpack.c.l.b16 %v661
    %v1328 = vunpack.c.h.b16 %v661
    %v1329 = vunpack.c.l.b16 %v662
    %v1330 = vunpack.c.h.b16 %v662
    %v1331 = vunpack.c.l.b16 %v663
    %v1332 = vunpack.c.h.b16 %v663
    %v1333 = vunpack.c.l.b16 %v664
    %v1334 = vunpack.c.h.b16 %v664
    %v1335 = vunpack.c.l.b16 %v665
    %v1336 = vunpack.c.h.b16 %v665
    %v1337 = vunpack.c.l.b16 %v666
    %v1338 = vunpack.c.h.b16 %v666
    %v1339 = vunpack.c.l.b16 %v667
    %v1340 = vunpack.c.h.b16 %v667
    %v1341 = vunpack.c.l.b16 %v668
    %v1342 = vunpack.c.h.b16 %v668
    %v1343 = vunpack.c.l.b16 %v669
    %v1344 = vunpack.c.h.b16 %v669
    %v1345 = vunpack.c.l.b16 %v670
    %v1346 = vunpack.c.h.b16 %v670
    %v1347 = vunpack.c.l.b16 %v671
    %v1348 = vunpack.c.h.b16 %v671
    %v1349 = vunpack.c.l.b16 %v672
    %v1350 = vunpack.c.h.b16 %v672
    %v1351 = vunpack.c.l.b16 %v673
    %v1352 = vunpack.c.h.b16 %v673
    %v1353 = vunpack.c.l.b16 %v674
    %v1354 = vunpack.c.h.b16 %v674
    %v1355 = vunpack.c.l.b16 %v675
    %v1356 = vunpack.c.h.b16 %v675
    %v1357 = vunpack.c.l.b16 %v676
    %v1358 = vunpack.c.h.b16 %v676
    %v1359 = vunpack.c.l.b16 %v677
    %v1360 = vunpack.c.h.b16 %v677
    %v1361 = vunpack.c.l.b16 %v678
    %v1362 = vunpack.c.h.b16 %v678
    %v1363 = vunpack.c.l.b16 %v679
    %v1364 = vunpack.c.h.b16 %v679
    %v1365 = vunpack.c.l.b16 %v680
    %v1366 = vunpack.c.h.b16 %v680
    %v1367 = vunpack.c.l.b16 %v681
    %v1368 = vunpack.c.h.b16 %v681
    %v1369 = vunpack.c.l.b16 %v682
    %v1370 = vunpack.c.h.b16 %v682
    %v1371 = vunpack.c.l.b16 %v683
    %v1372 = vunpack.c.h.b16 %v683
    %v1373 = vunpack.c.l.b16 %v684
    %v1374 = vunpack.c.h.b16 %v684
    %v1375 = vunpack.c.l.b16 %v685
    %v1376 = vunpack.c.h.b16 %v685
    %v1377 = vunpack.c.l.b16 %v686
    %v1378 = vunpack.c.h.b16 %v686
    %v1379 = vunpack.c.l.b16 %v687
    %v1380 = vunpack.c.h.b16 %v687
    %v1381 = vunpack.c.l.b16 %v688
    %v1382 = vunpack.c.h.b16 %v688
    %v1383 = vunpack.c.l.b16 %v689
    %v1384 = vunpack.c.h.b16 %v689
    %v1385 = vunpack.c.l.b16 %v690
    %v1386 = vunpack.c.h.b16 %v690
    %v1387 = vunpack.c.l.b16 %v691
    %v1388 = vunpack.c.h.b16 %v691
    %v1389 = vunpack.c.l.b16 %v692
    %v1390 = vunpack.c.h.b16 %v692
    %v1391 = vunpack.c.l.b16 %v693
    %v1392 = vunpack.c.h.b16 %v693
    %v1393 = vunpack.c.l.b16 %v694
    %v1394 = vunpack.c.h.b16 %v694
    %v1395 = vunpack.c.l.b16 %v695
    %v1396 = vunpack.c.h.b16 %v695
    %v1397 = vunpack.c.l.b16 %v696
    %v1398 = vunpack.c.h.b16 %v696
    %v1399 = vunpack.c.l.b16 %v697
    %v1400 = vunpack.c.h.b16 %v697
    %v1401 = vunpack.c.l.b16 %v698
    %v1402 = vunpack.c.h.b16 %v698
    %v1403 = vunpack.c.l.b16 %v699
    %v1404 = vunpack.c.h.b16 %v699
    %v1405 = vunpack.c.l.b16 %v700
    %v1406 = vunpack.c.h.b16 %v700
    %v1407 = vunpack.c.l.b16 %v701
    %v1408 = vunpack.c.h.b16 %v701
    %v1409 = vunpack.c.l.b16 %v702
    %v1410 = vunpack.c.h.b16 %v702
    %v1411 = vunpack.c.l.b16 %v703
    %v1412 = vunpack.c.h.b16 %v703
    %v1413 = vunpack.c.l.b16 %v704
    %v1414 = vunpack.c.h.b16 %v704
    %v1415 = vunpack.c.l.b16 %v705
    %v1416 = vunpack.c.h.b16 %v705
    %v1417 = vunpack.c.l.b16 %v706
    %v1418 = vunpack.c.h.b16 %v706
    %v1419 = vunpack.c.l.b16 %v707
    %v1420 = vunpack.c.h.b16 %v707
    %v1421 = vunpack.c.l.b16 %v708
    %v1422 = vunpack.c.h.b16 %v708
    %v1423 = vunpack.c.l.b16 %v709
    %v1424 = vunpack.c.h.b16 %v709
    %v1425 = vunpack.c.l.b16 %v710
    %v1426 = vunpack.c.h.b16 %v710
    %v1427 = vunpack.c.l.b16 %v711
    %v1428 = vunpack.c.h.b16 %v711
    %v1429 = vunpack.c.l.b16 %v712
    %v1430 = vunpack.c.h.b16 %v712
    %v1431 = vunpack.c.l.b16 %v713
    %v1432 = vunpack.c.h.b16 %v713
    %v1433 = vunpack.c.l.b16 %v714
    %v1434 = vunpack.c.h.b16 %v714
    %v1435 = vpack.c.b16 %v961, %v955
    %v1436 = vpack.c.b16 %v962, %v956
    %v1437 = vpack.c.b16 %v963, %v957
    %v1438 = vpack.c.b16 %v964, %v958
    %v1439 = vpack.c.b16 %v965, %v959
    %v1440 = vpack.c.b16 %v966, %v960
    %v1441 = vpack.c.b16 %v973, %v967
    %v1442 = vpack.c.b16 %v974, %v968
    %v1443 = vpack.c.b16 %v975, %v969
    %v1444 = vpack.c.b16 %v976, %v970
    %v1445 = vpack.c.b16 %v977, %v971
    %v1446 = vpack.c.b16 %v978, %v972
    %v1447 = vpack.c.b16 %v985, %v979
    %v1448 = vpack.c.b16 %v986, %v980
    %v1449 = vpack.c.b16 %v987, %v981
    %v1450 = vpack.c.b16 %v988, %v982
    %v1451 = vpack.c.b16 %v989, %v983
    %v1452 = vpack.c.b16 %v990, %v984
    %v1453 = vpack.c.b16 %v997, %v991
    %v1454 = vpack.c.b16 %v998, %v992
    %v1455 = vpack.c.b16 %v999, %v993
    %v1456 = vpack.c.b16 %v1000, %v994
    %v1457 = vpack.c.b16 %v1001, %v995
    %v1458 = vpack.c.b16 %v1002, %v996
    %v1459 = vpack.c.b16 %v1009, %v1003
    %v1460 = vpack.c.b16 %v1010, %v1004
    %v1461 = vpack.c.b16 %v1011, %v1005
    %v1462 = vpack.c.b16 %v1012, %v1006
    %v1463 = vpack.c.b16 %v1013, %v1007
    %v1464 = vpack.c.b16 %v1014, %v1008
    %v1465 = vpack.c.b16 %v1021, %v1015
    %v1466 = vpack.c.b16 %v1022, %v1016
    %v1467 = vpack.c.b16 %v1023, %v1017
    %v1468 = vpack.c.b16 %v1024, %v1018
    %v1469 = vpack.c.b16 %v1025, %v1019
    %v1470 = vpack.c.b16 %v1026, %v1020
    %v1471 = vpack.c.b16 %v1033, %v1027
    %v1472 = vpack.c.b16 %v1034, %v1028
    %v1473 = vpack.c.b16 %v1035, %v1029
    %v1474 = vpack.c.b16 %v1036, %v1030
    %v1475 = vpack.c.b16 %v1037, %v1031
    %v1476 = vpack.c.b16 %v1038, %v1032
    %v1477 = vpack.c.b16 %v1045, %v1039
    %v1478 = vpack.c.b16 %v1046, %v1040
    %v1479 = vpack.c.b16 %v1047, %v1041
    %v1480 = vpack.c.b16 %v1048, %v1042
    %v1481 = vpack.c.b16 %v1049, %v1043
    %v1482 = vpack.c.b16 %v1050, %v1044
    %v1483 = vpack.c.b16 %v1057, %v1051
    %v1484 = vpack.c.b16 %v1058, %v1052
    %v1485 = vpack.c.b16 %v1059, %v1053
    %v1486 = vpack.c.b16 %v1060, %v1054
    %v1487 = vpack.c.b16 %v1061, %v1055
    %v1488 = vpack.c.b16 %v1062, %v1056
    %v1489 = vpack.c.b16 %v1069, %v1063
    %v1490 = vpack.c.b16 %v1070, %v1064
    %v1491 = vpack.c.b16 %v1071, %v1065
    %v1492 = vpack.c.b16 %v1072, %v1066
    %v1493 = vpack.c.b16 %v1073, %v1067
    %v1494 = vpack.c.b16 %v1074, %v1068
    %v1495 = vpack.c.b16 %v1081, %v1075
    %v1496 = vpack.c.b16 %v1082, %v1076
    %v1497 = vpack.c.b16 %v1083, %v1077
    %v1498 = vpack.c.b16 %v1084, %v1078
    %v1499 = vpack.c.b16 %v1085, %v1079
    %v1500 = vpack.c.b16 %v1086, %v1080
    %v1501 = vpack.c.b16 %v1093, %v1087
    %v1502 = vpack.c.b16 %v1094, %v1088
    %v1503 = vpack.c.b16 %v1095, %v1089
    %v1504 = vpack.c.b16 %v1096, %v1090
    %v1505 = vpack.c.b16 %v1097, %v1091
    %v1506 = vpack.c.b16 %v1098, %v1092
    %v1507 = vpack.c.b16 %v1105, %v1099
    %v1508 = vpack.c.b16 %v1106, %v1100
    %v1509 = vpack.c.b16 %v1107, %v1101
    %v1510 = vpack.c.b16 %v1108, %v1102
    %v1511 = vpack.c.b16 %v1109, %v1103
    %v1512 = vpack.c.b16 %v1110, %v1104
    %v1513 = vpack.c.b16 %v1117, %v1111
    %v1514 = vpack.c.b16 %v1118, %v1112
    %v1515 = vpack.c.b16 %v1119, %v1113
    %v1516 = vpack.c.b16 %v1120, %v1114
    %v1517 = vpack.c.b16 %v1121, %v1115
    %v1518 = vpack.c.b16 %v1122, %v1116
    %v1519 = vpack.c.b16 %v1129, %v1123
    %v1520 = vpack.c.b16 %v1130, %v1124
    %v1521 = vpack.c.b16 %v1131, %v1125
    %v1522 = vpack.c.b16 %v1132, %v1126
    %v1523 = vpack.c.b16 %v1133, %v1127
    %v1524 = vpack.c.b16 %v1134, %v1128
    %v1525 = vpack.c.b16 %v1141, %v1135
    %v1526 = vpack.c.b16 %v1142, %v1136
    %v1527 = vpack.c.b16 %v1143, %v1137
    %v1528 = vpack.c.b16 %v1144, %v1138
    %v1529 = vpack.c.b16 %v1145, %v1139
    %v1530 = vpack.c.b16 %v1146, %v1140
    %v1531 = vpack.c.b16 %v1153, %v1147
    %v1532 = vpack.c.b16 %v1154, %v1148
    %v1533 = vpack.c.b16 %v1155, %v1149
    %v1534 = vpack.c.b16 %v1156, %v1150
    %v1535 = vpack.c.b16 %v1157, %v1151
    %v1536 = vpack.c.b16 %v1158, %v1152
    %v1537 = vpack.c.b16 %v1165, %v1159
    %v1538 = vpack.c.b16 %v1166, %v1160
    %v1539 = vpack.c.b16 %v1167, %v1161
    %v1540 = vpack.c.b16 %v1168, %v1162
    %v1541 = vpack.c.b16 %v1169, %v1163
    %v1542 = vpack.c.b16 %v1170, %v1164
    %v1543 = vpack.c.b16 %v1177, %v1171
    %v1544 = vpack.c.b16 %v1178, %v1172
    %v1545 = vpack.c.b16 %v1179, %v1173
    %v1546 = vpack.c.b16 %v1180, %v1174
    %v1547 = vpack.c.b16 %v1181, %v1175
    %v1548 = vpack.c.b16 %v1182, %v1176
    %v1549 = vpack.c.b16 %v1189, %v1183
    %v1550 = vpack.c.b16 %v1190, %v1184
    %v1551 = vpack.c.b16 %v1191, %v1185
    %v1552 = vpack.c.b16 %v1192, %v1186
    %v1553 = vpack.c.b16 %v1193, %v1187
    %v1554 = vpack.c.b16 %v1194, %v1188
    %v1555 = vpack.c.b16 %v1201, %v1195
    %v1556 = vpack.c.b16 %v1202, %v1196
    %v1557 = vpack.c.b16 %v1203, %v1197
    %v1558 = vpack.c.b16 %v1204, %v1198
    %v1559 = vpack.c.b16 %v1205, %v1199
    %v1560 = vpack.c.b16 %v1206, %v1200
    %v1561 = vpack.c.b16 %v1213, %v1207
    %v1562 = vpack.c.b16 %v1214, %v1208
    %v1563 = vpack.c.b16 %v1215, %v1209
    %v1564 = vpack.c.b16 %v1216, %v1210
    %v1565 = vpack.c.b16 %v1217, %v1211
    %v1566 = vpack.c.b16 %v1218, %v1212
    %v1567 = vpack.c.b16 %v1225, %v1219
    %v1568 = vpack.c.b16 %v1226, %v1220
    %v1569 = vpack.c.b16 %v1227, %v1221
    %v1570 = vpack.c.b16 %v1228, %v1222
    %v1571 = vpack.c.b16 %v1229, %v1223
    %v1572 = vpack.c.b16 %v1230, %v1224
    %v1573 = vpack.c.b16 %v1237, %v1231
    %v1574 = vpack.c.b16 %v1238, %v1232
    %v1575 = vpack.c.b16 %v1239, %v1233
    %v1576 = vpack.c.b16 %v1240, %v1234
    %v1577 = vpack.c.b16 %v1241, %v1235
    %v1578 = vpack.c.b16 %v1242, %v1236
    %v1579 = vpack.c.b16 %v1249, %v1243
    %v1580 = vpack.c.b16 %v1250, %v1244
    %v1581 = vpack.c.b16 %v1251, %v1245
    %v1582 = vpack.c.b16 %v1252, %v1246
    %v1583 = vpack.c.b16 %v1253, %v1247
    %v1584 = vpack.c.b16 %v1254, %v1248
    %v1585 = vpack.c.b16 %v1261, %v1255
    %v1586 = vpack.c.b16 %v1262, %v1256
    %v1587 = vpack.c.b16 %v1263, %v1257
    %v1588 = vpack.c.b16 %v1264, %v1258
    %v1589 = vpack.c.b16 %v1265, %v1259
    %v1590 = vpack.c.b16 %v1266, %v1260
    %v1591 = vpack.c.b16 %v1273, %v1267
    %v1592 = vpack.c.b16 %v1274, %v1268
    %v1593 = vpack.c.b16 %v1275, %v1269
    %v1594 = vpack.c.b16 %v1276, %v1270
    %v1595 = vpack.c.b16 %v1277, %v1271
    %v1596 = vpack.c.b16 %v1278, %v1272
    %v1597 = vpack.c.b16 %v1285, %v1279
    %v1598 = vpack.c.b16 %v1286, %v1280
    %v1599 = vpack.c.b16 %v1287, %v1281
    %v1600 = vpack.c.b16 %v1288, %v1282
    %v1601 = vpack.c.b16 %v1289, %v1283
    %v1602 = vpack.c.b16 %v1290, %v1284
    %v1603 = vpack.c.b16 %v1297, %v1291
    %v1604 = vpack.c.b16 %v1298, %v1292
    %v1605 = vpack.c.b16 %v1299, %v1293
    %v1606 = vpack.c.b16 %v1300, %v1294
    %v1607 = vpack.c.b16 %v1301, %v1295
    %v1608 = vpack.c.b16 %v1302, %v1296
    %v1609 = vpack.c.b16 %v1309, %v1303
    %v1610 = vpack.c.b16 %v1310, %v1304
    %v1611 = vpack.c.b16 %v1311, %v1305
    %v1612 = vpack.c.b16 %v1312, %v1306
    %v1613 = vpack.c.b16 %v1313, %v1307
    %v1614 = vpack.c.b16 %v1314, %v1308
    %v1615 = vpack.c.b16 %v1321, %v1315
    %v1616 = vpack.c.b16 %v1322, %v1316
    %v1617 = vpack.c.b16 %v1323, %v1317
    %v1618 = vpack.c.b16 %v1324, %v1318
    %v1619 = vpack.c.b16 %v1325, %v1319
    %v1620 = vpack.c.b16 %v1326, %v1320
    %v1621 = vpack.c.b16 %v1333, %v1327
    %v1622 = vpack.c.b16 %v1334, %v1328
    %v1623 = vpack.c.b16 %v1335, %v1329
    %v1624 = vpack.c.b16 %v1336, %v1330
    %v1625 = vpack.c.b16 %v1337, %v1331
    %v1626 = vpack.c.b16 %v1338, %v1332
    %v1627 = vpack.c.b16 %v1345, %v1339
    %v1628 = vpack.c.b16 %v1346, %v1340
    %v1629 = vpack.c.b16 %v1347, %v1341
    %v1630 = vpack.c.b16 %v1348, %v1342
    %v1631 = vpack.c.b16 %v1349, %v1343
    %v1632 = vpack.c.b16 %v1350, %v1344
    %v1633 = vpack.c.b16 %v1357, %v1351
    %v1634 = vpack.c.b16 %v1358, %v1352
    %v1635 = vpack.c.b16 %v1359, %v1353
    %v1636 = vpack.c.b16 %v1360, %v1354
    %v1637 = vpack.c.b16 %v1361, %v1355
    %v1638 = vpack.c.b16 %v1362, %v1356
    %v1639 = vpack.c.b16 %v1369, %v1363
    %v1640 = vpack.c.b16 %v1370, %v1364
    %v1641 = vpack.c.b16 %v1371, %v1365
    %v1642 = vpack.c.b16 %v1372, %v1366
    %v1643 = vpack.c.b16 %v1373, %v1367
    %v1644 = vpack.c.b16 %v1374, %v1368
    %v1645 = vpack.c.b16 %v1381, %v1375
    %v1646 = vpack.c.b16 %v1382, %v1376
    %v1647 = vpack.c.b16 %v1383, %v1377
    %v1648 = vpack.c.b16 %v1384, %v1378
    %v1649 = vpack.c.b16 %v1385, %v1379
    %v1650 = vpack.c.b16 %v1386, %v1380
    %v1651 = vpack.c.b16 %v1393, %v1387
    %v1652 = vpack.c.b16 %v1394, %v1388
    %v1653 = vpack.c.b16 %v1395, %v1389
    %v1654 = vpack.c.b16 %v1396, %v1390
    %v1655 = vpack.c.b16 %v1397, %v1391
    %v1656 = vpack.c.b16 %v1398, %v1392
    %v1657 = vpack.c.b16 %v1405, %v1399
    %v1658 = vpack.c.b16 %v1406, %v1400
    %v1659 = vpack.c.b16 %v1407, %v1401
    %v1660 = vpack.c.b16 %v1408, %v1402
    %v1661 = vpack.c.b16 %v1409, %v1403
    %v1662 = vpack.c.b16 %v1410, %v1404
    %v1663 = vpack.c.b16 %v1417, %v1411
    %v1664 = vpack.c.b16 %v1418, %v1412
    %v1665 = vpack.c.b16 %v1419, %v1413
    %v1666 = vpack.c.b16 %v1420, %v1414
    %v1667 = vpack.c.b16 %v1421, %v1415
    %v1668 = vpack.c.b16 %v1422, %v1416
    %v1669 = vpack.c.b16 %v1429, %v1423
    %v1670 = vpack.c.b16 %v1430, %v1424
    %v1671 = vpack.c.b16 %v1431, %v1425
    %v1672 = vpack.c.b16 %v1432, %v1426
    %v1673 = vpack.c.b16 %v1433, %v1427
    %v1674 = vpack.c.b16 %v1434, %v1428
    %1915 = vmatprep.subr.bf16.mxu0 %v1436
    %1916 = vmatpush1.bf16.msra.mxu0 %v1435
    %1917 = vmatprep.subr.bf16.mxu0 %v1442
    %1918 = vmatpush1.bf16.msra.mxu0 %v1441
    %1919 = vmatprep.subr.bf16.mxu0 %v1448
    %1920 = vmatpush1.bf16.msra.mxu0 %v1447
    %1921 = vmatprep.subr.bf16.mxu0 %v1454
    %1922 = vmatpush1.bf16.msra.mxu0 %v1453
    %1923 = vmatprep.subr.bf16.mxu0 %v1460
    %1924 = vmatpush1.bf16.msra.mxu0 %v1459
    %1925 = vmatprep.subr.bf16.mxu0 %v1466
    %1926 = vmatpush1.bf16.msra.mxu0 %v1465
    %1927 = vmatprep.subr.bf16.mxu0 %v1472
    %1928 = vmatpush1.bf16.msra.mxu0 %v1471
    %1929 = vmatprep.subr.bf16.mxu0 %v1478
    %1930 = vmatpush1.bf16.msra.mxu0 %v1477
    %1931 = vmatprep.subr.bf16.mxu0 %v1484
    %1932 = vmatpush1.bf16.msra.mxu0 %v1483
    %1933 = vmatprep.subr.bf16.mxu0 %v1490
    %1934 = vmatpush1.bf16.msra.mxu0 %v1489
    %1935 = vmatprep.subr.bf16.mxu0 %v1496
    %1936 = vmatpush1.bf16.msra.mxu0 %v1495
    %1937 = vmatprep.subr.bf16.mxu0 %v1502
    %1938 = vmatpush1.bf16.msra.mxu0 %v1501
    %1939 = vmatprep.subr.bf16.mxu0 %v1508
    %1940 = vmatpush1.bf16.msra.mxu0 %v1507
    %1941 = vmatprep.subr.bf16.mxu0 %v1514
    %1942 = vmatpush1.bf16.msra.mxu0 %v1513
    %1943 = vmatprep.subr.bf16.mxu0 %v1520
    %1944 = vmatpush1.bf16.msra.mxu0 %v1519
    %1945 = vmatprep.subr.bf16.mxu0 %v1526
    %1946 = vmatpush1.bf16.msra.mxu0 %v1525
    %1947 = vmatprep.mubr.bf16.mxu0 %v433
    %1948 = vmatmul.mubr.bf16.gmra.mrb[0].mxu0 %v421
    %v1949 = vpop.f32.mrb[0].mxu0
    %v1950 = vadd.f32 0.0, %v1949
    %v1951 = vpop.f32.mrb[0].mxu0
    %v1952 = vadd.f32 0.0, %v1951
    %v1953 = vpop.f32.mrb[0].mxu0
    %v1954 = vadd.f32 0.0, %v1953
    %v1955 = vpop.f32.mrb[0].mxu0
    %v1956 = vadd.f32 0.0, %v1955
    %1957 = vmatprep.mubr.bf16.mxu0 %v434
    %1958 = vmatmul.mubr.bf16.gmra.mrb[0].mxu0 %v422
    %v1959 = vpop.f32.mrb[0].mxu0
    %v1960 = vadd.f32 0.0, %v1959
    %v1961 = vpop.f32.mrb[0].mxu0
    %v1962 = vadd.f32 0.0, %v1961
    %v1963 = vpop.f32.mrb[0].mxu0
    %v1964 = vadd.f32 0.0, %v1963
    %v1965 = vpop.f32.mrb[0].mxu0
    %v1966 = vadd.f32 0.0, %v1965
    %1967 = vmatprep.mubr.bf16.mxu0 %v435
    %1968 = vmatmul.mubr.bf16.gmra.mrb[0].mxu0 %v423
    %v1969 = vpop.f32.mrb[0].mxu0
    %v1970 = vadd.f32 0.0, %v1969
    %v1971 = vpop.f32.mrb[0].mxu0
    %v1972 = vadd.f32 0.0, %v1971
    %v1973 = vpop.f32.mrb[0].mxu0
    %v1974 = vadd.f32 0.0, %v1973
    %v1975 = vpop.f32.mrb[0].mxu0
    %v1976 = vadd.f32 0.0, %v1975
    %1977 = vdwg.mxu0
    %1978 = vmatprep.subr.bf16.mxu0 %v1532
    %1979 = vmatpush1.bf16.msra.mxu0 %v1531
    %1980 = vmatprep.subr.bf16.mxu0 %v1538
    %1981 = vmatpush1.bf16.msra.mxu0 %v1537
    %1982 = vmatprep.subr.bf16.mxu0 %v1544
    %1983 = vmatpush1.bf16.msra.mxu0 %v1543
    %1984 = vmatprep.subr.bf16.mxu0 %v1550
    %1985 = vmatpush1.bf16.msra.mxu0 %v1549
    %1986 = vmatprep.subr.bf16.mxu0 %v1556
    %1987 = vmatpush1.bf16.msra.mxu0 %v1555
    %1988 = vmatprep.subr.bf16.mxu0 %v1562
    %1989 = vmatpush1.bf16.msra.mxu0 %v1561
    %1990 = vmatprep.subr.bf16.mxu0 %v1568
    %1991 = vmatpush1.bf16.msra.mxu0 %v1567
    %1992 = vmatprep.subr.bf16.mxu0 %v1574
    %1993 = vmatpush1.bf16.msra.mxu0 %v1573
    %1994 = vmatprep.subr.bf16.mxu0 %v1580
    %1995 = vmatpush1.bf16.msra.mxu0 %v1579
    %1996 = vmatprep.subr.bf16.mxu0 %v1586
    %1997 = vmatpush1.bf16.msra.mxu0 %v1585
    %1998 = vmatprep.subr.bf16.mxu0 %v1592
    %1999 = vmatpush1.bf16.msra.mxu0 %v1591
    %2000 = vmatprep.subr.bf16.mxu0 %v1598
    %2001 = vmatpush1.bf16.msra.mxu0 %v1597
    %2002 = vmatprep.subr.bf16.mxu0 %v1604
    %2003 = vmatpush1.bf16.msra.mxu0 %v1603
    %2004 = vmatprep.subr.bf16.mxu0 %v1610
    %2005 = vmatpush1.bf16.msra.mxu0 %v1609
    %2006 = vmatprep.subr.bf16.mxu0 %v1616
    %2007 = vmatpush1.bf16.msra.mxu0 %v1615
    %2008 = vmatprep.subr.bf16.mxu0 %v1622
    %2009 = vmatpush1.bf16.msra.mxu0 %v1621
    %2010 = vmatprep.mubr.bf16.mxu0 %v457
    %2011 = vmatmul.mubr.bf16.gmra.mrb[0].mxu0 %v445
    %v2012 = vpop.f32.mrb[0].mxu0
    %v2013 = vadd.f32 %v1950, %v2012
    %v2014 = vpop.f32.mrb[0].mxu0
    %v2015 = vadd.f32 %v1952, %v2014
    %v2016 = vpop.f32.mrb[0].mxu0
    %v2017 = vadd.f32 %v1954, %v2016
    %v2018 = vpop.f32.mrb[0].mxu0
    %v2019 = vadd.f32 %v1956, %v2018
    %2020 = vmatprep.mubr.bf16.mxu0 %v458
    %2021 = vmatmul.mubr.bf16.gmra.mrb[0].mxu0 %v446
    %v2022 = vpop.f32.mrb[0].mxu0
    %v2023 = vadd.f32 %v1960, %v2022
    %v2024 = vpop.f32.mrb[0].mxu0
    %v2025 = vadd.f32 %v1962, %v2024
    %v2026 = vpop.f32.mrb[0].mxu0
    %v2027 = vadd.f32 %v1964, %v2026
    %v2028 = vpop.f32.mrb[0].mxu0
    %v2029 = vadd.f32 %v1966, %v2028
    %2030 = vmatprep.mubr.bf16.mxu0 %v459
    %2031 = vmatmul.mubr.bf16.gmra.mrb[0].mxu0 %v447
    %v2032 = vpop.f32.mrb[0].mxu0
    %v2033 = vadd.f32 %v1970, %v2032
    %v2034 = vpop.f32.mrb[0].mxu0
    %v2035 = vadd.f32 %v1972, %v2034
    %v2036 = vpop.f32.mrb[0].mxu0
    %v2037 = vadd.f32 %v1974, %v2036
    %v2038 = vpop.f32.mrb[0].mxu0
    %v2039 = vadd.f32 %v1976, %v2038
    %2040 = vdwg.mxu0
    %2041 = vmatprep.subr.bf16.mxu0 %v1628
    %2042 = vmatpush1.bf16.msra.mxu0 %v1627
    %2043 = vmatprep.subr.bf16.mxu0 %v1634
    %2044 = vmatpush1.bf16.msra.mxu0 %v1633
    %2045 = vmatprep.subr.bf16.mxu0 %v1640
    %2046 = vmatpush1.bf16.msra.mxu0 %v1639
    %2047 = vmatprep.subr.bf16.mxu0 %v1646
    %2048 = vmatpush1.bf16.msra.mxu0 %v1645
    %2049 = vmatprep.subr.bf16.mxu0 %v1652
    %2050 = vmatpush1.bf16.msra.mxu0 %v1651
    %2051 = vmatprep.subr.bf16.mxu0 %v1658
    %2052 = vmatpush1.bf16.msra.mxu0 %v1657
    %2053 = vmatprep.subr.bf16.mxu0 %v1664
    %2054 = vmatpush1.bf16.msra.mxu0 %v1663
    %2055 = vmatprep.subr.bf16.mxu0 %v1670
    %2056 = vmatpush1.bf16.msra.mxu0 %v1669
    %2057 = vmatprep.subr.bf16.mxu0 0
    %2058 = vmatpush1.bf16.msra.mxu0 0
    %2059 = vmatprep.subr.bf16.mxu0 0
    %2060 = vmatpush1.bf16.msra.mxu0 0
    %2061 = vmatprep.subr.bf16.mxu0 0
    %2062 = vmatpush1.bf16.msra.mxu0 0
    %2063 = vmatprep.subr.bf16.mxu0 0
    %2064 = vmatpush1.bf16.msra.mxu0 0
    %2065 = vmatprep.subr.bf16.mxu0 0
    %2066 = vmatpush1.bf16.msra.mxu0 0
    %2067 = vmatprep.subr.bf16.mxu0 0
    %2068 = vmatpush1.bf16.msra.mxu0 0
    %2069 = vmatprep.subr.bf16.mxu0 0
    %2070 = vmatpush1.bf16.msra.mxu0 0
    %2071 = vmatprep.subr.bf16.mxu0 0
    %2072 = vmatpush1.bf16.msra.mxu0 0
    %2073 = vmatprep.mubr.bf16.mxu0 0
    %2074 = vmatmul.mubr.bf16.gmra.mrb[0].mxu0 %v469
    %v2075 = vpop.f32.mrb[0].mxu0
    %v2076 = vadd.f32 %v2013, %v2075
    %v2077 = vpop.f32.mrb[0].mxu0
    %v2078 = vadd.f32 %v2015, %v2077
    %v2079 = vpop.f32.mrb[0].mxu0
    %v2080 = vadd.f32 %v2017, %v2079
    %v2081 = vpop.f32.mrb[0].mxu0
    %v2082 = vadd.f32 %v2019, %v2081
    %2083 = vmatprep.mubr.bf16.mxu0 0
    %2084 = vmatmul.mubr.bf16.gmra.mrb[0].mxu0 %v470
    %v2085 = vpop.f32.mrb[0].mxu0
    %v2086 = vadd.f32 %v2023, %v2085
    %v2087 = vpop.f32.mrb[0].mxu0
    %v2088 = vadd.f32 %v2025, %v2087
    %v2089 = vpop.f32.mrb[0].mxu0
    %v2090 = vadd.f32 %v2027, %v2089
    %v2091 = vpop.f32.mrb[0].mxu0
    %v2092 = vadd.f32 %v2029, %v2091
    %2093 = vmatprep.mubr.bf16.mxu0 0
    %2094 = vmatmul.mubr.bf16.gmra.mrb[0].mxu0 %v471
    %v2095 = vpop.f32.mrb[0].mxu0
    %v2096 = vadd.f32 %v2033, %v2095
    %v2097 = vpop.f32.mrb[0].mxu0
    %v2098 = vadd.f32 %v2035, %v2097
    %v2099 = vpop.f32.mrb[0].mxu0
    %v2100 = vadd.f32 %v2037, %v2099
    %v2101 = vpop.f32.mrb[0].mxu0
    %v2102 = vadd.f32 %v2039, %v2101
    %2103 = vdwg.mxu0
    %2104 = vmatprep.subr.bf16.mxu0 %v1438
    %2105 = vmatpush1.bf16.msra.mxu0 %v1437
    %2106 = vmatprep.subr.bf16.mxu0 %v1444
    %2107 = vmatpush1.bf16.msra.mxu0 %v1443
    %2108 = vmatprep.subr.bf16.mxu0 %v1450
    %2109 = vmatpush1.bf16.msra.mxu0 %v1449
    %2110 = vmatprep.subr.bf16.mxu0 %v1456
    %2111 = vmatpush1.bf16.msra.mxu0 %v1455
    %2112 = vmatprep.subr.bf16.mxu0 %v1462
    %2113 = vmatpush1.bf16.msra.mxu0 %v1461
    %2114 = vmatprep.subr.bf16.mxu0 %v1468
    %2115 = vmatpush1.bf16.msra.mxu0 %v1467
    %2116 = vmatprep.subr.bf16.mxu0 %v1474
    %2117 = vmatpush1.bf16.msra.mxu0 %v1473
    %2118 = vmatprep.subr.bf16.mxu0 %v1480
    %2119 = vmatpush1.bf16.msra.mxu0 %v1479
    %2120 = vmatprep.subr.bf16.mxu0 %v1486
    %2121 = vmatpush1.bf16.msra.mxu0 %v1485
    %2122 = vmatprep.subr.bf16.mxu0 %v1492
    %2123 = vmatpush1.bf16.msra.mxu0 %v1491
    %2124 = vmatprep.subr.bf16.mxu0 %v1498
    %2125 = vmatpush1.bf16.msra.mxu0 %v1497
    %2126 = vmatprep.subr.bf16.mxu0 %v1504
    %2127 = vmatpush1.bf16.msra.mxu0 %v1503
    %2128 = vmatprep.subr.bf16.mxu0 %v1510
    %2129 = vmatpush1.bf16.msra.mxu0 %v1509
    %2130 = vmatprep.subr.bf16.mxu0 %v1516
    %2131 = vmatpush1.bf16.msra.mxu0 %v1515
    %2132 = vmatprep.subr.bf16.mxu0 %v1522
    %2133 = vmatpush1.bf16.msra.mxu0 %v1521
    %2134 = vmatprep.subr.bf16.mxu0 %v1528
    %2135 = vmatpush1.bf16.msra.mxu0 %v1527
    %2136 = vmatprep.mubr.bf16.mxu0 %v433
    %2137 = vmatmul.mubr.bf16.gmra.mrb[0].mxu0 %v421
    %v2138 = vpop.f32.mrb[0].mxu0
    %v2139 = vadd.f32 0.0, %v2138
    %v2140 = vpop.f32.mrb[0].mxu0
    %v2141 = vadd.f32 0.0, %v2140
    %v2142 = vpop.f32.mrb[0].mxu0
    %v2143 = vadd.f32 0.0, %v2142
    %v2144 = vpop.f32.mrb[0].mxu0
    %v2145 = vadd.f32 0.0, %v2144
    %2146 = vmatprep.mubr.bf16.mxu0 %v434
    %2147 = vmatmul.mubr.bf16.gmra.mrb[0].mxu0 %v422
    %v2148 = vpop.f32.mrb[0].mxu0
    %v2149 = vadd.f32 0.0, %v2148
    %v2150 = vpop.f32.mrb[0].mxu0
    %v2151 = vadd.f32 0.0, %v2150
    %v2152 = vpop.f32.mrb[0].mxu0
    %v2153 = vadd.f32 0.0, %v2152
    %v2154 = vpop.f32.mrb[0].mxu0
    %v2155 = vadd.f32 0.0, %v2154
    %2156 = vmatprep.mubr.bf16.mxu0 %v435
    %2157 = vmatmul.mubr.bf16.gmra.mrb[0].mxu0 %v423
    %v2158 = vpop.f32.mrb[0].mxu0
    %v2159 = vadd.f32 0.0, %v2158
    %v2160 = vpop.f32.mrb[0].mxu0
    %v2161 = vadd.f32 0.0, %v2160
    %v2162 = vpop.f32.mrb[0].mxu0
    %v2163 = vadd.f32 0.0, %v2162
    %v2164 = vpop.f32.mrb[0].mxu0
    %v2165 = vadd.f32 0.0, %v2164
    %2166 = vdwg.mxu0
    %2167 = vmatprep.subr.bf16.mxu0 %v1534
    %2168 = vmatpush1.bf16.msra.mxu0 %v1533
    %2169 = vmatprep.subr.bf16.mxu0 %v1540
    %2170 = vmatpush1.bf16.msra.mxu0 %v1539
    %2171 = vmatprep.subr.bf16.mxu0 %v1546
    %2172 = vmatpush1.bf16.msra.mxu0 %v1545
    %2173 = vmatprep.subr.bf16.mxu0 %v1552
    %2174 = vmatpush1.bf16.msra.mxu0 %v1551
    %2175 = vmatprep.subr.bf16.mxu0 %v1558
    %2176 = vmatpush1.bf16.msra.mxu0 %v1557
    %2177 = vmatprep.subr.bf16.mxu0 %v1564
    %2178 = vmatpush1.bf16.msra.mxu0 %v1563
    %2179 = vmatprep.subr.bf16.mxu0 %v1570
    %2180 = vmatpush1.bf16.msra.mxu0 %v1569
    %2181 = vmatprep.subr.bf16.mxu0 %v1576
    %2182 = vmatpush1.bf16.msra.mxu0 %v1575
    %2183 = vmatprep.subr.bf16.mxu0 %v1582
    %2184 = vmatpush1.bf16.msra.mxu0 %v1581
    %2185 = vmatprep.subr.bf16.mxu0 %v1588
    %2186 = vmatpush1.bf16.msra.mxu0 %v1587
    %2187 = vmatprep.subr.bf16.mxu0 %v1594
    %2188 = vmatpush1.bf16.msra.mxu0 %v1593
    %2189 = vmatprep.subr.bf16.mxu0 %v1600
    %2190 = vmatpush1.bf16.msra.mxu0 %v1599
    %2191 = vmatprep.subr.bf16.mxu0 %v1606
    %2192 = vmatpush1.bf16.msra.mxu0 %v1605
    %2193 = vmatprep.subr.bf16.mxu0 %v1612
    %2194 = vmatpush1.bf16.msra.mxu0 %v1611
    %2195 = vmatprep.subr.bf16.mxu0 %v1618
    %2196 = vmatpush1.bf16.msra.mxu0 %v1617
    %2197 = vmatprep.subr.bf16.mxu0 %v1624
    %2198 = vmatpush1.bf16.msra.mxu0 %v1623
    %2199 = vmatprep.mubr.bf16.mxu0 %v457
    %2200 = vmatmul.mubr.bf16.gmra.mrb[0].mxu0 %v445
    %v2201 = vpop.f32.mrb[0].mxu0
    %v2202 = vadd.f32 %v2139, %v2201
    %v2203 = vpop.f32.mrb[0].mxu0
    %v2204 = vadd.f32 %v2141, %v2203
    %v2205 = vpop.f32.mrb[0].mxu0
    %v2206 = vadd.f32 %v2143, %v2205
    %v2207 = vpop.f32.mrb[0].mxu0
    %v2208 = vadd.f32 %v2145, %v2207
    %2209 = vmatprep.mubr.bf16.mxu0 %v458
    %2210 = vmatmul.mubr.bf16.gmra.mrb[0].mxu0 %v446
    %v2211 = vpop.f32.mrb[0].mxu0
    %v2212 = vadd.f32 %v2149, %v2211
    %v2213 = vpop.f32.mrb[0].mxu0
    %v2214 = vadd.f32 %v2151, %v2213
    %v2215 = vpop.f32.mrb[0].mxu0
    %v2216 = vadd.f32 %v2153, %v2215
    %v2217 = vpop.f32.mrb[0].mxu0
    %v2218 = vadd.f32 %v2155, %v2217
    %2219 = vmatprep.mubr.bf16.mxu0 %v459
    %2220 = vmatmul.mubr.bf16.gmra.mrb[0].mxu0 %v447
    %v2221 = vpop.f32.mrb[0].mxu0
    %v2222 = vadd.f32 %v2159, %v2221
    %v2223 = vpop.f32.mrb[0].mxu0
    %v2224 = vadd.f32 %v2161, %v2223
    %v2225 = vpop.f32.mrb[0].mxu0
    %v2226 = vadd.f32 %v2163, %v2225
    %v2227 = vpop.f32.mrb[0].mxu0
    %v2228 = vadd.f32 %v2165, %v2227
    %2229 = vdwg.mxu0
    %2230 = vmatprep.subr.bf16.mxu0 %v1630
    %2231 = vmatpush1.bf16.msra.mxu0 %v1629
    %2232 = vmatprep.subr.bf16.mxu0 %v1636
    %2233 = vmatpush1.bf16.msra.mxu0 %v1635
    %2234 = vmatprep.subr.bf16.mxu0 %v1642
    %2235 = vmatpush1.bf16.msra.mxu0 %v1641
    %2236 = vmatprep.subr.bf16.mxu0 %v1648
    %2237 = vmatpush1.bf16.msra.mxu0 %v1647
    %2238 = vmatprep.subr.bf16.mxu0 %v1654
    %2239 = vmatpush1.bf16.msra.mxu0 %v1653
    %2240 = vmatprep.subr.bf16.mxu0 %v1660
    %2241 = vmatpush1.bf16.msra.mxu0 %v1659
    %2242 = vmatprep.subr.bf16.mxu0 %v1666
    %2243 = vmatpush1.bf16.msra.mxu0 %v1665
    %2244 = vmatprep.subr.bf16.mxu0 %v1672
    %2245 = vmatpush1.bf16.msra.mxu0 %v1671
    %2246 = vmatprep.subr.bf16.mxu0 0
    %2247 = vmatpush1.bf16.msra.mxu0 0
    %2248 = vmatprep.subr.bf16.mxu0 0
    %2249 = vmatpush1.bf16.msra.mxu0 0
    %2250 = vmatprep.subr.bf16.mxu0 0
    %2251 = vmatpush1.bf16.msra.mxu0 0
    %2252 = vmatprep.subr.bf16.mxu0 0
    %2253 = vmatpush1.bf16.msra.mxu0 0
    %2254 = vmatprep.subr.bf16.mxu0 0
    %2255 = vmatpush1.bf16.msra.mxu0 0
    %2256 = vmatprep.subr.bf16.mxu0 0
    %2257 = vmatpush1.bf16.msra.mxu0 0
    %2258 = vmatprep.subr.bf16.mxu0 0
    %2259 = vmatpush1.bf16.msra.mxu0 0
    %2260 = vmatprep.subr.bf16.mxu0 0
    %2261 = vmatpush1.bf16.msra.mxu0 0
    %2262 = vmatprep.mubr.bf16.mxu0 0
    %2263 = vmatmul.mubr.bf16.gmra.mrb[0].mxu0 %v469
    %v2264 = vpop.f32.mrb[0].mxu0
    %v2265 = vadd.f32 %v2202, %v2264
    %v2266 = vpop.f32.mrb[0].mxu0
    %v2267 = vadd.f32 %v2204, %v2266
    %v2268 = vpop.f32.mrb[0].mxu0
    %v2269 = vadd.f32 %v2206, %v2268
    %v2270 = vpop.f32.mrb[0].mxu0
    %v2271 = vadd.f32 %v2208, %v2270
    %2272 = vmatprep.mubr.bf16.mxu0 0
    %2273 = vmatmul.mubr.bf16.gmra.mrb[0].mxu0 %v470
    %v2274 = vpop.f32.mrb[0].mxu0
    %v2275 = vadd.f32 %v2212, %v2274
    %v2276 = vpop.f32.mrb[0].mxu0
    %v2277 = vadd.f32 %v2214, %v2276
    %v2278 = vpop.f32.mrb[0].mxu0
    %v2279 = vadd.f32 %v2216, %v2278
    %v2280 = vpop.f32.mrb[0].mxu0
    %v2281 = vadd.f32 %v2218, %v2280
    %2282 = vmatprep.mubr.bf16.mxu0 0
    %2283 = vmatmul.mubr.bf16.gmra.mrb[0].mxu0 %v471
    %v2284 = vpop.f32.mrb[0].mxu0
    %v2285 = vadd.f32 %v2222, %v2284
    %v2286 = vpop.f32.mrb[0].mxu0
    %v2287 = vadd.f32 %v2224, %v2286
    %v2288 = vpop.f32.mrb[0].mxu0
    %v2289 = vadd.f32 %v2226, %v2288
    %v2290 = vpop.f32.mrb[0].mxu0
    %v2291 = vadd.f32 %v2228, %v2290
    %2292 = vdwg.mxu0
    %2293 = vmatprep.subr.bf16.mxu0 %v1440
    %2294 = vmatpush1.bf16.msra.mxu0 %v1439
    %2295 = vmatprep.subr.bf16.mxu0 %v1446
    %2296 = vmatpush1.bf16.msra.mxu0 %v1445
    %2297 = vmatprep.subr.bf16.mxu0 %v1452
    %2298 = vmatpush1.bf16.msra.mxu0 %v1451
    %2299 = vmatprep.subr.bf16.mxu0 %v1458
    %2300 = vmatpush1.bf16.msra.mxu0 %v1457
    %2301 = vmatprep.subr.bf16.mxu0 %v1464
    %2302 = vmatpush1.bf16.msra.mxu0 %v1463
    %2303 = vmatprep.subr.bf16.mxu0 %v1470
    %2304 = vmatpush1.bf16.msra.mxu0 %v1469
    %2305 = vmatprep.subr.bf16.mxu0 %v1476
    %2306 = vmatpush1.bf16.msra.mxu0 %v1475
    %2307 = vmatprep.subr.bf16.mxu0 %v1482
    %2308 = vmatpush1.bf16.msra.mxu0 %v1481
    %2309 = vmatprep.subr.bf16.mxu0 %v1488
    %2310 = vmatpush1.bf16.msra.mxu0 %v1487
    %2311 = vmatprep.subr.bf16.mxu0 %v1494
    %2312 = vmatpush1.bf16.msra.mxu0 %v1493
    %2313 = vmatprep.subr.bf16.mxu0 %v1500
    %2314 = vmatpush1.bf16.msra.mxu0 %v1499
    %2315 = vmatprep.subr.bf16.mxu0 %v1506
    %2316 = vmatpush1.bf16.msra.mxu0 %v1505
    %2317 = vmatprep.subr.bf16.mxu0 %v1512
    %2318 = vmatpush1.bf16.msra.mxu0 %v1511
    %2319 = vmatprep.subr.bf16.mxu0 %v1518
    %2320 = vmatpush1.bf16.msra.mxu0 %v1517
    %2321 = vmatprep.subr.bf16.mxu0 %v1524
    %2322 = vmatpush1.bf16.msra.mxu0 %v1523
    %2323 = vmatprep.subr.bf16.mxu0 %v1530
    %2324 = vmatpush1.bf16.msra.mxu0 %v1529
    %2325 = vmatprep.mubr.bf16.mxu0 %v433
    %2326 = vmatmul.mubr.bf16.gmra.mrb[0].mxu0 %v421
    %v2327 = vpop.f32.mrb[0].mxu0
    %v2328 = vadd.f32 0.0, %v2327
    %v2329 = vpop.f32.mrb[0].mxu0
    %v2330 = vadd.f32 0.0, %v2329
    %v2331 = vpop.f32.mrb[0].mxu0
    %v2332 = vadd.f32 0.0, %v2331
    %v2333 = vpop.f32.mrb[0].mxu0
    %v2334 = vadd.f32 0.0, %v2333
    %2335 = vmatprep.mubr.bf16.mxu0 %v434
    %2336 = vmatmul.mubr.bf16.gmra.mrb[0].mxu0 %v422
    %v2337 = vpop.f32.mrb[0].mxu0
    %v2338 = vadd.f32 0.0, %v2337
    %v2339 = vpop.f32.mrb[0].mxu0
    %v2340 = vadd.f32 0.0, %v2339
    %v2341 = vpop.f32.mrb[0].mxu0
    %v2342 = vadd.f32 0.0, %v2341
    %v2343 = vpop.f32.mrb[0].mxu0
    %v2344 = vadd.f32 0.0, %v2343
    %2345 = vmatprep.mubr.bf16.mxu0 %v435
    %2346 = vmatmul.mubr.bf16.gmra.mrb[0].mxu0 %v423
    %v2347 = vpop.f32.mrb[0].mxu0
    %v2348 = vadd.f32 0.0, %v2347
    %v2349 = vpop.f32.mrb[0].mxu0
    %v2350 = vadd.f32 0.0, %v2349
    %v2351 = vpop.f32.mrb[0].mxu0
    %v2352 = vadd.f32 0.0, %v2351
    %v2353 = vpop.f32.mrb[0].mxu0
    %v2354 = vadd.f32 0.0, %v2353
    %2355 = vdwg.mxu0
    %2356 = vmatprep.subr.bf16.mxu0 %v1536
    %2357 = vmatpush1.bf16.msra.mxu0 %v1535
    %2358 = vmatprep.subr.bf16.mxu0 %v1542
    %2359 = vmatpush1.bf16.msra.mxu0 %v1541
    %2360 = vmatprep.subr.bf16.mxu0 %v1548
    %2361 = vmatpush1.bf16.msra.mxu0 %v1547
    %2362 = vmatprep.subr.bf16.mxu0 %v1554
    %2363 = vmatpush1.bf16.msra.mxu0 %v1553
    %2364 = vmatprep.subr.bf16.mxu0 %v1560
    %2365 = vmatpush1.bf16.msra.mxu0 %v1559
    %2366 = vmatprep.subr.bf16.mxu0 %v1566
    %2367 = vmatpush1.bf16.msra.mxu0 %v1565
    %2368 = vmatprep.subr.bf16.mxu0 %v1572
    %2369 = vmatpush1.bf16.msra.mxu0 %v1571
    %2370 = vmatprep.subr.bf16.mxu0 %v1578
    %2371 = vmatpush1.bf16.msra.mxu0 %v1577
    %2372 = vmatprep.subr.bf16.mxu0 %v1584
    %2373 = vmatpush1.bf16.msra.mxu0 %v1583
    %2374 = vmatprep.subr.bf16.mxu0 %v1590
    %2375 = vmatpush1.bf16.msra.mxu0 %v1589
    %2376 = vmatprep.subr.bf16.mxu0 %v1596
    %2377 = vmatpush1.bf16.msra.mxu0 %v1595
    %2378 = vmatprep.subr.bf16.mxu0 %v1602
    %2379 = vmatpush1.bf16.msra.mxu0 %v1601
    %2380 = vmatprep.subr.bf16.mxu0 %v1608
    %2381 = vmatpush1.bf16.msra.mxu0 %v1607
    %2382 = vmatprep.subr.bf16.mxu0 %v1614
    %2383 = vmatpush1.bf16.msra.mxu0 %v1613
    %2384 = vmatprep.subr.bf16.mxu0 %v1620
    %2385 = vmatpush1.bf16.msra.mxu0 %v1619
    %2386 = vmatprep.subr.bf16.mxu0 %v1626
    %2387 = vmatpush1.bf16.msra.mxu0 %v1625
    %2388 = vmatprep.mubr.bf16.mxu0 %v457
    %2389 = vmatmul.mubr.bf16.gmra.mrb[0].mxu0 %v445
    %v2390 = vpop.f32.mrb[0].mxu0
    %v2391 = vadd.f32 %v2328, %v2390
    %v2392 = vpop.f32.mrb[0].mxu0
    %v2393 = vadd.f32 %v2330, %v2392
    %v2394 = vpop.f32.mrb[0].mxu0
    %v2395 = vadd.f32 %v2332, %v2394
    %v2396 = vpop.f32.mrb[0].mxu0
    %v2397 = vadd.f32 %v2334, %v2396
    %2398 = vmatprep.mubr.bf16.mxu0 %v458
    %2399 = vmatmul.mubr.bf16.gmra.mrb[0].mxu0 %v446
    %v2400 = vpop.f32.mrb[0].mxu0
    %v2401 = vadd.f32 %v2338, %v2400
    %v2402 = vpop.f32.mrb[0].mxu0
    %v2403 = vadd.f32 %v2340, %v2402
    %v2404 = vpop.f32.mrb[0].mxu0
    %v2405 = vadd.f32 %v2342, %v2404
    %v2406 = vpop.f32.mrb[0].mxu0
    %v2407 = vadd.f32 %v2344, %v2406
    %2408 = vmatprep.mubr.bf16.mxu0 %v459
    %2409 = vmatmul.mubr.bf16.gmra.mrb[0].mxu0 %v447
    %v2410 = vpop.f32.mrb[0].mxu0
    %v2411 = vadd.f32 %v2348, %v2410
    %v2412 = vpop.f32.mrb[0].mxu0
    %v2413 = vadd.f32 %v2350, %v2412
    %v2414 = vpop.f32.mrb[0].mxu0
    %v2415 = vadd.f32 %v2352, %v2414
    %v2416 = vpop.f32.mrb[0].mxu0
    %v2417 = vadd.f32 %v2354, %v2416
    %2418 = vdwg.mxu0
    %2419 = vmatprep.subr.bf16.mxu0 %v1632
    %2420 = vmatpush1.bf16.msra.mxu0 %v1631
    %2421 = vmatprep.subr.bf16.mxu0 %v1638
    %2422 = vmatpush1.bf16.msra.mxu0 %v1637
    %2423 = vmatprep.subr.bf16.mxu0 %v1644
    %2424 = vmatpush1.bf16.msra.mxu0 %v1643
    %2425 = vmatprep.subr.bf16.mxu0 %v1650
    %2426 = vmatpush1.bf16.msra.mxu0 %v1649
    %2427 = vmatprep.subr.bf16.mxu0 %v1656
    %2428 = vmatpush1.bf16.msra.mxu0 %v1655
    %2429 = vmatprep.subr.bf16.mxu0 %v1662
    %2430 = vmatpush1.bf16.msra.mxu0 %v1661
    %2431 = vmatprep.subr.bf16.mxu0 %v1668
    %2432 = vmatpush1.bf16.msra.mxu0 %v1667
    %2433 = vmatprep.subr.bf16.mxu0 %v1674
    %2434 = vmatpush1.bf16.msra.mxu0 %v1673
    %2435 = vmatprep.subr.bf16.mxu0 0
    %2436 = vmatpush1.bf16.msra.mxu0 0
    %2437 = vmatprep.subr.bf16.mxu0 0
    %2438 = vmatpush1.bf16.msra.mxu0 0
    %2439 = vmatprep.subr.bf16.mxu0 0
    %2440 = vmatpush1.bf16.msra.mxu0 0
    %2441 = vmatprep.subr.bf16.mxu0 0
    %2442 = vmatpush1.bf16.msra.mxu0 0
    %2443 = vmatprep.subr.bf16.mxu0 0
    %2444 = vmatpush1.bf16.msra.mxu0 0
    %2445 = vmatprep.subr.bf16.mxu0 0
    %2446 = vmatpush1.bf16.msra.mxu0 0
    %2447 = vmatprep.subr.bf16.mxu0 0
    %2448 = vmatpush1.bf16.msra.mxu0 0
    %2449 = vmatprep.subr.bf16.mxu0 0
    %2450 = vmatpush1.bf16.msra.mxu0 0
    %2451 = vmatprep.mubr.bf16.mxu0 0
    %2452 = vmatmul.mubr.bf16.gmra.mrb[0].mxu0 %v469
    %v2453 = vpop.f32.mrb[0].mxu0
    %v2454 = vadd.f32 %v2391, %v2453
    %v2455 = vpop.f32.mrb[0].mxu0
    %v2456 = vadd.f32 %v2393, %v2455
    %v2457 = vpop.f32.mrb[0].mxu0
    %v2458 = vadd.f32 %v2395, %v2457
    %v2459 = vpop.f32.mrb[0].mxu0
    %v2460 = vadd.f32 %v2397, %v2459
    %2461 = vmatprep.mubr.bf16.mxu0 0
    %2462 = vmatmul.mubr.bf16.gmra.mrb[0].mxu0 %v470
    %v2463 = vpop.f32.mrb[0].mxu0
    %v2464 = vadd.f32 %v2401, %v2463
    %v2465 = vpop.f32.mrb[0].mxu0
    %v2466 = vadd.f32 %v2403, %v2465
    %v2467 = vpop.f32.mrb[0].mxu0
    %v2468 = vadd.f32 %v2405, %v2467
    %v2469 = vpop.f32.mrb[0].mxu0
    %v2470 = vadd.f32 %v2407, %v2469
    %2471 = vmatprep.mubr.bf16.mxu0 0
    %2472 = vmatmul.mubr.bf16.gmra.mrb[0].mxu0 %v471
    %v2473 = vpop.f32.mrb[0].mxu0
    %v2474 = vadd.f32 %v2411, %v2473
    %v2475 = vpop.f32.mrb[0].mxu0
    %v2476 = vadd.f32 %v2413, %v2475
    %v2477 = vpop.f32.mrb[0].mxu0
    %v2478 = vadd.f32 %v2415, %v2477
    %v2479 = vpop.f32.mrb[0].mxu0
    %v2480 = vadd.f32 %v2417, %v2479
    %2481 = vdwg.mxu0
    %v2482 = vld [vmem:[#allocation4] sm:$0x3f]
    %v2484 = vlaneseq
    %v2485 = vshrl.u32 %v2484, 7
    %v2486 = vsub.s32 0, %v2485
    %v2487 = vrot.slane %v2482, %v2486
    %v2488 = vlaneseq
    %v2489 = vshrl.u32 %v2488, 7
    %v2490 = vsub.s32 1, %v2489
    %v2491 = vrot.slane %v2482, %v2490
    %v2492 = vlaneseq
    %v2493 = vshrl.u32 %v2492, 7
    %v2494 = vsub.s32 2, %v2493
    %v2495 = vrot.slane %v2482, %v2494
    %v2496 = vlaneseq
    %v2497 = vshrl.u32 %v2496, 7
    %v2498 = vsub.s32 3, %v2497
    %v2499 = vrot.slane %v2482, %v2498
    %v2500 = vlaneseq
    %v2501 = vshrl.u32 %v2500, 7
    %v2502 = vsub.s32 4, %v2501
    %v2503 = vrot.slane %v2482, %v2502
    %v2504 = vlaneseq
    %v2505 = vshrl.u32 %v2504, 7
    %v2506 = vsub.s32 5, %v2505
    %v2507 = vrot.slane %v2482, %v2506
    %v2514 = vmul.f32 %v2076, %v2487
    %v2515 = vmul.f32 %v2078, %v2491
    %v2516 = vmul.f32 %v2265, %v2495
    %v2517 = vmul.f32 %v2267, %v2499
    %v2518 = vmul.f32 %v2454, %v2503
    %v2519 = vmul.f32 %v2456, %v2507
    %v2520 = vmul.f32 %v2080, %v2487
    %v2521 = vmul.f32 %v2082, %v2491
    %v2522 = vmul.f32 %v2269, %v2495
    %v2523 = vmul.f32 %v2271, %v2499
    %v2524 = vmul.f32 %v2458, %v2503
    %v2525 = vmul.f32 %v2460, %v2507
    %v2526 = vmul.f32 %v2086, %v2487
    %v2527 = vmul.f32 %v2088, %v2491
    %v2528 = vmul.f32 %v2275, %v2495
    %v2529 = vmul.f32 %v2277, %v2499
    %v2530 = vmul.f32 %v2464, %v2503
    %v2531 = vmul.f32 %v2466, %v2507
    %v2532 = vmul.f32 %v2090, %v2487
    %v2533 = vmul.f32 %v2092, %v2491
    %v2534 = vmul.f32 %v2279, %v2495
    %v2535 = vmul.f32 %v2281, %v2499
    %v2536 = vmul.f32 %v2468, %v2503
    %v2537 = vmul.f32 %v2470, %v2507
    %v2538 = vmul.f32 %v2096, %v2487
    %v2539 = vmul.f32 %v2098, %v2491
    %v2540 = vmul.f32 %v2285, %v2495
    %v2541 = vmul.f32 %v2287, %v2499
    %v2542 = vmul.f32 %v2474, %v2503
    %v2543 = vmul.f32 %v2476, %v2507
    %v2544 = vmul.f32 %v2100, %v2487
    %v2545 = vmul.f32 %v2102, %v2491
    %v2546 = vmul.f32 %v2289, %v2495
    %v2547 = vmul.f32 %v2291, %v2499
    %v2548 = vmul.f32 %v2478, %v2503
    %v2549 = vmul.f32 %v2480, %v2507
    %v2550 = vld [vmem:[#allocation6] sm:$0x3f]
    %v2552 = vlaneseq
    %v2553 = vshrl.u32 %v2552, 7
    %v2554 = vsub.s32 0, %v2553
    %v2555 = vrot.slane %v2550, %v2554
    %v2556 = vlaneseq
    %v2557 = vshrl.u32 %v2556, 7
    %v2558 = vsub.s32 1, %v2557
    %v2559 = vrot.slane %v2550, %v2558
    %v2560 = vlaneseq
    %v2561 = vshrl.u32 %v2560, 7
    %v2562 = vsub.s32 2, %v2561
    %v2563 = vrot.slane %v2550, %v2562
    %v2564 = vlaneseq
    %v2565 = vshrl.u32 %v2564, 7
    %v2566 = vsub.s32 3, %v2565
    %v2567 = vrot.slane %v2550, %v2566
    %v2568 = vlaneseq
    %v2569 = vshrl.u32 %v2568, 7
    %v2570 = vsub.s32 4, %v2569
    %v2571 = vrot.slane %v2550, %v2570
    %v2572 = vlaneseq
    %v2573 = vshrl.u32 %v2572, 7
    %v2574 = vsub.s32 5, %v2573
    %v2575 = vrot.slane %v2550, %v2574
    %v2582 = vadd.f32 %v2514, %v2555
    %v2583 = vadd.f32 %v2515, %v2559
    %v2584 = vadd.f32 %v2516, %v2563
    %v2585 = vadd.f32 %v2517, %v2567
    %v2586 = vadd.f32 %v2518, %v2571
    %v2587 = vadd.f32 %v2519, %v2575
    %v2588 = vadd.f32 %v2520, %v2555
    %v2589 = vadd.f32 %v2521, %v2559
    %v2590 = vadd.f32 %v2522, %v2563
    %v2591 = vadd.f32 %v2523, %v2567
    %v2592 = vadd.f32 %v2524, %v2571
    %v2593 = vadd.f32 %v2525, %v2575
    %v2594 = vadd.f32 %v2526, %v2555
    %v2595 = vadd.f32 %v2527, %v2559
    %v2596 = vadd.f32 %v2528, %v2563
    %v2597 = vadd.f32 %v2529, %v2567
    %v2598 = vadd.f32 %v2530, %v2571
    %v2599 = vadd.f32 %v2531, %v2575
    %v2600 = vadd.f32 %v2532, %v2555
    %v2601 = vadd.f32 %v2533, %v2559
    %v2602 = vadd.f32 %v2534, %v2563
    %v2603 = vadd.f32 %v2535, %v2567
    %v2604 = vadd.f32 %v2536, %v2571
    %v2605 = vadd.f32 %v2537, %v2575
    %v2606 = vadd.f32 %v2538, %v2555
    %v2607 = vadd.f32 %v2539, %v2559
    %v2608 = vadd.f32 %v2540, %v2563
    %v2609 = vadd.f32 %v2541, %v2567
    %v2610 = vadd.f32 %v2542, %v2571
    %v2611 = vadd.f32 %v2543, %v2575
    %v2612 = vadd.f32 %v2544, %v2555
    %v2613 = vadd.f32 %v2545, %v2559
    %v2614 = vadd.f32 %v2546, %v2563
    %v2615 = vadd.f32 %v2547, %v2567
    %v2616 = vadd.f32 %v2548, %v2571
    %v2617 = vadd.f32 %v2549, %v2575
    %v2618 = vmax.f32 %v2582, %v2585
    %v2619 = vmax.f32 %v2583, %v2586
    %v2620 = vmax.f32 %v2584, %v2587
    %v2621 = vmax.f32 %v2588, %v2591
    %v2622 = vmax.f32 %v2589, %v2592
    %v2623 = vmax.f32 %v2590, %v2593
    %v2624 = vmax.f32 %v2594, %v2597
    %v2625 = vmax.f32 %v2595, %v2598
    %v2626 = vmax.f32 %v2596, %v2599
    %v2627 = vmax.f32 %v2600, %v2603
    %v2628 = vmax.f32 %v2601, %v2604
    %v2629 = vmax.f32 %v2602, %v2605
    %v2630 = vmax.f32 %v2606, %v2609
    %v2631 = vmax.f32 %v2607, %v2610
    %v2632 = vmax.f32 %v2608, %v2611
    %v2633 = vmax.f32 %v2612, %v2615
    %v2634 = vmax.f32 %v2613, %v2616
    %v2635 = vmax.f32 %v2614, %v2617
    %v2654 = vcombine.low %v2618, %v2619
    %v2655 = vcombine.high %v2618, %v2619
    %v2656 = vcombine.high %v2620, %v2620
    %v2658 = vunpack.c.l.s4 1983009808
    %v2659 = vunpack.c.0.s8 %v2658
    %v2660 = vlaneseq
    %v2661 = vshrl.u32 %v2660, 7
    %v2662 = vsub.s32 %v2659, %v2661
    %v2663 = vrot.slane %v2654, %v2662
    %v2665 = vunpack.c.l.s4 1983009808
    %v2666 = vunpack.c.0.s8 %v2665
    %v2667 = vlaneseq
    %v2668 = vshrl.u32 %v2667, 7
    %v2669 = vsub.s32 %v2666, %v2668
    %v2670 = vrot.slane %v2655, %v2669
    %v2672 = vunpack.c.l.s4 1983009808
    %v2673 = vunpack.c.0.s8 %v2672
    %v2674 = vlaneseq
    %v2675 = vshrl.u32 %v2674, 7
    %v2676 = vsub.s32 %v2673, %v2675
    %v2677 = vrot.slane %v2620, %v2676
    %v2679 = vunpack.c.l.s4 1983009808
    %v2680 = vunpack.c.0.s8 %v2679
    %v2681 = vlaneseq
    %v2682 = vshrl.u32 %v2681, 7
    %v2683 = vsub.s32 %v2680, %v2682
    %v2684 = vrot.slane %v2656, %v2683
    %v2685 = vcombine.low %v2663, %v2677
    %v2686 = vcombine.high %v2663, %v2677
    %v2687 = vcombine.low %v2670, %v2684
    %v2688 = vcombine.high %v2670, %v2684
    %v2689 = vcombine.low %v2621, %v2622
    %v2690 = vcombine.high %v2621, %v2622
    %v2691 = vcombine.high %v2623, %v2623
    %v2693 = vunpack.c.l.s4 1983009808
    %v2694 = vunpack.c.0.s8 %v2693
    %v2695 = vlaneseq
    %v2696 = vshrl.u32 %v2695, 7
    %v2697 = vsub.s32 %v2694, %v2696
    %v2698 = vrot.slane %v2689, %v2697
    %v2700 = vunpack.c.l.s4 1983009808
    %v2701 = vunpack.c.0.s8 %v2700
    %v2702 = vlaneseq
    %v2703 = vshrl.u32 %v2702, 7
    %v2704 = vsub.s32 %v2701, %v2703
    %v2705 = vrot.slane %v2690, %v2704
    %v2707 = vunpack.c.l.s4 1983009808
    %v2708 = vunpack.c.0.s8 %v2707
    %v2709 = vlaneseq
    %v2710 = vshrl.u32 %v2709, 7
    %v2711 = vsub.s32 %v2708, %v2710
    %v2712 = vrot.slane %v2623, %v2711
    %v2714 = vunpack.c.l.s4 1983009808
    %v2715 = vunpack.c.0.s8 %v2714
    %v2716 = vlaneseq
    %v2717 = vshrl.u32 %v2716, 7
    %v2718 = vsub.s32 %v2715, %v2717
    %v2719 = vrot.slane %v2691, %v2718
    %v2720 = vcombine.low %v2698, %v2712
    %v2721 = vcombine.high %v2698, %v2712
    %v2722 = vcombine.low %v2705, %v2719
    %v2723 = vcombine.high %v2705, %v2719
    %v2724 = vcombine.low %v2624, %v2625
    %v2725 = vcombine.high %v2624, %v2625
    %v2726 = vcombine.high %v2626, %v2626
    %v2728 = vunpack.c.l.s4 1983009808
    %v2729 = vunpack.c.0.s8 %v2728
    %v2730 = vlaneseq
    %v2731 = vshrl.u32 %v2730, 7
    %v2732 = vsub.s32 %v2729, %v2731
    %v2733 = vrot.slane %v2724, %v2732
    %v2735 = vunpack.c.l.s4 1983009808
    %v2736 = vunpack.c.0.s8 %v2735
    %v2737 = vlaneseq
    %v2738 = vshrl.u32 %v2737, 7
    %v2739 = vsub.s32 %v2736, %v2738
    %v2740 = vrot.slane %v2725, %v2739
    %v2742 = vunpack.c.l.s4 1983009808
    %v2743 = vunpack.c.0.s8 %v2742
    %v2744 = vlaneseq
    %v2745 = vshrl.u32 %v2744, 7
    %v2746 = vsub.s32 %v2743, %v2745
    %v2747 = vrot.slane %v2626, %v2746
    %v2749 = vunpack.c.l.s4 1983009808
    %v2750 = vunpack.c.0.s8 %v2749
    %v2751 = vlaneseq
    %v2752 = vshrl.u32 %v2751, 7
    %v2753 = vsub.s32 %v2750, %v2752
    %v2754 = vrot.slane %v2726, %v2753
    %v2755 = vcombine.low %v2733, %v2747
    %v2756 = vcombine.high %v2733, %v2747
    %v2757 = vcombine.low %v2740, %v2754
    %v2758 = vcombine.high %v2740, %v2754
    %v2759 = vcombine.low %v2627, %v2628
    %v2760 = vcombine.high %v2627, %v2628
    %v2761 = vcombine.high %v2629, %v2629
    %v2763 = vunpack.c.l.s4 1983009808
    %v2764 = vunpack.c.0.s8 %v2763
    %v2765 = vlaneseq
    %v2766 = vshrl.u32 %v2765, 7
    %v2767 = vsub.s32 %v2764, %v2766
    %v2768 = vrot.slane %v2759, %v2767
    %v2770 = vunpack.c.l.s4 1983009808
    %v2771 = vunpack.c.0.s8 %v2770
    %v2772 = vlaneseq
    %v2773 = vshrl.u32 %v2772, 7
    %v2774 = vsub.s32 %v2771, %v2773
    %v2775 = vrot.slane %v2760, %v2774
    %v2777 = vunpack.c.l.s4 1983009808
    %v2778 = vunpack.c.0.s8 %v2777
    %v2779 = vlaneseq
    %v2780 = vshrl.u32 %v2779, 7
    %v2781 = vsub.s32 %v2778, %v2780
    %v2782 = vrot.slane %v2629, %v2781
    %v2784 = vunpack.c.l.s4 1983009808
    %v2785 = vunpack.c.0.s8 %v2784
    %v2786 = vlaneseq
    %v2787 = vshrl.u32 %v2786, 7
    %v2788 = vsub.s32 %v2785, %v2787
    %v2789 = vrot.slane %v2761, %v2788
    %v2790 = vcombine.low %v2768, %v2782
    %v2791 = vcombine.high %v2768, %v2782
    %v2792 = vcombine.low %v2775, %v2789
    %v2793 = vcombine.high %v2775, %v2789
    %v2794 = vcombine.low %v2630, %v2631
    %v2795 = vcombine.high %v2630, %v2631
    %v2796 = vcombine.high %v2632, %v2632
    %v2798 = vunpack.c.l.s4 1983009808
    %v2799 = vunpack.c.0.s8 %v2798
    %v2800 = vlaneseq
    %v2801 = vshrl.u32 %v2800, 7
    %v2802 = vsub.s32 %v2799, %v2801
    %v2803 = vrot.slane %v2794, %v2802
    %v2805 = vunpack.c.l.s4 1983009808
    %v2806 = vunpack.c.0.s8 %v2805
    %v2807 = vlaneseq
    %v2808 = vshrl.u32 %v2807, 7
    %v2809 = vsub.s32 %v2806, %v2808
    %v2810 = vrot.slane %v2795, %v2809
    %v2812 = vunpack.c.l.s4 1983009808
    %v2813 = vunpack.c.0.s8 %v2812
    %v2814 = vlaneseq
    %v2815 = vshrl.u32 %v2814, 7
    %v2816 = vsub.s32 %v2813, %v2815
    %v2817 = vrot.slane %v2632, %v2816
    %v2819 = vunpack.c.l.s4 1983009808
    %v2820 = vunpack.c.0.s8 %v2819
    %v2821 = vlaneseq
    %v2822 = vshrl.u32 %v2821, 7
    %v2823 = vsub.s32 %v2820, %v2822
    %v2824 = vrot.slane %v2796, %v2823
    %v2825 = vcombine.low %v2803, %v2817
    %v2826 = vcombine.high %v2803, %v2817
    %v2827 = vcombine.low %v2810, %v2824
    %v2828 = vcombine.high %v2810, %v2824
    %v2829 = vcombine.low %v2633, %v2634
    %v2830 = vcombine.high %v2633, %v2634
    %v2831 = vcombine.high %v2635, %v2635
    %v2833 = vunpack.c.l.s4 1983009808
    %v2834 = vunpack.c.0.s8 %v2833
    %v2835 = vlaneseq
    %v2836 = vshrl.u32 %v2835, 7
    %v2837 = vsub.s32 %v2834, %v2836
    %v2838 = vrot.slane %v2829, %v2837
    %v2840 = vunpack.c.l.s4 1983009808
    %v2841 = vunpack.c.0.s8 %v2840
    %v2842 = vlaneseq
    %v2843 = vshrl.u32 %v2842, 7
    %v2844 = vsub.s32 %v2841, %v2843
    %v2845 = vrot.slane %v2830, %v2844
    %v2847 = vunpack.c.l.s4 1983009808
    %v2848 = vunpack.c.0.s8 %v2847
    %v2849 = vlaneseq
    %v2850 = vshrl.u32 %v2849, 7
    %v2851 = vsub.s32 %v2848, %v2850
    %v2852 = vrot.slane %v2635, %v2851
    %v2854 = vunpack.c.l.s4 1983009808
    %v2855 = vunpack.c.0.s8 %v2854
    %v2856 = vlaneseq
    %v2857 = vshrl.u32 %v2856, 7
    %v2858 = vsub.s32 %v2855, %v2857
    %v2859 = vrot.slane %v2831, %v2858
    %v2860 = vcombine.low %v2838, %v2852
    %v2861 = vcombine.high %v2838, %v2852
    %v2862 = vcombine.low %v2845, %v2859
    %v2863 = vcombine.high %v2845, %v2859
    %v2864 = vcombine.high %v2685, %v2685
    %v2866 = vunpack.c.l.s4 1983009808
    %v2867 = vunpack.c.0.s8 %v2866
    %v2868 = vlaneseq
    %v2869 = vshrl.u32 %v2868, 7
    %v2870 = vsub.s32 %v2867, %v2869
    %v2871 = vrot.slane %v2685, %v2870
    %v2873 = vunpack.c.l.s4 1983009808
    %v2874 = vunpack.c.0.s8 %v2873
    %v2875 = vlaneseq
    %v2876 = vshrl.u32 %v2875, 7
    %v2877 = vsub.s32 %v2874, %v2876
    %v2878 = vrot.slane %v2864, %v2877
    %v2879 = vcombine.high %v2871, %v2871
    %v2880 = vcombine.high %v2686, %v2686
    %v2882 = vunpack.c.l.s4 1983009808
    %v2883 = vunpack.c.0.s8 %v2882
    %v2884 = vlaneseq
    %v2885 = vshrl.u32 %v2884, 7
    %v2886 = vsub.s32 %v2883, %v2885
    %v2887 = vrot.slane %v2686, %v2886
    %v2889 = vunpack.c.l.s4 1983009808
    %v2890 = vunpack.c.0.s8 %v2889
    %v2891 = vlaneseq
    %v2892 = vshrl.u32 %v2891, 7
    %v2893 = vsub.s32 %v2890, %v2892
    %v2894 = vrot.slane %v2880, %v2893
    %v2895 = vcombine.high %v2887, %v2887
    %v2896 = vcombine.high %v2687, %v2687
    %v2898 = vunpack.c.l.s4 1983009808
    %v2899 = vunpack.c.0.s8 %v2898
    %v2900 = vlaneseq
    %v2901 = vshrl.u32 %v2900, 7
    %v2902 = vsub.s32 %v2899, %v2901
    %v2903 = vrot.slane %v2687, %v2902
    %v2905 = vunpack.c.l.s4 1983009808
    %v2906 = vunpack.c.0.s8 %v2905
    %v2907 = vlaneseq
    %v2908 = vshrl.u32 %v2907, 7
    %v2909 = vsub.s32 %v2906, %v2908
    %v2910 = vrot.slane %v2896, %v2909
    %v2911 = vcombine.high %v2903, %v2903
    %v2912 = vcombine.high %v2688, %v2688
    %v2914 = vunpack.c.l.s4 1983009808
    %v2915 = vunpack.c.0.s8 %v2914
    %v2916 = vlaneseq
    %v2917 = vshrl.u32 %v2916, 7
    %v2918 = vsub.s32 %v2915, %v2917
    %v2919 = vrot.slane %v2688, %v2918
    %v2921 = vunpack.c.l.s4 1983009808
    %v2922 = vunpack.c.0.s8 %v2921
    %v2923 = vlaneseq
    %v2924 = vshrl.u32 %v2923, 7
    %v2925 = vsub.s32 %v2922, %v2924
    %v2926 = vrot.slane %v2912, %v2925
    %v2927 = vcombine.high %v2919, %v2919
    %v2928 = vcombine.high %v2720, %v2720
    %v2930 = vunpack.c.l.s4 1983009808
    %v2931 = vunpack.c.0.s8 %v2930
    %v2932 = vlaneseq
    %v2933 = vshrl.u32 %v2932, 7
    %v2934 = vsub.s32 %v2931, %v2933
    %v2935 = vrot.slane %v2720, %v2934
    %v2937 = vunpack.c.l.s4 1983009808
    %v2938 = vunpack.c.0.s8 %v2937
    %v2939 = vlaneseq
    %v2940 = vshrl.u32 %v2939, 7
    %v2941 = vsub.s32 %v2938, %v2940
    %v2942 = vrot.slane %v2928, %v2941
    %v2943 = vcombine.high %v2935, %v2935
    %v2944 = vcombine.high %v2721, %v2721
    %v2946 = vunpack.c.l.s4 1983009808
    %v2947 = vunpack.c.0.s8 %v2946
    %v2948 = vlaneseq
    %v2949 = vshrl.u32 %v2948, 7
    %v2950 = vsub.s32 %v2947, %v2949
    %v2951 = vrot.slane %v2721, %v2950
    %v2953 = vunpack.c.l.s4 1983009808
    %v2954 = vunpack.c.0.s8 %v2953
    %v2955 = vlaneseq
    %v2956 = vshrl.u32 %v2955, 7
    %v2957 = vsub.s32 %v2954, %v2956
    %v2958 = vrot.slane %v2944, %v2957
    %v2959 = vcombine.high %v2951, %v2951
    %v2960 = vcombine.high %v2722, %v2722
    %v2962 = vunpack.c.l.s4 1983009808
    %v2963 = vunpack.c.0.s8 %v2962
    %v2964 = vlaneseq
    %v2965 = vshrl.u32 %v2964, 7
    %v2966 = vsub.s32 %v2963, %v2965
    %v2967 = vrot.slane %v2722, %v2966
    %v2969 = vunpack.c.l.s4 1983009808
    %v2970 = vunpack.c.0.s8 %v2969
    %v2971 = vlaneseq
    %v2972 = vshrl.u32 %v2971, 7
    %v2973 = vsub.s32 %v2970, %v2972
    %v2974 = vrot.slane %v2960, %v2973
    %v2975 = vcombine.high %v2967, %v2967
    %v2976 = vcombine.high %v2723, %v2723
    %v2978 = vunpack.c.l.s4 1983009808
    %v2979 = vunpack.c.0.s8 %v2978
    %v2980 = vlaneseq
    %v2981 = vshrl.u32 %v2980, 7
    %v2982 = vsub.s32 %v2979, %v2981
    %v2983 = vrot.slane %v2723, %v2982
    %v2985 = vunpack.c.l.s4 1983009808
    %v2986 = vunpack.c.0.s8 %v2985
    %v2987 = vlaneseq
    %v2988 = vshrl.u32 %v2987, 7
    %v2989 = vsub.s32 %v2986, %v2988
    %v2990 = vrot.slane %v2976, %v2989
    %v2991 = vcombine.high %v2983, %v2983
    %v2992 = vcombine.high %v2755, %v2755
    %v2994 = vunpack.c.l.s4 1983009808
    %v2995 = vunpack.c.0.s8 %v2994
    %v2996 = vlaneseq
    %v2997 = vshrl.u32 %v2996, 7
    %v2998 = vsub.s32 %v2995, %v2997
    %v2999 = vrot.slane %v2755, %v2998
    %v3001 = vunpack.c.l.s4 1983009808
    %v3002 = vunpack.c.0.s8 %v3001
    %v3003 = vlaneseq
    %v3004 = vshrl.u32 %v3003, 7
    %v3005 = vsub.s32 %v3002, %v3004
    %v3006 = vrot.slane %v2992, %v3005
    %v3007 = vcombine.high %v2999, %v2999
    %v3008 = vcombine.high %v2756, %v2756
    %v3010 = vunpack.c.l.s4 1983009808
    %v3011 = vunpack.c.0.s8 %v3010
    %v3012 = vlaneseq
    %v3013 = vshrl.u32 %v3012, 7
    %v3014 = vsub.s32 %v3011, %v3013
    %v3015 = vrot.slane %v2756, %v3014
    %v3017 = vunpack.c.l.s4 1983009808
    %v3018 = vunpack.c.0.s8 %v3017
    %v3019 = vlaneseq
    %v3020 = vshrl.u32 %v3019, 7
    %v3021 = vsub.s32 %v3018, %v3020
    %v3022 = vrot.slane %v3008, %v3021
    %v3023 = vcombine.high %v3015, %v3015
    %v3024 = vcombine.high %v2757, %v2757
    %v3026 = vunpack.c.l.s4 1983009808
    %v3027 = vunpack.c.0.s8 %v3026
    %v3028 = vlaneseq
    %v3029 = vshrl.u32 %v3028, 7
    %v3030 = vsub.s32 %v3027, %v3029
    %v3031 = vrot.slane %v2757, %v3030
    %v3033 = vunpack.c.l.s4 1983009808
    %v3034 = vunpack.c.0.s8 %v3033
    %v3035 = vlaneseq
    %v3036 = vshrl.u32 %v3035, 7
    %v3037 = vsub.s32 %v3034, %v3036
    %v3038 = vrot.slane %v3024, %v3037
    %v3039 = vcombine.high %v3031, %v3031
    %v3040 = vcombine.high %v2758, %v2758
    %v3042 = vunpack.c.l.s4 1983009808
    %v3043 = vunpack.c.0.s8 %v3042
    %v3044 = vlaneseq
    %v3045 = vshrl.u32 %v3044, 7
    %v3046 = vsub.s32 %v3043, %v3045
    %v3047 = vrot.slane %v2758, %v3046
    %v3049 = vunpack.c.l.s4 1983009808
    %v3050 = vunpack.c.0.s8 %v3049
    %v3051 = vlaneseq
    %v3052 = vshrl.u32 %v3051, 7
    %v3053 = vsub.s32 %v3050, %v3052
    %v3054 = vrot.slane %v3040, %v3053
    %v3055 = vcombine.high %v3047, %v3047
    %v3056 = vcombine.high %v2790, %v2790
    %v3058 = vunpack.c.l.s4 1983009808
    %v3059 = vunpack.c.0.s8 %v3058
    %v3060 = vlaneseq
    %v3061 = vshrl.u32 %v3060, 7
    %v3062 = vsub.s32 %v3059, %v3061
    %v3063 = vrot.slane %v2790, %v3062
    %v3065 = vunpack.c.l.s4 1983009808
    %v3066 = vunpack.c.0.s8 %v3065
    %v3067 = vlaneseq
    %v3068 = vshrl.u32 %v3067, 7
    %v3069 = vsub.s32 %v3066, %v3068
    %v3070 = vrot.slane %v3056, %v3069
    %v3071 = vcombine.high %v3063, %v3063
    %v3072 = vcombine.high %v2791, %v2791
    %v3074 = vunpack.c.l.s4 1983009808
    %v3075 = vunpack.c.0.s8 %v3074
    %v3076 = vlaneseq
    %v3077 = vshrl.u32 %v3076, 7
    %v3078 = vsub.s32 %v3075, %v3077
    %v3079 = vrot.slane %v2791, %v3078
    %v3081 = vunpack.c.l.s4 1983009808
    %v3082 = vunpack.c.0.s8 %v3081
    %v3083 = vlaneseq
    %v3084 = vshrl.u32 %v3083, 7
    %v3085 = vsub.s32 %v3082, %v3084
    %v3086 = vrot.slane %v3072, %v3085
    %v3087 = vcombine.high %v3079, %v3079
    %v3088 = vcombine.high %v2792, %v2792
    %v3090 = vunpack.c.l.s4 1983009808
    %v3091 = vunpack.c.0.s8 %v3090
    %v3092 = vlaneseq
    %v3093 = vshrl.u32 %v3092, 7
    %v3094 = vsub.s32 %v3091, %v3093
    %v3095 = vrot.slane %v2792, %v3094
    %v3097 = vunpack.c.l.s4 1983009808
    %v3098 = vunpack.c.0.s8 %v3097
    %v3099 = vlaneseq
    %v3100 = vshrl.u32 %v3099, 7
    %v3101 = vsub.s32 %v3098, %v3100
    %v3102 = vrot.slane %v3088, %v3101
    %v3103 = vcombine.high %v3095, %v3095
    %v3104 = vcombine.high %v2793, %v2793
    %v3106 = vunpack.c.l.s4 1983009808
    %v3107 = vunpack.c.0.s8 %v3106
    %v3108 = vlaneseq
    %v3109 = vshrl.u32 %v3108, 7
    %v3110 = vsub.s32 %v3107, %v3109
    %v3111 = vrot.slane %v2793, %v3110
    %v3113 = vunpack.c.l.s4 1983009808
    %v3114 = vunpack.c.0.s8 %v3113
    %v3115 = vlaneseq
    %v3116 = vshrl.u32 %v3115, 7
    %v3117 = vsub.s32 %v3114, %v3116
    %v3118 = vrot.slane %v3104, %v3117
    %v3119 = vcombine.high %v3111, %v3111
    %v3120 = vcombine.high %v2825, %v2825
    %v3122 = vunpack.c.l.s4 1983009808
    %v3123 = vunpack.c.0.s8 %v3122
    %v3124 = vlaneseq
    %v3125 = vshrl.u32 %v3124, 7
    %v3126 = vsub.s32 %v3123, %v3125
    %v3127 = vrot.slane %v2825, %v3126
    %v3129 = vunpack.c.l.s4 1983009808
    %v3130 = vunpack.c.0.s8 %v3129
    %v3131 = vlaneseq
    %v3132 = vshrl.u32 %v3131, 7
    %v3133 = vsub.s32 %v3130, %v3132
    %v3134 = vrot.slane %v3120, %v3133
    %v3135 = vcombine.high %v3127, %v3127
    %v3136 = vcombine.high %v2826, %v2826
    %v3138 = vunpack.c.l.s4 1983009808
    %v3139 = vunpack.c.0.s8 %v3138
    %v3140 = vlaneseq
    %v3141 = vshrl.u32 %v3140, 7
    %v3142 = vsub.s32 %v3139, %v3141
    %v3143 = vrot.slane %v2826, %v3142
    %v3145 = vunpack.c.l.s4 1983009808
    %v3146 = vunpack.c.0.s8 %v3145
    %v3147 = vlaneseq
    %v3148 = vshrl.u32 %v3147, 7
    %v3149 = vsub.s32 %v3146, %v3148
    %v3150 = vrot.slane %v3136, %v3149
    %v3151 = vcombine.high %v3143, %v3143
    %v3152 = vcombine.high %v2827, %v2827
    %v3154 = vunpack.c.l.s4 1983009808
    %v3155 = vunpack.c.0.s8 %v3154
    %v3156 = vlaneseq
    %v3157 = vshrl.u32 %v3156, 7
    %v3158 = vsub.s32 %v3155, %v3157
    %v3159 = vrot.slane %v2827, %v3158
    %v3161 = vunpack.c.l.s4 1983009808
    %v3162 = vunpack.c.0.s8 %v3161
    %v3163 = vlaneseq
    %v3164 = vshrl.u32 %v3163, 7
    %v3165 = vsub.s32 %v3162, %v3164
    %v3166 = vrot.slane %v3152, %v3165
    %v3167 = vcombine.high %v3159, %v3159
    %v3168 = vcombine.high %v2828, %v2828
    %v3170 = vunpack.c.l.s4 1983009808
    %v3171 = vunpack.c.0.s8 %v3170
    %v3172 = vlaneseq
    %v3173 = vshrl.u32 %v3172, 7
    %v3174 = vsub.s32 %v3171, %v3173
    %v3175 = vrot.slane %v2828, %v3174
    %v3177 = vunpack.c.l.s4 1983009808
    %v3178 = vunpack.c.0.s8 %v3177
    %v3179 = vlaneseq
    %v3180 = vshrl.u32 %v3179, 7
    %v3181 = vsub.s32 %v3178, %v3180
    %v3182 = vrot.slane %v3168, %v3181
    %v3183 = vcombine.high %v3175, %v3175
    %v3184 = vcombine.high %v2860, %v2860
    %v3186 = vunpack.c.l.s4 1983009808
    %v3187 = vunpack.c.0.s8 %v3186
    %v3188 = vlaneseq
    %v3189 = vshrl.u32 %v3188, 7
    %v3190 = vsub.s32 %v3187, %v3189
    %v3191 = vrot.slane %v2860, %v3190
    %v3193 = vunpack.c.l.s4 1983009808
    %v3194 = vunpack.c.0.s8 %v3193
    %v3195 = vlaneseq
    %v3196 = vshrl.u32 %v3195, 7
    %v3197 = vsub.s32 %v3194, %v3196
    %v3198 = vrot.slane %v3184, %v3197
    %v3199 = vcombine.high %v3191, %v3191
    %v3200 = vcombine.high %v2861, %v2861
    %v3202 = vunpack.c.l.s4 1983009808
    %v3203 = vunpack.c.0.s8 %v3202
    %v3204 = vlaneseq
    %v3205 = vshrl.u32 %v3204, 7
    %v3206 = vsub.s32 %v3203, %v3205
    %v3207 = vrot.slane %v2861, %v3206
    %v3209 = vunpack.c.l.s4 1983009808
    %v3210 = vunpack.c.0.s8 %v3209
    %v3211 = vlaneseq
    %v3212 = vshrl.u32 %v3211, 7
    %v3213 = vsub.s32 %v3210, %v3212
    %v3214 = vrot.slane %v3200, %v3213
    %v3215 = vcombine.high %v3207, %v3207
    %v3216 = vcombine.high %v2862, %v2862
    %v3218 = vunpack.c.l.s4 1983009808
    %v3219 = vunpack.c.0.s8 %v3218
    %v3220 = vlaneseq
    %v3221 = vshrl.u32 %v3220, 7
    %v3222 = vsub.s32 %v3219, %v3221
    %v3223 = vrot.slane %v2862, %v3222
    %v3225 = vunpack.c.l.s4 1983009808
    %v3226 = vunpack.c.0.s8 %v3225
    %v3227 = vlaneseq
    %v3228 = vshrl.u32 %v3227, 7
    %v3229 = vsub.s32 %v3226, %v3228
    %v3230 = vrot.slane %v3216, %v3229
    %v3231 = vcombine.high %v3223, %v3223
    %v3232 = vcombine.high %v2863, %v2863
    %v3234 = vunpack.c.l.s4 1983009808
    %v3235 = vunpack.c.0.s8 %v3234
    %v3236 = vlaneseq
    %v3237 = vshrl.u32 %v3236, 7
    %v3238 = vsub.s32 %v3235, %v3237
    %v3239 = vrot.slane %v2863, %v3238
    %v3241 = vunpack.c.l.s4 1983009808
    %v3242 = vunpack.c.0.s8 %v3241
    %v3243 = vlaneseq
    %v3244 = vshrl.u32 %v3243, 7
    %v3245 = vsub.s32 %v3242, %v3244
    %v3246 = vrot.slane %v3232, %v3245
    %v3247 = vcombine.high %v3239, %v3239
    %vm3320 = vcmask 1041408
    %v3321 = vsel %vm3320, %v2871, -inf
    %v3322 = vrot.slane %v3321, 4
    %v3323 = vmax.f32 %v3321, %v3322
    %v3324 = vrot.slane %v3323, 2
    %v3325 = vmax.f32 %v3323, %v3324
    %v3326 = vrot.slane %v3325, 1
    %v3327 = vmax.f32 %v3325, %v3326
    %v3328 = vsel %vm3320, %v2879, -inf
    %v3329 = vrot.slane %v3328, 4
    %v3330 = vmax.f32 %v3328, %v3329
    %v3331 = vrot.slane %v3330, 2
    %v3332 = vmax.f32 %v3330, %v3331
    %v3333 = vrot.slane %v3332, 1
    %v3334 = vmax.f32 %v3332, %v3333
    %v3335 = vsel %vm3320, %v2878, -inf
    %v3336 = vrot.slane %v3335, 4
    %v3337 = vmax.f32 %v3335, %v3336
    %v3338 = vrot.slane %v3337, 2
    %v3339 = vmax.f32 %v3337, %v3338
    %v3340 = vrot.slane %v3339, 1
    %v3341 = vmax.f32 %v3339, %v3340
    %v3342 = vsel %vm3320, %v2887, -inf
    %v3343 = vrot.slane %v3342, 4
    %v3344 = vmax.f32 %v3342, %v3343
    %v3345 = vrot.slane %v3344, 2
    %v3346 = vmax.f32 %v3344, %v3345
    %v3347 = vrot.slane %v3346, 1
    %v3348 = vmax.f32 %v3346, %v3347
    %v3349 = vsel %vm3320, %v2895, -inf
    %v3350 = vrot.slane %v3349, 4
    %v3351 = vmax.f32 %v3349, %v3350
    %v3352 = vrot.slane %v3351, 2
    %v3353 = vmax.f32 %v3351, %v3352
    %v3354 = vrot.slane %v3353, 1
    %v3355 = vmax.f32 %v3353, %v3354
    %v3356 = vsel %vm3320, %v2894, -inf
    %v3357 = vrot.slane %v3356, 4
    %v3358 = vmax.f32 %v3356, %v3357
    %v3359 = vrot.slane %v3358, 2
    %v3360 = vmax.f32 %v3358, %v3359
    %v3361 = vrot.slane %v3360, 1
    %v3362 = vmax.f32 %v3360, %v3361
    %v3363 = vsel %vm3320, %v2903, -inf
    %v3364 = vrot.slane %v3363, 4
    %v3365 = vmax.f32 %v3363, %v3364
    %v3366 = vrot.slane %v3365, 2
    %v3367 = vmax.f32 %v3365, %v3366
    %v3368 = vrot.slane %v3367, 1
    %v3369 = vmax.f32 %v3367, %v3368
    %v3370 = vsel %vm3320, %v2911, -inf
    %v3371 = vrot.slane %v3370, 4
    %v3372 = vmax.f32 %v3370, %v3371
    %v3373 = vrot.slane %v3372, 2
    %v3374 = vmax.f32 %v3372, %v3373
    %v3375 = vrot.slane %v3374, 1
    %v3376 = vmax.f32 %v3374, %v3375
    %v3377 = vsel %vm3320, %v2910, -inf
    %v3378 = vrot.slane %v3377, 4
    %v3379 = vmax.f32 %v3377, %v3378
    %v3380 = vrot.slane %v3379, 2
    %v3381 = vmax.f32 %v3379, %v3380
    %v3382 = vrot.slane %v3381, 1
    %v3383 = vmax.f32 %v3381, %v3382
    %v3384 = vsel %vm3320, %v2919, -inf
    %v3385 = vrot.slane %v3384, 4
    %v3386 = vmax.f32 %v3384, %v3385
    %v3387 = vrot.slane %v3386, 2
    %v3388 = vmax.f32 %v3386, %v3387
    %v3389 = vrot.slane %v3388, 1
    %v3390 = vmax.f32 %v3388, %v3389
    %v3391 = vsel %vm3320, %v2927, -inf
    %v3392 = vrot.slane %v3391, 4
    %v3393 = vmax.f32 %v3391, %v3392
    %v3394 = vrot.slane %v3393, 2
    %v3395 = vmax.f32 %v3393, %v3394
    %v3396 = vrot.slane %v3395, 1
    %v3397 = vmax.f32 %v3395, %v3396
    %v3398 = vsel %vm3320, %v2926, -inf
    %v3399 = vrot.slane %v3398, 4
    %v3400 = vmax.f32 %v3398, %v3399
    %v3401 = vrot.slane %v3400, 2
    %v3402 = vmax.f32 %v3400, %v3401
    %v3403 = vrot.slane %v3402, 1
    %v3404 = vmax.f32 %v3402, %v3403
    %v3405 = vsel %vm3320, %v2935, -inf
    %v3406 = vrot.slane %v3405, 4
    %v3407 = vmax.f32 %v3405, %v3406
    %v3408 = vrot.slane %v3407, 2
    %v3409 = vmax.f32 %v3407, %v3408
    %v3410 = vrot.slane %v3409, 1
    %v3411 = vmax.f32 %v3409, %v3410
    %v3412 = vsel %vm3320, %v2943, -inf
    %v3413 = vrot.slane %v3412, 4
    %v3414 = vmax.f32 %v3412, %v3413
    %v3415 = vrot.slane %v3414, 2
    %v3416 = vmax.f32 %v3414, %v3415
    %v3417 = vrot.slane %v3416, 1
    %v3418 = vmax.f32 %v3416, %v3417
    %v3419 = vsel %vm3320, %v2942, -inf
    %v3420 = vrot.slane %v3419, 4
    %v3421 = vmax.f32 %v3419, %v3420
    %v3422 = vrot.slane %v3421, 2
    %v3423 = vmax.f32 %v3421, %v3422
    %v3424 = vrot.slane %v3423, 1
    %v3425 = vmax.f32 %v3423, %v3424
    %v3426 = vsel %vm3320, %v2951, -inf
    %v3427 = vrot.slane %v3426, 4
    %v3428 = vmax.f32 %v3426, %v3427
    %v3429 = vrot.slane %v3428, 2
    %v3430 = vmax.f32 %v3428, %v3429
    %v3431 = vrot.slane %v3430, 1
    %v3432 = vmax.f32 %v3430, %v3431
    %v3433 = vsel %vm3320, %v2959, -inf
    %v3434 = vrot.slane %v3433, 4
    %v3435 = vmax.f32 %v3433, %v3434
    %v3436 = vrot.slane %v3435, 2
    %v3437 = vmax.f32 %v3435, %v3436
    %v3438 = vrot.slane %v3437, 1
    %v3439 = vmax.f32 %v3437, %v3438
    %v3440 = vsel %vm3320, %v2958, -inf
    %v3441 = vrot.slane %v3440, 4
    %v3442 = vmax.f32 %v3440, %v3441
    %v3443 = vrot.slane %v3442, 2
    %v3444 = vmax.f32 %v3442, %v3443
    %v3445 = vrot.slane %v3444, 1
    %v3446 = vmax.f32 %v3444, %v3445
    %v3447 = vsel %vm3320, %v2967, -inf
    %v3448 = vrot.slane %v3447, 4
    %v3449 = vmax.f32 %v3447, %v3448
    %v3450 = vrot.slane %v3449, 2
    %v3451 = vmax.f32 %v3449, %v3450
    %v3452 = vrot.slane %v3451, 1
    %v3453 = vmax.f32 %v3451, %v3452
    %v3454 = vsel %vm3320, %v2975, -inf
    %v3455 = vrot.slane %v3454, 4
    %v3456 = vmax.f32 %v3454, %v3455
    %v3457 = vrot.slane %v3456, 2
    %v3458 = vmax.f32 %v3456, %v3457
    %v3459 = vrot.slane %v3458, 1
    %v3460 = vmax.f32 %v3458, %v3459
    %v3461 = vsel %vm3320, %v2974, -inf
    %v3462 = vrot.slane %v3461, 4
    %v3463 = vmax.f32 %v3461, %v3462
    %v3464 = vrot.slane %v3463, 2
    %v3465 = vmax.f32 %v3463, %v3464
    %v3466 = vrot.slane %v3465, 1
    %v3467 = vmax.f32 %v3465, %v3466
    %v3468 = vsel %vm3320, %v2983, -inf
    %v3469 = vrot.slane %v3468, 4
    %v3470 = vmax.f32 %v3468, %v3469
    %v3471 = vrot.slane %v3470, 2
    %v3472 = vmax.f32 %v3470, %v3471
    %v3473 = vrot.slane %v3472, 1
    %v3474 = vmax.f32 %v3472, %v3473
    %v3475 = vsel %vm3320, %v2991, -inf
    %v3476 = vrot.slane %v3475, 4
    %v3477 = vmax.f32 %v3475, %v3476
    %v3478 = vrot.slane %v3477, 2
    %v3479 = vmax.f32 %v3477, %v3478
    %v3480 = vrot.slane %v3479, 1
    %v3481 = vmax.f32 %v3479, %v3480
    %v3482 = vsel %vm3320, %v2990, -inf
    %v3483 = vrot.slane %v3482, 4
    %v3484 = vmax.f32 %v3482, %v3483
    %v3485 = vrot.slane %v3484, 2
    %v3486 = vmax.f32 %v3484, %v3485
    %v3487 = vrot.slane %v3486, 1
    %v3488 = vmax.f32 %v3486, %v3487
    %v3489 = vsel %vm3320, %v2999, -inf
    %v3490 = vrot.slane %v3489, 4
    %v3491 = vmax.f32 %v3489, %v3490
    %v3492 = vrot.slane %v3491, 2
    %v3493 = vmax.f32 %v3491, %v3492
    %v3494 = vrot.slane %v3493, 1
    %v3495 = vmax.f32 %v3493, %v3494
    %v3496 = vsel %vm3320, %v3007, -inf
    %v3497 = vrot.slane %v3496, 4
    %v3498 = vmax.f32 %v3496, %v3497
    %v3499 = vrot.slane %v3498, 2
    %v3500 = vmax.f32 %v3498, %v3499
    %v3501 = vrot.slane %v3500, 1
    %v3502 = vmax.f32 %v3500, %v3501
    %v3503 = vsel %vm3320, %v3006, -inf
    %v3504 = vrot.slane %v3503, 4
    %v3505 = vmax.f32 %v3503, %v3504
    %v3506 = vrot.slane %v3505, 2
    %v3507 = vmax.f32 %v3505, %v3506
    %v3508 = vrot.slane %v3507, 1
    %v3509 = vmax.f32 %v3507, %v3508
    %v3510 = vsel %vm3320, %v3015, -inf
    %v3511 = vrot.slane %v3510, 4
    %v3512 = vmax.f32 %v3510, %v3511
    %v3513 = vrot.slane %v3512, 2
    %v3514 = vmax.f32 %v3512, %v3513
    %v3515 = vrot.slane %v3514, 1
    %v3516 = vmax.f32 %v3514, %v3515
    %v3517 = vsel %vm3320, %v3023, -inf
    %v3518 = vrot.slane %v3517, 4
    %v3519 = vmax.f32 %v3517, %v3518
    %v3520 = vrot.slane %v3519, 2
    %v3521 = vmax.f32 %v3519, %v3520
    %v3522 = vrot.slane %v3521, 1
    %v3523 = vmax.f32 %v3521, %v3522
    %v3524 = vsel %vm3320, %v3022, -inf
    %v3525 = vrot.slane %v3524, 4
    %v3526 = vmax.f32 %v3524, %v3525
    %v3527 = vrot.slane %v3526, 2
    %v3528 = vmax.f32 %v3526, %v3527
    %v3529 = vrot.slane %v3528, 1
    %v3530 = vmax.f32 %v3528, %v3529
    %v3531 = vsel %vm3320, %v3031, -inf
    %v3532 = vrot.slane %v3531, 4
    %v3533 = vmax.f32 %v3531, %v3532
    %v3534 = vrot.slane %v3533, 2
    %v3535 = vmax.f32 %v3533, %v3534
    %v3536 = vrot.slane %v3535, 1
    %v3537 = vmax.f32 %v3535, %v3536
    %v3538 = vsel %vm3320, %v3039, -inf
    %v3539 = vrot.slane %v3538, 4
    %v3540 = vmax.f32 %v3538, %v3539
    %v3541 = vrot.slane %v3540, 2
    %v3542 = vmax.f32 %v3540, %v3541
    %v3543 = vrot.slane %v3542, 1
    %v3544 = vmax.f32 %v3542, %v3543
    %v3545 = vsel %vm3320, %v3038, -inf
    %v3546 = vrot.slane %v3545, 4
    %v3547 = vmax.f32 %v3545, %v3546
    %v3548 = vrot.slane %v3547, 2
    %v3549 = vmax.f32 %v3547, %v3548
    %v3550 = vrot.slane %v3549, 1
    %v3551 = vmax.f32 %v3549, %v3550
    %v3552 = vsel %vm3320, %v3047, -inf
    %v3553 = vrot.slane %v3552, 4
    %v3554 = vmax.f32 %v3552, %v3553
    %v3555 = vrot.slane %v3554, 2
    %v3556 = vmax.f32 %v3554, %v3555
    %v3557 = vrot.slane %v3556, 1
    %v3558 = vmax.f32 %v3556, %v3557
    %v3559 = vsel %vm3320, %v3055, -inf
    %v3560 = vrot.slane %v3559, 4
    %v3561 = vmax.f32 %v3559, %v3560
    %v3562 = vrot.slane %v3561, 2
    %v3563 = vmax.f32 %v3561, %v3562
    %v3564 = vrot.slane %v3563, 1
    %v3565 = vmax.f32 %v3563, %v3564
    %v3566 = vsel %vm3320, %v3054, -inf
    %v3567 = vrot.slane %v3566, 4
    %v3568 = vmax.f32 %v3566, %v3567
    %v3569 = vrot.slane %v3568, 2
    %v3570 = vmax.f32 %v3568, %v3569
    %v3571 = vrot.slane %v3570, 1
    %v3572 = vmax.f32 %v3570, %v3571
    %v3573 = vsel %vm3320, %v3063, -inf
    %v3574 = vrot.slane %v3573, 4
    %v3575 = vmax.f32 %v3573, %v3574
    %v3576 = vrot.slane %v3575, 2
    %v3577 = vmax.f32 %v3575, %v3576
    %v3578 = vrot.slane %v3577, 1
    %v3579 = vmax.f32 %v3577, %v3578
    %v3580 = vsel %vm3320, %v3071, -inf
    %v3581 = vrot.slane %v3580, 4
    %v3582 = vmax.f32 %v3580, %v3581
    %v3583 = vrot.slane %v3582, 2
    %v3584 = vmax.f32 %v3582, %v3583
    %v3585 = vrot.slane %v3584, 1
    %v3586 = vmax.f32 %v3584, %v3585
    %v3587 = vsel %vm3320, %v3070, -inf
    %v3588 = vrot.slane %v3587, 4
    %v3589 = vmax.f32 %v3587, %v3588
    %v3590 = vrot.slane %v3589, 2
    %v3591 = vmax.f32 %v3589, %v3590
    %v3592 = vrot.slane %v3591, 1
    %v3593 = vmax.f32 %v3591, %v3592
    %v3594 = vsel %vm3320, %v3079, -inf
    %v3595 = vrot.slane %v3594, 4
    %v3596 = vmax.f32 %v3594, %v3595
    %v3597 = vrot.slane %v3596, 2
    %v3598 = vmax.f32 %v3596, %v3597
    %v3599 = vrot.slane %v3598, 1
    %v3600 = vmax.f32 %v3598, %v3599
    %v3601 = vsel %vm3320, %v3087, -inf
    %v3602 = vrot.slane %v3601, 4
    %v3603 = vmax.f32 %v3601, %v3602
    %v3604 = vrot.slane %v3603, 2
    %v3605 = vmax.f32 %v3603, %v3604
    %v3606 = vrot.slane %v3605, 1
    %v3607 = vmax.f32 %v3605, %v3606
    %v3608 = vsel %vm3320, %v3086, -inf
    %v3609 = vrot.slane %v3608, 4
    %v3610 = vmax.f32 %v3608, %v3609
    %v3611 = vrot.slane %v3610, 2
    %v3612 = vmax.f32 %v3610, %v3611
    %v3613 = vrot.slane %v3612, 1
    %v3614 = vmax.f32 %v3612, %v3613
    %v3615 = vsel %vm3320, %v3095, -inf
    %v3616 = vrot.slane %v3615, 4
    %v3617 = vmax.f32 %v3615, %v3616
    %v3618 = vrot.slane %v3617, 2
    %v3619 = vmax.f32 %v3617, %v3618
    %v3620 = vrot.slane %v3619, 1
    %v3621 = vmax.f32 %v3619, %v3620
    %v3622 = vsel %vm3320, %v3103, -inf
    %v3623 = vrot.slane %v3622, 4
    %v3624 = vmax.f32 %v3622, %v3623
    %v3625 = vrot.slane %v3624, 2
    %v3626 = vmax.f32 %v3624, %v3625
    %v3627 = vrot.slane %v3626, 1
    %v3628 = vmax.f32 %v3626, %v3627
    %v3629 = vsel %vm3320, %v3102, -inf
    %v3630 = vrot.slane %v3629, 4
    %v3631 = vmax.f32 %v3629, %v3630
    %v3632 = vrot.slane %v3631, 2
    %v3633 = vmax.f32 %v3631, %v3632
    %v3634 = vrot.slane %v3633, 1
    %v3635 = vmax.f32 %v3633, %v3634
    %v3636 = vsel %vm3320, %v3111, -inf
    %v3637 = vrot.slane %v3636, 4
    %v3638 = vmax.f32 %v3636, %v3637
    %v3639 = vrot.slane %v3638, 2
    %v3640 = vmax.f32 %v3638, %v3639
    %v3641 = vrot.slane %v3640, 1
    %v3642 = vmax.f32 %v3640, %v3641
    %v3643 = vsel %vm3320, %v3119, -inf
    %v3644 = vrot.slane %v3643, 4
    %v3645 = vmax.f32 %v3643, %v3644
    %v3646 = vrot.slane %v3645, 2
    %v3647 = vmax.f32 %v3645, %v3646
    %v3648 = vrot.slane %v3647, 1
    %v3649 = vmax.f32 %v3647, %v3648
    %v3650 = vsel %vm3320, %v3118, -inf
    %v3651 = vrot.slane %v3650, 4
    %v3652 = vmax.f32 %v3650, %v3651
    %v3653 = vrot.slane %v3652, 2
    %v3654 = vmax.f32 %v3652, %v3653
    %v3655 = vrot.slane %v3654, 1
    %v3656 = vmax.f32 %v3654, %v3655
    %v3657 = vsel %vm3320, %v3127, -inf
    %v3658 = vrot.slane %v3657, 4
    %v3659 = vmax.f32 %v3657, %v3658
    %v3660 = vrot.slane %v3659, 2
    %v3661 = vmax.f32 %v3659, %v3660
    %v3662 = vrot.slane %v3661, 1
    %v3663 = vmax.f32 %v3661, %v3662
    %v3664 = vsel %vm3320, %v3135, -inf
    %v3665 = vrot.slane %v3664, 4
    %v3666 = vmax.f32 %v3664, %v3665
    %v3667 = vrot.slane %v3666, 2
    %v3668 = vmax.f32 %v3666, %v3667
    %v3669 = vrot.slane %v3668, 1
    %v3670 = vmax.f32 %v3668, %v3669
    %v3671 = vsel %vm3320, %v3134, -inf
    %v3672 = vrot.slane %v3671, 4
    %v3673 = vmax.f32 %v3671, %v3672
    %v3674 = vrot.slane %v3673, 2
    %v3675 = vmax.f32 %v3673, %v3674
    %v3676 = vrot.slane %v3675, 1
    %v3677 = vmax.f32 %v3675, %v3676
    %v3678 = vsel %vm3320, %v3143, -inf
    %v3679 = vrot.slane %v3678, 4
    %v3680 = vmax.f32 %v3678, %v3679
    %v3681 = vrot.slane %v3680, 2
    %v3682 = vmax.f32 %v3680, %v3681
    %v3683 = vrot.slane %v3682, 1
    %v3684 = vmax.f32 %v3682, %v3683
    %v3685 = vsel %vm3320, %v3151, -inf
    %v3686 = vrot.slane %v3685, 4
    %v3687 = vmax.f32 %v3685, %v3686
    %v3688 = vrot.slane %v3687, 2
    %v3689 = vmax.f32 %v3687, %v3688
    %v3690 = vrot.slane %v3689, 1
    %v3691 = vmax.f32 %v3689, %v3690
    %v3692 = vsel %vm3320, %v3150, -inf
    %v3693 = vrot.slane %v3692, 4
    %v3694 = vmax.f32 %v3692, %v3693
    %v3695 = vrot.slane %v3694, 2
    %v3696 = vmax.f32 %v3694, %v3695
    %v3697 = vrot.slane %v3696, 1
    %v3698 = vmax.f32 %v3696, %v3697
    %v3699 = vsel %vm3320, %v3159, -inf
    %v3700 = vrot.slane %v3699, 4
    %v3701 = vmax.f32 %v3699, %v3700
    %v3702 = vrot.slane %v3701, 2
    %v3703 = vmax.f32 %v3701, %v3702
    %v3704 = vrot.slane %v3703, 1
    %v3705 = vmax.f32 %v3703, %v3704
    %v3706 = vsel %vm3320, %v3167, -inf
    %v3707 = vrot.slane %v3706, 4
    %v3708 = vmax.f32 %v3706, %v3707
    %v3709 = vrot.slane %v3708, 2
    %v3710 = vmax.f32 %v3708, %v3709
    %v3711 = vrot.slane %v3710, 1
    %v3712 = vmax.f32 %v3710, %v3711
    %v3713 = vsel %vm3320, %v3166, -inf
    %v3714 = vrot.slane %v3713, 4
    %v3715 = vmax.f32 %v3713, %v3714
    %v3716 = vrot.slane %v3715, 2
    %v3717 = vmax.f32 %v3715, %v3716
    %v3718 = vrot.slane %v3717, 1
    %v3719 = vmax.f32 %v3717, %v3718
    %v3720 = vsel %vm3320, %v3175, -inf
    %v3721 = vrot.slane %v3720, 4
    %v3722 = vmax.f32 %v3720, %v3721
    %v3723 = vrot.slane %v3722, 2
    %v3724 = vmax.f32 %v3722, %v3723
    %v3725 = vrot.slane %v3724, 1
    %v3726 = vmax.f32 %v3724, %v3725
    %v3727 = vsel %vm3320, %v3183, -inf
    %v3728 = vrot.slane %v3727, 4
    %v3729 = vmax.f32 %v3727, %v3728
    %v3730 = vrot.slane %v3729, 2
    %v3731 = vmax.f32 %v3729, %v3730
    %v3732 = vrot.slane %v3731, 1
    %v3733 = vmax.f32 %v3731, %v3732
    %v3734 = vsel %vm3320, %v3182, -inf
    %v3735 = vrot.slane %v3734, 4
    %v3736 = vmax.f32 %v3734, %v3735
    %v3737 = vrot.slane %v3736, 2
    %v3738 = vmax.f32 %v3736, %v3737
    %v3739 = vrot.slane %v3738, 1
    %v3740 = vmax.f32 %v3738, %v3739
    %v3741 = vsel %vm3320, %v3191, -inf
    %v3742 = vrot.slane %v3741, 4
    %v3743 = vmax.f32 %v3741, %v3742
    %v3744 = vrot.slane %v3743, 2
    %v3745 = vmax.f32 %v3743, %v3744
    %v3746 = vrot.slane %v3745, 1
    %v3747 = vmax.f32 %v3745, %v3746
    %v3748 = vsel %vm3320, %v3199, -inf
    %v3749 = vrot.slane %v3748, 4
    %v3750 = vmax.f32 %v3748, %v3749
    %v3751 = vrot.slane %v3750, 2
    %v3752 = vmax.f32 %v3750, %v3751
    %v3753 = vrot.slane %v3752, 1
    %v3754 = vmax.f32 %v3752, %v3753
    %v3755 = vsel %vm3320, %v3198, -inf
    %v3756 = vrot.slane %v3755, 4
    %v3757 = vmax.f32 %v3755, %v3756
    %v3758 = vrot.slane %v3757, 2
    %v3759 = vmax.f32 %v3757, %v3758
    %v3760 = vrot.slane %v3759, 1
    %v3761 = vmax.f32 %v3759, %v3760
    %v3762 = vsel %vm3320, %v3207, -inf
    %v3763 = vrot.slane %v3762, 4
    %v3764 = vmax.f32 %v3762, %v3763
    %v3765 = vrot.slane %v3764, 2
    %v3766 = vmax.f32 %v3764, %v3765
    %v3767 = vrot.slane %v3766, 1
    %v3768 = vmax.f32 %v3766, %v3767
    %v3769 = vsel %vm3320, %v3215, -inf
    %v3770 = vrot.slane %v3769, 4
    %v3771 = vmax.f32 %v3769, %v3770
    %v3772 = vrot.slane %v3771, 2
    %v3773 = vmax.f32 %v3771, %v3772
    %v3774 = vrot.slane %v3773, 1
    %v3775 = vmax.f32 %v3773, %v3774
    %v3776 = vsel %vm3320, %v3214, -inf
    %v3777 = vrot.slane %v3776, 4
    %v3778 = vmax.f32 %v3776, %v3777
    %v3779 = vrot.slane %v3778, 2
    %v3780 = vmax.f32 %v3778, %v3779
    %v3781 = vrot.slane %v3780, 1
    %v3782 = vmax.f32 %v3780, %v3781
    %v3783 = vsel %vm3320, %v3223, -inf
    %v3784 = vrot.slane %v3783, 4
    %v3785 = vmax.f32 %v3783, %v3784
    %v3786 = vrot.slane %v3785, 2
    %v3787 = vmax.f32 %v3785, %v3786
    %v3788 = vrot.slane %v3787, 1
    %v3789 = vmax.f32 %v3787, %v3788
    %v3790 = vsel %vm3320, %v3231, -inf
    %v3791 = vrot.slane %v3790, 4
    %v3792 = vmax.f32 %v3790, %v3791
    %v3793 = vrot.slane %v3792, 2
    %v3794 = vmax.f32 %v3792, %v3793
    %v3795 = vrot.slane %v3794, 1
    %v3796 = vmax.f32 %v3794, %v3795
    %v3797 = vsel %vm3320, %v3230, -inf
    %v3798 = vrot.slane %v3797, 4
    %v3799 = vmax.f32 %v3797, %v3798
    %v3800 = vrot.slane %v3799, 2
    %v3801 = vmax.f32 %v3799, %v3800
    %v3802 = vrot.slane %v3801, 1
    %v3803 = vmax.f32 %v3801, %v3802
    %v3804 = vsel %vm3320, %v3239, -inf
    %v3805 = vrot.slane %v3804, 4
    %v3806 = vmax.f32 %v3804, %v3805
    %v3807 = vrot.slane %v3806, 2
    %v3808 = vmax.f32 %v3806, %v3807
    %v3809 = vrot.slane %v3808, 1
    %v3810 = vmax.f32 %v3808, %v3809
    %v3811 = vsel %vm3320, %v3247, -inf
    %v3812 = vrot.slane %v3811, 4
    %v3813 = vmax.f32 %v3811, %v3812
    %v3814 = vrot.slane %v3813, 2
    %v3815 = vmax.f32 %v3813, %v3814
    %v3816 = vrot.slane %v3815, 1
    %v3817 = vmax.f32 %v3815, %v3816
    %v3818 = vsel %vm3320, %v3246, -inf
    %v3819 = vrot.slane %v3818, 4
    %v3820 = vmax.f32 %v3818, %v3819
    %v3821 = vrot.slane %v3820, 2
    %v3822 = vmax.f32 %v3820, %v3821
    %v3823 = vrot.slane %v3822, 1
    %v3824 = vmax.f32 %v3822, %v3823
    %v3825 = vmax.f32 %v3327, 0.0
    %v3826 = vmax.f32 %v3334, 0.0
    %v3827 = vmax.f32 %v3341, 0.0
    %v3828 = vmax.f32 %v3348, 0.0
    %v3829 = vmax.f32 %v3355, 0.0
    %v3830 = vmax.f32 %v3362, 0.0
    %v3831 = vmax.f32 %v3369, 0.0
    %v3832 = vmax.f32 %v3376, 0.0
    %v3833 = vmax.f32 %v3383, 0.0
    %v3834 = vmax.f32 %v3390, 0.0
    %v3835 = vmax.f32 %v3397, 0.0
    %v3836 = vmax.f32 %v3404, 0.0
    %v3837 = vmax.f32 %v3411, 0.0
    %v3838 = vmax.f32 %v3418, 0.0
    %v3839 = vmax.f32 %v3425, 0.0
    %v3840 = vmax.f32 %v3432, 0.0
    %v3841 = vmax.f32 %v3439, 0.0
    %v3842 = vmax.f32 %v3446, 0.0
    %v3843 = vmax.f32 %v3453, 0.0
    %v3844 = vmax.f32 %v3460, 0.0
    %v3845 = vmax.f32 %v3467, 0.0
    %v3846 = vmax.f32 %v3474, 0.0
    %v3847 = vmax.f32 %v3481, 0.0
    %v3848 = vmax.f32 %v3488, 0.0
    %v3849 = vmax.f32 %v3495, 0.0
    %v3850 = vmax.f32 %v3502, 0.0
    %v3851 = vmax.f32 %v3509, 0.0
    %v3852 = vmax.f32 %v3516, 0.0
    %v3853 = vmax.f32 %v3523, 0.0
    %v3854 = vmax.f32 %v3530, 0.0
    %v3855 = vmax.f32 %v3537, 0.0
    %v3856 = vmax.f32 %v3544, 0.0
    %v3857 = vmax.f32 %v3551, 0.0
    %v3858 = vmax.f32 %v3558, 0.0
    %v3859 = vmax.f32 %v3565, 0.0
    %v3860 = vmax.f32 %v3572, 0.0
    %v3861 = vmax.f32 %v3579, 0.0
    %v3862 = vmax.f32 %v3586, 0.0
    %v3863 = vmax.f32 %v3593, 0.0
    %v3864 = vmax.f32 %v3600, 0.0
    %v3865 = vmax.f32 %v3607, 0.0
    %v3866 = vmax.f32 %v3614, 0.0
    %v3867 = vmax.f32 %v3621, 0.0
    %v3868 = vmax.f32 %v3628, 0.0
    %v3869 = vmax.f32 %v3635, 0.0
    %v3870 = vmax.f32 %v3642, 0.0
    %v3871 = vmax.f32 %v3649, 0.0
    %v3872 = vmax.f32 %v3656, 0.0
    %v3873 = vmax.f32 %v3663, 0.0
    %v3874 = vmax.f32 %v3670, 0.0
    %v3875 = vmax.f32 %v3677, 0.0
    %v3876 = vmax.f32 %v3684, 0.0
    %v3877 = vmax.f32 %v3691, 0.0
    %v3878 = vmax.f32 %v3698, 0.0
    %v3879 = vmax.f32 %v3705, 0.0
    %v3880 = vmax.f32 %v3712, 0.0
    %v3881 = vmax.f32 %v3719, 0.0
    %v3882 = vmax.f32 %v3726, 0.0
    %v3883 = vmax.f32 %v3733, 0.0
    %v3884 = vmax.f32 %v3740, 0.0
    %v3885 = vmax.f32 %v3747, 0.0
    %v3886 = vmax.f32 %v3754, 0.0
    %v3887 = vmax.f32 %v3761, 0.0
    %v3888 = vmax.f32 %v3768, 0.0
    %v3889 = vmax.f32 %v3775, 0.0
    %v3890 = vmax.f32 %v3782, 0.0
    %v3891 = vmax.f32 %v3789, 0.0
    %v3892 = vmax.f32 %v3796, 0.0
    %v3893 = vmax.f32 %v3803, 0.0
    %v3894 = vmax.f32 %v3810, 0.0
    %v3895 = vmax.f32 %v3817, 0.0
    %v3896 = vmax.f32 %v3824, 0.0
    %v3897 = vpack.c.bf16 %v3825, %v3825
    %v3898 = vpack.c.bf16 %v3826, %v3826
    %v3899 = vpack.c.bf16 %v3827, %v3827
    %v3900 = vpack.c.bf16 %v3828, %v3828
    %v3901 = vpack.c.bf16 %v3829, %v3829
    %v3902 = vpack.c.bf16 %v3830, %v3830
    %v3903 = vpack.c.bf16 %v3831, %v3831
    %v3904 = vpack.c.bf16 %v3832, %v3832
    %v3905 = vpack.c.bf16 %v3833, %v3833
    %v3906 = vpack.c.bf16 %v3834, %v3834
    %v3907 = vpack.c.bf16 %v3835, %v3835
    %v3908 = vpack.c.bf16 %v3836, %v3836
    %v3909 = vpack.c.bf16 %v3837, %v3837
    %v3910 = vpack.c.bf16 %v3838, %v3838
    %v3911 = vpack.c.bf16 %v3839, %v3839
    %v3912 = vpack.c.bf16 %v3840, %v3840
    %v3913 = vpack.c.bf16 %v3841, %v3841
    %v3914 = vpack.c.bf16 %v3842, %v3842
    %v3915 = vpack.c.bf16 %v3843, %v3843
    %v3916 = vpack.c.bf16 %v3844, %v3844
    %v3917 = vpack.c.bf16 %v3845, %v3845
    %v3918 = vpack.c.bf16 %v3846, %v3846
    %v3919 = vpack.c.bf16 %v3847, %v3847
    %v3920 = vpack.c.bf16 %v3848, %v3848
    %v3921 = vpack.c.bf16 %v3849, %v3849
    %v3922 = vpack.c.bf16 %v3850, %v3850
    %v3923 = vpack.c.bf16 %v3851, %v3851
    %v3924 = vpack.c.bf16 %v3852, %v3852
    %v3925 = vpack.c.bf16 %v3853, %v3853
    %v3926 = vpack.c.bf16 %v3854, %v3854
    %v3927 = vpack.c.bf16 %v3855, %v3855
    %v3928 = vpack.c.bf16 %v3856, %v3856
    %v3929 = vpack.c.bf16 %v3857, %v3857
    %v3930 = vpack.c.bf16 %v3858, %v3858
    %v3931 = vpack.c.bf16 %v3859, %v3859
    %v3932 = vpack.c.bf16 %v3860, %v3860
    %v3933 = vpack.c.bf16 %v3861, %v3861
    %v3934 = vpack.c.bf16 %v3862, %v3862
    %v3935 = vpack.c.bf16 %v3863, %v3863
    %v3936 = vpack.c.bf16 %v3864, %v3864
    %v3937 = vpack.c.bf16 %v3865, %v3865
    %v3938 = vpack.c.bf16 %v3866, %v3866
    %v3939 = vpack.c.bf16 %v3867, %v3867
    %v3940 = vpack.c.bf16 %v3868, %v3868
    %v3941 = vpack.c.bf16 %v3869, %v3869
    %v3942 = vpack.c.bf16 %v3870, %v3870
    %v3943 = vpack.c.bf16 %v3871, %v3871
    %v3944 = vpack.c.bf16 %v3872, %v3872
    %v3945 = vpack.c.bf16 %v3873, %v3873
    %v3946 = vpack.c.bf16 %v3874, %v3874
    %v3947 = vpack.c.bf16 %v3875, %v3875
    %v3948 = vpack.c.bf16 %v3876, %v3876
    %v3949 = vpack.c.bf16 %v3877, %v3877
    %v3950 = vpack.c.bf16 %v3878, %v3878
    %v3951 = vpack.c.bf16 %v3879, %v3879
    %v3952 = vpack.c.bf16 %v3880, %v3880
    %v3953 = vpack.c.bf16 %v3881, %v3881
    %v3954 = vpack.c.bf16 %v3882, %v3882
    %v3955 = vpack.c.bf16 %v3883, %v3883
    %v3956 = vpack.c.bf16 %v3884, %v3884
    %v3957 = vpack.c.bf16 %v3885, %v3885
    %v3958 = vpack.c.bf16 %v3886, %v3886
    %v3959 = vpack.c.bf16 %v3887, %v3887
    %v3960 = vpack.c.bf16 %v3888, %v3888
    %v3961 = vpack.c.bf16 %v3889, %v3889
    %v3962 = vpack.c.bf16 %v3890, %v3890
    %v3963 = vpack.c.bf16 %v3891, %v3891
    %v3964 = vpack.c.bf16 %v3892, %v3892
    %v3965 = vpack.c.bf16 %v3893, %v3893
    %v3966 = vpack.c.bf16 %v3894, %v3894
    %v3967 = vpack.c.bf16 %v3895, %v3895
    %v3968 = vpack.c.bf16 %v3896, %v3896
    %v4017 = vunpack.c.l.b16 %v3897
    %v4018 = vunpack.c.l.b16 %v3898
    %v4019 = vunpack.c.l.b16 %v3899
    %v4020 = vunpack.c.l.b16 %v3900
    %v4021 = vunpack.c.l.b16 %v3901
    %v4022 = vunpack.c.l.b16 %v3902
    %v4023 = vunpack.c.l.b16 %v3903
    %v4024 = vunpack.c.l.b16 %v3904
    %v4025 = vunpack.c.l.b16 %v3905
    %v4026 = vunpack.c.l.b16 %v3906
    %v4027 = vunpack.c.l.b16 %v3907
    %v4028 = vunpack.c.l.b16 %v3908
    %v4029 = vunpack.c.l.b16 %v3909
    %v4030 = vunpack.c.l.b16 %v3910
    %v4031 = vunpack.c.l.b16 %v3911
    %v4032 = vunpack.c.l.b16 %v3912
    %v4033 = vunpack.c.l.b16 %v3913
    %v4034 = vunpack.c.l.b16 %v3914
    %v4035 = vunpack.c.l.b16 %v3915
    %v4036 = vunpack.c.l.b16 %v3916
    %v4037 = vunpack.c.l.b16 %v3917
    %v4038 = vunpack.c.l.b16 %v3918
    %v4039 = vunpack.c.l.b16 %v3919
    %v4040 = vunpack.c.l.b16 %v3920
    %v4041 = vunpack.c.l.b16 %v3933
    %v4042 = vunpack.c.l.b16 %v3934
    %v4043 = vunpack.c.l.b16 %v3935
    %v4044 = vunpack.c.l.b16 %v3936
    %v4045 = vunpack.c.l.b16 %v3937
    %v4046 = vunpack.c.l.b16 %v3938
    %v4047 = vunpack.c.l.b16 %v3939
    %v4048 = vunpack.c.l.b16 %v3940
    %v4049 = vunpack.c.l.b16 %v3941
    %v4050 = vunpack.c.l.b16 %v3942
    %v4051 = vunpack.c.l.b16 %v3943
    %v4052 = vunpack.c.l.b16 %v3944
    %v4053 = vunpack.c.l.b16 %v3945
    %v4054 = vunpack.c.l.b16 %v3946
    %v4055 = vunpack.c.l.b16 %v3947
    %v4056 = vunpack.c.l.b16 %v3948
    %v4057 = vunpack.c.l.b16 %v3949
    %v4058 = vunpack.c.l.b16 %v3950
    %v4059 = vunpack.c.l.b16 %v3951
    %v4060 = vunpack.c.l.b16 %v3952
    %v4061 = vunpack.c.l.b16 %v3953
    %v4062 = vunpack.c.l.b16 %v3954
    %v4063 = vunpack.c.l.b16 %v3955
    %v4064 = vunpack.c.l.b16 %v3956
    %vm4065 = vcmask 1041409
    %v4066 = vsel %vm4065, %v4020, %v4017
    %vm4067 = vcmask 1042434
    %v4068 = vsel %vm4067, %v4023, %v4066
    %vm4069 = vcmask 1043459
    %v4070 = vsel %vm4069, %v4026, %v4068
    %vm4071 = vcmask 1044484
    %v4072 = vsel %vm4071, %v4029, %v4070
    %vm4073 = vcmask 1045509
    %v4074 = vsel %vm4073, %v4032, %v4072
    %vm4075 = vcmask 1046534
    %v4076 = vsel %vm4075, %v4035, %v4074
    %vm4077 = vcmask 1047559
    %v4078 = vsel %vm4077, %v4038, %v4076
    %v4079 = vsel %vm4065, %v4021, %v4018
    %v4080 = vsel %vm4067, %v4024, %v4079
    %v4081 = vsel %vm4069, %v4027, %v4080
    %v4082 = vsel %vm4071, %v4030, %v4081
    %v4083 = vsel %vm4073, %v4033, %v4082
    %v4084 = vsel %vm4075, %v4036, %v4083
    %v4085 = vsel %vm4077, %v4039, %v4084
    %v4086 = vsel %vm4065, %v4022, %v4019
    %v4087 = vsel %vm4067, %v4025, %v4086
    %v4088 = vsel %vm4069, %v4028, %v4087
    %v4089 = vsel %vm4071, %v4031, %v4088
    %v4090 = vsel %vm4073, %v4034, %v4089
    %v4091 = vsel %vm4075, %v4037, %v4090
    %v4092 = vsel %vm4077, %v4040, %v4091
    %v4093 = vsel %vm4065, %v4044, %v4041
    %v4094 = vsel %vm4067, %v4047, %v4093
    %v4095 = vsel %vm4069, %v4050, %v4094
    %v4096 = vsel %vm4071, %v4053, %v4095
    %v4097 = vsel %vm4073, %v4056, %v4096
    %v4098 = vsel %vm4075, %v4059, %v4097
    %v4099 = vsel %vm4077, %v4062, %v4098
    %v4100 = vsel %vm4065, %v4045, %v4042
    %v4101 = vsel %vm4067, %v4048, %v4100
    %v4102 = vsel %vm4069, %v4051, %v4101
    %v4103 = vsel %vm4071, %v4054, %v4102
    %v4104 = vsel %vm4073, %v4057, %v4103
    %v4105 = vsel %vm4075, %v4060, %v4104
    %v4106 = vsel %vm4077, %v4063, %v4105
    %v4107 = vsel %vm4065, %v4046, %v4043
    %v4108 = vsel %vm4067, %v4049, %v4107
    %v4109 = vsel %vm4069, %v4052, %v4108
    %v4110 = vsel %vm4071, %v4055, %v4109
    %v4111 = vsel %vm4073, %v4058, %v4110
    %v4112 = vsel %vm4075, %v4061, %v4111
    %v4113 = vsel %vm4077, %v4064, %v4112
    %v4114 = vpack.c.b16 %v4099, %v4078
    %v4115 = vpack.c.b16 %v4106, %v4085
    %v4116 = vpack.c.b16 %v4113, %v4092
    %v4126 = vunpack.c.l.b16 %v3921
    %v4127 = vunpack.c.l.b16 %v3922
    %v4128 = vunpack.c.l.b16 %v3923
    %v4129 = vunpack.c.l.b16 %v3957
    %v4130 = vunpack.c.l.b16 %v3958
    %v4131 = vunpack.c.l.b16 %v3959
    %v4132 = vsel %vm4065, %v4023, %v4020
    %v4133 = vsel %vm4067, %v4026, %v4132
    %v4134 = vsel %vm4069, %v4029, %v4133
    %v4135 = vsel %vm4071, %v4032, %v4134
    %v4136 = vsel %vm4073, %v4035, %v4135
    %v4137 = vsel %vm4075, %v4038, %v4136
    %v4138 = vsel %vm4077, %v4126, %v4137
    %v4139 = vsel %vm4065, %v4024, %v4021
    %v4140 = vsel %vm4067, %v4027, %v4139
    %v4141 = vsel %vm4069, %v4030, %v4140
    %v4142 = vsel %vm4071, %v4033, %v4141
    %v4143 = vsel %vm4073, %v4036, %v4142
    %v4144 = vsel %vm4075, %v4039, %v4143
    %v4145 = vsel %vm4077, %v4127, %v4144
    %v4146 = vsel %vm4065, %v4025, %v4022
    %v4147 = vsel %vm4067, %v4028, %v4146
    %v4148 = vsel %vm4069, %v4031, %v4147
    %v4149 = vsel %vm4071, %v4034, %v4148
    %v4150 = vsel %vm4073, %v4037, %v4149
    %v4151 = vsel %vm4075, %v4040, %v4150
    %v4152 = vsel %vm4077, %v4128, %v4151
    %v4153 = vsel %vm4065, %v4047, %v4044
    %v4154 = vsel %vm4067, %v4050, %v4153
    %v4155 = vsel %vm4069, %v4053, %v4154
    %v4156 = vsel %vm4071, %v4056, %v4155
    %v4157 = vsel %vm4073, %v4059, %v4156
    %v4158 = vsel %vm4075, %v4062, %v4157
    %v4159 = vsel %vm4077, %v4129, %v4158
    %v4160 = vsel %vm4065, %v4048, %v4045
    %v4161 = vsel %vm4067, %v4051, %v4160
    %v4162 = vsel %vm4069, %v4054, %v4161
    %v4163 = vsel %vm4071, %v4057, %v4162
    %v4164 = vsel %vm4073, %v4060, %v4163
    %v4165 = vsel %vm4075, %v4063, %v4164
    %v4166 = vsel %vm4077, %v4130, %v4165
    %v4167 = vsel %vm4065, %v4049, %v4046
    %v4168 = vsel %vm4067, %v4052, %v4167
    %v4169 = vsel %vm4069, %v4055, %v4168
    %v4170 = vsel %vm4071, %v4058, %v4169
    %v4171 = vsel %vm4073, %v4061, %v4170
    %v4172 = vsel %vm4075, %v4064, %v4171
    %v4173 = vsel %vm4077, %v4131, %v4172
    %v4174 = vpack.c.b16 %v4159, %v4138
    %v4175 = vpack.c.b16 %v4166, %v4145
    %v4176 = vpack.c.b16 %v4173, %v4152
    %v4186 = vunpack.c.l.b16 %v3924
    %v4187 = vunpack.c.l.b16 %v3925
    %v4188 = vunpack.c.l.b16 %v3926
    %v4189 = vunpack.c.l.b16 %v3960
    %v4190 = vunpack.c.l.b16 %v3961
    %v4191 = vunpack.c.l.b16 %v3962
    %v4192 = vsel %vm4065, %v4026, %v4023
    %v4193 = vsel %vm4067, %v4029, %v4192
    %v4194 = vsel %vm4069, %v4032, %v4193
    %v4195 = vsel %vm4071, %v4035, %v4194
    %v4196 = vsel %vm4073, %v4038, %v4195
    %v4197 = vsel %vm4075, %v4126, %v4196
    %v4198 = vsel %vm4077, %v4186, %v4197
    %v4199 = vsel %vm4065, %v4027, %v4024
    %v4200 = vsel %vm4067, %v4030, %v4199
    %v4201 = vsel %vm4069, %v4033, %v4200
    %v4202 = vsel %vm4071, %v4036, %v4201
    %v4203 = vsel %vm4073, %v4039, %v4202
    %v4204 = vsel %vm4075, %v4127, %v4203
    %v4205 = vsel %vm4077, %v4187, %v4204
    %v4206 = vsel %vm4065, %v4028, %v4025
    %v4207 = vsel %vm4067, %v4031, %v4206
    %v4208 = vsel %vm4069, %v4034, %v4207
    %v4209 = vsel %vm4071, %v4037, %v4208
    %v4210 = vsel %vm4073, %v4040, %v4209
    %v4211 = vsel %vm4075, %v4128, %v4210
    %v4212 = vsel %vm4077, %v4188, %v4211
    %v4213 = vsel %vm4065, %v4050, %v4047
    %v4214 = vsel %vm4067, %v4053, %v4213
    %v4215 = vsel %vm4069, %v4056, %v4214
    %v4216 = vsel %vm4071, %v4059, %v4215
    %v4217 = vsel %vm4073, %v4062, %v4216
    %v4218 = vsel %vm4075, %v4129, %v4217
    %v4219 = vsel %vm4077, %v4189, %v4218
    %v4220 = vsel %vm4065, %v4051, %v4048
    %v4221 = vsel %vm4067, %v4054, %v4220
    %v4222 = vsel %vm4069, %v4057, %v4221
    %v4223 = vsel %vm4071, %v4060, %v4222
    %v4224 = vsel %vm4073, %v4063, %v4223
    %v4225 = vsel %vm4075, %v4130, %v4224
    %v4226 = vsel %vm4077, %v4190, %v4225
    %v4227 = vsel %vm4065, %v4052, %v4049
    %v4228 = vsel %vm4067, %v4055, %v4227
    %v4229 = vsel %vm4069, %v4058, %v4228
    %v4230 = vsel %vm4071, %v4061, %v4229
    %v4231 = vsel %vm4073, %v4064, %v4230
    %v4232 = vsel %vm4075, %v4131, %v4231
    %v4233 = vsel %vm4077, %v4191, %v4232
    %v4234 = vpack.c.b16 %v4219, %v4198
    %v4235 = vpack.c.b16 %v4226, %v4205
    %v4236 = vpack.c.b16 %v4233, %v4212
    %v4246 = vunpack.c.l.b16 %v3927
    %v4247 = vunpack.c.l.b16 %v3928
    %v4248 = vunpack.c.l.b16 %v3929
    %v4249 = vunpack.c.l.b16 %v3963
    %v4250 = vunpack.c.l.b16 %v3964
    %v4251 = vunpack.c.l.b16 %v3965
    %v4252 = vsel %vm4065, %v4029, %v4026
    %v4253 = vsel %vm4067, %v4032, %v4252
    %v4254 = vsel %vm4069, %v4035, %v4253
    %v4255 = vsel %vm4071, %v4038, %v4254
    %v4256 = vsel %vm4073, %v4126, %v4255
    %v4257 = vsel %vm4075, %v4186, %v4256
    %v4258 = vsel %vm4077, %v4246, %v4257
    %v4259 = vsel %vm4065, %v4030, %v4027
    %v4260 = vsel %vm4067, %v4033, %v4259
    %v4261 = vsel %vm4069, %v4036, %v4260
    %v4262 = vsel %vm4071, %v4039, %v4261
    %v4263 = vsel %vm4073, %v4127, %v4262
    %v4264 = vsel %vm4075, %v4187, %v4263
    %v4265 = vsel %vm4077, %v4247, %v4264
    %v4266 = vsel %vm4065, %v4031, %v4028
    %v4267 = vsel %vm4067, %v4034, %v4266
    %v4268 = vsel %vm4069, %v4037, %v4267
    %v4269 = vsel %vm4071, %v4040, %v4268
    %v4270 = vsel %vm4073, %v4128, %v4269
    %v4271 = vsel %vm4075, %v4188, %v4270
    %v4272 = vsel %vm4077, %v4248, %v4271
    %v4273 = vsel %vm4065, %v4053, %v4050
    %v4274 = vsel %vm4067, %v4056, %v4273
    %v4275 = vsel %vm4069, %v4059, %v4274
    %v4276 = vsel %vm4071, %v4062, %v4275
    %v4277 = vsel %vm4073, %v4129, %v4276
    %v4278 = vsel %vm4075, %v4189, %v4277
    %v4279 = vsel %vm4077, %v4249, %v4278
    %v4280 = vsel %vm4065, %v4054, %v4051
    %v4281 = vsel %vm4067, %v4057, %v4280
    %v4282 = vsel %vm4069, %v4060, %v4281
    %v4283 = vsel %vm4071, %v4063, %v4282
    %v4284 = vsel %vm4073, %v4130, %v4283
    %v4285 = vsel %vm4075, %v4190, %v4284
    %v4286 = vsel %vm4077, %v4250, %v4285
    %v4287 = vsel %vm4065, %v4055, %v4052
    %v4288 = vsel %vm4067, %v4058, %v4287
    %v4289 = vsel %vm4069, %v4061, %v4288
    %v4290 = vsel %vm4071, %v4064, %v4289
    %v4291 = vsel %vm4073, %v4131, %v4290
    %v4292 = vsel %vm4075, %v4191, %v4291
    %v4293 = vsel %vm4077, %v4251, %v4292
    %v4294 = vpack.c.b16 %v4279, %v4258
    %v4295 = vpack.c.b16 %v4286, %v4265
    %v4296 = vpack.c.b16 %v4293, %v4272
    %v4306 = vunpack.c.l.b16 %v3930
    %v4307 = vunpack.c.l.b16 %v3931
    %v4308 = vunpack.c.l.b16 %v3932
    %v4309 = vunpack.c.l.b16 %v3966
    %v4310 = vunpack.c.l.b16 %v3967
    %v4311 = vunpack.c.l.b16 %v3968
    %v4312 = vsel %vm4065, %v4032, %v4029
    %v4313 = vsel %vm4067, %v4035, %v4312
    %v4314 = vsel %vm4069, %v4038, %v4313
    %v4315 = vsel %vm4071, %v4126, %v4314
    %v4316 = vsel %vm4073, %v4186, %v4315
    %v4317 = vsel %vm4075, %v4246, %v4316
    %v4318 = vsel %vm4077, %v4306, %v4317
    %v4319 = vsel %vm4065, %v4033, %v4030
    %v4320 = vsel %vm4067, %v4036, %v4319
    %v4321 = vsel %vm4069, %v4039, %v4320
    %v4322 = vsel %vm4071, %v4127, %v4321
    %v4323 = vsel %vm4073, %v4187, %v4322
    %v4324 = vsel %vm4075, %v4247, %v4323
    %v4325 = vsel %vm4077, %v4307, %v4324
    %v4326 = vsel %vm4065, %v4034, %v4031
    %v4327 = vsel %vm4067, %v4037, %v4326
    %v4328 = vsel %vm4069, %v4040, %v4327
    %v4329 = vsel %vm4071, %v4128, %v4328
    %v4330 = vsel %vm4073, %v4188, %v4329
    %v4331 = vsel %vm4075, %v4248, %v4330
    %v4332 = vsel %vm4077, %v4308, %v4331
    %v4333 = vsel %vm4065, %v4056, %v4053
    %v4334 = vsel %vm4067, %v4059, %v4333
    %v4335 = vsel %vm4069, %v4062, %v4334
    %v4336 = vsel %vm4071, %v4129, %v4335
    %v4337 = vsel %vm4073, %v4189, %v4336
    %v4338 = vsel %vm4075, %v4249, %v4337
    %v4339 = vsel %vm4077, %v4309, %v4338
    %v4340 = vsel %vm4065, %v4057, %v4054
    %v4341 = vsel %vm4067, %v4060, %v4340
    %v4342 = vsel %vm4069, %v4063, %v4341
    %v4343 = vsel %vm4071, %v4130, %v4342
    %v4344 = vsel %vm4073, %v4190, %v4343
    %v4345 = vsel %vm4075, %v4250, %v4344
    %v4346 = vsel %vm4077, %v4310, %v4345
    %v4347 = vsel %vm4065, %v4058, %v4055
    %v4348 = vsel %vm4067, %v4061, %v4347
    %v4349 = vsel %vm4069, %v4064, %v4348
    %v4350 = vsel %vm4071, %v4131, %v4349
    %v4351 = vsel %vm4073, %v4191, %v4350
    %v4352 = vsel %vm4075, %v4251, %v4351
    %v4353 = vsel %vm4077, %v4311, %v4352
    %v4354 = vpack.c.b16 %v4339, %v4318
    %v4355 = vpack.c.b16 %v4346, %v4325
    %v4356 = vpack.c.b16 %v4353, %v4332
    %v4360 = vld [vmem:[#allocation7] sm:$0xff]
    %v4361 = vld [vmem:[#allocation7 + $0x8] sm:$0xf]
    %v4362 = vld [vmem:[#allocation7 + $0xc] sm:$0xff]
    %v4363 = vld [vmem:[#allocation7 + $0x14] sm:$0xf]
    %v4364 = vld [vmem:[#allocation7 + $0x18] sm:$0xff]
    %v4365 = vld [vmem:[#allocation7 + $0x20] sm:$0xf]
    %v4366 = vld [vmem:[#allocation7 + $0x24] sm:$0xff]
    %v4367 = vld [vmem:[#allocation7 + $0x2c] sm:$0xf]
    %v4368 = vld [vmem:[#allocation7 + $0x30] sm:$0xff]
    %v4369 = vld [vmem:[#allocation7 + $0x38] sm:$0xf]
    %v4370 = vld [vmem:[#allocation7 + $0x3c] sm:$0xff]
    %v4371 = vld [vmem:[#allocation7 + $0x44] sm:$0xf]
    %v4372 = vld [vmem:[#allocation7 + $0x48] sm:$0xff]
    %v4373 = vld [vmem:[#allocation7 + $0x50] sm:$0xf]
    %v4374 = vld [vmem:[#allocation7 + $0x54] sm:$0xff]
    %v4375 = vld [vmem:[#allocation7 + $0x5c] sm:$0xf]
    %v4376 = vld [vmem:[#allocation7 + $0x60] sm:$0xff]
    %v4377 = vld [vmem:[#allocation7 + $0x68] sm:$0xf]
    %v4378 = vld [vmem:[#allocation7 + $0x6c] sm:$0xff]
    %v4379 = vld [vmem:[#allocation7 + $0x74] sm:$0xf]
    %v4380 = vld [vmem:[#allocation7 + $0x78] sm:$0xff]
    %v4381 = vld [vmem:[#allocation7 + $0x80] sm:$0xf]
    %v4382 = vld [vmem:[#allocation7 + $0x84] sm:$0xff]
    %v4383 = vld [vmem:[#allocation7 + $0x8c] sm:$0xf]
    %v4384 = vld [vmem:[#allocation7 + $0x90] sm:$0xff]
    %v4385 = vld [vmem:[#allocation7 + $0x98] sm:$0xf]
    %v4386 = vld [vmem:[#allocation7 + $0x9c] sm:$0xff]
    %v4387 = vld [vmem:[#allocation7 + $0xa4] sm:$0xf]
    %v4388 = vld [vmem:[#allocation7 + $0xa8] sm:$0xff]
    %v4389 = vld [vmem:[#allocation7 + $0xb0] sm:$0xf]
    %v4390 = vld [vmem:[#allocation7 + $0xb4] sm:$0xff]
    %v4391 = vld [vmem:[#allocation7 + $0xbc] sm:$0xf]
    %v4392 = vld [vmem:[#allocation7 + $0xc0] sm:$0xff]
    %v4393 = vld [vmem:[#allocation7 + $0xc8] sm:$0xf]
    %v4394 = vld [vmem:[#allocation7 + $0xcc] sm:$0xff]
    %v4395 = vld [vmem:[#allocation7 + $0xd4] sm:$0xf]
    %v4396 = vld [vmem:[#allocation7 + $0xd8] sm:$0xff]
    %v4397 = vld [vmem:[#allocation7 + $0xe0] sm:$0xf]
    %v4398 = vld [vmem:[#allocation7 + $0xe4] sm:$0xff]
    %v4399 = vld [vmem:[#allocation7 + $0xec] sm:$0xf]
    %v4400 = vld [vmem:[#allocation7 + $0xf0] sm:$0xff]
    %v4401 = vld [vmem:[#allocation7 + $0xf8] sm:$0xf]
    %v4402 = vld [vmem:[#allocation7 + $0xfc] sm:$0xff]
    %v4403 = vld [vmem:[#allocation7 + $0x104] sm:$0xf]
    %v4404 = vld [vmem:[#allocation7 + $0x108] sm:$0xff]
    %v4405 = vld [vmem:[#allocation7 + $0x110] sm:$0xf]
    %v4406 = vld [vmem:[#allocation7 + $0x114] sm:$0xff]
    %v4407 = vld [vmem:[#allocation7 + $0x11c] sm:$0xf]
    %v4408 = vld [vmem:[#allocation7 + $0x120] sm:$0xff]
    %v4409 = vld [vmem:[#allocation7 + $0x128] sm:$0xf]
    %v4410 = vld [vmem:[#allocation7 + $0x12c] sm:$0xff]
    %v4411 = vld [vmem:[#allocation7 + $0x134] sm:$0xf]
    %v4412 = vld [vmem:[#allocation7 + $0x138] sm:$0xff]
    %v4413 = vld [vmem:[#allocation7 + $0x140] sm:$0xf]
    %v4414 = vld [vmem:[#allocation7 + $0x144] sm:$0xff]
    %v4415 = vld [vmem:[#allocation7 + $0x14c] sm:$0xf]
    %v4416 = vld [vmem:[#allocation7 + $0x150] sm:$0xff]
    %v4417 = vld [vmem:[#allocation7 + $0x158] sm:$0xf]
    %v4418 = vld [vmem:[#allocation7 + $0x15c] sm:$0xff]
    %v4419 = vld [vmem:[#allocation7 + $0x164] sm:$0xf]
    %v4420 = vld [vmem:[#allocation7 + $0x168] sm:$0xff]
    %v4421 = vld [vmem:[#allocation7 + $0x170] sm:$0xf]
    %v4422 = vld [vmem:[#allocation7 + $0x174] sm:$0xff]
    %v4423 = vld [vmem:[#allocation7 + $0x17c] sm:$0xf]
    %v4424 = vld [vmem:[#allocation7 + $0x180] sm:$0xff]
    %v4425 = vld [vmem:[#allocation7 + $0x188] sm:$0xf]
    %v4426 = vld [vmem:[#allocation7 + $0x18c] sm:$0xff]
    %v4427 = vld [vmem:[#allocation7 + $0x194] sm:$0xf]
    %v4428 = vld [vmem:[#allocation7 + $0x198] sm:$0xff]
    %v4429 = vld [vmem:[#allocation7 + $0x1a0] sm:$0xf]
    %v4430 = vld [vmem:[#allocation7 + $0x1a4] sm:$0xff]
    %v4431 = vld [vmem:[#allocation7 + $0x1ac] sm:$0xf]
    %v4432 = vld [vmem:[#allocation7 + $0x1b0] sm:$0xff]
    %v4433 = vld [vmem:[#allocation7 + $0x1b8] sm:$0xf]
    %v4434 = vld [vmem:[#allocation7 + $0x1bc] sm:$0xff]
    %v4435 = vld [vmem:[#allocation7 + $0x1c4] sm:$0xf]
    %v4436 = vld [vmem:[#allocation7 + $0x1c8] sm:$0xff]
    %v4437 = vld [vmem:[#allocation7 + $0x1d0] sm:$0xf]
    %v4438 = vld [vmem:[#allocation7 + $0x1d4] sm:$0xff]
    %v4439 = vld [vmem:[#allocation7 + $0x1dc] sm:$0xf]
    %v4440 = vld [vmem:[#allocation7 + $0x1e0] sm:$0xff]
    %v4441 = vld [vmem:[#allocation7 + $0x1e8] sm:$0xf]
    %v4442 = vld [vmem:[#allocation7 + $0x1ec] sm:$0xff]
    %v4443 = vld [vmem:[#allocation7 + $0x1f4] sm:$0xf]
    %v4444 = vld [vmem:[#allocation7 + $0x1f8] sm:$0xff]
    %v4445 = vld [vmem:[#allocation7 + $0x200] sm:$0xf]
    %v4446 = vld [vmem:[#allocation7 + $0x204] sm:$0xff]
    %v4447 = vld [vmem:[#allocation7 + $0x20c] sm:$0xf]
    %v4448 = vld [vmem:[#allocation7 + $0x210] sm:$0xff]
    %v4449 = vld [vmem:[#allocation7 + $0x218] sm:$0xf]
    %v4450 = vld [vmem:[#allocation7 + $0x21c] sm:$0xff]
    %v4451 = vld [vmem:[#allocation7 + $0x224] sm:$0xf]
    %v4452 = vld [vmem:[#allocation7 + $0x228] sm:$0xff]
    %v4453 = vld [vmem:[#allocation7 + $0x230] sm:$0xf]
    %v4454 = vld [vmem:[#allocation7 + $0x234] sm:$0xff]
    %v4455 = vld [vmem:[#allocation7 + $0x23c] sm:$0xf]
    %v4456 = vld [vmem:[#allocation7 + $0x240] sm:$0xff]
    %v4457 = vld [vmem:[#allocation7 + $0x248] sm:$0xf]
    %v4458 = vld [vmem:[#allocation7 + $0x24c] sm:$0xff]
    %v4459 = vld [vmem:[#allocation7 + $0x254] sm:$0xf]
    %v4460 = vld [vmem:[#allocation7 + $0x258] sm:$0xff]
    %v4461 = vld [vmem:[#allocation7 + $0x260] sm:$0xf]
    %v4462 = vld [vmem:[#allocation7 + $0x264] sm:$0xff]
    %v4463 = vld [vmem:[#allocation7 + $0x26c] sm:$0xf]
    %v4464 = vld [vmem:[#allocation7 + $0x270] sm:$0xff]
    %v4465 = vld [vmem:[#allocation7 + $0x278] sm:$0xf]
    %v4466 = vld [vmem:[#allocation7 + $0x27c] sm:$0xff]
    %v4467 = vld [vmem:[#allocation7 + $0x284] sm:$0xf]
    %v4468 = vld [vmem:[#allocation7 + $0x288] sm:$0xff]
    %v4469 = vld [vmem:[#allocation7 + $0x290] sm:$0xf]
    %v4470 = vld [vmem:[#allocation7 + $0x294] sm:$0xff]
    %v4471 = vld [vmem:[#allocation7 + $0x29c] sm:$0xf]
    %v4472 = vld [vmem:[#allocation7 + $0x2a0] sm:$0xff]
    %v4473 = vld [vmem:[#allocation7 + $0x2a8] sm:$0xf]
    %v4474 = vld [vmem:[#allocation7 + $0x2ac] sm:$0xff]
    %v4475 = vld [vmem:[#allocation7 + $0x2b4] sm:$0xf]
    %v4476 = vld [vmem:[#allocation7 + $0x2b8] sm:$0xff]
    %v4477 = vld [vmem:[#allocation7 + $0x2c0] sm:$0xf]
    %v4478 = vld [vmem:[#allocation7 + $0x2c4] sm:$0xff]
    %v4479 = vld [vmem:[#allocation7 + $0x2cc] sm:$0xf]
    %v4480 = vld [vmem:[#allocation7 + $0x2d0] sm:$0xff]
    %v4481 = vld [vmem:[#allocation7 + $0x2d8] sm:$0xf]
    %v4482 = vld [vmem:[#allocation7 + $0x2dc] sm:$0xff]
    %v4483 = vld [vmem:[#allocation7 + $0x2e4] sm:$0xf]
    %v4484 = vld [vmem:[#allocation7 + $0x2e8] sm:$0xff]
    %v4485 = vld [vmem:[#allocation7 + $0x2f0] sm:$0xf]
    %v4486 = vld [vmem:[#allocation7 + $0x2f4] sm:$0xff]
    %v4487 = vld [vmem:[#allocation7 + $0x2fc] sm:$0xf]
    %v4488 = vld [vmem:[#allocation7 + $0x300] sm:$0xff]
    %v4489 = vld [vmem:[#allocation7 + $0x308] sm:$0xf]
    %v4490 = vld [vmem:[#allocation7 + $0x30c] sm:$0xff]
    %v4491 = vld [vmem:[#allocation7 + $0x314] sm:$0xf]
    %v4492 = vld [vmem:[#allocation7 + $0x318] sm:$0xff]
    %v4493 = vld [vmem:[#allocation7 + $0x320] sm:$0xf]
    %v4494 = vld [vmem:[#allocation7 + $0x324] sm:$0xff]
    %v4495 = vld [vmem:[#allocation7 + $0x32c] sm:$0xf]
    %v4496 = vld [vmem:[#allocation7 + $0x330] sm:$0xff]
    %v4497 = vld [vmem:[#allocation7 + $0x338] sm:$0xf]
    %v4498 = vld [vmem:[#allocation7 + $0x33c] sm:$0xff]
    %v4499 = vld [vmem:[#allocation7 + $0x344] sm:$0xf]
    %v4500 = vld [vmem:[#allocation7 + $0x348] sm:$0xff]
    %v4501 = vld [vmem:[#allocation7 + $0x350] sm:$0xf]
    %v4502 = vld [vmem:[#allocation7 + $0x354] sm:$0xff]
    %v4503 = vld [vmem:[#allocation7 + $0x35c] sm:$0xf]
    %v4504 = vld [vmem:[#allocation7 + $0x360] sm:$0xff]
    %v4505 = vld [vmem:[#allocation7 + $0x368] sm:$0xf]
    %v4506 = vld [vmem:[#allocation7 + $0x36c] sm:$0xff]
    %v4507 = vld [vmem:[#allocation7 + $0x374] sm:$0xf]
    %v4508 = vld [vmem:[#allocation7 + $0x378] sm:$0xff]
    %v4509 = vld [vmem:[#allocation7 + $0x380] sm:$0xf]
    %v4510 = vld [vmem:[#allocation7 + $0x384] sm:$0xff]
    %v4511 = vld [vmem:[#allocation7 + $0x38c] sm:$0xf]
    %v4512 = vld [vmem:[#allocation7 + $0x390] sm:$0xff]
    %v4513 = vld [vmem:[#allocation7 + $0x398] sm:$0xf]
    %v4514 = vld [vmem:[#allocation7 + $0x39c] sm:$0xff]
    %v4515 = vld [vmem:[#allocation7 + $0x3a4] sm:$0xf]
    %v4516 = vld [vmem:[#allocation7 + $0x3a8] sm:$0xff]
    %v4517 = vld [vmem:[#allocation7 + $0x3b0] sm:$0xf]
    %v4518 = vld [vmem:[#allocation7 + $0x3b4] sm:$0xff]
    %v4519 = vld [vmem:[#allocation7 + $0x3bc] sm:$0xf]
    %v4520 = vld [vmem:[#allocation7 + $0x3c0] sm:$0xff]
    %v4521 = vld [vmem:[#allocation7 + $0x3c8] sm:$0xf]
    %v4522 = vld [vmem:[#allocation7 + $0x3cc] sm:$0xff]
    %v4523 = vld [vmem:[#allocation7 + $0x3d4] sm:$0xf]
    %v4524 = vld [vmem:[#allocation7 + $0x3d8] sm:$0xff]
    %v4525 = vld [vmem:[#allocation7 + $0x3e0] sm:$0xf]
    %v4526 = vld [vmem:[#allocation7 + $0x3e4] sm:$0xff]
    %v4527 = vld [vmem:[#allocation7 + $0x3ec] sm:$0xf]
    %v4528 = vld [vmem:[#allocation7 + $0x3f0] sm:$0xff]
    %v4529 = vld [vmem:[#allocation7 + $0x3f8] sm:$0xf]
    %v4530 = vld [vmem:[#allocation7 + $0x3fc] sm:$0xff]
    %v4531 = vld [vmem:[#allocation7 + $0x404] sm:$0xf]
    %v4532 = vld [vmem:[#allocation7 + $0x408] sm:$0xff]
    %v4533 = vld [vmem:[#allocation7 + $0x410] sm:$0xf]
    %v4534 = vld [vmem:[#allocation7 + $0x414] sm:$0xff]
    %v4535 = vld [vmem:[#allocation7 + $0x41c] sm:$0xf]
    %v4536 = vld [vmem:[#allocation7 + $0x420] sm:$0xff]
    %v4537 = vld [vmem:[#allocation7 + $0x428] sm:$0xf]
    %v4538 = vld [vmem:[#allocation7 + $0x42c] sm:$0xff]
    %v4539 = vld [vmem:[#allocation7 + $0x434] sm:$0xf]
    %v4540 = vld [vmem:[#allocation7 + $0x438] sm:$0xff]
    %v4541 = vld [vmem:[#allocation7 + $0x440] sm:$0xf]
    %v4542 = vld [vmem:[#allocation7 + $0x444] sm:$0xff]
    %v4543 = vld [vmem:[#allocation7 + $0x44c] sm:$0xf]
    %v4544 = vld [vmem:[#allocation7 + $0x450] sm:$0xff]
    %v4545 = vld [vmem:[#allocation7 + $0x458] sm:$0xf]
    %v4546 = vld [vmem:[#allocation7 + $0x45c] sm:$0xff]
    %v4547 = vld [vmem:[#allocation7 + $0x464] sm:$0xf]
    %v4548 = vld [vmem:[#allocation7 + $0x468] sm:$0xff]
    %v4549 = vld [vmem:[#allocation7 + $0x470] sm:$0xf]
    %v4550 = vld [vmem:[#allocation7 + $0x474] sm:$0xff]
    %v4551 = vld [vmem:[#allocation7 + $0x47c] sm:$0xf]
    %v4552 = vld [vmem:[#allocation7 + $0x480] sm:$0xff]
    %v4553 = vld [vmem:[#allocation7 + $0x488] sm:$0xf]
    %v4554 = vld [vmem:[#allocation7 + $0x48c] sm:$0xff]
    %v4555 = vld [vmem:[#allocation7 + $0x494] sm:$0xf]
    %v4556 = vld [vmem:[#allocation7 + $0x498] sm:$0xff]
    %v4557 = vld [vmem:[#allocation7 + $0x4a0] sm:$0xf]
    %v4558 = vld [vmem:[#allocation7 + $0x4a4] sm:$0xff]
    %v4559 = vld [vmem:[#allocation7 + $0x4ac] sm:$0xf]
    %v4560 = vld [vmem:[#allocation7 + $0x4b0] sm:$0xff]
    %v4561 = vld [vmem:[#allocation7 + $0x4b8] sm:$0xf]
    %v4562 = vld [vmem:[#allocation7 + $0x4bc] sm:$0xff]
    %v4563 = vld [vmem:[#allocation7 + $0x4c4] sm:$0xf]
    %v4564 = vld [vmem:[#allocation7 + $0x4c8] sm:$0xff]
    %v4565 = vld [vmem:[#allocation7 + $0x4d0] sm:$0xf]
    %v4566 = vld [vmem:[#allocation7 + $0x4d4] sm:$0xff]
    %v4567 = vld [vmem:[#allocation7 + $0x4dc] sm:$0xf]
    %v4568 = vld [vmem:[#allocation7 + $0x4e0] sm:$0xff]
    %v4569 = vld [vmem:[#allocation7 + $0x4e8] sm:$0xf]
    %v4570 = vld [vmem:[#allocation7 + $0x4ec] sm:$0xff]
    %v4571 = vld [vmem:[#allocation7 + $0x4f4] sm:$0xf]
    %v4572 = vld [vmem:[#allocation7 + $0x4f8] sm:$0xff]
    %v4573 = vld [vmem:[#allocation7 + $0x500] sm:$0xf]
    %v4574 = vld [vmem:[#allocation7 + $0x504] sm:$0xff]
    %v4575 = vld [vmem:[#allocation7 + $0x50c] sm:$0xf]
    %v4576 = vld [vmem:[#allocation7 + $0x510] sm:$0xff]
    %v4577 = vld [vmem:[#allocation7 + $0x518] sm:$0xf]
    %v4578 = vld [vmem:[#allocation7 + $0x51c] sm:$0xff]
    %v4579 = vld [vmem:[#allocation7 + $0x524] sm:$0xf]
    %v4580 = vld [vmem:[#allocation7 + $0x528] sm:$0xff]
    %v4581 = vld [vmem:[#allocation7 + $0x530] sm:$0xf]
    %v4582 = vld [vmem:[#allocation7 + $0x534] sm:$0xff]
    %v4583 = vld [vmem:[#allocation7 + $0x53c] sm:$0xf]
    %v4584 = vld [vmem:[#allocation7 + $0x540] sm:$0xff]
    %v4585 = vld [vmem:[#allocation7 + $0x548] sm:$0xf]
    %v4586 = vld [vmem:[#allocation7 + $0x54c] sm:$0xff]
    %v4587 = vld [vmem:[#allocation7 + $0x554] sm:$0xf]
    %v4588 = vld [vmem:[#allocation7 + $0x558] sm:$0xff]
    %v4589 = vld [vmem:[#allocation7 + $0x560] sm:$0xf]
    %v4590 = vld [vmem:[#allocation7 + $0x564] sm:$0xff]
    %v4591 = vld [vmem:[#allocation7 + $0x56c] sm:$0xf]
    %v4592 = vld [vmem:[#allocation7 + $0x570] sm:$0xff]
    %v4593 = vld [vmem:[#allocation7 + $0x578] sm:$0xf]
    %v4594 = vld [vmem:[#allocation7 + $0x57c] sm:$0xff]
    %v4595 = vld [vmem:[#allocation7 + $0x584] sm:$0xf]
    %v4596 = vld [vmem:[#allocation7 + $0x588] sm:$0xff]
    %v4597 = vld [vmem:[#allocation7 + $0x590] sm:$0xf]
    %v4598 = vld [vmem:[#allocation7 + $0x594] sm:$0xff]
    %v4599 = vld [vmem:[#allocation7 + $0x59c] sm:$0xf]
    %v4600 = vld [vmem:[#allocation7 + $0x5a0] sm:$0xff]
    %v4601 = vld [vmem:[#allocation7 + $0x5a8] sm:$0xf]
    %v4602 = vld [vmem:[#allocation7 + $0x5ac] sm:$0xff]
    %v4603 = vld [vmem:[#allocation7 + $0x5b4] sm:$0xf]
    %v4604 = vld [vmem:[#allocation7 + $0x5b8] sm:$0xff]
    %v4605 = vld [vmem:[#allocation7 + $0x5c0] sm:$0xf]
    %v4606 = vld [vmem:[#allocation7 + $0x5c4] sm:$0xff]
    %v4607 = vld [vmem:[#allocation7 + $0x5cc] sm:$0xf]
    %v4608 = vld [vmem:[#allocation7 + $0x5d0] sm:$0xff]
    %v4609 = vld [vmem:[#allocation7 + $0x5d8] sm:$0xf]
    %v4610 = vld [vmem:[#allocation7 + $0x5dc] sm:$0xff]
    %v4611 = vld [vmem:[#allocation7 + $0x5e4] sm:$0xf]
    %v4612 = vld [vmem:[#allocation7 + $0x5e8] sm:$0xff]
    %v4613 = vld [vmem:[#allocation7 + $0x5f0] sm:$0xf]
    %v4614 = vld [vmem:[#allocation7 + $0x5f4] sm:$0xff]
    %v4615 = vld [vmem:[#allocation7 + $0x5fc] sm:$0xf]
    %v4616 = vld [vmem:[#allocation7 + $0x600] sm:$0xff]
    %v4617 = vld [vmem:[#allocation7 + $0x608] sm:$0xf]
    %v4618 = vld [vmem:[#allocation7 + $0x60c] sm:$0xff]
    %v4619 = vld [vmem:[#allocation7 + $0x614] sm:$0xf]
    %v4620 = vld [vmem:[#allocation7 + $0x618] sm:$0xff]
    %v4621 = vld [vmem:[#allocation7 + $0x620] sm:$0xf]
    %v4622 = vld [vmem:[#allocation7 + $0x624] sm:$0xff]
    %v4623 = vld [vmem:[#allocation7 + $0x62c] sm:$0xf]
    %v4624 = vld [vmem:[#allocation7 + $0x630] sm:$0xff]
    %v4625 = vld [vmem:[#allocation7 + $0x638] sm:$0xf]
    %v4626 = vld [vmem:[#allocation7 + $0x63c] sm:$0xff]
    %v4627 = vld [vmem:[#allocation7 + $0x644] sm:$0xf]
    %v4628 = vld [vmem:[#allocation7 + $0x648] sm:$0xff]
    %v4629 = vld [vmem:[#allocation7 + $0x650] sm:$0xf]
    %v4630 = vld [vmem:[#allocation7 + $0x654] sm:$0xff]
    %v4631 = vld [vmem:[#allocation7 + $0x65c] sm:$0xf]
    %v4632 = vld [vmem:[#allocation7 + $0x660] sm:$0xff]
    %v4633 = vld [vmem:[#allocation7 + $0x668] sm:$0xf]
    %v4634 = vld [vmem:[#allocation7 + $0x66c] sm:$0xff]
    %v4635 = vld [vmem:[#allocation7 + $0x674] sm:$0xf]
    %v4636 = vld [vmem:[#allocation7 + $0x678] sm:$0xff]
    %v4637 = vld [vmem:[#allocation7 + $0x680] sm:$0xf]
    %v4638 = vld [vmem:[#allocation7 + $0x684] sm:$0xff]
    %v4639 = vld [vmem:[#allocation7 + $0x68c] sm:$0xf]
    %v4640 = vld [vmem:[#allocation7 + $0x690] sm:$0xff]
    %v4641 = vld [vmem:[#allocation7 + $0x698] sm:$0xf]
    %v4642 = vld [vmem:[#allocation7 + $0x69c] sm:$0xff]
    %v4643 = vld [vmem:[#allocation7 + $0x6a4] sm:$0xf]
    %v4644 = vld [vmem:[#allocation7 + $0x6a8] sm:$0xff]
    %v4645 = vld [vmem:[#allocation7 + $0x6b0] sm:$0xf]
    %v4646 = vld [vmem:[#allocation7 + $0x6b4] sm:$0xff]
    %v4647 = vld [vmem:[#allocation7 + $0x6bc] sm:$0xf]
    %v4648 = vld [vmem:[#allocation7 + $0x6c0] sm:$0xff]
    %v4649 = vld [vmem:[#allocation7 + $0x6c8] sm:$0xf]
    %v4650 = vld [vmem:[#allocation7 + $0x6cc] sm:$0xff]
    %v4651 = vld [vmem:[#allocation7 + $0x6d4] sm:$0xf]
    %v4652 = vld [vmem:[#allocation7 + $0x6d8] sm:$0xff]
    %v4653 = vld [vmem:[#allocation7 + $0x6e0] sm:$0xf]
    %v4654 = vld [vmem:[#allocation7 + $0x6e4] sm:$0xff]
    %v4655 = vld [vmem:[#allocation7 + $0x6ec] sm:$0xf]
    %v4656 = vld [vmem:[#allocation7 + $0x6f0] sm:$0xff]
    %v4657 = vld [vmem:[#allocation7 + $0x6f8] sm:$0xf]
    %v4658 = vld [vmem:[#allocation7 + $0x6fc] sm:$0xff]
    %v4659 = vld [vmem:[#allocation7 + $0x704] sm:$0xf]
    %v4660 = vld [vmem:[#allocation7 + $0x708] sm:$0xff]
    %v4661 = vld [vmem:[#allocation7 + $0x710] sm:$0xf]
    %v4662 = vld [vmem:[#allocation7 + $0x714] sm:$0xff]
    %v4663 = vld [vmem:[#allocation7 + $0x71c] sm:$0xf]
    %v4664 = vld [vmem:[#allocation7 + $0x720] sm:$0xff]
    %v4665 = vld [vmem:[#allocation7 + $0x728] sm:$0xf]
    %v4666 = vld [vmem:[#allocation7 + $0x72c] sm:$0xff]
    %v4667 = vld [vmem:[#allocation7 + $0x734] sm:$0xf]
    %v4668 = vld [vmem:[#allocation7 + $0x738] sm:$0xff]
    %v4669 = vld [vmem:[#allocation7 + $0x740] sm:$0xf]
    %v4670 = vld [vmem:[#allocation7 + $0x744] sm:$0xff]
    %v4671 = vld [vmem:[#allocation7 + $0x74c] sm:$0xf]
    %v4672 = vld [vmem:[#allocation7 + $0x750] sm:$0xff]
    %v4673 = vld [vmem:[#allocation7 + $0x758] sm:$0xf]
    %v4674 = vld [vmem:[#allocation7 + $0x75c] sm:$0xff]
    %v4675 = vld [vmem:[#allocation7 + $0x764] sm:$0xf]
    %v4676 = vld [vmem:[#allocation7 + $0x768] sm:$0xff]
    %v4677 = vld [vmem:[#allocation7 + $0x770] sm:$0xf]
    %v4678 = vld [vmem:[#allocation7 + $0x774] sm:$0xff]
    %v4679 = vld [vmem:[#allocation7 + $0x77c] sm:$0xf]
    %v4680 = vld [vmem:[#allocation7 + $0x780] sm:$0xff]
    %v4681 = vld [vmem:[#allocation7 + $0x788] sm:$0xf]
    %v4682 = vld [vmem:[#allocation7 + $0x78c] sm:$0xff]
    %v4683 = vld [vmem:[#allocation7 + $0x794] sm:$0xf]
    %v4684 = vld [vmem:[#allocation7 + $0x798] sm:$0xff]
    %v4685 = vld [vmem:[#allocation7 + $0x7a0] sm:$0xf]
    %v4686 = vld [vmem:[#allocation7 + $0x7a4] sm:$0xff]
    %v4687 = vld [vmem:[#allocation7 + $0x7ac] sm:$0xf]
    %v4688 = vld [vmem:[#allocation7 + $0x7b0] sm:$0xff]
    %v4689 = vld [vmem:[#allocation7 + $0x7b8] sm:$0xf]
    %v4690 = vld [vmem:[#allocation7 + $0x7bc] sm:$0xff]
    %v4691 = vld [vmem:[#allocation7 + $0x7c4] sm:$0xf]
    %v4692 = vld [vmem:[#allocation7 + $0x7c8] sm:$0xff]
    %v4693 = vld [vmem:[#allocation7 + $0x7d0] sm:$0xf]
    %v4694 = vld [vmem:[#allocation7 + $0x7d4] sm:$0xff]
    %v4695 = vld [vmem:[#allocation7 + $0x7dc] sm:$0xf]
    %v4696 = vld [vmem:[#allocation7 + $0x7e0] sm:$0xff]
    %v4697 = vld [vmem:[#allocation7 + $0x7e8] sm:$0xf]
    %v4698 = vld [vmem:[#allocation7 + $0x7ec] sm:$0xff]
    %v4699 = vld [vmem:[#allocation7 + $0x7f4] sm:$0xf]
    %v4700 = vld [vmem:[#allocation7 + $0x7f8] sm:$0xff]
    %v4701 = vld [vmem:[#allocation7 + $0x800] sm:$0xf]
    %v4702 = vld [vmem:[#allocation7 + $0x804] sm:$0xff]
    %v4703 = vld [vmem:[#allocation7 + $0x80c] sm:$0xf]
    %v4704 = vld [vmem:[#allocation7 + $0x810] sm:$0xff]
    %v4705 = vld [vmem:[#allocation7 + $0x818] sm:$0xf]
    %v4706 = vld [vmem:[#allocation7 + $0x81c] sm:$0xff]
    %v4707 = vld [vmem:[#allocation7 + $0x824] sm:$0xf]
    %v4708 = vld [vmem:[#allocation7 + $0x828] sm:$0xff]
    %v4709 = vld [vmem:[#allocation7 + $0x830] sm:$0xf]
    %v4710 = vld [vmem:[#allocation7 + $0x834] sm:$0xff]
    %v4711 = vld [vmem:[#allocation7 + $0x83c] sm:$0xf]
    %v4712 = vld [vmem:[#allocation7 + $0x840] sm:$0xff]
    %v4713 = vld [vmem:[#allocation7 + $0x848] sm:$0xf]
    %v4714 = vld [vmem:[#allocation7 + $0x84c] sm:$0xff]
    %v4715 = vld [vmem:[#allocation7 + $0x854] sm:$0xf]
    %v4716 = vld [vmem:[#allocation7 + $0x858] sm:$0xff]
    %v4717 = vld [vmem:[#allocation7 + $0x860] sm:$0xf]
    %v4718 = vld [vmem:[#allocation7 + $0x864] sm:$0xff]
    %v4719 = vld [vmem:[#allocation7 + $0x86c] sm:$0xf]
    %v4720 = vld [vmem:[#allocation7 + $0x870] sm:$0xff]
    %v4721 = vld [vmem:[#allocation7 + $0x878] sm:$0xf]
    %v4722 = vld [vmem:[#allocation7 + $0x87c] sm:$0xff]
    %v4723 = vld [vmem:[#allocation7 + $0x884] sm:$0xf]
    %v4724 = vld [vmem:[#allocation7 + $0x888] sm:$0xff]
    %v4725 = vld [vmem:[#allocation7 + $0x890] sm:$0xf]
    %v4726 = vld [vmem:[#allocation7 + $0x894] sm:$0xff]
    %v4727 = vld [vmem:[#allocation7 + $0x89c] sm:$0xf]
    %v4728 = vld [vmem:[#allocation7 + $0x8a0] sm:$0xff]
    %v4729 = vld [vmem:[#allocation7 + $0x8a8] sm:$0xf]
    %v4730 = vld [vmem:[#allocation7 + $0x8ac] sm:$0xff]
    %v4731 = vld [vmem:[#allocation7 + $0x8b4] sm:$0xf]
    %v4732 = vld [vmem:[#allocation7 + $0x8b8] sm:$0xff]
    %v4733 = vld [vmem:[#allocation7 + $0x8c0] sm:$0xf]
    %v4734 = vld [vmem:[#allocation7 + $0x8c4] sm:$0xff]
    %v4735 = vld [vmem:[#allocation7 + $0x8cc] sm:$0xf]
    %v4736 = vld [vmem:[#allocation7 + $0x8d0] sm:$0xff]
    %v4737 = vld [vmem:[#allocation7 + $0x8d8] sm:$0xf]
    %v4738 = vld [vmem:[#allocation7 + $0x8dc] sm:$0xff]
    %v4739 = vld [vmem:[#allocation7 + $0x8e4] sm:$0xf]
    %v4740 = vld [vmem:[#allocation7 + $0x8e8] sm:$0xff]
    %v4741 = vld [vmem:[#allocation7 + $0x8f0] sm:$0xf]
    %v4742 = vld [vmem:[#allocation7 + $0x8f4] sm:$0xff]
    %v4743 = vld [vmem:[#allocation7 + $0x8fc] sm:$0xf]
    %v4744 = vld [vmem:[#allocation7 + $0x900] sm:$0xff]
    %v4745 = vld [vmem:[#allocation7 + $0x908] sm:$0xf]
    %v4746 = vld [vmem:[#allocation7 + $0x90c] sm:$0xff]
    %v4747 = vld [vmem:[#allocation7 + $0x914] sm:$0xf]
    %v4748 = vld [vmem:[#allocation7 + $0x918] sm:$0xff]
    %v4749 = vld [vmem:[#allocation7 + $0x920] sm:$0xf]
    %v4750 = vld [vmem:[#allocation7 + $0x924] sm:$0xff]
    %v4751 = vld [vmem:[#allocation7 + $0x92c] sm:$0xf]
    %v4752 = vld [vmem:[#allocation7 + $0x930] sm:$0xff]
    %v4753 = vld [vmem:[#allocation7 + $0x938] sm:$0xf]
    %v4754 = vld [vmem:[#allocation7 + $0x93c] sm:$0xff]
    %v4755 = vld [vmem:[#allocation7 + $0x944] sm:$0xf]
    %v4756 = vld [vmem:[#allocation7 + $0x948] sm:$0xff]
    %v4757 = vld [vmem:[#allocation7 + $0x950] sm:$0xf]
    %v4758 = vld [vmem:[#allocation7 + $0x954] sm:$0xff]
    %v4759 = vld [vmem:[#allocation7 + $0x95c] sm:$0xf]
    %v4760 = vld [vmem:[#allocation7 + $0x960] sm:$0xff]
    %v4761 = vld [vmem:[#allocation7 + $0x968] sm:$0xf]
    %v4762 = vld [vmem:[#allocation7 + $0x96c] sm:$0xff]
    %v4763 = vld [vmem:[#allocation7 + $0x974] sm:$0xf]
    %v4764 = vld [vmem:[#allocation7 + $0x978] sm:$0xff]
    %v4765 = vld [vmem:[#allocation7 + $0x980] sm:$0xf]
    %v4766 = vld [vmem:[#allocation7 + $0x984] sm:$0xff]
    %v4767 = vld [vmem:[#allocation7 + $0x98c] sm:$0xf]
    %v4768 = vld [vmem:[#allocation7 + $0x990] sm:$0xff]
    %v4769 = vld [vmem:[#allocation7 + $0x998] sm:$0xf]
    %v4770 = vld [vmem:[#allocation7 + $0x99c] sm:$0xff]
    %v4771 = vld [vmem:[#allocation7 + $0x9a4] sm:$0xf]
    %v4772 = vld [vmem:[#allocation7 + $0x9a8] sm:$0xff]
    %v4773 = vld [vmem:[#allocation7 + $0x9b0] sm:$0xf]
    %v4774 = vld [vmem:[#allocation7 + $0x9b4] sm:$0xff]
    %v4775 = vld [vmem:[#allocation7 + $0x9bc] sm:$0xf]
    %v4776 = vld [vmem:[#allocation7 + $0x9c0] sm:$0xff]
    %v4777 = vld [vmem:[#allocation7 + $0x9c8] sm:$0xf]
    %v4778 = vld [vmem:[#allocation7 + $0x9cc] sm:$0xff]
    %v4779 = vld [vmem:[#allocation7 + $0x9d4] sm:$0xf]
    %v4780 = vld [vmem:[#allocation7 + $0x9d8] sm:$0xff]
    %v4781 = vld [vmem:[#allocation7 + $0x9e0] sm:$0xf]
    %v4782 = vld [vmem:[#allocation7 + $0x9e4] sm:$0xff]
    %v4783 = vld [vmem:[#allocation7 + $0x9ec] sm:$0xf]
    %v4784 = vld [vmem:[#allocation7 + $0x9f0] sm:$0xff]
    %v4785 = vld [vmem:[#allocation7 + $0x9f8] sm:$0xf]
    %v4786 = vld [vmem:[#allocation7 + $0x9fc] sm:$0xff]
    %v4787 = vld [vmem:[#allocation7 + $0xa04] sm:$0xf]
    %v4788 = vld [vmem:[#allocation7 + $0xa08] sm:$0xff]
    %v4789 = vld [vmem:[#allocation7 + $0xa10] sm:$0xf]
    %v4790 = vld [vmem:[#allocation7 + $0xa14] sm:$0xff]
    %v4791 = vld [vmem:[#allocation7 + $0xa1c] sm:$0xf]
    %v4792 = vld [vmem:[#allocation7 + $0xa20] sm:$0xff]
    %v4793 = vld [vmem:[#allocation7 + $0xa28] sm:$0xf]
    %v4794 = vld [vmem:[#allocation7 + $0xa2c] sm:$0xff]
    %v4795 = vld [vmem:[#allocation7 + $0xa34] sm:$0xf]
    %v4796 = vld [vmem:[#allocation7 + $0xa38] sm:$0xff]
    %v4797 = vld [vmem:[#allocation7 + $0xa40] sm:$0xf]
    %v4798 = vld [vmem:[#allocation7 + $0xa44] sm:$0xff]
    %v4799 = vld [vmem:[#allocation7 + $0xa4c] sm:$0xf]
    %v4800 = vld [vmem:[#allocation7 + $0xa50] sm:$0xff]
    %v4801 = vld [vmem:[#allocation7 + $0xa58] sm:$0xf]
    %v4802 = vld [vmem:[#allocation7 + $0xa5c] sm:$0xff]
    %v4803 = vld [vmem:[#allocation7 + $0xa64] sm:$0xf]
    %v4804 = vld [vmem:[#allocation7 + $0xa68] sm:$0xff]
    %v4805 = vld [vmem:[#allocation7 + $0xa70] sm:$0xf]
    %v4806 = vld [vmem:[#allocation7 + $0xa74] sm:$0xff]
    %v4807 = vld [vmem:[#allocation7 + $0xa7c] sm:$0xf]
    %v4808 = vld [vmem:[#allocation7 + $0xa80] sm:$0xff]
    %v4809 = vld [vmem:[#allocation7 + $0xa88] sm:$0xf]
    %v4810 = vld [vmem:[#allocation7 + $0xa8c] sm:$0xff]
    %v4811 = vld [vmem:[#allocation7 + $0xa94] sm:$0xf]
    %v4812 = vld [vmem:[#allocation7 + $0xa98] sm:$0xff]
    %v4813 = vld [vmem:[#allocation7 + $0xaa0] sm:$0xf]
    %v4814 = vld [vmem:[#allocation7 + $0xaa4] sm:$0xff]
    %v4815 = vld [vmem:[#allocation7 + $0xaac] sm:$0xf]
    %v4816 = vld [vmem:[#allocation7 + $0xab0] sm:$0xff]
    %v4817 = vld [vmem:[#allocation7 + $0xab8] sm:$0xf]
    %v4818 = vld [vmem:[#allocation7 + $0xabc] sm:$0xff]
    %v4819 = vld [vmem:[#allocation7 + $0xac4] sm:$0xf]
    %v4820 = vld [vmem:[#allocation7 + $0xac8] sm:$0xff]
    %v4821 = vld [vmem:[#allocation7 + $0xad0] sm:$0xf]
    %v4822 = vld [vmem:[#allocation7 + $0xad4] sm:$0xff]
    %v4823 = vld [vmem:[#allocation7 + $0xadc] sm:$0xf]
    %v4824 = vld [vmem:[#allocation7 + $0xae0] sm:$0xff]
    %v4825 = vld [vmem:[#allocation7 + $0xae8] sm:$0xf]
    %v4826 = vld [vmem:[#allocation7 + $0xaec] sm:$0xff]
    %v4827 = vld [vmem:[#allocation7 + $0xaf4] sm:$0xf]
    %v4828 = vld [vmem:[#allocation7 + $0xaf8] sm:$0xff]
    %v4829 = vld [vmem:[#allocation7 + $0xb00] sm:$0xf]
    %v4830 = vld [vmem:[#allocation7 + $0xb04] sm:$0xff]
    %v4831 = vld [vmem:[#allocation7 + $0xb0c] sm:$0xf]
    %v4832 = vld [vmem:[#allocation7 + $0xb10] sm:$0xff]
    %v4833 = vld [vmem:[#allocation7 + $0xb18] sm:$0xf]
    %v4834 = vld [vmem:[#allocation7 + $0xb1c] sm:$0xff]
    %v4835 = vld [vmem:[#allocation7 + $0xb24] sm:$0xf]
    %v4836 = vld [vmem:[#allocation7 + $0xb28] sm:$0xff]
    %v4837 = vld [vmem:[#allocation7 + $0xb30] sm:$0xf]
    %v4838 = vld [vmem:[#allocation7 + $0xb34] sm:$0xff]
    %v4839 = vld [vmem:[#allocation7 + $0xb3c] sm:$0xf]
    %v5320 = vunpack.c.l.b16 %v4360
    %v5321 = vunpack.c.h.b16 %v4360
    %v5322 = vunpack.c.l.b16 %v4361
    %v5323 = vunpack.c.l.b16 %v4362
    %v5324 = vunpack.c.h.b16 %v4362
    %v5325 = vunpack.c.l.b16 %v4363
    %v5326 = vunpack.c.l.b16 %v4364
    %v5327 = vunpack.c.h.b16 %v4364
    %v5328 = vunpack.c.l.b16 %v4365
    %v5329 = vunpack.c.l.b16 %v4366
    %v5330 = vunpack.c.h.b16 %v4366
    %v5331 = vunpack.c.l.b16 %v4367
    %v5332 = vunpack.c.l.b16 %v4368
    %v5333 = vunpack.c.h.b16 %v4368
    %v5334 = vunpack.c.l.b16 %v4369
    %v5335 = vunpack.c.l.b16 %v4370
    %v5336 = vunpack.c.h.b16 %v4370
    %v5337 = vunpack.c.l.b16 %v4371
    %v5338 = vunpack.c.l.b16 %v4372
    %v5339 = vunpack.c.h.b16 %v4372
    %v5340 = vunpack.c.l.b16 %v4373
    %v5341 = vunpack.c.l.b16 %v4374
    %v5342 = vunpack.c.h.b16 %v4374
    %v5343 = vunpack.c.l.b16 %v4375
    %v5344 = vunpack.c.l.b16 %v4376
    %v5345 = vunpack.c.h.b16 %v4376
    %v5346 = vunpack.c.l.b16 %v4377
    %v5347 = vunpack.c.l.b16 %v4378
    %v5348 = vunpack.c.h.b16 %v4378
    %v5349 = vunpack.c.l.b16 %v4379
    %v5350 = vunpack.c.l.b16 %v4380
    %v5351 = vunpack.c.h.b16 %v4380
    %v5352 = vunpack.c.l.b16 %v4381
    %v5353 = vunpack.c.l.b16 %v4382
    %v5354 = vunpack.c.h.b16 %v4382
    %v5355 = vunpack.c.l.b16 %v4383
    %v5356 = vunpack.c.l.b16 %v4384
    %v5357 = vunpack.c.h.b16 %v4384
    %v5358 = vunpack.c.l.b16 %v4385
    %v5359 = vunpack.c.l.b16 %v4386
    %v5360 = vunpack.c.h.b16 %v4386
    %v5361 = vunpack.c.l.b16 %v4387
    %v5362 = vunpack.c.l.b16 %v4388
    %v5363 = vunpack.c.h.b16 %v4388
    %v5364 = vunpack.c.l.b16 %v4389
    %v5365 = vunpack.c.l.b16 %v4390
    %v5366 = vunpack.c.h.b16 %v4390
    %v5367 = vunpack.c.l.b16 %v4391
    %v5368 = vunpack.c.l.b16 %v4392
    %v5369 = vunpack.c.h.b16 %v4392
    %v5370 = vunpack.c.l.b16 %v4393
    %v5371 = vunpack.c.l.b16 %v4394
    %v5372 = vunpack.c.h.b16 %v4394
    %v5373 = vunpack.c.l.b16 %v4395
    %v5374 = vunpack.c.l.b16 %v4396
    %v5375 = vunpack.c.h.b16 %v4396
    %v5376 = vunpack.c.l.b16 %v4397
    %v5377 = vunpack.c.l.b16 %v4398
    %v5378 = vunpack.c.h.b16 %v4398
    %v5379 = vunpack.c.l.b16 %v4399
    %v5380 = vunpack.c.l.b16 %v4400
    %v5381 = vunpack.c.h.b16 %v4400
    %v5382 = vunpack.c.l.b16 %v4401
    %v5383 = vunpack.c.l.b16 %v4402
    %v5384 = vunpack.c.h.b16 %v4402
    %v5385 = vunpack.c.l.b16 %v4403
    %v5386 = vunpack.c.l.b16 %v4404
    %v5387 = vunpack.c.h.b16 %v4404
    %v5388 = vunpack.c.l.b16 %v4405
    %v5389 = vunpack.c.l.b16 %v4406
    %v5390 = vunpack.c.h.b16 %v4406
    %v5391 = vunpack.c.l.b16 %v4407
    %v5392 = vunpack.c.l.b16 %v4408
    %v5393 = vunpack.c.h.b16 %v4408
    %v5394 = vunpack.c.l.b16 %v4409
    %v5395 = vunpack.c.l.b16 %v4410
    %v5396 = vunpack.c.h.b16 %v4410
    %v5397 = vunpack.c.l.b16 %v4411
    %v5398 = vunpack.c.l.b16 %v4412
    %v5399 = vunpack.c.h.b16 %v4412
    %v5400 = vunpack.c.l.b16 %v4413
    %v5401 = vunpack.c.l.b16 %v4414
    %v5402 = vunpack.c.h.b16 %v4414
    %v5403 = vunpack.c.l.b16 %v4415
    %v5404 = vunpack.c.l.b16 %v4416
    %v5405 = vunpack.c.h.b16 %v4416
    %v5406 = vunpack.c.l.b16 %v4417
    %v5407 = vunpack.c.l.b16 %v4418
    %v5408 = vunpack.c.h.b16 %v4418
    %v5409 = vunpack.c.l.b16 %v4419
    %v5410 = vunpack.c.l.b16 %v4420
    %v5411 = vunpack.c.h.b16 %v4420
    %v5412 = vunpack.c.l.b16 %v4421
    %v5413 = vunpack.c.l.b16 %v4422
    %v5414 = vunpack.c.h.b16 %v4422
    %v5415 = vunpack.c.l.b16 %v4423
    %v5416 = vunpack.c.l.b16 %v4424
    %v5417 = vunpack.c.h.b16 %v4424
    %v5418 = vunpack.c.l.b16 %v4425
    %v5419 = vunpack.c.l.b16 %v4426
    %v5420 = vunpack.c.h.b16 %v4426
    %v5421 = vunpack.c.l.b16 %v4427
    %v5422 = vunpack.c.l.b16 %v4428
    %v5423 = vunpack.c.h.b16 %v4428
    %v5424 = vunpack.c.l.b16 %v4429
    %v5425 = vunpack.c.l.b16 %v4430
    %v5426 = vunpack.c.h.b16 %v4430
    %v5427 = vunpack.c.l.b16 %v4431
    %v5428 = vunpack.c.l.b16 %v4432
    %v5429 = vunpack.c.h.b16 %v4432
    %v5430 = vunpack.c.l.b16 %v4433
    %v5431 = vunpack.c.l.b16 %v4434
    %v5432 = vunpack.c.h.b16 %v4434
    %v5433 = vunpack.c.l.b16 %v4435
    %v5434 = vunpack.c.l.b16 %v4436
    %v5435 = vunpack.c.h.b16 %v4436
    %v5436 = vunpack.c.l.b16 %v4437
    %v5437 = vunpack.c.l.b16 %v4438
    %v5438 = vunpack.c.h.b16 %v4438
    %v5439 = vunpack.c.l.b16 %v4439
    %v5440 = vunpack.c.l.b16 %v4440
    %v5441 = vunpack.c.h.b16 %v4440
    %v5442 = vunpack.c.l.b16 %v4441
    %v5443 = vunpack.c.l.b16 %v4442
    %v5444 = vunpack.c.h.b16 %v4442
    %v5445 = vunpack.c.l.b16 %v4443
    %v5446 = vunpack.c.l.b16 %v4444
    %v5447 = vunpack.c.h.b16 %v4444
    %v5448 = vunpack.c.l.b16 %v4445
    %v5449 = vunpack.c.l.b16 %v4446
    %v5450 = vunpack.c.h.b16 %v4446
    %v5451 = vunpack.c.l.b16 %v4447
    %v5452 = vunpack.c.l.b16 %v4448
    %v5453 = vunpack.c.h.b16 %v4448
    %v5454 = vunpack.c.l.b16 %v4449
    %v5455 = vunpack.c.l.b16 %v4450
    %v5456 = vunpack.c.h.b16 %v4450
    %v5457 = vunpack.c.l.b16 %v4451
    %v5458 = vunpack.c.l.b16 %v4452
    %v5459 = vunpack.c.h.b16 %v4452
    %v5460 = vunpack.c.l.b16 %v4453
    %v5461 = vunpack.c.l.b16 %v4454
    %v5462 = vunpack.c.h.b16 %v4454
    %v5463 = vunpack.c.l.b16 %v4455
    %v5464 = vunpack.c.l.b16 %v4456
    %v5465 = vunpack.c.h.b16 %v4456
    %v5466 = vunpack.c.l.b16 %v4457
    %v5467 = vunpack.c.l.b16 %v4458
    %v5468 = vunpack.c.h.b16 %v4458
    %v5469 = vunpack.c.l.b16 %v4459
    %v5470 = vunpack.c.l.b16 %v4460
    %v5471 = vunpack.c.h.b16 %v4460
    %v5472 = vunpack.c.l.b16 %v4461
    %v5473 = vunpack.c.l.b16 %v4462
    %v5474 = vunpack.c.h.b16 %v4462
    %v5475 = vunpack.c.l.b16 %v4463
    %v5476 = vunpack.c.l.b16 %v4464
    %v5477 = vunpack.c.h.b16 %v4464
    %v5478 = vunpack.c.l.b16 %v4465
    %v5479 = vunpack.c.l.b16 %v4466
    %v5480 = vunpack.c.h.b16 %v4466
    %v5481 = vunpack.c.l.b16 %v4467
    %v5482 = vunpack.c.l.b16 %v4468
    %v5483 = vunpack.c.h.b16 %v4468
    %v5484 = vunpack.c.l.b16 %v4469
    %v5485 = vunpack.c.l.b16 %v4470
    %v5486 = vunpack.c.h.b16 %v4470
    %v5487 = vunpack.c.l.b16 %v4471
    %v5488 = vunpack.c.l.b16 %v4472
    %v5489 = vunpack.c.h.b16 %v4472
    %v5490 = vunpack.c.l.b16 %v4473
    %v5491 = vunpack.c.l.b16 %v4474
    %v5492 = vunpack.c.h.b16 %v4474
    %v5493 = vunpack.c.l.b16 %v4475
    %v5494 = vunpack.c.l.b16 %v4476
    %v5495 = vunpack.c.h.b16 %v4476
    %v5496 = vunpack.c.l.b16 %v4477
    %v5497 = vunpack.c.l.b16 %v4478
    %v5498 = vunpack.c.h.b16 %v4478
    %v5499 = vunpack.c.l.b16 %v4479
    %v5500 = vunpack.c.l.b16 %v4480
    %v5501 = vunpack.c.h.b16 %v4480
    %v5502 = vunpack.c.l.b16 %v4481
    %v5503 = vunpack.c.l.b16 %v4482
    %v5504 = vunpack.c.h.b16 %v4482
    %v5505 = vunpack.c.l.b16 %v4483
    %v5506 = vunpack.c.l.b16 %v4484
    %v5507 = vunpack.c.h.b16 %v4484
    %v5508 = vunpack.c.l.b16 %v4485
    %v5509 = vunpack.c.l.b16 %v4486
    %v5510 = vunpack.c.h.b16 %v4486
    %v5511 = vunpack.c.l.b16 %v4487
    %v5512 = vunpack.c.l.b16 %v4488
    %v5513 = vunpack.c.h.b16 %v4488
    %v5514 = vunpack.c.l.b16 %v4489
    %v5515 = vunpack.c.l.b16 %v4490
    %v5516 = vunpack.c.h.b16 %v4490
    %v5517 = vunpack.c.l.b16 %v4491
    %v5518 = vunpack.c.l.b16 %v4492
    %v5519 = vunpack.c.h.b16 %v4492
    %v5520 = vunpack.c.l.b16 %v4493
    %v5521 = vunpack.c.l.b16 %v4494
    %v5522 = vunpack.c.h.b16 %v4494
    %v5523 = vunpack.c.l.b16 %v4495
    %v5524 = vunpack.c.l.b16 %v4496
    %v5525 = vunpack.c.h.b16 %v4496
    %v5526 = vunpack.c.l.b16 %v4497
    %v5527 = vunpack.c.l.b16 %v4498
    %v5528 = vunpack.c.h.b16 %v4498
    %v5529 = vunpack.c.l.b16 %v4499
    %v5530 = vunpack.c.l.b16 %v4500
    %v5531 = vunpack.c.h.b16 %v4500
    %v5532 = vunpack.c.l.b16 %v4501
    %v5533 = vunpack.c.l.b16 %v4502
    %v5534 = vunpack.c.h.b16 %v4502
    %v5535 = vunpack.c.l.b16 %v4503
    %v5536 = vunpack.c.l.b16 %v4504
    %v5537 = vunpack.c.h.b16 %v4504
    %v5538 = vunpack.c.l.b16 %v4505
    %v5539 = vunpack.c.l.b16 %v4506
    %v5540 = vunpack.c.h.b16 %v4506
    %v5541 = vunpack.c.l.b16 %v4507
    %v5542 = vunpack.c.l.b16 %v4508
    %v5543 = vunpack.c.h.b16 %v4508
    %v5544 = vunpack.c.l.b16 %v4509
    %v5545 = vunpack.c.l.b16 %v4510
    %v5546 = vunpack.c.h.b16 %v4510
    %v5547 = vunpack.c.l.b16 %v4511
    %v5548 = vunpack.c.l.b16 %v4512
    %v5549 = vunpack.c.h.b16 %v4512
    %v5550 = vunpack.c.l.b16 %v4513
    %v5551 = vunpack.c.l.b16 %v4514
    %v5552 = vunpack.c.h.b16 %v4514
    %v5553 = vunpack.c.l.b16 %v4515
    %v5554 = vunpack.c.l.b16 %v4516
    %v5555 = vunpack.c.h.b16 %v4516
    %v5556 = vunpack.c.l.b16 %v4517
    %v5557 = vunpack.c.l.b16 %v4518
    %v5558 = vunpack.c.h.b16 %v4518
    %v5559 = vunpack.c.l.b16 %v4519
    %v5560 = vunpack.c.l.b16 %v4520
    %v5561 = vunpack.c.h.b16 %v4520
    %v5562 = vunpack.c.l.b16 %v4521
    %v5563 = vunpack.c.l.b16 %v4522
    %v5564 = vunpack.c.h.b16 %v4522
    %v5565 = vunpack.c.l.b16 %v4523
    %v5566 = vunpack.c.l.b16 %v4524
    %v5567 = vunpack.c.h.b16 %v4524
    %v5568 = vunpack.c.l.b16 %v4525
    %v5569 = vunpack.c.l.b16 %v4526
    %v5570 = vunpack.c.h.b16 %v4526
    %v5571 = vunpack.c.l.b16 %v4527
    %v5572 = vunpack.c.l.b16 %v4528
    %v5573 = vunpack.c.h.b16 %v4528
    %v5574 = vunpack.c.l.b16 %v4529
    %v5575 = vunpack.c.l.b16 %v4530
    %v5576 = vunpack.c.h.b16 %v4530
    %v5577 = vunpack.c.l.b16 %v4531
    %v5578 = vunpack.c.l.b16 %v4532
    %v5579 = vunpack.c.h.b16 %v4532
    %v5580 = vunpack.c.l.b16 %v4533
    %v5581 = vunpack.c.l.b16 %v4534
    %v5582 = vunpack.c.h.b16 %v4534
    %v5583 = vunpack.c.l.b16 %v4535
    %v5584 = vunpack.c.l.b16 %v4536
    %v5585 = vunpack.c.h.b16 %v4536
    %v5586 = vunpack.c.l.b16 %v4537
    %v5587 = vunpack.c.l.b16 %v4538
    %v5588 = vunpack.c.h.b16 %v4538
    %v5589 = vunpack.c.l.b16 %v4539
    %v5590 = vunpack.c.l.b16 %v4540
    %v5591 = vunpack.c.h.b16 %v4540
    %v5592 = vunpack.c.l.b16 %v4541
    %v5593 = vunpack.c.l.b16 %v4542
    %v5594 = vunpack.c.h.b16 %v4542
    %v5595 = vunpack.c.l.b16 %v4543
    %v5596 = vunpack.c.l.b16 %v4544
    %v5597 = vunpack.c.h.b16 %v4544
    %v5598 = vunpack.c.l.b16 %v4545
    %v5599 = vunpack.c.l.b16 %v4546
    %v5600 = vunpack.c.h.b16 %v4546
    %v5601 = vunpack.c.l.b16 %v4547
    %v5602 = vunpack.c.l.b16 %v4548
    %v5603 = vunpack.c.h.b16 %v4548
    %v5604 = vunpack.c.l.b16 %v4549
    %v5605 = vunpack.c.l.b16 %v4550
    %v5606 = vunpack.c.h.b16 %v4550
    %v5607 = vunpack.c.l.b16 %v4551
    %v5608 = vunpack.c.l.b16 %v4552
    %v5609 = vunpack.c.h.b16 %v4552
    %v5610 = vunpack.c.l.b16 %v4553
    %v5611 = vunpack.c.l.b16 %v4554
    %v5612 = vunpack.c.h.b16 %v4554
    %v5613 = vunpack.c.l.b16 %v4555
    %v5614 = vunpack.c.l.b16 %v4556
    %v5615 = vunpack.c.h.b16 %v4556
    %v5616 = vunpack.c.l.b16 %v4557
    %v5617 = vunpack.c.l.b16 %v4558
    %v5618 = vunpack.c.h.b16 %v4558
    %v5619 = vunpack.c.l.b16 %v4559
    %v5620 = vunpack.c.l.b16 %v4560
    %v5621 = vunpack.c.h.b16 %v4560
    %v5622 = vunpack.c.l.b16 %v4561
    %v5623 = vunpack.c.l.b16 %v4562
    %v5624 = vunpack.c.h.b16 %v4562
    %v5625 = vunpack.c.l.b16 %v4563
    %v5626 = vunpack.c.l.b16 %v4564
    %v5627 = vunpack.c.h.b16 %v4564
    %v5628 = vunpack.c.l.b16 %v4565
    %v5629 = vunpack.c.l.b16 %v4566
    %v5630 = vunpack.c.h.b16 %v4566
    %v5631 = vunpack.c.l.b16 %v4567
    %v5632 = vunpack.c.l.b16 %v4568
    %v5633 = vunpack.c.h.b16 %v4568
    %v5634 = vunpack.c.l.b16 %v4569
    %v5635 = vunpack.c.l.b16 %v4570
    %v5636 = vunpack.c.h.b16 %v4570
    %v5637 = vunpack.c.l.b16 %v4571
    %v5638 = vunpack.c.l.b16 %v4572
    %v5639 = vunpack.c.h.b16 %v4572
    %v5640 = vunpack.c.l.b16 %v4573
    %v5641 = vunpack.c.l.b16 %v4574
    %v5642 = vunpack.c.h.b16 %v4574
    %v5643 = vunpack.c.l.b16 %v4575
    %v5644 = vunpack.c.l.b16 %v4576
    %v5645 = vunpack.c.h.b16 %v4576
    %v5646 = vunpack.c.l.b16 %v4577
    %v5647 = vunpack.c.l.b16 %v4578
    %v5648 = vunpack.c.h.b16 %v4578
    %v5649 = vunpack.c.l.b16 %v4579
    %v5650 = vunpack.c.l.b16 %v4580
    %v5651 = vunpack.c.h.b16 %v4580
    %v5652 = vunpack.c.l.b16 %v4581
    %v5653 = vunpack.c.l.b16 %v4582
    %v5654 = vunpack.c.h.b16 %v4582
    %v5655 = vunpack.c.l.b16 %v4583
    %v5656 = vunpack.c.l.b16 %v4584
    %v5657 = vunpack.c.h.b16 %v4584
    %v5658 = vunpack.c.l.b16 %v4585
    %v5659 = vunpack.c.l.b16 %v4586
    %v5660 = vunpack.c.h.b16 %v4586
    %v5661 = vunpack.c.l.b16 %v4587
    %v5662 = vunpack.c.l.b16 %v4588
    %v5663 = vunpack.c.h.b16 %v4588
    %v5664 = vunpack.c.l.b16 %v4589
    %v5665 = vunpack.c.l.b16 %v4590
    %v5666 = vunpack.c.h.b16 %v4590
    %v5667 = vunpack.c.l.b16 %v4591
    %v5668 = vunpack.c.l.b16 %v4592
    %v5669 = vunpack.c.h.b16 %v4592
    %v5670 = vunpack.c.l.b16 %v4593
    %v5671 = vunpack.c.l.b16 %v4594
    %v5672 = vunpack.c.h.b16 %v4594
    %v5673 = vunpack.c.l.b16 %v4595
    %v5674 = vunpack.c.l.b16 %v4596
    %v5675 = vunpack.c.h.b16 %v4596
    %v5676 = vunpack.c.l.b16 %v4597
    %v5677 = vunpack.c.l.b16 %v4598
    %v5678 = vunpack.c.h.b16 %v4598
    %v5679 = vunpack.c.l.b16 %v4599
    %v5680 = vunpack.c.l.b16 %v4600
    %v5681 = vunpack.c.h.b16 %v4600
    %v5682 = vunpack.c.l.b16 %v4601
    %v5683 = vunpack.c.l.b16 %v4602
    %v5684 = vunpack.c.h.b16 %v4602
    %v5685 = vunpack.c.l.b16 %v4603
    %v5686 = vunpack.c.l.b16 %v4604
    %v5687 = vunpack.c.h.b16 %v4604
    %v5688 = vunpack.c.l.b16 %v4605
    %v5689 = vunpack.c.l.b16 %v4606
    %v5690 = vunpack.c.h.b16 %v4606
    %v5691 = vunpack.c.l.b16 %v4607
    %v5692 = vunpack.c.l.b16 %v4608
    %v5693 = vunpack.c.h.b16 %v4608
    %v5694 = vunpack.c.l.b16 %v4609
    %v5695 = vunpack.c.l.b16 %v4610
    %v5696 = vunpack.c.h.b16 %v4610
    %v5697 = vunpack.c.l.b16 %v4611
    %v5698 = vunpack.c.l.b16 %v4612
    %v5699 = vunpack.c.h.b16 %v4612
    %v5700 = vunpack.c.l.b16 %v4613
    %v5701 = vunpack.c.l.b16 %v4614
    %v5702 = vunpack.c.h.b16 %v4614
    %v5703 = vunpack.c.l.b16 %v4615
    %v5704 = vunpack.c.l.b16 %v4616
    %v5705 = vunpack.c.h.b16 %v4616
    %v5706 = vunpack.c.l.b16 %v4617
    %v5707 = vunpack.c.l.b16 %v4618
    %v5708 = vunpack.c.h.b16 %v4618
    %v5709 = vunpack.c.l.b16 %v4619
    %v5710 = vunpack.c.l.b16 %v4620
    %v5711 = vunpack.c.h.b16 %v4620
    %v5712 = vunpack.c.l.b16 %v4621
    %v5713 = vunpack.c.l.b16 %v4622
    %v5714 = vunpack.c.h.b16 %v4622
    %v5715 = vunpack.c.l.b16 %v4623
    %v5716 = vunpack.c.l.b16 %v4624
    %v5717 = vunpack.c.h.b16 %v4624
    %v5718 = vunpack.c.l.b16 %v4625
    %v5719 = vunpack.c.l.b16 %v4626
    %v5720 = vunpack.c.h.b16 %v4626
    %v5721 = vunpack.c.l.b16 %v4627
    %v5722 = vunpack.c.l.b16 %v4628
    %v5723 = vunpack.c.h.b16 %v4628
    %v5724 = vunpack.c.l.b16 %v4629
    %v5725 = vunpack.c.l.b16 %v4630
    %v5726 = vunpack.c.h.b16 %v4630
    %v5727 = vunpack.c.l.b16 %v4631
    %v5728 = vunpack.c.l.b16 %v4632
    %v5729 = vunpack.c.h.b16 %v4632
    %v5730 = vunpack.c.l.b16 %v4633
    %v5731 = vunpack.c.l.b16 %v4634
    %v5732 = vunpack.c.h.b16 %v4634
    %v5733 = vunpack.c.l.b16 %v4635
    %v5734 = vunpack.c.l.b16 %v4636
    %v5735 = vunpack.c.h.b16 %v4636
    %v5736 = vunpack.c.l.b16 %v4637
    %v5737 = vunpack.c.l.b16 %v4638
    %v5738 = vunpack.c.h.b16 %v4638
    %v5739 = vunpack.c.l.b16 %v4639
    %v5740 = vunpack.c.l.b16 %v4640
    %v5741 = vunpack.c.h.b16 %v4640
    %v5742 = vunpack.c.l.b16 %v4641
    %v5743 = vunpack.c.l.b16 %v4642
    %v5744 = vunpack.c.h.b16 %v4642
    %v5745 = vunpack.c.l.b16 %v4643
    %v5746 = vunpack.c.l.b16 %v4644
    %v5747 = vunpack.c.h.b16 %v4644
    %v5748 = vunpack.c.l.b16 %v4645
    %v5749 = vunpack.c.l.b16 %v4646
    %v5750 = vunpack.c.h.b16 %v4646
    %v5751 = vunpack.c.l.b16 %v4647
    %v5752 = vunpack.c.l.b16 %v4648
    %v5753 = vunpack.c.h.b16 %v4648
    %v5754 = vunpack.c.l.b16 %v4649
    %v5755 = vunpack.c.l.b16 %v4650
    %v5756 = vunpack.c.h.b16 %v4650
    %v5757 = vunpack.c.l.b16 %v4651
    %v5758 = vunpack.c.l.b16 %v4652
    %v5759 = vunpack.c.h.b16 %v4652
    %v5760 = vunpack.c.l.b16 %v4653
    %v5761 = vunpack.c.l.b16 %v4654
    %v5762 = vunpack.c.h.b16 %v4654
    %v5763 = vunpack.c.l.b16 %v4655
    %v5764 = vunpack.c.l.b16 %v4656
    %v5765 = vunpack.c.h.b16 %v4656
    %v5766 = vunpack.c.l.b16 %v4657
    %v5767 = vunpack.c.l.b16 %v4658
    %v5768 = vunpack.c.h.b16 %v4658
    %v5769 = vunpack.c.l.b16 %v4659
    %v5770 = vunpack.c.l.b16 %v4660
    %v5771 = vunpack.c.h.b16 %v4660
    %v5772 = vunpack.c.l.b16 %v4661
    %v5773 = vunpack.c.l.b16 %v4662
    %v5774 = vunpack.c.h.b16 %v4662
    %v5775 = vunpack.c.l.b16 %v4663
    %v5776 = vunpack.c.l.b16 %v4664
    %v5777 = vunpack.c.h.b16 %v4664
    %v5778 = vunpack.c.l.b16 %v4665
    %v5779 = vunpack.c.l.b16 %v4666
    %v5780 = vunpack.c.h.b16 %v4666
    %v5781 = vunpack.c.l.b16 %v4667
    %v5782 = vunpack.c.l.b16 %v4668
    %v5783 = vunpack.c.h.b16 %v4668
    %v5784 = vunpack.c.l.b16 %v4669
    %v5785 = vunpack.c.l.b16 %v4670
    %v5786 = vunpack.c.h.b16 %v4670
    %v5787 = vunpack.c.l.b16 %v4671
    %v5788 = vunpack.c.l.b16 %v4672
    %v5789 = vunpack.c.h.b16 %v4672
    %v5790 = vunpack.c.l.b16 %v4673
    %v5791 = vunpack.c.l.b16 %v4674
    %v5792 = vunpack.c.h.b16 %v4674
    %v5793 = vunpack.c.l.b16 %v4675
    %v5794 = vunpack.c.l.b16 %v4676
    %v5795 = vunpack.c.h.b16 %v4676
    %v5796 = vunpack.c.l.b16 %v4677
    %v5797 = vunpack.c.l.b16 %v4678
    %v5798 = vunpack.c.h.b16 %v4678
    %v5799 = vunpack.c.l.b16 %v4679
    %v5800 = vunpack.c.l.b16 %v4680
    %v5801 = vunpack.c.h.b16 %v4680
    %v5802 = vunpack.c.l.b16 %v4681
    %v5803 = vunpack.c.l.b16 %v4682
    %v5804 = vunpack.c.h.b16 %v4682
    %v5805 = vunpack.c.l.b16 %v4683
    %v5806 = vunpack.c.l.b16 %v4684
    %v5807 = vunpack.c.h.b16 %v4684
    %v5808 = vunpack.c.l.b16 %v4685
    %v5809 = vunpack.c.l.b16 %v4686
    %v5810 = vunpack.c.h.b16 %v4686
    %v5811 = vunpack.c.l.b16 %v4687
    %v5812 = vunpack.c.l.b16 %v4688
    %v5813 = vunpack.c.h.b16 %v4688
    %v5814 = vunpack.c.l.b16 %v4689
    %v5815 = vunpack.c.l.b16 %v4690
    %v5816 = vunpack.c.h.b16 %v4690
    %v5817 = vunpack.c.l.b16 %v4691
    %v5818 = vunpack.c.l.b16 %v4692
    %v5819 = vunpack.c.h.b16 %v4692
    %v5820 = vunpack.c.l.b16 %v4693
    %v5821 = vunpack.c.l.b16 %v4694
    %v5822 = vunpack.c.h.b16 %v4694
    %v5823 = vunpack.c.l.b16 %v4695
    %v5824 = vunpack.c.l.b16 %v4696
    %v5825 = vunpack.c.h.b16 %v4696
    %v5826 = vunpack.c.l.b16 %v4697
    %v5827 = vunpack.c.l.b16 %v4698
    %v5828 = vunpack.c.h.b16 %v4698
    %v5829 = vunpack.c.l.b16 %v4699
    %v5830 = vunpack.c.l.b16 %v4700
    %v5831 = vunpack.c.h.b16 %v4700
    %v5832 = vunpack.c.l.b16 %v4701
    %v5833 = vunpack.c.l.b16 %v4702
    %v5834 = vunpack.c.h.b16 %v4702
    %v5835 = vunpack.c.l.b16 %v4703
    %v5836 = vunpack.c.l.b16 %v4704
    %v5837 = vunpack.c.h.b16 %v4704
    %v5838 = vunpack.c.l.b16 %v4705
    %v5839 = vunpack.c.l.b16 %v4706
    %v5840 = vunpack.c.h.b16 %v4706
    %v5841 = vunpack.c.l.b16 %v4707
    %v5842 = vunpack.c.l.b16 %v4708
    %v5843 = vunpack.c.h.b16 %v4708
    %v5844 = vunpack.c.l.b16 %v4709
    %v5845 = vunpack.c.l.b16 %v4710
    %v5846 = vunpack.c.h.b16 %v4710
    %v5847 = vunpack.c.l.b16 %v4711
    %v5848 = vunpack.c.l.b16 %v4712
    %v5849 = vunpack.c.h.b16 %v4712
    %v5850 = vunpack.c.l.b16 %v4713
    %v5851 = vunpack.c.l.b16 %v4714
    %v5852 = vunpack.c.h.b16 %v4714
    %v5853 = vunpack.c.l.b16 %v4715
    %v5854 = vunpack.c.l.b16 %v4716
    %v5855 = vunpack.c.h.b16 %v4716
    %v5856 = vunpack.c.l.b16 %v4717
    %v5857 = vunpack.c.l.b16 %v4718
    %v5858 = vunpack.c.h.b16 %v4718
    %v5859 = vunpack.c.l.b16 %v4719
    %v5860 = vunpack.c.l.b16 %v4720
    %v5861 = vunpack.c.h.b16 %v4720
    %v5862 = vunpack.c.l.b16 %v4721
    %v5863 = vunpack.c.l.b16 %v4722
    %v5864 = vunpack.c.h.b16 %v4722
    %v5865 = vunpack.c.l.b16 %v4723
    %v5866 = vunpack.c.l.b16 %v4724
    %v5867 = vunpack.c.h.b16 %v4724
    %v5868 = vunpack.c.l.b16 %v4725
    %v5869 = vunpack.c.l.b16 %v4726
    %v5870 = vunpack.c.h.b16 %v4726
    %v5871 = vunpack.c.l.b16 %v4727
    %v5872 = vunpack.c.l.b16 %v4728
    %v5873 = vunpack.c.h.b16 %v4728
    %v5874 = vunpack.c.l.b16 %v4729
    %v5875 = vunpack.c.l.b16 %v4730
    %v5876 = vunpack.c.h.b16 %v4730
    %v5877 = vunpack.c.l.b16 %v4731
    %v5878 = vunpack.c.l.b16 %v4732
    %v5879 = vunpack.c.h.b16 %v4732
    %v5880 = vunpack.c.l.b16 %v4733
    %v5881 = vunpack.c.l.b16 %v4734
    %v5882 = vunpack.c.h.b16 %v4734
    %v5883 = vunpack.c.l.b16 %v4735
    %v5884 = vunpack.c.l.b16 %v4736
    %v5885 = vunpack.c.h.b16 %v4736
    %v5886 = vunpack.c.l.b16 %v4737
    %v5887 = vunpack.c.l.b16 %v4738
    %v5888 = vunpack.c.h.b16 %v4738
    %v5889 = vunpack.c.l.b16 %v4739
    %v5890 = vunpack.c.l.b16 %v4740
    %v5891 = vunpack.c.h.b16 %v4740
    %v5892 = vunpack.c.l.b16 %v4741
    %v5893 = vunpack.c.l.b16 %v4742
    %v5894 = vunpack.c.h.b16 %v4742
    %v5895 = vunpack.c.l.b16 %v4743
    %v5896 = vunpack.c.l.b16 %v4744
    %v5897 = vunpack.c.h.b16 %v4744
    %v5898 = vunpack.c.l.b16 %v4745
    %v5899 = vunpack.c.l.b16 %v4746
    %v5900 = vunpack.c.h.b16 %v4746
    %v5901 = vunpack.c.l.b16 %v4747
    %v5902 = vunpack.c.l.b16 %v4748
    %v5903 = vunpack.c.h.b16 %v4748
    %v5904 = vunpack.c.l.b16 %v4749
    %v5905 = vunpack.c.l.b16 %v4750
    %v5906 = vunpack.c.h.b16 %v4750
    %v5907 = vunpack.c.l.b16 %v4751
    %v5908 = vunpack.c.l.b16 %v4752
    %v5909 = vunpack.c.h.b16 %v4752
    %v5910 = vunpack.c.l.b16 %v4753
    %v5911 = vunpack.c.l.b16 %v4754
    %v5912 = vunpack.c.h.b16 %v4754
    %v5913 = vunpack.c.l.b16 %v4755
    %v5914 = vunpack.c.l.b16 %v4756
    %v5915 = vunpack.c.h.b16 %v4756
    %v5916 = vunpack.c.l.b16 %v4757
    %v5917 = vunpack.c.l.b16 %v4758
    %v5918 = vunpack.c.h.b16 %v4758
    %v5919 = vunpack.c.l.b16 %v4759
    %v5920 = vunpack.c.l.b16 %v4760
    %v5921 = vunpack.c.h.b16 %v4760
    %v5922 = vunpack.c.l.b16 %v4761
    %v5923 = vunpack.c.l.b16 %v4762
    %v5924 = vunpack.c.h.b16 %v4762
    %v5925 = vunpack.c.l.b16 %v4763
    %v5926 = vunpack.c.l.b16 %v4764
    %v5927 = vunpack.c.h.b16 %v4764
    %v5928 = vunpack.c.l.b16 %v4765
    %v5929 = vunpack.c.l.b16 %v4766
    %v5930 = vunpack.c.h.b16 %v4766
    %v5931 = vunpack.c.l.b16 %v4767
    %v5932 = vunpack.c.l.b16 %v4768
    %v5933 = vunpack.c.h.b16 %v4768
    %v5934 = vunpack.c.l.b16 %v4769
    %v5935 = vunpack.c.l.b16 %v4770
    %v5936 = vunpack.c.h.b16 %v4770
    %v5937 = vunpack.c.l.b16 %v4771
    %v5938 = vunpack.c.l.b16 %v4772
    %v5939 = vunpack.c.h.b16 %v4772
    %v5940 = vunpack.c.l.b16 %v4773
    %v5941 = vunpack.c.l.b16 %v4774
    %v5942 = vunpack.c.h.b16 %v4774
    %v5943 = vunpack.c.l.b16 %v4775
    %v5944 = vunpack.c.l.b16 %v4776
    %v5945 = vunpack.c.h.b16 %v4776
    %v5946 = vunpack.c.l.b16 %v4777
    %v5947 = vunpack.c.l.b16 %v4778
    %v5948 = vunpack.c.h.b16 %v4778
    %v5949 = vunpack.c.l.b16 %v4779
    %v5950 = vunpack.c.l.b16 %v4780
    %v5951 = vunpack.c.h.b16 %v4780
    %v5952 = vunpack.c.l.b16 %v4781
    %v5953 = vunpack.c.l.b16 %v4782
    %v5954 = vunpack.c.h.b16 %v4782
    %v5955 = vunpack.c.l.b16 %v4783
    %v5956 = vunpack.c.l.b16 %v4784
    %v5957 = vunpack.c.h.b16 %v4784
    %v5958 = vunpack.c.l.b16 %v4785
    %v5959 = vunpack.c.l.b16 %v4786
    %v5960 = vunpack.c.h.b16 %v4786
    %v5961 = vunpack.c.l.b16 %v4787
    %v5962 = vunpack.c.l.b16 %v4788
    %v5963 = vunpack.c.h.b16 %v4788
    %v5964 = vunpack.c.l.b16 %v4789
    %v5965 = vunpack.c.l.b16 %v4790
    %v5966 = vunpack.c.h.b16 %v4790
    %v5967 = vunpack.c.l.b16 %v4791
    %v5968 = vunpack.c.l.b16 %v4792
    %v5969 = vunpack.c.h.b16 %v4792
    %v5970 = vunpack.c.l.b16 %v4793
    %v5971 = vunpack.c.l.b16 %v4794
    %v5972 = vunpack.c.h.b16 %v4794
    %v5973 = vunpack.c.l.b16 %v4795
    %v5974 = vunpack.c.l.b16 %v4796
    %v5975 = vunpack.c.h.b16 %v4796
    %v5976 = vunpack.c.l.b16 %v4797
    %v5977 = vunpack.c.l.b16 %v4798
    %v5978 = vunpack.c.h.b16 %v4798
    %v5979 = vunpack.c.l.b16 %v4799
    %v5980 = vunpack.c.l.b16 %v4800
    %v5981 = vunpack.c.h.b16 %v4800
    %v5982 = vunpack.c.l.b16 %v4801
    %v5983 = vunpack.c.l.b16 %v4802
    %v5984 = vunpack.c.h.b16 %v4802
    %v5985 = vunpack.c.l.b16 %v4803
    %v5986 = vunpack.c.l.b16 %v4804
    %v5987 = vunpack.c.h.b16 %v4804
    %v5988 = vunpack.c.l.b16 %v4805
    %v5989 = vunpack.c.l.b16 %v4806
    %v5990 = vunpack.c.h.b16 %v4806
    %v5991 = vunpack.c.l.b16 %v4807
    %v5992 = vunpack.c.l.b16 %v4808
    %v5993 = vunpack.c.h.b16 %v4808
    %v5994 = vunpack.c.l.b16 %v4809
    %v5995 = vunpack.c.l.b16 %v4810
    %v5996 = vunpack.c.h.b16 %v4810
    %v5997 = vunpack.c.l.b16 %v4811
    %v5998 = vunpack.c.l.b16 %v4812
    %v5999 = vunpack.c.h.b16 %v4812
    %v6000 = vunpack.c.l.b16 %v4813
    %v6001 = vunpack.c.l.b16 %v4814
    %v6002 = vunpack.c.h.b16 %v4814
    %v6003 = vunpack.c.l.b16 %v4815
    %v6004 = vunpack.c.l.b16 %v4816
    %v6005 = vunpack.c.h.b16 %v4816
    %v6006 = vunpack.c.l.b16 %v4817
    %v6007 = vunpack.c.l.b16 %v4818
    %v6008 = vunpack.c.h.b16 %v4818
    %v6009 = vunpack.c.l.b16 %v4819
    %v6010 = vunpack.c.l.b16 %v4820
    %v6011 = vunpack.c.h.b16 %v4820
    %v6012 = vunpack.c.l.b16 %v4821
    %v6013 = vunpack.c.l.b16 %v4822
    %v6014 = vunpack.c.h.b16 %v4822
    %v6015 = vunpack.c.l.b16 %v4823
    %v6016 = vunpack.c.l.b16 %v4824
    %v6017 = vunpack.c.h.b16 %v4824
    %v6018 = vunpack.c.l.b16 %v4825
    %v6019 = vunpack.c.l.b16 %v4826
    %v6020 = vunpack.c.h.b16 %v4826
    %v6021 = vunpack.c.l.b16 %v4827
    %v6022 = vunpack.c.l.b16 %v4828
    %v6023 = vunpack.c.h.b16 %v4828
    %v6024 = vunpack.c.l.b16 %v4829
    %v6025 = vunpack.c.l.b16 %v4830
    %v6026 = vunpack.c.h.b16 %v4830
    %v6027 = vunpack.c.l.b16 %v4831
    %v6028 = vunpack.c.l.b16 %v4832
    %v6029 = vunpack.c.h.b16 %v4832
    %v6030 = vunpack.c.l.b16 %v4833
    %v6031 = vunpack.c.l.b16 %v4834
    %v6032 = vunpack.c.h.b16 %v4834
    %v6033 = vunpack.c.l.b16 %v4835
    %v6034 = vunpack.c.l.b16 %v4836
    %v6035 = vunpack.c.h.b16 %v4836
    %v6036 = vunpack.c.l.b16 %v4837
    %v6037 = vunpack.c.l.b16 %v4838
    %v6038 = vunpack.c.h.b16 %v4838
    %v6039 = vunpack.c.l.b16 %v4839
    %v6040 = vpack.c.b16 %v5323, %v5320
    %v6041 = vpack.c.b16 %v5324, %v5321
    %v6042 = vpack.c.b16 %v5325, %v5322
    %v6043 = vpack.c.b16 %v5329, %v5326
    %v6044 = vpack.c.b16 %v5330, %v5327
    %v6045 = vpack.c.b16 %v5331, %v5328
    %v6046 = vpack.c.b16 %v5335, %v5332
    %v6047 = vpack.c.b16 %v5336, %v5333
    %v6048 = vpack.c.b16 %v5337, %v5334
    %v6049 = vpack.c.b16 %v5341, %v5338
    %v6050 = vpack.c.b16 %v5342, %v5339
    %v6051 = vpack.c.b16 %v5343, %v5340
    %v6052 = vpack.c.b16 %v5347, %v5344
    %v6053 = vpack.c.b16 %v5348, %v5345
    %v6054 = vpack.c.b16 %v5349, %v5346
    %v6055 = vpack.c.b16 %v5353, %v5350
    %v6056 = vpack.c.b16 %v5354, %v5351
    %v6057 = vpack.c.b16 %v5355, %v5352
    %v6058 = vpack.c.b16 %v5359, %v5356
    %v6059 = vpack.c.b16 %v5360, %v5357
    %v6060 = vpack.c.b16 %v5361, %v5358
    %v6061 = vpack.c.b16 %v5365, %v5362
    %v6062 = vpack.c.b16 %v5366, %v5363
    %v6063 = vpack.c.b16 %v5367, %v5364
    %v6064 = vpack.c.b16 %v5371, %v5368
    %v6065 = vpack.c.b16 %v5372, %v5369
    %v6066 = vpack.c.b16 %v5373, %v5370
    %v6067 = vpack.c.b16 %v5377, %v5374
    %v6068 = vpack.c.b16 %v5378, %v5375
    %v6069 = vpack.c.b16 %v5379, %v5376
    %v6070 = vpack.c.b16 %v5383, %v5380
    %v6071 = vpack.c.b16 %v5384, %v5381
    %v6072 = vpack.c.b16 %v5385, %v5382
    %v6073 = vpack.c.b16 %v5389, %v5386
    %v6074 = vpack.c.b16 %v5390, %v5387
    %v6075 = vpack.c.b16 %v5391, %v5388
    %v6076 = vpack.c.b16 %v5395, %v5392
    %v6077 = vpack.c.b16 %v5396, %v5393
    %v6078 = vpack.c.b16 %v5397, %v5394
    %v6079 = vpack.c.b16 %v5401, %v5398
    %v6080 = vpack.c.b16 %v5402, %v5399
    %v6081 = vpack.c.b16 %v5403, %v5400
    %v6082 = vpack.c.b16 %v5407, %v5404
    %v6083 = vpack.c.b16 %v5408, %v5405
    %v6084 = vpack.c.b16 %v5409, %v5406
    %v6085 = vpack.c.b16 %v5413, %v5410
    %v6086 = vpack.c.b16 %v5414, %v5411
    %v6087 = vpack.c.b16 %v5415, %v5412
    %v6088 = vpack.c.b16 %v5419, %v5416
    %v6089 = vpack.c.b16 %v5420, %v5417
    %v6090 = vpack.c.b16 %v5421, %v5418
    %v6091 = vpack.c.b16 %v5425, %v5422
    %v6092 = vpack.c.b16 %v5426, %v5423
    %v6093 = vpack.c.b16 %v5427, %v5424
    %v6094 = vpack.c.b16 %v5431, %v5428
    %v6095 = vpack.c.b16 %v5432, %v5429
    %v6096 = vpack.c.b16 %v5433, %v5430
    %v6097 = vpack.c.b16 %v5437, %v5434
    %v6098 = vpack.c.b16 %v5438, %v5435
    %v6099 = vpack.c.b16 %v5439, %v5436
    %v6100 = vpack.c.b16 %v5443, %v5440
    %v6101 = vpack.c.b16 %v5444, %v5441
    %v6102 = vpack.c.b16 %v5445, %v5442
    %v6103 = vpack.c.b16 %v5449, %v5446
    %v6104 = vpack.c.b16 %v5450, %v5447
    %v6105 = vpack.c.b16 %v5451, %v5448
    %v6106 = vpack.c.b16 %v5455, %v5452
    %v6107 = vpack.c.b16 %v5456, %v5453
    %v6108 = vpack.c.b16 %v5457, %v5454
    %v6109 = vpack.c.b16 %v5461, %v5458
    %v6110 = vpack.c.b16 %v5462, %v5459
    %v6111 = vpack.c.b16 %v5463, %v5460
    %v6112 = vpack.c.b16 %v5467, %v5464
    %v6113 = vpack.c.b16 %v5468, %v5465
    %v6114 = vpack.c.b16 %v5469, %v5466
    %v6115 = vpack.c.b16 %v5473, %v5470
    %v6116 = vpack.c.b16 %v5474, %v5471
    %v6117 = vpack.c.b16 %v5475, %v5472
    %v6118 = vpack.c.b16 %v5479, %v5476
    %v6119 = vpack.c.b16 %v5480, %v5477
    %v6120 = vpack.c.b16 %v5481, %v5478
    %v6121 = vpack.c.b16 %v5485, %v5482
    %v6122 = vpack.c.b16 %v5486, %v5483
    %v6123 = vpack.c.b16 %v5487, %v5484
    %v6124 = vpack.c.b16 %v5491, %v5488
    %v6125 = vpack.c.b16 %v5492, %v5489
    %v6126 = vpack.c.b16 %v5493, %v5490
    %v6127 = vpack.c.b16 %v5497, %v5494
    %v6128 = vpack.c.b16 %v5498, %v5495
    %v6129 = vpack.c.b16 %v5499, %v5496
    %v6130 = vpack.c.b16 %v5503, %v5500
    %v6131 = vpack.c.b16 %v5504, %v5501
    %v6132 = vpack.c.b16 %v5505, %v5502
    %v6133 = vpack.c.b16 %v5509, %v5506
    %v6134 = vpack.c.b16 %v5510, %v5507
    %v6135 = vpack.c.b16 %v5511, %v5508
    %v6136 = vpack.c.b16 %v5515, %v5512
    %v6137 = vpack.c.b16 %v5516, %v5513
    %v6138 = vpack.c.b16 %v5517, %v5514
    %v6139 = vpack.c.b16 %v5521, %v5518
    %v6140 = vpack.c.b16 %v5522, %v5519
    %v6141 = vpack.c.b16 %v5523, %v5520
    %v6142 = vpack.c.b16 %v5527, %v5524
    %v6143 = vpack.c.b16 %v5528, %v5525
    %v6144 = vpack.c.b16 %v5529, %v5526
    %v6145 = vpack.c.b16 %v5533, %v5530
    %v6146 = vpack.c.b16 %v5534, %v5531
    %v6147 = vpack.c.b16 %v5535, %v5532
    %v6148 = vpack.c.b16 %v5539, %v5536
    %v6149 = vpack.c.b16 %v5540, %v5537
    %v6150 = vpack.c.b16 %v5541, %v5538
    %v6151 = vpack.c.b16 %v5545, %v5542
    %v6152 = vpack.c.b16 %v5546, %v5543
    %v6153 = vpack.c.b16 %v5547, %v5544
    %v6154 = vpack.c.b16 %v5551, %v5548
    %v6155 = vpack.c.b16 %v5552, %v5549
    %v6156 = vpack.c.b16 %v5553, %v5550
    %v6157 = vpack.c.b16 %v5557, %v5554
    %v6158 = vpack.c.b16 %v5558, %v5555
    %v6159 = vpack.c.b16 %v5559, %v5556
    %v6160 = vpack.c.b16 %v5563, %v5560
    %v6161 = vpack.c.b16 %v5564, %v5561
    %v6162 = vpack.c.b16 %v5565, %v5562
    %v6163 = vpack.c.b16 %v5569, %v5566
    %v6164 = vpack.c.b16 %v5570, %v5567
    %v6165 = vpack.c.b16 %v5571, %v5568
    %v6166 = vpack.c.b16 %v5575, %v5572
    %v6167 = vpack.c.b16 %v5576, %v5573
    %v6168 = vpack.c.b16 %v5577, %v5574
    %v6169 = vpack.c.b16 %v5581, %v5578
    %v6170 = vpack.c.b16 %v5582, %v5579
    %v6171 = vpack.c.b16 %v5583, %v5580
    %v6172 = vpack.c.b16 %v5587, %v5584
    %v6173 = vpack.c.b16 %v5588, %v5585
    %v6174 = vpack.c.b16 %v5589, %v5586
    %v6175 = vpack.c.b16 %v5593, %v5590
    %v6176 = vpack.c.b16 %v5594, %v5591
    %v6177 = vpack.c.b16 %v5595, %v5592
    %v6178 = vpack.c.b16 %v5599, %v5596
    %v6179 = vpack.c.b16 %v5600, %v5597
    %v6180 = vpack.c.b16 %v5601, %v5598
    %v6181 = vpack.c.b16 %v5605, %v5602
    %v6182 = vpack.c.b16 %v5606, %v5603
    %v6183 = vpack.c.b16 %v5607, %v5604
    %v6184 = vpack.c.b16 %v5611, %v5608
    %v6185 = vpack.c.b16 %v5612, %v5609
    %v6186 = vpack.c.b16 %v5613, %v5610
    %v6187 = vpack.c.b16 %v5617, %v5614
    %v6188 = vpack.c.b16 %v5618, %v5615
    %v6189 = vpack.c.b16 %v5619, %v5616
    %v6190 = vpack.c.b16 %v5623, %v5620
    %v6191 = vpack.c.b16 %v5624, %v5621
    %v6192 = vpack.c.b16 %v5625, %v5622
    %v6193 = vpack.c.b16 %v5629, %v5626
    %v6194 = vpack.c.b16 %v5630, %v5627
    %v6195 = vpack.c.b16 %v5631, %v5628
    %v6196 = vpack.c.b16 %v5635, %v5632
    %v6197 = vpack.c.b16 %v5636, %v5633
    %v6198 = vpack.c.b16 %v5637, %v5634
    %v6199 = vpack.c.b16 %v5641, %v5638
    %v6200 = vpack.c.b16 %v5642, %v5639
    %v6201 = vpack.c.b16 %v5643, %v5640
    %v6202 = vpack.c.b16 %v5647, %v5644
    %v6203 = vpack.c.b16 %v5648, %v5645
    %v6204 = vpack.c.b16 %v5649, %v5646
    %v6205 = vpack.c.b16 %v5653, %v5650
    %v6206 = vpack.c.b16 %v5654, %v5651
    %v6207 = vpack.c.b16 %v5655, %v5652
    %v6208 = vpack.c.b16 %v5659, %v5656
    %v6209 = vpack.c.b16 %v5660, %v5657
    %v6210 = vpack.c.b16 %v5661, %v5658
    %v6211 = vpack.c.b16 %v5665, %v5662
    %v6212 = vpack.c.b16 %v5666, %v5663
    %v6213 = vpack.c.b16 %v5667, %v5664
    %v6214 = vpack.c.b16 %v5671, %v5668
    %v6215 = vpack.c.b16 %v5672, %v5669
    %v6216 = vpack.c.b16 %v5673, %v5670
    %v6217 = vpack.c.b16 %v5677, %v5674
    %v6218 = vpack.c.b16 %v5678, %v5675
    %v6219 = vpack.c.b16 %v5679, %v5676
    %v6220 = vpack.c.b16 %v5683, %v5680
    %v6221 = vpack.c.b16 %v5684, %v5681
    %v6222 = vpack.c.b16 %v5685, %v5682
    %v6223 = vpack.c.b16 %v5689, %v5686
    %v6224 = vpack.c.b16 %v5690, %v5687
    %v6225 = vpack.c.b16 %v5691, %v5688
    %v6226 = vpack.c.b16 %v5695, %v5692
    %v6227 = vpack.c.b16 %v5696, %v5693
    %v6228 = vpack.c.b16 %v5697, %v5694
    %v6229 = vpack.c.b16 %v5701, %v5698
    %v6230 = vpack.c.b16 %v5702, %v5699
    %v6231 = vpack.c.b16 %v5703, %v5700
    %v6232 = vpack.c.b16 %v5707, %v5704
    %v6233 = vpack.c.b16 %v5708, %v5705
    %v6234 = vpack.c.b16 %v5709, %v5706
    %v6235 = vpack.c.b16 %v5713, %v5710
    %v6236 = vpack.c.b16 %v5714, %v5711
    %v6237 = vpack.c.b16 %v5715, %v5712
    %v6238 = vpack.c.b16 %v5719, %v5716
    %v6239 = vpack.c.b16 %v5720, %v5717
    %v6240 = vpack.c.b16 %v5721, %v5718
    %v6241 = vpack.c.b16 %v5725, %v5722
    %v6242 = vpack.c.b16 %v5726, %v5723
    %v6243 = vpack.c.b16 %v5727, %v5724
    %v6244 = vpack.c.b16 %v5731, %v5728
    %v6245 = vpack.c.b16 %v5732, %v5729
    %v6246 = vpack.c.b16 %v5733, %v5730
    %v6247 = vpack.c.b16 %v5737, %v5734
    %v6248 = vpack.c.b16 %v5738, %v5735
    %v6249 = vpack.c.b16 %v5739, %v5736
    %v6250 = vpack.c.b16 %v5743, %v5740
    %v6251 = vpack.c.b16 %v5744, %v5741
    %v6252 = vpack.c.b16 %v5745, %v5742
    %v6253 = vpack.c.b16 %v5749, %v5746
    %v6254 = vpack.c.b16 %v5750, %v5747
    %v6255 = vpack.c.b16 %v5751, %v5748
    %v6256 = vpack.c.b16 %v5755, %v5752
    %v6257 = vpack.c.b16 %v5756, %v5753
    %v6258 = vpack.c.b16 %v5757, %v5754
    %v6259 = vpack.c.b16 %v5761, %v5758
    %v6260 = vpack.c.b16 %v5762, %v5759
    %v6261 = vpack.c.b16 %v5763, %v5760
    %v6262 = vpack.c.b16 %v5767, %v5764
    %v6263 = vpack.c.b16 %v5768, %v5765
    %v6264 = vpack.c.b16 %v5769, %v5766
    %v6265 = vpack.c.b16 %v5773, %v5770
    %v6266 = vpack.c.b16 %v5774, %v5771
    %v6267 = vpack.c.b16 %v5775, %v5772
    %v6268 = vpack.c.b16 %v5779, %v5776
    %v6269 = vpack.c.b16 %v5780, %v5777
    %v6270 = vpack.c.b16 %v5781, %v5778
    %v6271 = vpack.c.b16 %v5785, %v5782
    %v6272 = vpack.c.b16 %v5786, %v5783
    %v6273 = vpack.c.b16 %v5787, %v5784
    %v6274 = vpack.c.b16 %v5791, %v5788
    %v6275 = vpack.c.b16 %v5792, %v5789
    %v6276 = vpack.c.b16 %v5793, %v5790
    %v6277 = vpack.c.b16 %v5797, %v5794
    %v6278 = vpack.c.b16 %v5798, %v5795
    %v6279 = vpack.c.b16 %v5799, %v5796
    %v6280 = vpack.c.b16 %v5803, %v5800
    %v6281 = vpack.c.b16 %v5804, %v5801
    %v6282 = vpack.c.b16 %v5805, %v5802
    %v6283 = vpack.c.b16 %v5809, %v5806
    %v6284 = vpack.c.b16 %v5810, %v5807
    %v6285 = vpack.c.b16 %v5811, %v5808
    %v6286 = vpack.c.b16 %v5815, %v5812
    %v6287 = vpack.c.b16 %v5816, %v5813
    %v6288 = vpack.c.b16 %v5817, %v5814
    %v6289 = vpack.c.b16 %v5821, %v5818
    %v6290 = vpack.c.b16 %v5822, %v5819
    %v6291 = vpack.c.b16 %v5823, %v5820
    %v6292 = vpack.c.b16 %v5827, %v5824
    %v6293 = vpack.c.b16 %v5828, %v5825
    %v6294 = vpack.c.b16 %v5829, %v5826
    %v6295 = vpack.c.b16 %v5833, %v5830
    %v6296 = vpack.c.b16 %v5834, %v5831
    %v6297 = vpack.c.b16 %v5835, %v5832
    %v6298 = vpack.c.b16 %v5839, %v5836
    %v6299 = vpack.c.b16 %v5840, %v5837
    %v6300 = vpack.c.b16 %v5841, %v5838
    %v6301 = vpack.c.b16 %v5845, %v5842
    %v6302 = vpack.c.b16 %v5846, %v5843
    %v6303 = vpack.c.b16 %v5847, %v5844
    %v6304 = vpack.c.b16 %v5851, %v5848
    %v6305 = vpack.c.b16 %v5852, %v5849
    %v6306 = vpack.c.b16 %v5853, %v5850
    %v6307 = vpack.c.b16 %v5857, %v5854
    %v6308 = vpack.c.b16 %v5858, %v5855
    %v6309 = vpack.c.b16 %v5859, %v5856
    %v6310 = vpack.c.b16 %v5863, %v5860
    %v6311 = vpack.c.b16 %v5864, %v5861
    %v6312 = vpack.c.b16 %v5865, %v5862
    %v6313 = vpack.c.b16 %v5869, %v5866
    %v6314 = vpack.c.b16 %v5870, %v5867
    %v6315 = vpack.c.b16 %v5871, %v5868
    %v6316 = vpack.c.b16 %v5875, %v5872
    %v6317 = vpack.c.b16 %v5876, %v5873
    %v6318 = vpack.c.b16 %v5877, %v5874
    %v6319 = vpack.c.b16 %v5881, %v5878
    %v6320 = vpack.c.b16 %v5882, %v5879
    %v6321 = vpack.c.b16 %v5883, %v5880
    %v6322 = vpack.c.b16 %v5887, %v5884
    %v6323 = vpack.c.b16 %v5888, %v5885
    %v6324 = vpack.c.b16 %v5889, %v5886
    %v6325 = vpack.c.b16 %v5893, %v5890
    %v6326 = vpack.c.b16 %v5894, %v5891
    %v6327 = vpack.c.b16 %v5895, %v5892
    %v6328 = vpack.c.b16 %v5899, %v5896
    %v6329 = vpack.c.b16 %v5900, %v5897
    %v6330 = vpack.c.b16 %v5901, %v5898
    %v6331 = vpack.c.b16 %v5905, %v5902
    %v6332 = vpack.c.b16 %v5906, %v5903
    %v6333 = vpack.c.b16 %v5907, %v5904
    %v6334 = vpack.c.b16 %v5911, %v5908
    %v6335 = vpack.c.b16 %v5912, %v5909
    %v6336 = vpack.c.b16 %v5913, %v5910
    %v6337 = vpack.c.b16 %v5917, %v5914
    %v6338 = vpack.c.b16 %v5918, %v5915
    %v6339 = vpack.c.b16 %v5919, %v5916
    %v6340 = vpack.c.b16 %v5923, %v5920
    %v6341 = vpack.c.b16 %v5924, %v5921
    %v6342 = vpack.c.b16 %v5925, %v5922
    %v6343 = vpack.c.b16 %v5929, %v5926
    %v6344 = vpack.c.b16 %v5930, %v5927
    %v6345 = vpack.c.b16 %v5931, %v5928
    %v6346 = vpack.c.b16 %v5935, %v5932
    %v6347 = vpack.c.b16 %v5936, %v5933
    %v6348 = vpack.c.b16 %v5937, %v5934
    %v6349 = vpack.c.b16 %v5941, %v5938
    %v6350 = vpack.c.b16 %v5942, %v5939
    %v6351 = vpack.c.b16 %v5943, %v5940
    %v6352 = vpack.c.b16 %v5947, %v5944
    %v6353 = vpack.c.b16 %v5948, %v5945
    %v6354 = vpack.c.b16 %v5949, %v5946
    %v6355 = vpack.c.b16 %v5953, %v5950
    %v6356 = vpack.c.b16 %v5954, %v5951
    %v6357 = vpack.c.b16 %v5955, %v5952
    %v6358 = vpack.c.b16 %v5959, %v5956
    %v6359 = vpack.c.b16 %v5960, %v5957
    %v6360 = vpack.c.b16 %v5961, %v5958
    %v6361 = vpack.c.b16 %v5965, %v5962
    %v6362 = vpack.c.b16 %v5966, %v5963
    %v6363 = vpack.c.b16 %v5967, %v5964
    %v6364 = vpack.c.b16 %v5971, %v5968
    %v6365 = vpack.c.b16 %v5972, %v5969
    %v6366 = vpack.c.b16 %v5973, %v5970
    %v6367 = vpack.c.b16 %v5977, %v5974
    %v6368 = vpack.c.b16 %v5978, %v5975
    %v6369 = vpack.c.b16 %v5979, %v5976
    %v6370 = vpack.c.b16 %v5983, %v5980
    %v6371 = vpack.c.b16 %v5984, %v5981
    %v6372 = vpack.c.b16 %v5985, %v5982
    %v6373 = vpack.c.b16 %v5989, %v5986
    %v6374 = vpack.c.b16 %v5990, %v5987
    %v6375 = vpack.c.b16 %v5991, %v5988
    %v6376 = vpack.c.b16 %v5995, %v5992
    %v6377 = vpack.c.b16 %v5996, %v5993
    %v6378 = vpack.c.b16 %v5997, %v5994
    %v6379 = vpack.c.b16 %v6001, %v5998
    %v6380 = vpack.c.b16 %v6002, %v5999
    %v6381 = vpack.c.b16 %v6003, %v6000
    %v6382 = vpack.c.b16 %v6007, %v6004
    %v6383 = vpack.c.b16 %v6008, %v6005
    %v6384 = vpack.c.b16 %v6009, %v6006
    %v6385 = vpack.c.b16 %v6013, %v6010
    %v6386 = vpack.c.b16 %v6014, %v6011
    %v6387 = vpack.c.b16 %v6015, %v6012
    %v6388 = vpack.c.b16 %v6019, %v6016
    %v6389 = vpack.c.b16 %v6020, %v6017
    %v6390 = vpack.c.b16 %v6021, %v6018
    %v6391 = vpack.c.b16 %v6025, %v6022
    %v6392 = vpack.c.b16 %v6026, %v6023
    %v6393 = vpack.c.b16 %v6027, %v6024
    %v6394 = vpack.c.b16 %v6031, %v6028
    %v6395 = vpack.c.b16 %v6032, %v6029
    %v6396 = vpack.c.b16 %v6033, %v6030
    %v6397 = vpack.c.b16 %v6037, %v6034
    %v6398 = vpack.c.b16 %v6038, %v6035
    %v6399 = vpack.c.b16 %v6039, %v6036
    %6760 = vmatprep.subr.bf16.mxu0 %v6041
    %6761 = vmatpush1.bf16.msra.mxu0 %v6040
    %6762 = vmatprep.subr.bf16.mxu0 %v6044
    %6763 = vmatpush1.bf16.msra.mxu0 %v6043
    %6764 = vmatprep.subr.bf16.mxu0 %v6047
    %6765 = vmatpush1.bf16.msra.mxu0 %v6046
    %6766 = vmatprep.subr.bf16.mxu0 %v6050
    %6767 = vmatpush1.bf16.msra.mxu0 %v6049
    %6768 = vmatprep.subr.bf16.mxu0 %v6053
    %6769 = vmatpush1.bf16.msra.mxu0 %v6052
    %6770 = vmatprep.subr.bf16.mxu0 %v6056
    %6771 = vmatpush1.bf16.msra.mxu0 %v6055
    %6772 = vmatprep.subr.bf16.mxu0 %v6059
    %6773 = vmatpush1.bf16.msra.mxu0 %v6058
    %6774 = vmatprep.subr.bf16.mxu0 %v6062
    %6775 = vmatpush1.bf16.msra.mxu0 %v6061
    %6776 = vmatprep.subr.bf16.mxu0 %v6065
    %6777 = vmatpush1.bf16.msra.mxu0 %v6064
    %6778 = vmatprep.subr.bf16.mxu0 %v6068
    %6779 = vmatpush1.bf16.msra.mxu0 %v6067
    %6780 = vmatprep.subr.bf16.mxu0 %v6071
    %6781 = vmatpush1.bf16.msra.mxu0 %v6070
    %6782 = vmatprep.subr.bf16.mxu0 %v6074
    %6783 = vmatpush1.bf16.msra.mxu0 %v6073
    %6784 = vmatprep.subr.bf16.mxu0 %v6077
    %6785 = vmatpush1.bf16.msra.mxu0 %v6076
    %6786 = vmatprep.subr.bf16.mxu0 %v6080
    %6787 = vmatpush1.bf16.msra.mxu0 %v6079
    %6788 = vmatprep.subr.bf16.mxu0 %v6083
    %6789 = vmatpush1.bf16.msra.mxu0 %v6082
    %6790 = vmatprep.subr.bf16.mxu0 %v6086
    %6791 = vmatpush1.bf16.msra.mxu0 %v6085
    %6792 = vmatprep.mubr.bf16.mxu0 %v4115
    %6793 = vmatmul.mubr.bf16.gmra.mrb[0].mxu0 %v4114
    %v6794 = vpop.f32.mrb[0].mxu0
    %v6795 = vadd.f32 0.0, %v6794
    %v6796 = vpop.f32.mrb[0].mxu0
    %v6797 = vadd.f32 0.0, %v6796
    %v6798 = vpop.f32.mrb[0].mxu0
    %v6799 = vadd.f32 0.0, %v6798
    %v6800 = vpop.f32.mrb[0].mxu0
    %v6801 = vadd.f32 0.0, %v6800
    %6802 = vdwg.mxu0
    %6803 = vmatprep.subr.bf16.mxu0 %v6089
    %6804 = vmatpush1.bf16.msra.mxu0 %v6088
    %6805 = vmatprep.subr.bf16.mxu0 %v6092
    %6806 = vmatpush1.bf16.msra.mxu0 %v6091
    %6807 = vmatprep.subr.bf16.mxu0 %v6095
    %6808 = vmatpush1.bf16.msra.mxu0 %v6094
    %6809 = vmatprep.subr.bf16.mxu0 %v6098
    %6810 = vmatpush1.bf16.msra.mxu0 %v6097
    %6811 = vmatprep.subr.bf16.mxu0 %v6101
    %6812 = vmatpush1.bf16.msra.mxu0 %v6100
    %6813 = vmatprep.subr.bf16.mxu0 %v6104
    %6814 = vmatpush1.bf16.msra.mxu0 %v6103
    %6815 = vmatprep.subr.bf16.mxu0 %v6107
    %6816 = vmatpush1.bf16.msra.mxu0 %v6106
    %6817 = vmatprep.subr.bf16.mxu0 %v6110
    %6818 = vmatpush1.bf16.msra.mxu0 %v6109
    %6819 = vmatprep.subr.bf16.mxu0 %v6113
    %6820 = vmatpush1.bf16.msra.mxu0 %v6112
    %6821 = vmatprep.subr.bf16.mxu0 %v6116
    %6822 = vmatpush1.bf16.msra.mxu0 %v6115
    %6823 = vmatprep.subr.bf16.mxu0 %v6119
    %6824 = vmatpush1.bf16.msra.mxu0 %v6118
    %6825 = vmatprep.subr.bf16.mxu0 %v6122
    %6826 = vmatpush1.bf16.msra.mxu0 %v6121
    %6827 = vmatprep.subr.bf16.mxu0 %v6125
    %6828 = vmatpush1.bf16.msra.mxu0 %v6124
    %6829 = vmatprep.subr.bf16.mxu0 %v6128
    %6830 = vmatpush1.bf16.msra.mxu0 %v6127
    %6831 = vmatprep.subr.bf16.mxu0 %v6131
    %6832 = vmatpush1.bf16.msra.mxu0 %v6130
    %6833 = vmatprep.subr.bf16.mxu0 %v6134
    %6834 = vmatpush1.bf16.msra.mxu0 %v6133
    %6835 = vmatprep.mubr.bf16.mxu0 %v4174
    %6836 = vmatmul.mubr.bf16.gmra.mrb[0].mxu0 %v4116
    %v6837 = vpop.f32.mrb[0].mxu0
    %v6838 = vadd.f32 %v6795, %v6837
    %v6839 = vpop.f32.mrb[0].mxu0
    %v6840 = vadd.f32 %v6797, %v6839
    %v6841 = vpop.f32.mrb[0].mxu0
    %v6842 = vadd.f32 %v6799, %v6841
    %v6843 = vpop.f32.mrb[0].mxu0
    %v6844 = vadd.f32 %v6801, %v6843
    %6845 = vdwg.mxu0
    %6846 = vmatprep.subr.bf16.mxu0 %v6137
    %6847 = vmatpush1.bf16.msra.mxu0 %v6136
    %6848 = vmatprep.subr.bf16.mxu0 %v6140
    %6849 = vmatpush1.bf16.msra.mxu0 %v6139
    %6850 = vmatprep.subr.bf16.mxu0 %v6143
    %6851 = vmatpush1.bf16.msra.mxu0 %v6142
    %6852 = vmatprep.subr.bf16.mxu0 %v6146
    %6853 = vmatpush1.bf16.msra.mxu0 %v6145
    %6854 = vmatprep.subr.bf16.mxu0 %v6149
    %6855 = vmatpush1.bf16.msra.mxu0 %v6148
    %6856 = vmatprep.subr.bf16.mxu0 %v6152
    %6857 = vmatpush1.bf16.msra.mxu0 %v6151
    %6858 = vmatprep.subr.bf16.mxu0 %v6155
    %6859 = vmatpush1.bf16.msra.mxu0 %v6154
    %6860 = vmatprep.subr.bf16.mxu0 %v6158
    %6861 = vmatpush1.bf16.msra.mxu0 %v6157
    %6862 = vmatprep.subr.bf16.mxu0 %v6161
    %6863 = vmatpush1.bf16.msra.mxu0 %v6160
    %6864 = vmatprep.subr.bf16.mxu0 %v6164
    %6865 = vmatpush1.bf16.msra.mxu0 %v6163
    %6866 = vmatprep.subr.bf16.mxu0 %v6167
    %6867 = vmatpush1.bf16.msra.mxu0 %v6166
    %6868 = vmatprep.subr.bf16.mxu0 %v6170
    %6869 = vmatpush1.bf16.msra.mxu0 %v6169
    %6870 = vmatprep.subr.bf16.mxu0 %v6173
    %6871 = vmatpush1.bf16.msra.mxu0 %v6172
    %6872 = vmatprep.subr.bf16.mxu0 %v6176
    %6873 = vmatpush1.bf16.msra.mxu0 %v6175
    %6874 = vmatprep.subr.bf16.mxu0 %v6179
    %6875 = vmatpush1.bf16.msra.mxu0 %v6178
    %6876 = vmatprep.subr.bf16.mxu0 %v6182
    %6877 = vmatpush1.bf16.msra.mxu0 %v6181
    %6878 = vmatprep.mubr.bf16.mxu0 %v4176
    %6879 = vmatmul.mubr.bf16.gmra.mrb[0].mxu0 %v4175
    %v6880 = vpop.f32.mrb[0].mxu0
    %v6881 = vadd.f32 %v6838, %v6880
    %v6882 = vpop.f32.mrb[0].mxu0
    %v6883 = vadd.f32 %v6840, %v6882
    %v6884 = vpop.f32.mrb[0].mxu0
    %v6885 = vadd.f32 %v6842, %v6884
    %v6886 = vpop.f32.mrb[0].mxu0
    %v6887 = vadd.f32 %v6844, %v6886
    %6888 = vdwg.mxu0
    %6889 = vmatprep.subr.bf16.mxu0 %v6185
    %6890 = vmatpush1.bf16.msra.mxu0 %v6184
    %6891 = vmatprep.subr.bf16.mxu0 %v6188
    %6892 = vmatpush1.bf16.msra.mxu0 %v6187
    %6893 = vmatprep.subr.bf16.mxu0 %v6191
    %6894 = vmatpush1.bf16.msra.mxu0 %v6190
    %6895 = vmatprep.subr.bf16.mxu0 %v6194
    %6896 = vmatpush1.bf16.msra.mxu0 %v6193
    %6897 = vmatprep.subr.bf16.mxu0 %v6197
    %6898 = vmatpush1.bf16.msra.mxu0 %v6196
    %6899 = vmatprep.subr.bf16.mxu0 %v6200
    %6900 = vmatpush1.bf16.msra.mxu0 %v6199
    %6901 = vmatprep.subr.bf16.mxu0 %v6203
    %6902 = vmatpush1.bf16.msra.mxu0 %v6202
    %6903 = vmatprep.subr.bf16.mxu0 %v6206
    %6904 = vmatpush1.bf16.msra.mxu0 %v6205
    %6905 = vmatprep.subr.bf16.mxu0 %v6209
    %6906 = vmatpush1.bf16.msra.mxu0 %v6208
    %6907 = vmatprep.subr.bf16.mxu0 %v6212
    %6908 = vmatpush1.bf16.msra.mxu0 %v6211
    %6909 = vmatprep.subr.bf16.mxu0 %v6215
    %6910 = vmatpush1.bf16.msra.mxu0 %v6214
    %6911 = vmatprep.subr.bf16.mxu0 %v6218
    %6912 = vmatpush1.bf16.msra.mxu0 %v6217
    %6913 = vmatprep.subr.bf16.mxu0 %v6221
    %6914 = vmatpush1.bf16.msra.mxu0 %v6220
    %6915 = vmatprep.subr.bf16.mxu0 %v6224
    %6916 = vmatpush1.bf16.msra.mxu0 %v6223
    %6917 = vmatprep.subr.bf16.mxu0 %v6227
    %6918 = vmatpush1.bf16.msra.mxu0 %v6226
    %6919 = vmatprep.subr.bf16.mxu0 %v6230
    %6920 = vmatpush1.bf16.msra.mxu0 %v6229
    %6921 = vmatprep.mubr.bf16.mxu0 %v4235
    %6922 = vmatmul.mubr.bf16.gmra.mrb[0].mxu0 %v4234
    %v6923 = vpop.f32.mrb[0].mxu0
    %v6924 = vadd.f32 %v6881, %v6923
    %v6925 = vpop.f32.mrb[0].mxu0
    %v6926 = vadd.f32 %v6883, %v6925
    %v6927 = vpop.f32.mrb[0].mxu0
    %v6928 = vadd.f32 %v6885, %v6927
    %v6929 = vpop.f32.mrb[0].mxu0
    %v6930 = vadd.f32 %v6887, %v6929
    %6931 = vdwg.mxu0
    %6932 = vmatprep.subr.bf16.mxu0 %v6233
    %6933 = vmatpush1.bf16.msra.mxu0 %v6232
    %6934 = vmatprep.subr.bf16.mxu0 %v6236
    %6935 = vmatpush1.bf16.msra.mxu0 %v6235
    %6936 = vmatprep.subr.bf16.mxu0 %v6239
    %6937 = vmatpush1.bf16.msra.mxu0 %v6238
    %6938 = vmatprep.subr.bf16.mxu0 %v6242
    %6939 = vmatpush1.bf16.msra.mxu0 %v6241
    %6940 = vmatprep.subr.bf16.mxu0 %v6245
    %6941 = vmatpush1.bf16.msra.mxu0 %v6244
    %6942 = vmatprep.subr.bf16.mxu0 %v6248
    %6943 = vmatpush1.bf16.msra.mxu0 %v6247
    %6944 = vmatprep.subr.bf16.mxu0 %v6251
    %6945 = vmatpush1.bf16.msra.mxu0 %v6250
    %6946 = vmatprep.subr.bf16.mxu0 %v6254
    %6947 = vmatpush1.bf16.msra.mxu0 %v6253
    %6948 = vmatprep.subr.bf16.mxu0 %v6257
    %6949 = vmatpush1.bf16.msra.mxu0 %v6256
    %6950 = vmatprep.subr.bf16.mxu0 %v6260
    %6951 = vmatpush1.bf16.msra.mxu0 %v6259
    %6952 = vmatprep.subr.bf16.mxu0 %v6263
    %6953 = vmatpush1.bf16.msra.mxu0 %v6262
    %6954 = vmatprep.subr.bf16.mxu0 %v6266
    %6955 = vmatpush1.bf16.msra.mxu0 %v6265
    %6956 = vmatprep.subr.bf16.mxu0 %v6269
    %6957 = vmatpush1.bf16.msra.mxu0 %v6268
    %6958 = vmatprep.subr.bf16.mxu0 %v6272
    %6959 = vmatpush1.bf16.msra.mxu0 %v6271
    %6960 = vmatprep.subr.bf16.mxu0 %v6275
    %6961 = vmatpush1.bf16.msra.mxu0 %v6274
    %6962 = vmatprep.subr.bf16.mxu0 %v6278
    %6963 = vmatpush1.bf16.msra.mxu0 %v6277
    %6964 = vmatprep.mubr.bf16.mxu0 %v4294
    %6965 = vmatmul.mubr.bf16.gmra.mrb[0].mxu0 %v4236
    %v6966 = vpop.f32.mrb[0].mxu0
    %v6967 = vadd.f32 %v6924, %v6966
    %v6968 = vpop.f32.mrb[0].mxu0
    %v6969 = vadd.f32 %v6926, %v6968
    %v6970 = vpop.f32.mrb[0].mxu0
    %v6971 = vadd.f32 %v6928, %v6970
    %v6972 = vpop.f32.mrb[0].mxu0
    %v6973 = vadd.f32 %v6930, %v6972
    %6974 = vdwg.mxu0
    %6975 = vmatprep.subr.bf16.mxu0 %v6281
    %6976 = vmatpush1.bf16.msra.mxu0 %v6280
    %6977 = vmatprep.subr.bf16.mxu0 %v6284
    %6978 = vmatpush1.bf16.msra.mxu0 %v6283
    %6979 = vmatprep.subr.bf16.mxu0 %v6287
    %6980 = vmatpush1.bf16.msra.mxu0 %v6286
    %6981 = vmatprep.subr.bf16.mxu0 %v6290
    %6982 = vmatpush1.bf16.msra.mxu0 %v6289
    %6983 = vmatprep.subr.bf16.mxu0 %v6293
    %6984 = vmatpush1.bf16.msra.mxu0 %v6292
    %6985 = vmatprep.subr.bf16.mxu0 %v6296
    %6986 = vmatpush1.bf16.msra.mxu0 %v6295
    %6987 = vmatprep.subr.bf16.mxu0 %v6299
    %6988 = vmatpush1.bf16.msra.mxu0 %v6298
    %6989 = vmatprep.subr.bf16.mxu0 %v6302
    %6990 = vmatpush1.bf16.msra.mxu0 %v6301
    %6991 = vmatprep.subr.bf16.mxu0 %v6305
    %6992 = vmatpush1.bf16.msra.mxu0 %v6304
    %6993 = vmatprep.subr.bf16.mxu0 %v6308
    %6994 = vmatpush1.bf16.msra.mxu0 %v6307
    %6995 = vmatprep.subr.bf16.mxu0 %v6311
    %6996 = vmatpush1.bf16.msra.mxu0 %v6310
    %6997 = vmatprep.subr.bf16.mxu0 %v6314
    %6998 = vmatpush1.bf16.msra.mxu0 %v6313
    %6999 = vmatprep.subr.bf16.mxu0 %v6317
    %7000 = vmatpush1.bf16.msra.mxu0 %v6316
    %7001 = vmatprep.subr.bf16.mxu0 %v6320
    %7002 = vmatpush1.bf16.msra.mxu0 %v6319
    %7003 = vmatprep.subr.bf16.mxu0 %v6323
    %7004 = vmatpush1.bf16.msra.mxu0 %v6322
    %7005 = vmatprep.subr.bf16.mxu0 %v6326
    %7006 = vmatpush1.bf16.msra.mxu0 %v6325
    %7007 = vmatprep.mubr.bf16.mxu0 %v4296
    %7008 = vmatmul.mubr.bf16.gmra.mrb[0].mxu0 %v4295
    %v7009 = vpop.f32.mrb[0].mxu0
    %v7010 = vadd.f32 %v6967, %v7009
    %v7011 = vpop.f32.mrb[0].mxu0
    %v7012 = vadd.f32 %v6969, %v7011
    %v7013 = vpop.f32.mrb[0].mxu0
    %v7014 = vadd.f32 %v6971, %v7013
    %v7015 = vpop.f32.mrb[0].mxu0
    %v7016 = vadd.f32 %v6973, %v7015
    %7017 = vdwg.mxu0
    %7018 = vmatprep.subr.bf16.mxu0 %v6329
    %7019 = vmatpush1.bf16.msra.mxu0 %v6328
    %7020 = vmatprep.subr.bf16.mxu0 %v6332
    %7021 = vmatpush1.bf16.msra.mxu0 %v6331
    %7022 = vmatprep.subr.bf16.mxu0 %v6335
    %7023 = vmatpush1.bf16.msra.mxu0 %v6334
    %7024 = vmatprep.subr.bf16.mxu0 %v6338
    %7025 = vmatpush1.bf16.msra.mxu0 %v6337
    %7026 = vmatprep.subr.bf16.mxu0 %v6341
    %7027 = vmatpush1.bf16.msra.mxu0 %v6340
    %7028 = vmatprep.subr.bf16.mxu0 %v6344
    %7029 = vmatpush1.bf16.msra.mxu0 %v6343
    %7030 = vmatprep.subr.bf16.mxu0 %v6347
    %7031 = vmatpush1.bf16.msra.mxu0 %v6346
    %7032 = vmatprep.subr.bf16.mxu0 %v6350
    %7033 = vmatpush1.bf16.msra.mxu0 %v6349
    %7034 = vmatprep.subr.bf16.mxu0 %v6353
    %7035 = vmatpush1.bf16.msra.mxu0 %v6352
    %7036 = vmatprep.subr.bf16.mxu0 %v6356
    %7037 = vmatpush1.bf16.msra.mxu0 %v6355
    %7038 = vmatprep.subr.bf16.mxu0 %v6359
    %7039 = vmatpush1.bf16.msra.mxu0 %v6358
    %7040 = vmatprep.subr.bf16.mxu0 %v6362
    %7041 = vmatpush1.bf16.msra.mxu0 %v6361
    %7042 = vmatprep.subr.bf16.mxu0 %v6365
    %7043 = vmatpush1.bf16.msra.mxu0 %v6364
    %7044 = vmatprep.subr.bf16.mxu0 %v6368
    %7045 = vmatpush1.bf16.msra.mxu0 %v6367
    %7046 = vmatprep.subr.bf16.mxu0 %v6371
    %7047 = vmatpush1.bf16.msra.mxu0 %v6370
    %7048 = vmatprep.subr.bf16.mxu0 %v6374
    %7049 = vmatpush1.bf16.msra.mxu0 %v6373
    %7050 = vmatprep.mubr.bf16.mxu0 %v4355
    %7051 = vmatmul.mubr.bf16.gmra.mrb[0].mxu0 %v4354
    %v7052 = vpop.f32.mrb[0].mxu0
    %v7053 = vadd.f32 %v7010, %v7052
    %v7054 = vpop.f32.mrb[0].mxu0
    %v7055 = vadd.f32 %v7012, %v7054
    %v7056 = vpop.f32.mrb[0].mxu0
    %v7057 = vadd.f32 %v7014, %v7056
    %v7058 = vpop.f32.mrb[0].mxu0
    %v7059 = vadd.f32 %v7016, %v7058
    %7060 = vdwg.mxu0
    %7061 = vmatprep.subr.bf16.mxu0 %v6377
    %7062 = vmatpush1.bf16.msra.mxu0 %v6376
    %7063 = vmatprep.subr.bf16.mxu0 %v6380
    %7064 = vmatpush1.bf16.msra.mxu0 %v6379
    %7065 = vmatprep.subr.bf16.mxu0 %v6383
    %7066 = vmatpush1.bf16.msra.mxu0 %v6382
    %7067 = vmatprep.subr.bf16.mxu0 %v6386
    %7068 = vmatpush1.bf16.msra.mxu0 %v6385
    %7069 = vmatprep.subr.bf16.mxu0 %v6389
    %7070 = vmatpush1.bf16.msra.mxu0 %v6388
    %7071 = vmatprep.subr.bf16.mxu0 %v6392
    %7072 = vmatpush1.bf16.msra.mxu0 %v6391
    %7073 = vmatprep.subr.bf16.mxu0 %v6395
    %7074 = vmatpush1.bf16.msra.mxu0 %v6394
    %7075 = vmatprep.subr.bf16.mxu0 %v6398
    %7076 = vmatpush1.bf16.msra.mxu0 %v6397
    %7077 = vmatprep.subr.bf16.mxu0 0
    %7078 = vmatpush1.bf16.msra.mxu0 0
    %7079 = vmatprep.subr.bf16.mxu0 0
    %7080 = vmatpush1.bf16.msra.mxu0 0
    %7081 = vmatprep.subr.bf16.mxu0 0
    %7082 = vmatpush1.bf16.msra.mxu0 0
    %7083 = vmatprep.subr.bf16.mxu0 0
    %7084 = vmatpush1.bf16.msra.mxu0 0
    %7085 = vmatprep.subr.bf16.mxu0 0
    %7086 = vmatpush1.bf16.msra.mxu0 0
    %7087 = vmatprep.subr.bf16.mxu0 0
    %7088 = vmatpush1.bf16.msra.mxu0 0
    %7089 = vmatprep.subr.bf16.mxu0 0
    %7090 = vmatpush1.bf16.msra.mxu0 0
    %7091 = vmatprep.subr.bf16.mxu0 0
    %7092 = vmatpush1.bf16.msra.mxu0 0
    %7093 = vmatprep.mubr.bf16.mxu0 0
    %7094 = vmatmul.mubr.bf16.gmra.mrb[0].mxu0 %v4356
    %v7095 = vpop.f32.mrb[0].mxu0
    %v7096 = vadd.f32 %v7053, %v7095
    %v7097 = vpop.f32.mrb[0].mxu0
    %v7098 = vadd.f32 %v7055, %v7097
    %v7099 = vpop.f32.mrb[0].mxu0
    %v7100 = vadd.f32 %v7057, %v7099
    %v7101 = vpop.f32.mrb[0].mxu0
    %v7102 = vadd.f32 %v7059, %v7101
    %7103 = vdwg.mxu0
    %7104 = vmatprep.subr.bf16.mxu0 0
    %7105 = vmatpush1.bf16.msra.mxu0 %v6042
    %7106 = vmatprep.subr.bf16.mxu0 0
    %7107 = vmatpush1.bf16.msra.mxu0 %v6045
    %7108 = vmatprep.subr.bf16.mxu0 0
    %7109 = vmatpush1.bf16.msra.mxu0 %v6048
    %7110 = vmatprep.subr.bf16.mxu0 0
    %7111 = vmatpush1.bf16.msra.mxu0 %v6051
    %7112 = vmatprep.subr.bf16.mxu0 0
    %7113 = vmatpush1.bf16.msra.mxu0 %v6054
    %7114 = vmatprep.subr.bf16.mxu0 0
    %7115 = vmatpush1.bf16.msra.mxu0 %v6057
    %7116 = vmatprep.subr.bf16.mxu0 0
    %7117 = vmatpush1.bf16.msra.mxu0 %v6060
    %7118 = vmatprep.subr.bf16.mxu0 0
    %7119 = vmatpush1.bf16.msra.mxu0 %v6063
    %7120 = vmatprep.subr.bf16.mxu0 0
    %7121 = vmatpush1.bf16.msra.mxu0 %v6066
    %7122 = vmatprep.subr.bf16.mxu0 0
    %7123 = vmatpush1.bf16.msra.mxu0 %v6069
    %7124 = vmatprep.subr.bf16.mxu0 0
    %7125 = vmatpush1.bf16.msra.mxu0 %v6072
    %7126 = vmatprep.subr.bf16.mxu0 0
    %7127 = vmatpush1.bf16.msra.mxu0 %v6075
    %7128 = vmatprep.subr.bf16.mxu0 0
    %7129 = vmatpush1.bf16.msra.mxu0 %v6078
    %7130 = vmatprep.subr.bf16.mxu0 0
    %7131 = vmatpush1.bf16.msra.mxu0 %v6081
    %7132 = vmatprep.subr.bf16.mxu0 0
    %7133 = vmatpush1.bf16.msra.mxu0 %v6084
    %7134 = vmatprep.subr.bf16.mxu0 0
    %7135 = vmatpush1.bf16.msra.mxu0 %v6087
    %7136 = vmatprep.mubr.bf16.mxu0 %v4115
    %7137 = vmatmul.mubr.bf16.gmra.mrb[0].mxu0 %v4114
    %v7138 = vpop.f32.mrb[0].mxu0
    %v7139 = vadd.f32 0.0, %v7138
    %v7140 = vpop.f32.mrb[0].mxu0
    %v7141 = vpop.f32.mrb[0].mxu0
    %v7142 = vadd.f32 0.0, %v7141
    %v7143 = vpop.f32.mrb[0].mxu0
    %7144 = vdwg.mxu0
    %7145 = vmatprep.subr.bf16.mxu0 0
    %7146 = vmatpush1.bf16.msra.mxu0 %v6090
    %7147 = vmatprep.subr.bf16.mxu0 0
    %7148 = vmatpush1.bf16.msra.mxu0 %v6093
    %7149 = vmatprep.subr.bf16.mxu0 0
    %7150 = vmatpush1.bf16.msra.mxu0 %v6096
    %7151 = vmatprep.subr.bf16.mxu0 0
    %7152 = vmatpush1.bf16.msra.mxu0 %v6099
    %7153 = vmatprep.subr.bf16.mxu0 0
    %7154 = vmatpush1.bf16.msra.mxu0 %v6102
    %7155 = vmatprep.subr.bf16.mxu0 0
    %7156 = vmatpush1.bf16.msra.mxu0 %v6105
    %7157 = vmatprep.subr.bf16.mxu0 0
    %7158 = vmatpush1.bf16.msra.mxu0 %v6108
    %7159 = vmatprep.subr.bf16.mxu0 0
    %7160 = vmatpush1.bf16.msra.mxu0 %v6111
    %7161 = vmatprep.subr.bf16.mxu0 0
    %7162 = vmatpush1.bf16.msra.mxu0 %v6114
    %7163 = vmatprep.subr.bf16.mxu0 0
    %7164 = vmatpush1.bf16.msra.mxu0 %v6117
    %7165 = vmatprep.subr.bf16.mxu0 0
    %7166 = vmatpush1.bf16.msra.mxu0 %v6120
    %7167 = vmatprep.subr.bf16.mxu0 0
    %7168 = vmatpush1.bf16.msra.mxu0 %v6123
    %7169 = vmatprep.subr.bf16.mxu0 0
    %7170 = vmatpush1.bf16.msra.mxu0 %v6126
    %7171 = vmatprep.subr.bf16.mxu0 0
    %7172 = vmatpush1.bf16.msra.mxu0 %v6129
    %7173 = vmatprep.subr.bf16.mxu0 0
    %7174 = vmatpush1.bf16.msra.mxu0 %v6132
    %7175 = vmatprep.subr.bf16.mxu0 0
    %7176 = vmatpush1.bf16.msra.mxu0 %v6135
    %7177 = vmatprep.mubr.bf16.mxu0 %v4174
    %7178 = vmatmul.mubr.bf16.gmra.mrb[0].mxu0 %v4116
    %v7179 = vpop.f32.mrb[0].mxu0
    %v7180 = vadd.f32 %v7139, %v7179
    %v7181 = vpop.f32.mrb[0].mxu0
    %v7182 = vpop.f32.mrb[0].mxu0
    %v7183 = vadd.f32 %v7142, %v7182
    %v7184 = vpop.f32.mrb[0].mxu0
    %7185 = vdwg.mxu0
    %7186 = vmatprep.subr.bf16.mxu0 0
    %7187 = vmatpush1.bf16.msra.mxu0 %v6138
    %7188 = vmatprep.subr.bf16.mxu0 0
    %7189 = vmatpush1.bf16.msra.mxu0 %v6141
    %7190 = vmatprep.subr.bf16.mxu0 0
    %7191 = vmatpush1.bf16.msra.mxu0 %v6144
    %7192 = vmatprep.subr.bf16.mxu0 0
    %7193 = vmatpush1.bf16.msra.mxu0 %v6147
    %7194 = vmatprep.subr.bf16.mxu0 0
    %7195 = vmatpush1.bf16.msra.mxu0 %v6150
    %7196 = vmatprep.subr.bf16.mxu0 0
    %7197 = vmatpush1.bf16.msra.mxu0 %v6153
    %7198 = vmatprep.subr.bf16.mxu0 0
    %7199 = vmatpush1.bf16.msra.mxu0 %v6156
    %7200 = vmatprep.subr.bf16.mxu0 0
    %7201 = vmatpush1.bf16.msra.mxu0 %v6159
    %7202 = vmatprep.subr.bf16.mxu0 0
    %7203 = vmatpush1.bf16.msra.mxu0 %v6162
    %7204 = vmatprep.subr.bf16.mxu0 0
    %7205 = vmatpush1.bf16.msra.mxu0 %v6165
    %7206 = vmatprep.subr.bf16.mxu0 0
    %7207 = vmatpush1.bf16.msra.mxu0 %v6168
    %7208 = vmatprep.subr.bf16.mxu0 0
    %7209 = vmatpush1.bf16.msra.mxu0 %v6171
    %7210 = vmatprep.subr.bf16.mxu0 0
    %7211 = vmatpush1.bf16.msra.mxu0 %v6174
    %7212 = vmatprep.subr.bf16.mxu0 0
    %7213 = vmatpush1.bf16.msra.mxu0 %v6177
    %7214 = vmatprep.subr.bf16.mxu0 0
    %7215 = vmatpush1.bf16.msra.mxu0 %v6180
    %7216 = vmatprep.subr.bf16.mxu0 0
    %7217 = vmatpush1.bf16.msra.mxu0 %v6183
    %7218 = vmatprep.mubr.bf16.mxu0 %v4176
    %7219 = vmatmul.mubr.bf16.gmra.mrb[0].mxu0 %v4175
    %v7220 = vpop.f32.mrb[0].mxu0
    %v7221 = vadd.f32 %v7180, %v7220
    %v7222 = vpop.f32.mrb[0].mxu0
    %v7223 = vpop.f32.mrb[0].mxu0
    %v7224 = vadd.f32 %v7183, %v7223
    %v7225 = vpop.f32.mrb[0].mxu0
    %7226 = vdwg.mxu0
    %7227 = vmatprep.subr.bf16.mxu0 0
    %7228 = vmatpush1.bf16.msra.mxu0 %v6186
    %7229 = vmatprep.subr.bf16.mxu0 0
    %7230 = vmatpush1.bf16.msra.mxu0 %v6189
    %7231 = vmatprep.subr.bf16.mxu0 0
    %7232 = vmatpush1.bf16.msra.mxu0 %v6192
    %7233 = vmatprep.subr.bf16.mxu0 0
    %7234 = vmatpush1.bf16.msra.mxu0 %v6195
    %7235 = vmatprep.subr.bf16.mxu0 0
    %7236 = vmatpush1.bf16.msra.mxu0 %v6198
    %7237 = vmatprep.subr.bf16.mxu0 0
    %7238 = vmatpush1.bf16.msra.mxu0 %v6201
    %7239 = vmatprep.subr.bf16.mxu0 0
    %7240 = vmatpush1.bf16.msra.mxu0 %v6204
    %7241 = vmatprep.subr.bf16.mxu0 0
    %7242 = vmatpush1.bf16.msra.mxu0 %v6207
    %7243 = vmatprep.subr.bf16.mxu0 0
    %7244 = vmatpush1.bf16.msra.mxu0 %v6210
    %7245 = vmatprep.subr.bf16.mxu0 0
    %7246 = vmatpush1.bf16.msra.mxu0 %v6213
    %7247 = vmatprep.subr.bf16.mxu0 0
    %7248 = vmatpush1.bf16.msra.mxu0 %v6216
    %7249 = vmatprep.subr.bf16.mxu0 0
    %7250 = vmatpush1.bf16.msra.mxu0 %v6219
    %7251 = vmatprep.subr.bf16.mxu0 0
    %7252 = vmatpush1.bf16.msra.mxu0 %v6222
    %7253 = vmatprep.subr.bf16.mxu0 0
    %7254 = vmatpush1.bf16.msra.mxu0 %v6225
    %7255 = vmatprep.subr.bf16.mxu0 0
    %7256 = vmatpush1.bf16.msra.mxu0 %v6228
    %7257 = vmatprep.subr.bf16.mxu0 0
    %7258 = vmatpush1.bf16.msra.mxu0 %v6231
    %7259 = vmatprep.mubr.bf16.mxu0 %v4235
    %7260 = vmatmul.mubr.bf16.gmra.mrb[0].mxu0 %v4234
    %v7261 = vpop.f32.mrb[0].mxu0
    %v7262 = vadd.f32 %v7221, %v7261
    %v7263 = vpop.f32.mrb[0].mxu0
    %v7264 = vpop.f32.mrb[0].mxu0
    %v7265 = vadd.f32 %v7224, %v7264
    %v7266 = vpop.f32.mrb[0].mxu0
    %7267 = vdwg.mxu0
    %7268 = vmatprep.subr.bf16.mxu0 0
    %7269 = vmatpush1.bf16.msra.mxu0 %v6234
    %7270 = vmatprep.subr.bf16.mxu0 0
    %7271 = vmatpush1.bf16.msra.mxu0 %v6237
    %7272 = vmatprep.subr.bf16.mxu0 0
    %7273 = vmatpush1.bf16.msra.mxu0 %v6240
    %7274 = vmatprep.subr.bf16.mxu0 0
    %7275 = vmatpush1.bf16.msra.mxu0 %v6243
    %7276 = vmatprep.subr.bf16.mxu0 0
    %7277 = vmatpush1.bf16.msra.mxu0 %v6246
    %7278 = vmatprep.subr.bf16.mxu0 0
    %7279 = vmatpush1.bf16.msra.mxu0 %v6249
    %7280 = vmatprep.subr.bf16.mxu0 0
    %7281 = vmatpush1.bf16.msra.mxu0 %v6252
    %7282 = vmatprep.subr.bf16.mxu0 0
    %7283 = vmatpush1.bf16.msra.mxu0 %v6255
    %7284 = vmatprep.subr.bf16.mxu0 0
    %7285 = vmatpush1.bf16.msra.mxu0 %v6258
    %7286 = vmatprep.subr.bf16.mxu0 0
    %7287 = vmatpush1.bf16.msra.mxu0 %v6261
    %7288 = vmatprep.subr.bf16.mxu0 0
    %7289 = vmatpush1.bf16.msra.mxu0 %v6264
    %7290 = vmatprep.subr.bf16.mxu0 0
    %7291 = vmatpush1.bf16.msra.mxu0 %v6267
    %7292 = vmatprep.subr.bf16.mxu0 0
    %7293 = vmatpush1.bf16.msra.mxu0 %v6270
    %7294 = vmatprep.subr.bf16.mxu0 0
    %7295 = vmatpush1.bf16.msra.mxu0 %v6273
    %7296 = vmatprep.subr.bf16.mxu0 0
    %7297 = vmatpush1.bf16.msra.mxu0 %v6276
    %7298 = vmatprep.subr.bf16.mxu0 0
    %7299 = vmatpush1.bf16.msra.mxu0 %v6279
    %7300 = vmatprep.mubr.bf16.mxu0 %v4294
    %7301 = vmatmul.mubr.bf16.gmra.mrb[0].mxu0 %v4236
    %v7302 = vpop.f32.mrb[0].mxu0
    %v7303 = vadd.f32 %v7262, %v7302
    %v7304 = vpop.f32.mrb[0].mxu0
    %v7305 = vpop.f32.mrb[0].mxu0
    %v7306 = vadd.f32 %v7265, %v7305
    %v7307 = vpop.f32.mrb[0].mxu0
    %7308 = vdwg.mxu0
    %7309 = vmatprep.subr.bf16.mxu0 0
    %7310 = vmatpush1.bf16.msra.mxu0 %v6282
    %7311 = vmatprep.subr.bf16.mxu0 0
    %7312 = vmatpush1.bf16.msra.mxu0 %v6285
    %7313 = vmatprep.subr.bf16.mxu0 0
    %7314 = vmatpush1.bf16.msra.mxu0 %v6288
    %7315 = vmatprep.subr.bf16.mxu0 0
    %7316 = vmatpush1.bf16.msra.mxu0 %v6291
    %7317 = vmatprep.subr.bf16.mxu0 0
    %7318 = vmatpush1.bf16.msra.mxu0 %v6294
    %7319 = vmatprep.subr.bf16.mxu0 0
    %7320 = vmatpush1.bf16.msra.mxu0 %v6297
    %7321 = vmatprep.subr.bf16.mxu0 0
    %7322 = vmatpush1.bf16.msra.mxu0 %v6300
    %7323 = vmatprep.subr.bf16.mxu0 0
    %7324 = vmatpush1.bf16.msra.mxu0 %v6303
    %7325 = vmatprep.subr.bf16.mxu0 0
    %7326 = vmatpush1.bf16.msra.mxu0 %v6306
    %7327 = vmatprep.subr.bf16.mxu0 0
    %7328 = vmatpush1.bf16.msra.mxu0 %v6309
    %7329 = vmatprep.subr.bf16.mxu0 0
    %7330 = vmatpush1.bf16.msra.mxu0 %v6312
    %7331 = vmatprep.subr.bf16.mxu0 0
    %7332 = vmatpush1.bf16.msra.mxu0 %v6315
    %7333 = vmatprep.subr.bf16.mxu0 0
    %7334 = vmatpush1.bf16.msra.mxu0 %v6318
    %7335 = vmatprep.subr.bf16.mxu0 0
    %7336 = vmatpush1.bf16.msra.mxu0 %v6321
    %7337 = vmatprep.subr.bf16.mxu0 0
    %7338 = vmatpush1.bf16.msra.mxu0 %v6324
    %7339 = vmatprep.subr.bf16.mxu0 0
    %7340 = vmatpush1.bf16.msra.mxu0 %v6327
    %7341 = vmatprep.mubr.bf16.mxu0 %v4296
    %7342 = vmatmul.mubr.bf16.gmra.mrb[0].mxu0 %v4295
    %v7343 = vpop.f32.mrb[0].mxu0
    %v7344 = vadd.f32 %v7303, %v7343
    %v7345 = vpop.f32.mrb[0].mxu0
    %v7346 = vpop.f32.mrb[0].mxu0
    %v7347 = vadd.f32 %v7306, %v7346
    %v7348 = vpop.f32.mrb[0].mxu0
    %7349 = vdwg.mxu0
    %7350 = vmatprep.subr.bf16.mxu0 0
    %7351 = vmatpush1.bf16.msra.mxu0 %v6330
    %7352 = vmatprep.subr.bf16.mxu0 0
    %7353 = vmatpush1.bf16.msra.mxu0 %v6333
    %7354 = vmatprep.subr.bf16.mxu0 0
    %7355 = vmatpush1.bf16.msra.mxu0 %v6336
    %7356 = vmatprep.subr.bf16.mxu0 0
    %7357 = vmatpush1.bf16.msra.mxu0 %v6339
    %7358 = vmatprep.subr.bf16.mxu0 0
    %7359 = vmatpush1.bf16.msra.mxu0 %v6342
    %7360 = vmatprep.subr.bf16.mxu0 0
    %7361 = vmatpush1.bf16.msra.mxu0 %v6345
    %7362 = vmatprep.subr.bf16.mxu0 0
    %7363 = vmatpush1.bf16.msra.mxu0 %v6348
    %7364 = vmatprep.subr.bf16.mxu0 0
    %7365 = vmatpush1.bf16.msra.mxu0 %v6351
    %7366 = vmatprep.subr.bf16.mxu0 0
    %7367 = vmatpush1.bf16.msra.mxu0 %v6354
    %7368 = vmatprep.subr.bf16.mxu0 0
    %7369 = vmatpush1.bf16.msra.mxu0 %v6357
    %7370 = vmatprep.subr.bf16.mxu0 0
    %7371 = vmatpush1.bf16.msra.mxu0 %v6360
    %7372 = vmatprep.subr.bf16.mxu0 0
    %7373 = vmatpush1.bf16.msra.mxu0 %v6363
    %7374 = vmatprep.subr.bf16.mxu0 0
    %7375 = vmatpush1.bf16.msra.mxu0 %v6366
    %7376 = vmatprep.subr.bf16.mxu0 0
    %7377 = vmatpush1.bf16.msra.mxu0 %v6369
    %7378 = vmatprep.subr.bf16.mxu0 0
    %7379 = vmatpush1.bf16.msra.mxu0 %v6372
    %7380 = vmatprep.subr.bf16.mxu0 0
    %7381 = vmatpush1.bf16.msra.mxu0 %v6375
    %7382 = vmatprep.mubr.bf16.mxu0 %v4355
    %7383 = vmatmul.mubr.bf16.gmra.mrb[0].mxu0 %v4354
    %v7384 = vpop.f32.mrb[0].mxu0
    %v7385 = vadd.f32 %v7344, %v7384
    %v7386 = vpop.f32.mrb[0].mxu0
    %v7387 = vpop.f32.mrb[0].mxu0
    %v7388 = vadd.f32 %v7347, %v7387
    %v7389 = vpop.f32.mrb[0].mxu0
    %7390 = vdwg.mxu0
    %7391 = vmatprep.subr.bf16.mxu0 0
    %7392 = vmatpush1.bf16.msra.mxu0 %v6378
    %7393 = vmatprep.subr.bf16.mxu0 0
    %7394 = vmatpush1.bf16.msra.mxu0 %v6381
    %7395 = vmatprep.subr.bf16.mxu0 0
    %7396 = vmatpush1.bf16.msra.mxu0 %v6384
    %7397 = vmatprep.subr.bf16.mxu0 0
    %7398 = vmatpush1.bf16.msra.mxu0 %v6387
    %7399 = vmatprep.subr.bf16.mxu0 0
    %7400 = vmatpush1.bf16.msra.mxu0 %v6390
    %7401 = vmatprep.subr.bf16.mxu0 0
    %7402 = vmatpush1.bf16.msra.mxu0 %v6393
    %7403 = vmatprep.subr.bf16.mxu0 0
    %7404 = vmatpush1.bf16.msra.mxu0 %v6396
    %7405 = vmatprep.subr.bf16.mxu0 0
    %7406 = vmatpush1.bf16.msra.mxu0 %v6399
    %7407 = vmatprep.subr.bf16.mxu0 0
    %7408 = vmatpush1.bf16.msra.mxu0 0
    %7409 = vmatprep.subr.bf16.mxu0 0
    %7410 = vmatpush1.bf16.msra.mxu0 0
    %7411 = vmatprep.subr.bf16.mxu0 0
    %7412 = vmatpush1.bf16.msra.mxu0 0
    %7413 = vmatprep.subr.bf16.mxu0 0
    %7414 = vmatpush1.bf16.msra.mxu0 0
    %7415 = vmatprep.subr.bf16.mxu0 0
    %7416 = vmatpush1.bf16.msra.mxu0 0
    %7417 = vmatprep.subr.bf16.mxu0 0
    %7418 = vmatpush1.bf16.msra.mxu0 0
    %7419 = vmatprep.subr.bf16.mxu0 0
    %7420 = vmatpush1.bf16.msra.mxu0 0
    %7421 = vmatprep.subr.bf16.mxu0 0
    %7422 = vmatpush1.bf16.msra.mxu0 0
    %7423 = vmatprep.mubr.bf16.mxu0 0
    %7424 = vmatmul.mubr.bf16.gmra.mrb[0].mxu0 %v4356
    %v7425 = vpop.f32.mrb[0].mxu0
    %v7426 = vadd.f32 %v7385, %v7425
    %v7427 = vpop.f32.mrb[0].mxu0
    %v7428 = vpop.f32.mrb[0].mxu0
    %v7429 = vadd.f32 %v7388, %v7428
    %v7430 = vpop.f32.mrb[0].mxu0
    %7431 = vdwg.mxu0
    %v7432 = vld [vmem:[#allocation9] sm:$0x7]
    %v7434 = vlaneseq
    %v7435 = vshrl.u32 %v7434, 7
    %v7436 = vsub.s32 0, %v7435
    %v7437 = vrot.slane %v7432, %v7436
    %v7438 = vlaneseq
    %v7439 = vshrl.u32 %v7438, 7
    %v7440 = vsub.s32 1, %v7439
    %v7441 = vrot.slane %v7432, %v7440
    %v7442 = vlaneseq
    %v7443 = vshrl.u32 %v7442, 7
    %v7444 = vsub.s32 2, %v7443
    %v7445 = vrot.slane %v7432, %v7444
    %v7449 = vmul.f32 %v7096, %v7437
    %v7450 = vmul.f32 %v7098, %v7441
    %v7451 = vmul.f32 %v7426, %v7445
    %v7452 = vmul.f32 %v7100, %v7437
    %v7453 = vmul.f32 %v7102, %v7441
    %v7454 = vmul.f32 %v7429, %v7445
    %v7455 = vld [vmem:[#allocation10] sm:$0x7]
    %v7457 = vlaneseq
    %v7458 = vshrl.u32 %v7457, 7
    %v7459 = vsub.s32 0, %v7458
    %v7460 = vrot.slane %v7455, %v7459
    %v7461 = vlaneseq
    %v7462 = vshrl.u32 %v7461, 7
    %v7463 = vsub.s32 1, %v7462
    %v7464 = vrot.slane %v7455, %v7463
    %v7465 = vlaneseq
    %v7466 = vshrl.u32 %v7465, 7
    %v7467 = vsub.s32 2, %v7466
    %v7468 = vrot.slane %v7455, %v7467
    %v7472 = vadd.f32 %v7449, %v7460
    %v7473 = vadd.f32 %v7450, %v7464
    %v7474 = vadd.f32 %v7451, %v7468
    %v7475 = vadd.f32 %v7452, %v7460
    %v7476 = vadd.f32 %v7453, %v7464
    %v7477 = vadd.f32 %v7454, %v7468
    %7482 = vrot.lane.b32.xlu0 %v7473, 64
    %v7483 = vpop.permute.xlu0 %7482
    %7484 = vrot.lane.b32.xlu0 %v7474, 64
    %v7485 = vpop.permute.xlu0 %7484
    %7486 = vrot.lane.b32.xlu0 %v7476, 64
    %v7487 = vpop.permute.xlu0 %7486
    %7488 = vrot.lane.b32.xlu0 %v7477, 64
    %v7489 = vpop.permute.xlu0 %7488
    %vm7490 = vcmask 523264
    %v7491 = vsel %vm7490, %v7483, %v7485
    %v7492 = vsel %vm7490, %v7487, %v7489
    %v7497 = vmax.f32 %v7472, %v7491
    %v7498 = vmax.f32 %v7473, %v7485
    %v7499 = vmax.f32 %v7475, %v7492
    %v7500 = vmax.f32 %v7476, %v7489
    %v7505 = vcombine.low %v7497, %v7498
    %v7506 = vcombine.high %v7497, %v7498
    %v7508 = vunpack.c.l.s4 1983009808
    %v7509 = vunpack.c.0.s8 %v7508
    %v7510 = vlaneseq
    %v7511 = vshrl.u32 %v7510, 7
    %v7512 = vsub.s32 %v7509, %v7511
    %v7513 = vrot.slane %v7505, %v7512
    %v7515 = vunpack.c.l.s4 1983009808
    %v7516 = vunpack.c.0.s8 %v7515
    %v7517 = vlaneseq
    %v7518 = vshrl.u32 %v7517, 7
    %v7519 = vsub.s32 %v7516, %v7518
    %v7520 = vrot.slane %v7506, %v7519
    %v7521 = vcombine.high %v7513, %v7513
    %v7522 = vcombine.high %v7520, %v7520
    %v7523 = vcombine.low %v7499, %v7500
    %v7524 = vcombine.high %v7499, %v7500
    %v7526 = vunpack.c.l.s4 1983009808
    %v7527 = vunpack.c.0.s8 %v7526
    %v7528 = vlaneseq
    %v7529 = vshrl.u32 %v7528, 7
    %v7530 = vsub.s32 %v7527, %v7529
    %v7531 = vrot.slane %v7523, %v7530
    %v7533 = vunpack.c.l.s4 1983009808
    %v7534 = vunpack.c.0.s8 %v7533
    %v7535 = vlaneseq
    %v7536 = vshrl.u32 %v7535, 7
    %v7537 = vsub.s32 %v7534, %v7536
    %v7538 = vrot.slane %v7524, %v7537
    %v7539 = vcombine.high %v7531, %v7531
    %v7540 = vcombine.high %v7538, %v7538
    %v7542 = vunpack.c.l.s4 1983009808
    %v7543 = vunpack.c.0.s8 %v7542
    %v7544 = vlaneseq
    %v7545 = vshrl.u32 %v7544, 7
    %v7546 = vsub.s32 %v7543, %v7545
    %v7547 = vrot.slane %v7513, %v7546
    %v7548 = vcombine.high %v7547, %v7547
    %v7550 = vunpack.c.l.s4 1983009808
    %v7551 = vunpack.c.0.s8 %v7550
    %v7552 = vlaneseq
    %v7553 = vshrl.u32 %v7552, 7
    %v7554 = vsub.s32 %v7551, %v7553
    %v7555 = vrot.slane %v7521, %v7554
    %v7556 = vcombine.high %v7555, %v7555
    %v7558 = vunpack.c.l.s4 1983009808
    %v7559 = vunpack.c.0.s8 %v7558
    %v7560 = vlaneseq
    %v7561 = vshrl.u32 %v7560, 7
    %v7562 = vsub.s32 %v7559, %v7561
    %v7563 = vrot.slane %v7520, %v7562
    %v7564 = vcombine.high %v7563, %v7563
    %v7566 = vunpack.c.l.s4 1983009808
    %v7567 = vunpack.c.0.s8 %v7566
    %v7568 = vlaneseq
    %v7569 = vshrl.u32 %v7568, 7
    %v7570 = vsub.s32 %v7567, %v7569
    %v7571 = vrot.slane %v7522, %v7570
    %v7572 = vcombine.high %v7571, %v7571
    %v7574 = vunpack.c.l.s4 1983009808
    %v7575 = vunpack.c.0.s8 %v7574
    %v7576 = vlaneseq
    %v7577 = vshrl.u32 %v7576, 7
    %v7578 = vsub.s32 %v7575, %v7577
    %v7579 = vrot.slane %v7531, %v7578
    %v7580 = vcombine.high %v7579, %v7579
    %v7582 = vunpack.c.l.s4 1983009808
    %v7583 = vunpack.c.0.s8 %v7582
    %v7584 = vlaneseq
    %v7585 = vshrl.u32 %v7584, 7
    %v7586 = vsub.s32 %v7583, %v7585
    %v7587 = vrot.slane %v7539, %v7586
    %v7588 = vcombine.high %v7587, %v7587
    %v7590 = vunpack.c.l.s4 1983009808
    %v7591 = vunpack.c.0.s8 %v7590
    %v7592 = vlaneseq
    %v7593 = vshrl.u32 %v7592, 7
    %v7594 = vsub.s32 %v7591, %v7593
    %v7595 = vrot.slane %v7538, %v7594
    %v7596 = vcombine.high %v7595, %v7595
    %v7598 = vunpack.c.l.s4 1983009808
    %v7599 = vunpack.c.0.s8 %v7598
    %v7600 = vlaneseq
    %v7601 = vshrl.u32 %v7600, 7
    %v7602 = vsub.s32 %v7599, %v7601
    %v7603 = vrot.slane %v7540, %v7602
    %v7604 = vcombine.high %v7603, %v7603
    %v7621 = vsel %vm3320, %v7547, -inf
    %v7622 = vrot.slane %v7621, 4
    %v7623 = vmax.f32 %v7621, %v7622
    %v7624 = vrot.slane %v7623, 2
    %v7625 = vmax.f32 %v7623, %v7624
    %v7626 = vrot.slane %v7625, 1
    %v7627 = vmax.f32 %v7625, %v7626
    %vm7628 = vcmask 517120
    %v7629 = vsel %vm7628, %v7548, -inf
    %v7630 = vrot.slane %v7629, 4
    %v7631 = vmax.f32 %v7629, %v7630
    %v7632 = vrot.slane %v7631, 2
    %v7633 = vmax.f32 %v7631, %v7632
    %v7634 = vrot.slane %v7633, 1
    %v7635 = vmax.f32 %v7633, %v7634
    %v7636 = vsel %vm3320, %v7555, -inf
    %v7637 = vrot.slane %v7636, 4
    %v7638 = vmax.f32 %v7636, %v7637
    %v7639 = vrot.slane %v7638, 2
    %v7640 = vmax.f32 %v7638, %v7639
    %v7641 = vrot.slane %v7640, 1
    %v7642 = vmax.f32 %v7640, %v7641
    %v7643 = vsel %vm7628, %v7556, -inf
    %v7644 = vrot.slane %v7643, 4
    %v7645 = vmax.f32 %v7643, %v7644
    %v7646 = vrot.slane %v7645, 2
    %v7647 = vmax.f32 %v7645, %v7646
    %v7648 = vrot.slane %v7647, 1
    %v7649 = vmax.f32 %v7647, %v7648
    %v7650 = vsel %vm3320, %v7563, -inf
    %v7651 = vrot.slane %v7650, 4
    %v7652 = vmax.f32 %v7650, %v7651
    %v7653 = vrot.slane %v7652, 2
    %v7654 = vmax.f32 %v7652, %v7653
    %v7655 = vrot.slane %v7654, 1
    %v7656 = vmax.f32 %v7654, %v7655
    %v7657 = vsel %vm7628, %v7564, -inf
    %v7658 = vrot.slane %v7657, 4
    %v7659 = vmax.f32 %v7657, %v7658
    %v7660 = vrot.slane %v7659, 2
    %v7661 = vmax.f32 %v7659, %v7660
    %v7662 = vrot.slane %v7661, 1
    %v7663 = vmax.f32 %v7661, %v7662
    %v7664 = vsel %vm3320, %v7571, -inf
    %v7665 = vrot.slane %v7664, 4
    %v7666 = vmax.f32 %v7664, %v7665
    %v7667 = vrot.slane %v7666, 2
    %v7668 = vmax.f32 %v7666, %v7667
    %v7669 = vrot.slane %v7668, 1
    %v7670 = vmax.f32 %v7668, %v7669
    %v7671 = vsel %vm7628, %v7572, -inf
    %v7672 = vrot.slane %v7671, 4
    %v7673 = vmax.f32 %v7671, %v7672
    %v7674 = vrot.slane %v7673, 2
    %v7675 = vmax.f32 %v7673, %v7674
    %v7676 = vrot.slane %v7675, 1
    %v7677 = vmax.f32 %v7675, %v7676
    %v7678 = vsel %vm3320, %v7579, -inf
    %v7679 = vrot.slane %v7678, 4
    %v7680 = vmax.f32 %v7678, %v7679
    %v7681 = vrot.slane %v7680, 2
    %v7682 = vmax.f32 %v7680, %v7681
    %v7683 = vrot.slane %v7682, 1
    %v7684 = vmax.f32 %v7682, %v7683
    %v7685 = vsel %vm7628, %v7580, -inf
    %v7686 = vrot.slane %v7685, 4
    %v7687 = vmax.f32 %v7685, %v7686
    %v7688 = vrot.slane %v7687, 2
    %v7689 = vmax.f32 %v7687, %v7688
    %v7690 = vrot.slane %v7689, 1
    %v7691 = vmax.f32 %v7689, %v7690
    %v7692 = vsel %vm3320, %v7587, -inf
    %v7693 = vrot.slane %v7692, 4
    %v7694 = vmax.f32 %v7692, %v7693
    %v7695 = vrot.slane %v7694, 2
    %v7696 = vmax.f32 %v7694, %v7695
    %v7697 = vrot.slane %v7696, 1
    %v7698 = vmax.f32 %v7696, %v7697
    %v7699 = vsel %vm7628, %v7588, -inf
    %v7700 = vrot.slane %v7699, 4
    %v7701 = vmax.f32 %v7699, %v7700
    %v7702 = vrot.slane %v7701, 2
    %v7703 = vmax.f32 %v7701, %v7702
    %v7704 = vrot.slane %v7703, 1
    %v7705 = vmax.f32 %v7703, %v7704
    %v7706 = vsel %vm3320, %v7595, -inf
    %v7707 = vrot.slane %v7706, 4
    %v7708 = vmax.f32 %v7706, %v7707
    %v7709 = vrot.slane %v7708, 2
    %v7710 = vmax.f32 %v7708, %v7709
    %v7711 = vrot.slane %v7710, 1
    %v7712 = vmax.f32 %v7710, %v7711
    %v7713 = vsel %vm7628, %v7596, -inf
    %v7714 = vrot.slane %v7713, 4
    %v7715 = vmax.f32 %v7713, %v7714
    %v7716 = vrot.slane %v7715, 2
    %v7717 = vmax.f32 %v7715, %v7716
    %v7718 = vrot.slane %v7717, 1
    %v7719 = vmax.f32 %v7717, %v7718
    %v7720 = vsel %vm3320, %v7603, -inf
    %v7721 = vrot.slane %v7720, 4
    %v7722 = vmax.f32 %v7720, %v7721
    %v7723 = vrot.slane %v7722, 2
    %v7724 = vmax.f32 %v7722, %v7723
    %v7725 = vrot.slane %v7724, 1
    %v7726 = vmax.f32 %v7724, %v7725
    %v7727 = vsel %vm7628, %v7604, -inf
    %v7728 = vrot.slane %v7727, 4
    %v7729 = vmax.f32 %v7727, %v7728
    %v7730 = vrot.slane %v7729, 2
    %v7731 = vmax.f32 %v7729, %v7730
    %v7732 = vrot.slane %v7731, 1
    %v7733 = vmax.f32 %v7731, %v7732
    %v7734 = vmax.f32 %v7627, 0.0
    %v7735 = vmax.f32 %v7635, 0.0
    %v7736 = vmax.f32 %v7642, 0.0
    %v7737 = vmax.f32 %v7649, 0.0
    %v7738 = vmax.f32 %v7656, 0.0
    %v7739 = vmax.f32 %v7663, 0.0
    %v7740 = vmax.f32 %v7670, 0.0
    %v7741 = vmax.f32 %v7677, 0.0
    %v7742 = vmax.f32 %v7684, 0.0
    %v7743 = vmax.f32 %v7691, 0.0
    %v7744 = vmax.f32 %v7698, 0.0
    %v7745 = vmax.f32 %v7705, 0.0
    %v7746 = vmax.f32 %v7712, 0.0
    %v7747 = vmax.f32 %v7719, 0.0
    %v7748 = vmax.f32 %v7726, 0.0
    %v7749 = vmax.f32 %v7733, 0.0
    %v7750 = vpack.c.bf16 %v7734, %v7734
    %v7751 = vpack.c.bf16 %v7735, %v7735
    %v7752 = vpack.c.bf16 %v7736, %v7736
    %v7753 = vpack.c.bf16 %v7737, %v7737
    %v7754 = vpack.c.bf16 %v7738, %v7738
    %v7755 = vpack.c.bf16 %v7739, %v7739
    %v7756 = vpack.c.bf16 %v7740, %v7740
    %v7757 = vpack.c.bf16 %v7741, %v7741
    %v7758 = vpack.c.bf16 %v7742, %v7742
    %v7759 = vpack.c.bf16 %v7743, %v7743
    %v7760 = vpack.c.bf16 %v7744, %v7744
    %v7761 = vpack.c.bf16 %v7745, %v7745
    %v7762 = vpack.c.bf16 %v7746, %v7746
    %v7763 = vpack.c.bf16 %v7747, %v7747
    %v7764 = vpack.c.bf16 %v7748, %v7748
    %v7765 = vpack.c.bf16 %v7749, %v7749
    %v7766 = vld [vmem:[#allocation12] sm:$0xff]
    %v7767 = vld [vmem:[#allocation12 + $0x8] sm:$0xff]
    %v7768 = vld [vmem:[#allocation12 + $0x10] sm:$0xff]
    %v7769 = vld [vmem:[#allocation12 + $0x18] sm:$0xff]
    %v7770 = vld [vmem:[#allocation12 + $0x20] sm:$0xff]
    %v7771 = vld [vmem:[#allocation12 + $0x28] sm:$0xff]
    %v7772 = vld [vmem:[#allocation12 + $0x30] sm:$0xff]
    %v7773 = vld [vmem:[#allocation12 + $0x38] sm:$0xff]
    %v7774 = vld [vmem:[#allocation12 + $0x40] sm:$0xff]
    %v7775 = vld [vmem:[#allocation12 + $0x48] sm:$0xff]
    %v7776 = vld [vmem:[#allocation12 + $0x50] sm:$0xff]
    %v7777 = vld [vmem:[#allocation12 + $0x58] sm:$0xff]
    %v7778 = vld [vmem:[#allocation12 + $0x60] sm:$0xff]
    %v7779 = vld [vmem:[#allocation12 + $0x68] sm:$0xff]
    %v7780 = vld [vmem:[#allocation12 + $0x70] sm:$0xff]
    %v7781 = vld [vmem:[#allocation12 + $0x78] sm:$0xff]
    %v7782 = vld [vmem:[#allocation12 + $0x80] sm:$0xff]
    %v7783 = vld [vmem:[#allocation12 + $0x88] sm:$0xff]
    %v7784 = vld [vmem:[#allocation12 + $0x90] sm:$0xff]
    %v7785 = vld [vmem:[#allocation12 + $0x98] sm:$0xff]
    %v7786 = vld [vmem:[#allocation12 + $0xa0] sm:$0xff]
    %v7787 = vld [vmem:[#allocation12 + $0xa8] sm:$0xff]
    %v7788 = vld [vmem:[#allocation12 + $0xb0] sm:$0xff]
    %v7789 = vld [vmem:[#allocation12 + $0xb8] sm:$0xff]
    %s7790 = scalar_lea.vmem [#allocation12], 192
    %v7791 = vld [vmem:[%s7790] sm:$0xff]
    %v7792 = vld [vmem:[%s7790 + $0x8] sm:$0xff]
    %v7793 = vld [vmem:[%s7790 + $0x10] sm:$0xff]
    %v7794 = vld [vmem:[%s7790 + $0x18] sm:$0xff]
    %v7795 = vld [vmem:[%s7790 + $0x20] sm:$0xff]
    %v7796 = vld [vmem:[%s7790 + $0x28] sm:$0xff]
    %v7797 = vld [vmem:[%s7790 + $0x30] sm:$0xff]
    %v7798 = vld [vmem:[%s7790 + $0x38] sm:$0xff]
    %v7799 = vld [vmem:[%s7790 + $0x40] sm:$0xff]
    %v7800 = vld [vmem:[%s7790 + $0x48] sm:$0xff]
    %v7801 = vld [vmem:[%s7790 + $0x50] sm:$0xff]
    %v7802 = vld [vmem:[%s7790 + $0x58] sm:$0xff]
    %v7803 = vld [vmem:[%s7790 + $0x60] sm:$0xff]
    %v7804 = vld [vmem:[%s7790 + $0x68] sm:$0xff]
    %v7805 = vld [vmem:[%s7790 + $0x70] sm:$0xff]
    %v7806 = vld [vmem:[%s7790 + $0x78] sm:$0xff]
    %v7807 = vld [vmem:[%s7790 + $0x80] sm:$0xff]
    %v7808 = vld [vmem:[%s7790 + $0x88] sm:$0xff]
    %v7809 = vld [vmem:[%s7790 + $0x90] sm:$0xff]
    %v7810 = vld [vmem:[%s7790 + $0x98] sm:$0xff]
    %v7811 = vld [vmem:[%s7790 + $0xa0] sm:$0xff]
    %v7812 = vld [vmem:[%s7790 + $0xa8] sm:$0xff]
    %v7813 = vld [vmem:[%s7790 + $0xb0] sm:$0xff]
    %v7814 = vld [vmem:[%s7790 + $0xb8] sm:$0xff]
    %v7819 = vunpack.c.l.b16 %v7752
    %v7820 = vunpack.c.l.b16 %v7753
    %v7821 = vunpack.c.l.b16 %v7760
    %v7822 = vunpack.c.l.b16 %v7761
    %v7823 = vsel %vm4065, %v7821, %v7819
    %v7824 = vsel %vm4065, %v7822, %v7820
    %v7825 = vpack.c.b16 %v7823, %v7823
    %v7826 = vpack.c.b16 %v7824, %v7824
    %v7852 = vunpack.c.l.b16 %v7791
    %v7853 = vunpack.c.h.b16 %v7791
    %v7854 = vunpack.c.l.b16 %v7792
    %v7855 = vunpack.c.h.b16 %v7792
    %v7856 = vunpack.c.l.b16 %v7793
    %v7857 = vunpack.c.h.b16 %v7793
    %v7858 = vunpack.c.l.b16 %v7794
    %v7859 = vunpack.c.h.b16 %v7794
    %v7860 = vunpack.c.l.b16 %v7795
    %v7861 = vunpack.c.h.b16 %v7795
    %v7862 = vunpack.c.l.b16 %v7796
    %v7863 = vunpack.c.h.b16 %v7796
    %v7864 = vunpack.c.l.b16 %v7797
    %v7865 = vunpack.c.h.b16 %v7797
    %v7866 = vunpack.c.l.b16 %v7798
    %v7867 = vunpack.c.h.b16 %v7798
    %v7868 = vunpack.c.l.b16 %v7799
    %v7869 = vunpack.c.h.b16 %v7799
    %v7870 = vunpack.c.l.b16 %v7800
    %v7871 = vunpack.c.h.b16 %v7800
    %v7872 = vunpack.c.l.b16 %v7801
    %v7873 = vunpack.c.h.b16 %v7801
    %v7874 = vunpack.c.l.b16 %v7802
    %v7875 = vunpack.c.h.b16 %v7802
    %v7876 = vunpack.c.l.b16 %v7803
    %v7877 = vunpack.c.h.b16 %v7803
    %v7878 = vunpack.c.l.b16 %v7804
    %v7879 = vunpack.c.h.b16 %v7804
    %v7880 = vunpack.c.l.b16 %v7805
    %v7881 = vunpack.c.h.b16 %v7805
    %v7882 = vunpack.c.l.b16 %v7806
    %v7883 = vunpack.c.h.b16 %v7806
    %v7884 = vunpack.c.l.b16 %v7807
    %v7885 = vunpack.c.h.b16 %v7807
    %v7886 = vunpack.c.l.b16 %v7808
    %v7887 = vunpack.c.h.b16 %v7808
    %v7888 = vunpack.c.l.b16 %v7809
    %v7889 = vunpack.c.h.b16 %v7809
    %v7890 = vunpack.c.l.b16 %v7810
    %v7891 = vunpack.c.h.b16 %v7810
    %v7892 = vunpack.c.l.b16 %v7811
    %v7893 = vunpack.c.h.b16 %v7811
    %v7894 = vunpack.c.l.b16 %v7812
    %v7895 = vunpack.c.h.b16 %v7812
    %v7896 = vunpack.c.l.b16 %v7813
    %v7897 = vunpack.c.h.b16 %v7813
    %v7898 = vunpack.c.l.b16 %v7814
    %v7899 = vunpack.c.h.b16 %v7814
    %v7900 = vpack.c.b16 %v7854, %v7852
    %v7901 = vpack.c.b16 %v7855, %v7853
    %v7902 = vpack.c.b16 %v7858, %v7856
    %v7903 = vpack.c.b16 %v7859, %v7857
    %v7904 = vpack.c.b16 %v7862, %v7860
    %v7905 = vpack.c.b16 %v7863, %v7861
    %v7906 = vpack.c.b16 %v7866, %v7864
    %v7907 = vpack.c.b16 %v7867, %v7865
    %v7908 = vpack.c.b16 %v7870, %v7868
    %v7909 = vpack.c.b16 %v7871, %v7869
    %v7910 = vpack.c.b16 %v7874, %v7872
    %v7911 = vpack.c.b16 %v7875, %v7873
    %v7912 = vpack.c.b16 %v7878, %v7876
    %v7913 = vpack.c.b16 %v7879, %v7877
    %v7914 = vpack.c.b16 %v7882, %v7880
    %v7915 = vpack.c.b16 %v7883, %v7881
    %v7916 = vpack.c.b16 %v7886, %v7884
    %v7917 = vpack.c.b16 %v7887, %v7885
    %v7918 = vpack.c.b16 %v7890, %v7888
    %v7919 = vpack.c.b16 %v7891, %v7889
    %v7920 = vpack.c.b16 %v7894, %v7892
    %v7921 = vpack.c.b16 %v7895, %v7893
    %v7922 = vpack.c.b16 %v7898, %v7896
    %v7923 = vpack.c.b16 %v7899, %v7897
    %v7949 = vsel %vm7490, %v7826, 0
    %7951 = vmatprep.subr.bf16.mxu0 %v7901
    %7952 = vmatpush1.bf16.msra.mxu0 %v7900
    %7953 = vmatprep.subr.bf16.mxu0 %v7903
    %7954 = vmatpush1.bf16.msra.mxu0 %v7902
    %7955 = vmatprep.subr.bf16.mxu0 %v7905
    %7956 = vmatpush1.bf16.msra.mxu0 %v7904
    %7957 = vmatprep.subr.bf16.mxu0 %v7907
    %7958 = vmatpush1.bf16.msra.mxu0 %v7906
    %7959 = vmatprep.subr.bf16.mxu0 %v7909
    %7960 = vmatpush1.bf16.msra.mxu0 %v7908
    %7961 = vmatprep.subr.bf16.mxu0 %v7911
    %7962 = vmatpush1.bf16.msra.mxu0 %v7910
    %7963 = vmatprep.subr.bf16.mxu0 %v7913
    %7964 = vmatpush1.bf16.msra.mxu0 %v7912
    %7965 = vmatprep.subr.bf16.mxu0 %v7915
    %7966 = vmatpush1.bf16.msra.mxu0 %v7914
    %7967 = vmatprep.subr.bf16.mxu0 %v7917
    %7968 = vmatpush1.bf16.msra.mxu0 %v7916
    %7969 = vmatprep.subr.bf16.mxu0 %v7919
    %7970 = vmatpush1.bf16.msra.mxu0 %v7918
    %7971 = vmatprep.subr.bf16.mxu0 %v7921
    %7972 = vmatpush1.bf16.msra.mxu0 %v7920
    %7973 = vmatprep.subr.bf16.mxu0 %v7923
    %7974 = vmatpush1.bf16.msra.mxu0 %v7922
    %7975 = vmatprep.subr.bf16.mxu0 0
    %7976 = vmatpush1.bf16.msra.mxu0 0
    %7977 = vmatprep.subr.bf16.mxu0 0
    %7978 = vmatpush1.bf16.msra.mxu0 0
    %7979 = vmatprep.subr.bf16.mxu0 0
    %7980 = vmatpush1.bf16.msra.mxu0 0
    %7981 = vmatprep.subr.bf16.mxu0 0
    %7982 = vmatpush1.bf16.msra.mxu0 0
    %7983 = vmatprep.mubr.bf16.mxu0 %v7949
    %7984 = vmatmul.mubr.bf16.gmra.mrb[0].mxu0 %v7825
    %v7985 = vpop.f32.mrb[0].mxu0
    %v7986 = vadd.f32 0.0, %v7985
    %v7987 = vpop.f32.mrb[0].mxu0
    %v7988 = vadd.f32 0.0, %v7987
    %v7989 = vpop.f32.mrb[0].mxu0
    %v7990 = vpop.f32.mrb[0].mxu0
    %7991 = vdwg.mxu0
    %v7996 = vunpack.c.l.b16 %v7750
    %v7997 = vunpack.c.l.b16 %v7751
    %v7998 = vunpack.c.l.b16 %v7758
    %v7999 = vunpack.c.l.b16 %v7759
    %v8000 = vsel %vm4065, %v7998, %v7996
    %v8001 = vsel %vm4065, %v7999, %v7997
    %v8002 = vpack.c.b16 %v8000, %v8000
    %v8003 = vpack.c.b16 %v8001, %v8001
    %v8029 = vunpack.c.l.b16 %v7766
    %v8030 = vunpack.c.h.b16 %v7766
    %v8031 = vunpack.c.l.b16 %v7767
    %v8032 = vunpack.c.h.b16 %v7767
    %v8033 = vunpack.c.l.b16 %v7768
    %v8034 = vunpack.c.h.b16 %v7768
    %v8035 = vunpack.c.l.b16 %v7769
    %v8036 = vunpack.c.h.b16 %v7769
    %v8037 = vunpack.c.l.b16 %v7770
    %v8038 = vunpack.c.h.b16 %v7770
    %v8039 = vunpack.c.l.b16 %v7771
    %v8040 = vunpack.c.h.b16 %v7771
    %v8041 = vunpack.c.l.b16 %v7772
    %v8042 = vunpack.c.h.b16 %v7772
    %v8043 = vunpack.c.l.b16 %v7773
    %v8044 = vunpack.c.h.b16 %v7773
    %v8045 = vunpack.c.l.b16 %v7774
    %v8046 = vunpack.c.h.b16 %v7774
    %v8047 = vunpack.c.l.b16 %v7775
    %v8048 = vunpack.c.h.b16 %v7775
    %v8049 = vunpack.c.l.b16 %v7776
    %v8050 = vunpack.c.h.b16 %v7776
    %v8051 = vunpack.c.l.b16 %v7777
    %v8052 = vunpack.c.h.b16 %v7777
    %v8053 = vunpack.c.l.b16 %v7778
    %v8054 = vunpack.c.h.b16 %v7778
    %v8055 = vunpack.c.l.b16 %v7779
    %v8056 = vunpack.c.h.b16 %v7779
    %v8057 = vunpack.c.l.b16 %v7780
    %v8058 = vunpack.c.h.b16 %v7780
    %v8059 = vunpack.c.l.b16 %v7781
    %v8060 = vunpack.c.h.b16 %v7781
    %v8061 = vunpack.c.l.b16 %v7782
    %v8062 = vunpack.c.h.b16 %v7782
    %v8063 = vunpack.c.l.b16 %v7783
    %v8064 = vunpack.c.h.b16 %v7783
    %v8065 = vunpack.c.l.b16 %v7784
    %v8066 = vunpack.c.h.b16 %v7784
    %v8067 = vunpack.c.l.b16 %v7785
    %v8068 = vunpack.c.h.b16 %v7785
    %v8069 = vunpack.c.l.b16 %v7786
    %v8070 = vunpack.c.h.b16 %v7786
    %v8071 = vunpack.c.l.b16 %v7787
    %v8072 = vunpack.c.h.b16 %v7787
    %v8073 = vunpack.c.l.b16 %v7788
    %v8074 = vunpack.c.h.b16 %v7788
    %v8075 = vunpack.c.l.b16 %v7789
    %v8076 = vunpack.c.h.b16 %v7789
    %v8077 = vpack.c.b16 %v8031, %v8029
    %v8078 = vpack.c.b16 %v8032, %v8030
    %v8079 = vpack.c.b16 %v8035, %v8033
    %v8080 = vpack.c.b16 %v8036, %v8034
    %v8081 = vpack.c.b16 %v8039, %v8037
    %v8082 = vpack.c.b16 %v8040, %v8038
    %v8083 = vpack.c.b16 %v8043, %v8041
    %v8084 = vpack.c.b16 %v8044, %v8042
    %v8085 = vpack.c.b16 %v8047, %v8045
    %v8086 = vpack.c.b16 %v8048, %v8046
    %v8087 = vpack.c.b16 %v8051, %v8049
    %v8088 = vpack.c.b16 %v8052, %v8050
    %v8089 = vpack.c.b16 %v8055, %v8053
    %v8090 = vpack.c.b16 %v8056, %v8054
    %v8091 = vpack.c.b16 %v8059, %v8057
    %v8092 = vpack.c.b16 %v8060, %v8058
    %v8093 = vpack.c.b16 %v8063, %v8061
    %v8094 = vpack.c.b16 %v8064, %v8062
    %v8095 = vpack.c.b16 %v8067, %v8065
    %v8096 = vpack.c.b16 %v8068, %v8066
    %v8097 = vpack.c.b16 %v8071, %v8069
    %v8098 = vpack.c.b16 %v8072, %v8070
    %v8099 = vpack.c.b16 %v8075, %v8073
    %v8100 = vpack.c.b16 %v8076, %v8074
    %v8126 = vsel %vm7490, %v8003, 0
    %8128 = vmatprep.subr.bf16.mxu0 %v8078
    %8129 = vmatpush1.bf16.msra.mxu0 %v8077
    %8130 = vmatprep.subr.bf16.mxu0 %v8080
    %8131 = vmatpush1.bf16.msra.mxu0 %v8079
    %8132 = vmatprep.subr.bf16.mxu0 %v8082
    %8133 = vmatpush1.bf16.msra.mxu0 %v8081
    %8134 = vmatprep.subr.bf16.mxu0 %v8084
    %8135 = vmatpush1.bf16.msra.mxu0 %v8083
    %8136 = vmatprep.subr.bf16.mxu0 %v8086
    %8137 = vmatpush1.bf16.msra.mxu0 %v8085
    %8138 = vmatprep.subr.bf16.mxu0 %v8088
    %8139 = vmatpush1.bf16.msra.mxu0 %v8087
    %8140 = vmatprep.subr.bf16.mxu0 %v8090
    %8141 = vmatpush1.bf16.msra.mxu0 %v8089
    %8142 = vmatprep.subr.bf16.mxu0 %v8092
    %8143 = vmatpush1.bf16.msra.mxu0 %v8091
    %8144 = vmatprep.subr.bf16.mxu0 %v8094
    %8145 = vmatpush1.bf16.msra.mxu0 %v8093
    %8146 = vmatprep.subr.bf16.mxu0 %v8096
    %8147 = vmatpush1.bf16.msra.mxu0 %v8095
    %8148 = vmatprep.subr.bf16.mxu0 %v8098
    %8149 = vmatpush1.bf16.msra.mxu0 %v8097
    %8150 = vmatprep.subr.bf16.mxu0 %v8100
    %8151 = vmatpush1.bf16.msra.mxu0 %v8099
    %8152 = vmatprep.subr.bf16.mxu0 0
    %8153 = vmatpush1.bf16.msra.mxu0 0
    %8154 = vmatprep.subr.bf16.mxu0 0
    %8155 = vmatpush1.bf16.msra.mxu0 0
    %8156 = vmatprep.subr.bf16.mxu0 0
    %8157 = vmatpush1.bf16.msra.mxu0 0
    %8158 = vmatprep.subr.bf16.mxu0 0
    %8159 = vmatpush1.bf16.msra.mxu0 0
    %8160 = vmatprep.mubr.bf16.mxu0 %v8126
    %8161 = vmatmul.mubr.bf16.gmra.mrb[0].mxu0 %v8002
    %v8162 = vpop.f32.mrb[0].mxu0
    %v8163 = vadd.f32 %v7986, %v8162
    %v8164 = vpop.f32.mrb[0].mxu0
    %v8165 = vadd.f32 %v7988, %v8164
    %v8166 = vpop.f32.mrb[0].mxu0
    %v8167 = vpop.f32.mrb[0].mxu0
    %8168 = vdwg.mxu0
    %s8169 = scalar_lea.vmem [#allocation12], 384
    %v8170 = vld [vmem:[%s8169] sm:$0xff]
    %v8171 = vld [vmem:[%s8169 + $0x8] sm:$0xff]
    %v8172 = vld [vmem:[%s8169 + $0x10] sm:$0xff]
    %v8173 = vld [vmem:[%s8169 + $0x18] sm:$0xff]
    %v8174 = vld [vmem:[%s8169 + $0x20] sm:$0xff]
    %v8175 = vld [vmem:[%s8169 + $0x28] sm:$0xff]
    %v8176 = vld [vmem:[%s8169 + $0x30] sm:$0xff]
    %v8177 = vld [vmem:[%s8169 + $0x38] sm:$0xff]
    %v8178 = vld [vmem:[%s8169 + $0x40] sm:$0xff]
    %v8179 = vld [vmem:[%s8169 + $0x48] sm:$0xff]
    %v8180 = vld [vmem:[%s8169 + $0x50] sm:$0xff]
    %v8181 = vld [vmem:[%s8169 + $0x58] sm:$0xff]
    %v8182 = vld [vmem:[%s8169 + $0x60] sm:$0xff]
    %v8183 = vld [vmem:[%s8169 + $0x68] sm:$0xff]
    %v8184 = vld [vmem:[%s8169 + $0x70] sm:$0xff]
    %v8185 = vld [vmem:[%s8169 + $0x78] sm:$0xff]
    %v8186 = vld [vmem:[%s8169 + $0x80] sm:$0xff]
    %v8187 = vld [vmem:[%s8169 + $0x88] sm:$0xff]
    %v8188 = vld [vmem:[%s8169 + $0x90] sm:$0xff]
    %v8189 = vld [vmem:[%s8169 + $0x98] sm:$0xff]
    %v8190 = vld [vmem:[%s8169 + $0xa0] sm:$0xff]
    %v8191 = vld [vmem:[%s8169 + $0xa8] sm:$0xff]
    %v8192 = vld [vmem:[%s8169 + $0xb0] sm:$0xff]
    %v8193 = vld [vmem:[%s8169 + $0xb8] sm:$0xff]
    %v8198 = vunpack.c.l.b16 %v7754
    %v8199 = vunpack.c.l.b16 %v7755
    %v8200 = vunpack.c.l.b16 %v7762
    %v8201 = vunpack.c.l.b16 %v7763
    %v8202 = vsel %vm4065, %v8200, %v8198
    %v8203 = vsel %vm4065, %v8201, %v8199
    %v8204 = vpack.c.b16 %v8202, %v8202
    %v8205 = vpack.c.b16 %v8203, %v8203
    %v8231 = vunpack.c.l.b16 %v8170
    %v8232 = vunpack.c.h.b16 %v8170
    %v8233 = vunpack.c.l.b16 %v8171
    %v8234 = vunpack.c.h.b16 %v8171
    %v8235 = vunpack.c.l.b16 %v8172
    %v8236 = vunpack.c.h.b16 %v8172
    %v8237 = vunpack.c.l.b16 %v8173
    %v8238 = vunpack.c.h.b16 %v8173
    %v8239 = vunpack.c.l.b16 %v8174
    %v8240 = vunpack.c.h.b16 %v8174
    %v8241 = vunpack.c.l.b16 %v8175
    %v8242 = vunpack.c.h.b16 %v8175
    %v8243 = vunpack.c.l.b16 %v8176
    %v8244 = vunpack.c.h.b16 %v8176
    %v8245 = vunpack.c.l.b16 %v8177
    %v8246 = vunpack.c.h.b16 %v8177
    %v8247 = vunpack.c.l.b16 %v8178
    %v8248 = vunpack.c.h.b16 %v8178
    %v8249 = vunpack.c.l.b16 %v8179
    %v8250 = vunpack.c.h.b16 %v8179
    %v8251 = vunpack.c.l.b16 %v8180
    %v8252 = vunpack.c.h.b16 %v8180
    %v8253 = vunpack.c.l.b16 %v8181
    %v8254 = vunpack.c.h.b16 %v8181
    %v8255 = vunpack.c.l.b16 %v8182
    %v8256 = vunpack.c.h.b16 %v8182
    %v8257 = vunpack.c.l.b16 %v8183
    %v8258 = vunpack.c.h.b16 %v8183
    %v8259 = vunpack.c.l.b16 %v8184
    %v8260 = vunpack.c.h.b16 %v8184
    %v8261 = vunpack.c.l.b16 %v8185
    %v8262 = vunpack.c.h.b16 %v8185
    %v8263 = vunpack.c.l.b16 %v8186
    %v8264 = vunpack.c.h.b16 %v8186
    %v8265 = vunpack.c.l.b16 %v8187
    %v8266 = vunpack.c.h.b16 %v8187
    %v8267 = vunpack.c.l.b16 %v8188
    %v8268 = vunpack.c.h.b16 %v8188
    %v8269 = vunpack.c.l.b16 %v8189
    %v8270 = vunpack.c.h.b16 %v8189
    %v8271 = vunpack.c.l.b16 %v8190
    %v8272 = vunpack.c.h.b16 %v8190
    %v8273 = vunpack.c.l.b16 %v8191
    %v8274 = vunpack.c.h.b16 %v8191
    %v8275 = vunpack.c.l.b16 %v8192
    %v8276 = vunpack.c.h.b16 %v8192
    %v8277 = vunpack.c.l.b16 %v8193
    %v8278 = vunpack.c.h.b16 %v8193
    %v8279 = vpack.c.b16 %v8233, %v8231
    %v8280 = vpack.c.b16 %v8234, %v8232
    %v8281 = vpack.c.b16 %v8237, %v8235
    %v8282 = vpack.c.b16 %v8238, %v8236
    %v8283 = vpack.c.b16 %v8241, %v8239
    %v8284 = vpack.c.b16 %v8242, %v8240
    %v8285 = vpack.c.b16 %v8245, %v8243
    %v8286 = vpack.c.b16 %v8246, %v8244
    %v8287 = vpack.c.b16 %v8249, %v8247
    %v8288 = vpack.c.b16 %v8250, %v8248
    %v8289 = vpack.c.b16 %v8253, %v8251
    %v8290 = vpack.c.b16 %v8254, %v8252
    %v8291 = vpack.c.b16 %v8257, %v8255
    %v8292 = vpack.c.b16 %v8258, %v8256
    %v8293 = vpack.c.b16 %v8261, %v8259
    %v8294 = vpack.c.b16 %v8262, %v8260
    %v8295 = vpack.c.b16 %v8265, %v8263
    %v8296 = vpack.c.b16 %v8266, %v8264
    %v8297 = vpack.c.b16 %v8269, %v8267
    %v8298 = vpack.c.b16 %v8270, %v8268
    %v8299 = vpack.c.b16 %v8273, %v8271
    %v8300 = vpack.c.b16 %v8274, %v8272
    %v8301 = vpack.c.b16 %v8277, %v8275
    %v8302 = vpack.c.b16 %v8278, %v8276
    %v8328 = vsel %vm7490, %v8205, 0
    %8330 = vmatprep.subr.bf16.mxu0 %v8280
    %8331 = vmatpush1.bf16.msra.mxu0 %v8279
    %8332 = vmatprep.subr.bf16.mxu0 %v8282
    %8333 = vmatpush1.bf16.msra.mxu0 %v8281
    %8334 = vmatprep.subr.bf16.mxu0 %v8284
    %8335 = vmatpush1.bf16.msra.mxu0 %v8283
    %8336 = vmatprep.subr.bf16.mxu0 %v8286
    %8337 = vmatpush1.bf16.msra.mxu0 %v8285
    %8338 = vmatprep.subr.bf16.mxu0 %v8288
    %8339 = vmatpush1.bf16.msra.mxu0 %v8287
    %8340 = vmatprep.subr.bf16.mxu0 %v8290
    %8341 = vmatpush1.bf16.msra.mxu0 %v8289
    %8342 = vmatprep.subr.bf16.mxu0 %v8292
    %8343 = vmatpush1.bf16.msra.mxu0 %v8291
    %8344 = vmatprep.subr.bf16.mxu0 %v8294
    %8345 = vmatpush1.bf16.msra.mxu0 %v8293
    %8346 = vmatprep.subr.bf16.mxu0 %v8296
    %8347 = vmatpush1.bf16.msra.mxu0 %v8295
    %8348 = vmatprep.subr.bf16.mxu0 %v8298
    %8349 = vmatpush1.bf16.msra.mxu0 %v8297
    %8350 = vmatprep.subr.bf16.mxu0 %v8300
    %8351 = vmatpush1.bf16.msra.mxu0 %v8299
    %8352 = vmatprep.subr.bf16.mxu0 %v8302
    %8353 = vmatpush1.bf16.msra.mxu0 %v8301
    %8354 = vmatprep.subr.bf16.mxu0 0
    %8355 = vmatpush1.bf16.msra.mxu0 0
    %8356 = vmatprep.subr.bf16.mxu0 0
    %8357 = vmatpush1.bf16.msra.mxu0 0
    %8358 = vmatprep.subr.bf16.mxu0 0
    %8359 = vmatpush1.bf16.msra.mxu0 0
    %8360 = vmatprep.subr.bf16.mxu0 0
    %8361 = vmatpush1.bf16.msra.mxu0 0
    %8362 = vmatprep.mubr.bf16.mxu0 %v8328
    %8363 = vmatmul.mubr.bf16.gmra.mrb[0].mxu0 %v8204
    %v8364 = vpop.f32.mrb[0].mxu0
    %v8365 = vadd.f32 0.0, %v8364
    %v8366 = vpop.f32.mrb[0].mxu0
    %v8367 = vadd.f32 0.0, %v8366
    %v8368 = vpop.f32.mrb[0].mxu0
    %v8369 = vpop.f32.mrb[0].mxu0
    %8370 = vdwg.mxu0
    %v8371 = vadd.f32 %v8163, %v8365
    %v8372 = vadd.f32 %v8165, %v8367
    %s8373 = scalar_lea.vmem [#allocation12], 576
    %v8374 = vld [vmem:[%s8373] sm:$0xff]
    %v8375 = vld [vmem:[%s8373 + $0x8] sm:$0xff]
    %v8376 = vld [vmem:[%s8373 + $0x10] sm:$0xff]
    %v8377 = vld [vmem:[%s8373 + $0x18] sm:$0xff]
    %v8378 = vld [vmem:[%s8373 + $0x20] sm:$0xff]
    %v8379 = vld [vmem:[%s8373 + $0x28] sm:$0xff]
    %v8380 = vld [vmem:[%s8373 + $0x30] sm:$0xff]
    %v8381 = vld [vmem:[%s8373 + $0x38] sm:$0xff]
    %v8382 = vld [vmem:[%s8373 + $0x40] sm:$0xff]
    %v8383 = vld [vmem:[%s8373 + $0x48] sm:$0xff]
    %v8384 = vld [vmem:[%s8373 + $0x50] sm:$0xff]
    %v8385 = vld [vmem:[%s8373 + $0x58] sm:$0xff]
    %v8386 = vld [vmem:[%s8373 + $0x60] sm:$0xff]
    %v8387 = vld [vmem:[%s8373 + $0x68] sm:$0xff]
    %v8388 = vld [vmem:[%s8373 + $0x70] sm:$0xff]
    %v8389 = vld [vmem:[%s8373 + $0x78] sm:$0xff]
    %v8390 = vld [vmem:[%s8373 + $0x80] sm:$0xff]
    %v8391 = vld [vmem:[%s8373 + $0x88] sm:$0xff]
    %v8392 = vld [vmem:[%s8373 + $0x90] sm:$0xff]
    %v8393 = vld [vmem:[%s8373 + $0x98] sm:$0xff]
    %v8394 = vld [vmem:[%s8373 + $0xa0] sm:$0xff]
    %v8395 = vld [vmem:[%s8373 + $0xa8] sm:$0xff]
    %v8396 = vld [vmem:[%s8373 + $0xb0] sm:$0xff]
    %v8397 = vld [vmem:[%s8373 + $0xb8] sm:$0xff]
    %v8402 = vunpack.c.l.b16 %v7756
    %v8403 = vunpack.c.l.b16 %v7757
    %v8404 = vunpack.c.l.b16 %v7764
    %v8405 = vunpack.c.l.b16 %v7765
    %v8406 = vsel %vm4065, %v8404, %v8402
    %v8407 = vsel %vm4065, %v8405, %v8403
    %v8408 = vpack.c.b16 %v8406, %v8406
    %v8409 = vpack.c.b16 %v8407, %v8407
    %v8435 = vunpack.c.l.b16 %v8374
    %v8436 = vunpack.c.h.b16 %v8374
    %v8437 = vunpack.c.l.b16 %v8375
    %v8438 = vunpack.c.h.b16 %v8375
    %v8439 = vunpack.c.l.b16 %v8376
    %v8440 = vunpack.c.h.b16 %v8376
    %v8441 = vunpack.c.l.b16 %v8377
    %v8442 = vunpack.c.h.b16 %v8377
    %v8443 = vunpack.c.l.b16 %v8378
    %v8444 = vunpack.c.h.b16 %v8378
    %v8445 = vunpack.c.l.b16 %v8379
    %v8446 = vunpack.c.h.b16 %v8379
    %v8447 = vunpack.c.l.b16 %v8380
    %v8448 = vunpack.c.h.b16 %v8380
    %v8449 = vunpack.c.l.b16 %v8381
    %v8450 = vunpack.c.h.b16 %v8381
    %v8451 = vunpack.c.l.b16 %v8382
    %v8452 = vunpack.c.h.b16 %v8382
    %v8453 = vunpack.c.l.b16 %v8383
    %v8454 = vunpack.c.h.b16 %v8383
    %v8455 = vunpack.c.l.b16 %v8384
    %v8456 = vunpack.c.h.b16 %v8384
    %v8457 = vunpack.c.l.b16 %v8385
    %v8458 = vunpack.c.h.b16 %v8385
    %v8459 = vunpack.c.l.b16 %v8386
    %v8460 = vunpack.c.h.b16 %v8386
    %v8461 = vunpack.c.l.b16 %v8387
    %v8462 = vunpack.c.h.b16 %v8387
    %v8463 = vunpack.c.l.b16 %v8388
    %v8464 = vunpack.c.h.b16 %v8388
    %v8465 = vunpack.c.l.b16 %v8389
    %v8466 = vunpack.c.h.b16 %v8389
    %v8467 = vunpack.c.l.b16 %v8390
    %v8468 = vunpack.c.h.b16 %v8390
    %v8469 = vunpack.c.l.b16 %v8391
    %v8470 = vunpack.c.h.b16 %v8391
    %v8471 = vunpack.c.l.b16 %v8392
    %v8472 = vunpack.c.h.b16 %v8392
    %v8473 = vunpack.c.l.b16 %v8393
    %v8474 = vunpack.c.h.b16 %v8393
    %v8475 = vunpack.c.l.b16 %v8394
    %v8476 = vunpack.c.h.b16 %v8394
    %v8477 = vunpack.c.l.b16 %v8395
    %v8478 = vunpack.c.h.b16 %v8395
    %v8479 = vunpack.c.l.b16 %v8396
    %v8480 = vunpack.c.h.b16 %v8396
    %v8481 = vunpack.c.l.b16 %v8397
    %v8482 = vunpack.c.h.b16 %v8397
    %v8483 = vpack.c.b16 %v8437, %v8435
    %v8484 = vpack.c.b16 %v8438, %v8436
    %v8485 = vpack.c.b16 %v8441, %v8439
    %v8486 = vpack.c.b16 %v8442, %v8440
    %v8487 = vpack.c.b16 %v8445, %v8443
    %v8488 = vpack.c.b16 %v8446, %v8444
    %v8489 = vpack.c.b16 %v8449, %v8447
    %v8490 = vpack.c.b16 %v8450, %v8448
    %v8491 = vpack.c.b16 %v8453, %v8451
    %v8492 = vpack.c.b16 %v8454, %v8452
    %v8493 = vpack.c.b16 %v8457, %v8455
    %v8494 = vpack.c.b16 %v8458, %v8456
    %v8495 = vpack.c.b16 %v8461, %v8459
    %v8496 = vpack.c.b16 %v8462, %v8460
    %v8497 = vpack.c.b16 %v8465, %v8463
    %v8498 = vpack.c.b16 %v8466, %v8464
    %v8499 = vpack.c.b16 %v8469, %v8467
    %v8500 = vpack.c.b16 %v8470, %v8468
    %v8501 = vpack.c.b16 %v8473, %v8471
    %v8502 = vpack.c.b16 %v8474, %v8472
    %v8503 = vpack.c.b16 %v8477, %v8475
    %v8504 = vpack.c.b16 %v8478, %v8476
    %v8505 = vpack.c.b16 %v8481, %v8479
    %v8506 = vpack.c.b16 %v8482, %v8480
    %v8532 = vsel %vm7490, %v8409, 0
    %8534 = vmatprep.subr.bf16.mxu0 %v8484
    %8535 = vmatpush1.bf16.msra.mxu0 %v8483
    %8536 = vmatprep.subr.bf16.mxu0 %v8486
    %8537 = vmatpush1.bf16.msra.mxu0 %v8485
    %8538 = vmatprep.subr.bf16.mxu0 %v8488
    %8539 = vmatpush1.bf16.msra.mxu0 %v8487
    %8540 = vmatprep.subr.bf16.mxu0 %v8490
    %8541 = vmatpush1.bf16.msra.mxu0 %v8489
    %8542 = vmatprep.subr.bf16.mxu0 %v8492
    %8543 = vmatpush1.bf16.msra.mxu0 %v8491
    %8544 = vmatprep.subr.bf16.mxu0 %v8494
    %8545 = vmatpush1.bf16.msra.mxu0 %v8493
    %8546 = vmatprep.subr.bf16.mxu0 %v8496
    %8547 = vmatpush1.bf16.msra.mxu0 %v8495
    %8548 = vmatprep.subr.bf16.mxu0 %v8498
    %8549 = vmatpush1.bf16.msra.mxu0 %v8497
    %8550 = vmatprep.subr.bf16.mxu0 %v8500
    %8551 = vmatpush1.bf16.msra.mxu0 %v8499
    %8552 = vmatprep.subr.bf16.mxu0 %v8502
    %8553 = vmatpush1.bf16.msra.mxu0 %v8501
    %8554 = vmatprep.subr.bf16.mxu0 %v8504
    %8555 = vmatpush1.bf16.msra.mxu0 %v8503
    %8556 = vmatprep.subr.bf16.mxu0 %v8506
    %8557 = vmatpush1.bf16.msra.mxu0 %v8505
    %8558 = vmatprep.subr.bf16.mxu0 0
    %8559 = vmatpush1.bf16.msra.mxu0 0
    %8560 = vmatprep.subr.bf16.mxu0 0
    %8561 = vmatpush1.bf16.msra.mxu0 0
    %8562 = vmatprep.subr.bf16.mxu0 0
    %8563 = vmatpush1.bf16.msra.mxu0 0
    %8564 = vmatprep.subr.bf16.mxu0 0
    %8565 = vmatpush1.bf16.msra.mxu0 0
    %8566 = vmatprep.mubr.bf16.mxu0 %v8532
    %8567 = vmatmul.mubr.bf16.gmra.mrb[0].mxu0 %v8408
    %v8568 = vpop.f32.mrb[0].mxu0
    %v8569 = vadd.f32 0.0, %v8568
    %v8570 = vpop.f32.mrb[0].mxu0
    %v8571 = vadd.f32 0.0, %v8570
    %v8572 = vpop.f32.mrb[0].mxu0
    %v8573 = vpop.f32.mrb[0].mxu0
    %8574 = vdwg.mxu0
    %v8575 = vadd.f32 %v8371, %v8569
    %v8576 = vadd.f32 %v8372, %v8571
    %v8577 = vld [vmem:[#allocation13] sm:$0x3]
    %v8579 = vlaneseq
    %v8580 = vshrl.u32 %v8579, 7
    %v8581 = vsub.s32 0, %v8580
    %v8582 = vrot.slane %v8577, %v8581
    %v8583 = vlaneseq
    %v8584 = vshrl.u32 %v8583, 7
    %v8585 = vsub.s32 1, %v8584
    %v8586 = vrot.slane %v8577, %v8585
    %v8589 = vmul.f32 %v8575, %v8582
    %v8590 = vmul.f32 %v8576, %v8586
    %v8591 = vld [vmem:[#allocation15] sm:$0x3]
    %v8593 = vlaneseq
    %v8594 = vshrl.u32 %v8593, 7
    %v8595 = vsub.s32 0, %v8594
    %v8596 = vrot.slane %v8591, %v8595
    %v8597 = vlaneseq
    %v8598 = vshrl.u32 %v8597, 7
    %v8599 = vsub.s32 1, %v8598
    %v8600 = vrot.slane %v8591, %v8599
    %v8603 = vadd.f32 %v8589, %v8596
    %v8604 = vadd.f32 %v8590, %v8600
    %v8605 = vmax.f32 %v8603, 0.0
    %v8606 = vmax.f32 %v8604, 0.0
    %v8607 = vpack.c.bf16 %v8605, %v8605
    %v8608 = vpack.c.bf16 %v8606, %v8606
    %v8609 = vld [vmem:[#allocation16] sm:$0xf]
    %v8610 = vld [vmem:[#allocation16 + $0x4] sm:$0xf]
    %v8611 = vld [vmem:[#allocation16 + $0x8] sm:$0xf]
    %v8612 = vld [vmem:[#allocation16 + $0xc] sm:$0xf]
    %v8613 = vld [vmem:[#allocation16 + $0x10] sm:$0xf]
    %v8614 = vld [vmem:[#allocation16 + $0x14] sm:$0xf]
    %v8615 = vld [vmem:[#allocation16 + $0x18] sm:$0xf]
    %v8616 = vld [vmem:[#allocation16 + $0x1c] sm:$0xf]
    %v8617 = vld [vmem:[#allocation16 + $0x20] sm:$0xf]
    %v8618 = vld [vmem:[#allocation16 + $0x24] sm:$0xf]
    %v8619 = vld [vmem:[#allocation16 + $0x28] sm:$0xf]
    %v8620 = vld [vmem:[#allocation16 + $0x2c] sm:$0xf]
    %v8621 = vld [vmem:[#allocation16 + $0x30] sm:$0xf]
    %v8622 = vld [vmem:[#allocation16 + $0x34] sm:$0xf]
    %v8623 = vld [vmem:[#allocation16 + $0x38] sm:$0xf]
    %v8624 = vld [vmem:[#allocation16 + $0x3c] sm:$0xf]
    %v8641 = vunpack.c.l.b16 %v8609
    %v8642 = vunpack.c.l.b16 %v8610
    %v8643 = vunpack.c.l.b16 %v8611
    %v8644 = vunpack.c.l.b16 %v8612
    %v8645 = vunpack.c.l.b16 %v8613
    %v8646 = vunpack.c.l.b16 %v8614
    %v8647 = vunpack.c.l.b16 %v8615
    %v8648 = vunpack.c.l.b16 %v8616
    %v8649 = vunpack.c.l.b16 %v8617
    %v8650 = vunpack.c.l.b16 %v8618
    %v8651 = vunpack.c.l.b16 %v8619
    %v8652 = vunpack.c.l.b16 %v8620
    %v8653 = vunpack.c.l.b16 %v8621
    %v8654 = vunpack.c.l.b16 %v8622
    %v8655 = vunpack.c.l.b16 %v8623
    %v8656 = vunpack.c.l.b16 %v8624
    %v8657 = vpack.c.b16 %v8642, %v8641
    %v8658 = vpack.c.b16 %v8644, %v8643
    %v8659 = vpack.c.b16 %v8646, %v8645
    %v8660 = vpack.c.b16 %v8648, %v8647
    %v8661 = vpack.c.b16 %v8650, %v8649
    %v8662 = vpack.c.b16 %v8652, %v8651
    %v8663 = vpack.c.b16 %v8654, %v8653
    %v8664 = vpack.c.b16 %v8656, %v8655
    %8673 = vmatprep.subr.bf16.mxu0 0
    %8674 = vmatpush1.bf16.msra.mxu0 %v8657
    %8675 = vmatprep.subr.bf16.mxu0 0
    %8676 = vmatpush1.bf16.msra.mxu0 %v8658
    %8677 = vmatprep.subr.bf16.mxu0 0
    %8678 = vmatpush1.bf16.msra.mxu0 %v8659
    %8679 = vmatprep.subr.bf16.mxu0 0
    %8680 = vmatpush1.bf16.msra.mxu0 %v8660
    %8681 = vmatprep.subr.bf16.mxu0 0
    %8682 = vmatpush1.bf16.msra.mxu0 %v8661
    %8683 = vmatprep.subr.bf16.mxu0 0
    %8684 = vmatpush1.bf16.msra.mxu0 %v8662
    %8685 = vmatprep.subr.bf16.mxu0 0
    %8686 = vmatpush1.bf16.msra.mxu0 %v8663
    %8687 = vmatprep.subr.bf16.mxu0 0
    %8688 = vmatpush1.bf16.msra.mxu0 %v8664
    %8689 = vmatprep.subr.bf16.mxu0 0
    %8690 = vmatpush1.bf16.msra.mxu0 0
    %8691 = vmatprep.subr.bf16.mxu0 0
    %8692 = vmatpush1.bf16.msra.mxu0 0
    %8693 = vmatprep.subr.bf16.mxu0 0
    %8694 = vmatpush1.bf16.msra.mxu0 0
    %8695 = vmatprep.subr.bf16.mxu0 0
    %8696 = vmatpush1.bf16.msra.mxu0 0
    %8697 = vmatprep.subr.bf16.mxu0 0
    %8698 = vmatpush1.bf16.msra.mxu0 0
    %8699 = vmatprep.subr.bf16.mxu0 0
    %8700 = vmatpush1.bf16.msra.mxu0 0
    %8701 = vmatprep.subr.bf16.mxu0 0
    %8702 = vmatpush1.bf16.msra.mxu0 0
    %8703 = vmatprep.subr.bf16.mxu0 0
    %8704 = vmatpush1.bf16.msra.mxu0 0
    %8705 = vmatprep.mubr.bf16.mxu0 0
    %8706 = vmatmul.mubr.bf16.gmra.mrb[0].mxu0 %v8607
    %v8707 = vpop.f32.mrb[0].mxu0
    %v8708 = vadd.f32 0.0, %v8707
    %v8709 = vpop.f32.mrb[0].mxu0
    %v8710 = vpop.f32.mrb[0].mxu0
    %v8711 = vpop.f32.mrb[0].mxu0
    %8712 = vdwg.mxu0
    %v8713 = vld [vmem:[#allocation18] sm:$0x1]
    %v8715 = vlaneseq
    %v8716 = vshrl.u32 %v8715, 7
    %v8717 = vsub.s32 0, %v8716
    %v8718 = vrot.slane %v8713, %v8717
    %v8720 = vmul.f32 %v8708, %v8718
    %v8721 = vld [vmem:[#allocation19] sm:$0x1]
    %v8723 = vlaneseq
    %v8724 = vshrl.u32 %v8723, 7
    %v8725 = vsub.s32 0, %v8724
    %v8726 = vrot.slane %v8721, %v8725
    %v8728 = vadd.f32 %v8720, %v8726
    %v8729 = vmax.f32 %v8728, 0.0
    %v8730 = vpack.c.bf16 %v8729, %v8729
    %v8731 = vld [vmem:[#allocation21] sm:$0xf]
    %v8732 = vld [vmem:[#allocation21 + $0x4] sm:$0xf]
    %v8733 = vld [vmem:[#allocation21 + $0x8] sm:$0xf]
    %v8734 = vld [vmem:[#allocation21 + $0xc] sm:$0xf]
    %v8735 = vld [vmem:[#allocation21 + $0x10] sm:$0xf]
    %v8736 = vld [vmem:[#allocation21 + $0x14] sm:$0xf]
    %v8737 = vld [vmem:[#allocation21 + $0x18] sm:$0xf]
    %v8738 = vld [vmem:[#allocation21 + $0x1c] sm:$0xf]
    %v8739 = vld [vmem:[#allocation21 + $0x20] sm:$0xf]
    %v8740 = vld [vmem:[#allocation21 + $0x24] sm:$0xf]
    %v8741 = vld [vmem:[#allocation21 + $0x28] sm:$0xf]
    %v8742 = vld [vmem:[#allocation21 + $0x2c] sm:$0xf]
    %v8743 = vld [vmem:[#allocation21 + $0x30] sm:$0xf]
    %v8744 = vld [vmem:[#allocation21 + $0x34] sm:$0xf]
    %v8745 = vld [vmem:[#allocation21 + $0x38] sm:$0xf]
    %v8746 = vld [vmem:[#allocation21 + $0x3c] sm:$0xf]
    %v8747 = vld [vmem:[#allocation22] sm:$0xf]
    %v8748 = vld [vmem:[#allocation22 + $0x4] sm:$0xf]
    %v8749 = vld [vmem:[#allocation22 + $0x8] sm:$0xf]
    %v8750 = vld [vmem:[#allocation22 + $0xc] sm:$0xf]
    %v8751 = vld [vmem:[#allocation22 + $0x10] sm:$0xf]
    %v8752 = vld [vmem:[#allocation22 + $0x14] sm:$0xf]
    %v8753 = vld [vmem:[#allocation22 + $0x18] sm:$0xf]
    %v8754 = vld [vmem:[#allocation22 + $0x1c] sm:$0xf]
    %v8755 = vld [vmem:[#allocation22 + $0x20] sm:$0xf]
    %v8756 = vld [vmem:[#allocation22 + $0x24] sm:$0xf]
    %v8757 = vld [vmem:[#allocation22 + $0x28] sm:$0xf]
    %v8758 = vld [vmem:[#allocation22 + $0x2c] sm:$0xf]
    %v8759 = vld [vmem:[#allocation22 + $0x30] sm:$0xf]
    %v8760 = vld [vmem:[#allocation22 + $0x34] sm:$0xf]
    %v8761 = vld [vmem:[#allocation22 + $0x38] sm:$0xf]
    %v8762 = vld [vmem:[#allocation22 + $0x3c] sm:$0xf]
    %v8779 = vunpack.c.l.b16 %v8747
    %v8780 = vunpack.c.l.b16 %v8748
    %v8781 = vunpack.c.l.b16 %v8749
    %v8782 = vunpack.c.l.b16 %v8750
    %v8783 = vunpack.c.l.b16 %v8751
    %v8784 = vunpack.c.l.b16 %v8752
    %v8785 = vunpack.c.l.b16 %v8753
    %v8786 = vunpack.c.l.b16 %v8754
    %v8787 = vunpack.c.l.b16 %v8755
    %v8788 = vunpack.c.l.b16 %v8756
    %v8789 = vunpack.c.l.b16 %v8757
    %v8790 = vunpack.c.l.b16 %v8758
    %v8791 = vunpack.c.l.b16 %v8759
    %v8792 = vunpack.c.l.b16 %v8760
    %v8793 = vunpack.c.l.b16 %v8761
    %v8794 = vunpack.c.l.b16 %v8762
    %v8795 = vpack.c.b16 %v8780, %v8779
    %v8796 = vpack.c.b16 %v8782, %v8781
    %v8797 = vpack.c.b16 %v8784, %v8783
    %v8798 = vpack.c.b16 %v8786, %v8785
    %v8799 = vpack.c.b16 %v8788, %v8787
    %v8800 = vpack.c.b16 %v8790, %v8789
    %v8801 = vpack.c.b16 %v8792, %v8791
    %v8802 = vpack.c.b16 %v8794, %v8793
    %8811 = vmatprep.subr.bf16.mxu0 0
    %8812 = vmatpush1.bf16.msra.mxu0 %v8795
    %8813 = vmatprep.subr.bf16.mxu0 0
    %8814 = vmatpush1.bf16.msra.mxu0 %v8796
    %8815 = vmatprep.subr.bf16.mxu0 0
    %8816 = vmatpush1.bf16.msra.mxu0 %v8797
    %8817 = vmatprep.subr.bf16.mxu0 0
    %8818 = vmatpush1.bf16.msra.mxu0 %v8798
    %8819 = vmatprep.subr.bf16.mxu0 0
    %8820 = vmatpush1.bf16.msra.mxu0 %v8799
    %8821 = vmatprep.subr.bf16.mxu0 0
    %8822 = vmatpush1.bf16.msra.mxu0 %v8800
    %8823 = vmatprep.subr.bf16.mxu0 0
    %8824 = vmatpush1.bf16.msra.mxu0 %v8801
    %8825 = vmatprep.subr.bf16.mxu0 0
    %8826 = vmatpush1.bf16.msra.mxu0 %v8802
    %8827 = vmatprep.subr.bf16.mxu0 0
    %8828 = vmatpush1.bf16.msra.mxu0 0
    %8829 = vmatprep.subr.bf16.mxu0 0
    %8830 = vmatpush1.bf16.msra.mxu0 0
    %8831 = vmatprep.subr.bf16.mxu0 0
    %8832 = vmatpush1.bf16.msra.mxu0 0
    %8833 = vmatprep.subr.bf16.mxu0 0
    %8834 = vmatpush1.bf16.msra.mxu0 0
    %8835 = vmatprep.subr.bf16.mxu0 0
    %8836 = vmatpush1.bf16.msra.mxu0 0
    %8837 = vmatprep.subr.bf16.mxu0 0
    %8838 = vmatpush1.bf16.msra.mxu0 0
    %8839 = vmatprep.subr.bf16.mxu0 0
    %8840 = vmatpush1.bf16.msra.mxu0 0
    %8841 = vmatprep.subr.bf16.mxu0 0
    %8842 = vmatpush1.bf16.msra.mxu0 0
    %8843 = vmatprep.mubr.bf16.mxu0 0
    %8844 = vmatmul.mubr.bf16.gmra.mrb[0].mxu0 %v8608
    %v8845 = vpop.f32.mrb[0].mxu0
    %v8846 = vadd.f32 0.0, %v8845
    %v8847 = vpop.f32.mrb[0].mxu0
    %v8848 = vpop.f32.mrb[0].mxu0
    %v8849 = vpop.f32.mrb[0].mxu0
    %8850 = vdwg.mxu0
    %v8867 = vunpack.c.l.b16 %v8731
    %v8868 = vunpack.c.l.b16 %v8732
    %v8869 = vunpack.c.l.b16 %v8733
    %v8870 = vunpack.c.l.b16 %v8734
    %v8871 = vunpack.c.l.b16 %v8735
    %v8872 = vunpack.c.l.b16 %v8736
    %v8873 = vunpack.c.l.b16 %v8737
    %v8874 = vunpack.c.l.b16 %v8738
    %v8875 = vunpack.c.l.b16 %v8739
    %v8876 = vunpack.c.l.b16 %v8740
    %v8877 = vunpack.c.l.b16 %v8741
    %v8878 = vunpack.c.l.b16 %v8742
    %v8879 = vunpack.c.l.b16 %v8743
    %v8880 = vunpack.c.l.b16 %v8744
    %v8881 = vunpack.c.l.b16 %v8745
    %v8882 = vunpack.c.l.b16 %v8746
    %v8883 = vpack.c.b16 %v8868, %v8867
    %v8884 = vpack.c.b16 %v8870, %v8869
    %v8885 = vpack.c.b16 %v8872, %v8871
    %v8886 = vpack.c.b16 %v8874, %v8873
    %v8887 = vpack.c.b16 %v8876, %v8875
    %v8888 = vpack.c.b16 %v8878, %v8877
    %v8889 = vpack.c.b16 %v8880, %v8879
    %v8890 = vpack.c.b16 %v8882, %v8881
    %8899 = vmatprep.subr.bf16.mxu0 0
    %8900 = vmatpush1.bf16.msra.mxu0 %v8883
    %8901 = vmatprep.subr.bf16.mxu0 0
    %8902 = vmatpush1.bf16.msra.mxu0 %v8884
    %8903 = vmatprep.subr.bf16.mxu0 0
    %8904 = vmatpush1.bf16.msra.mxu0 %v8885
    %8905 = vmatprep.subr.bf16.mxu0 0
    %8906 = vmatpush1.bf16.msra.mxu0 %v8886
    %8907 = vmatprep.subr.bf16.mxu0 0
    %8908 = vmatpush1.bf16.msra.mxu0 %v8887
    %8909 = vmatprep.subr.bf16.mxu0 0
    %8910 = vmatpush1.bf16.msra.mxu0 %v8888
    %8911 = vmatprep.subr.bf16.mxu0 0
    %8912 = vmatpush1.bf16.msra.mxu0 %v8889
    %8913 = vmatprep.subr.bf16.mxu0 0
    %8914 = vmatpush1.bf16.msra.mxu0 %v8890
    %8915 = vmatprep.subr.bf16.mxu0 0
    %8916 = vmatpush1.bf16.msra.mxu0 0
    %8917 = vmatprep.subr.bf16.mxu0 0
    %8918 = vmatpush1.bf16.msra.mxu0 0
    %8919 = vmatprep.subr.bf16.mxu0 0
    %8920 = vmatpush1.bf16.msra.mxu0 0
    %8921 = vmatprep.subr.bf16.mxu0 0
    %8922 = vmatpush1.bf16.msra.mxu0 0
    %8923 = vmatprep.subr.bf16.mxu0 0
    %8924 = vmatpush1.bf16.msra.mxu0 0
    %8925 = vmatprep.subr.bf16.mxu0 0
    %8926 = vmatpush1.bf16.msra.mxu0 0
    %8927 = vmatprep.subr.bf16.mxu0 0
    %8928 = vmatpush1.bf16.msra.mxu0 0
    %8929 = vmatprep.subr.bf16.mxu0 0
    %8930 = vmatpush1.bf16.msra.mxu0 0
    %8931 = vmatprep.mubr.bf16.mxu0 0
    %8932 = vmatmul.mubr.bf16.gmra.mrb[0].mxu0 %v8730
    %v8933 = vpop.f32.mrb[0].mxu0
    %v8934 = vadd.f32 %v8846, %v8933
    %v8935 = vpop.f32.mrb[0].mxu0
    %v8936 = vpop.f32.mrb[0].mxu0
    %v8937 = vpop.f32.mrb[0].mxu0
    %8938 = vdwg.mxu0
    %v8939 = vld [vmem:[#allocation24] sm:$0x1]
    %v8941 = vlaneseq
    %v8942 = vshrl.u32 %v8941, 7
    %v8943 = vsub.s32 0, %v8942
    %v8944 = vrot.slane %v8939, %v8943
    %v8946 = vadd.f32 %v8934, %v8944
    %8947 = vst [vmem:[%s16] sm:$0x3] %v8946
    // Predicated region
    $region126: #{dann_forward.1} parent=1 // pred_check
      _
    $region127: #{dann_forward.1} parent=1 // pred_check_branch
      %8949 = sbr.rel (0) target = $region129
    $region128: #{dann_forward.1} parent=1 // pred_region
      _
    $region129: #{dann_forward.1} parent=1 // pred_fallthru
      _
    // Predicated region
    $region130: #{dann_forward.1} parent=1 // pred_check
      _
    $region131: #{dann_forward.1} parent=1 // pred_check_branch
      %8951 = sbr.rel (0) target = $region133
    $region132: #{dann_forward.1} parent=1 // pred_region
      _
    $region133: #{dann_forward.1} parent=1 // pred_fallthru
      _
    %8952 = vsyncpa [#allocation3], 1
    %8953 = vsyncpa [#allocation5], 1
    %8954 = vsyncpa [#allocation8], 1
    %8955 = vsyncpa [#allocation11], 1
    %8956 = vsyncpa [#allocation14], 1
    %8957 = vsyncpa [#allocation17], 1
    %8958 = vsyncpa [#allocation20], 1
    %8959 = vsyncpa [#allocation23], 1

</llo_original>
